<compile_context>
chip_gen: v7x
topology: tpu7x:2x2x1
jax: 0.10.0
libtpu: 0.0.40
codegen_flags: <defaults>
</compile_context>

<pallas_src>
import functools

import jax
import jax.numpy as jnp
from jax.experimental import pallas as pl
from jax.experimental.pallas import tpu as pltpu

LEAK = 0.2
BN_EPS = 1e-5
CHANNEL = 3
D_CHANNEL = 64
IMG_SIZE = 64

TILE_M = 512
TILE_K = 512


def _pick_tile(dim, target, align):
    """Largest tile <= target that divides dim and is `align`-aligned (or full dim)."""
    if dim <= target:
        return dim
    t = (target // align) * align
    while t >= align:
        if dim % t == 0:
            return t
        t -= align
    return dim


# ---------------------------------------------------------------------------
# Pallas kernels
# ---------------------------------------------------------------------------
def _gemm_act_kernel(x_ref, w_ref, b_ref, o_ref, acc_ref, *, act):
    """Tiled (tm, tk) @ (tk, N); bias + activation fused in the K-last epilogue."""
    @pl.when(pl.program_id(1) == 0)
    def _():
        acc_ref[...] = jnp.zeros_like(acc_ref)

    acc_ref[...] += jnp.dot(x_ref[...], w_ref[...], preferred_element_type=jnp.float32)

    @pl.when(pl.program_id(1) == pl.num_programs(1) - 1)
    def _():
        y = acc_ref[...] + b_ref[...]
        if act == "leaky":
            y = jnp.where(y > 0, y, LEAK * y)
        elif act == "sigmoid":
            y = 1.0 / (1.0 + jnp.exp(-y))
        o_ref[...] = y


def _gemm_stats_kernel(x_ref, w_ref, b_ref, o_ref, sum_ref, sq_ref, acc_ref):
    """Tiled GEMM + bias; epilogue also emits per-M-tile channel sum / sum-of-squares
    so BatchNorm statistics never require a full-tensor re-read from HBM."""
    @pl.when(pl.program_id(1) == 0)
    def _():
        acc_ref[...] = jnp.zeros_like(acc_ref)

    acc_ref[...] += jnp.dot(x_ref[...], w_ref[...], preferred_element_type=jnp.float32)

    @pl.when(pl.program_id(1) == pl.num_programs(1) - 1)
    def _():
        y = acc_ref[...] + b_ref[...]
        o_ref[...] = y
        ps = jnp.sum(y, axis=0, keepdims=True)        # (1, N) partial channel sum
        pq = jnp.sum(y * y, axis=0, keepdims=True)    # (1, N) partial channel sumsq
        # Replicate across the 8 sublanes of the (8, N) stats block; the
        # host-side combine divides by 8.
        sum_ref[...] = jnp.broadcast_to(ps, sum_ref.shape)
        sq_ref[...] = jnp.broadcast_to(pq, sq_ref.shape)


def _affine_lrelu_kernel(x_ref, s_ref, t_ref, o_ref):
    y = x_ref[...] * s_ref[...] + t_ref[...]
    o_ref[...] = jnp.where(y > 0, y, LEAK * y)


# ---------------------------------------------------------------------------
# Pallas wrappers
# ---------------------------------------------------------------------------
def fused_conv_gemm(patches, w2, b, act=None, with_stats=False):
    """(M, K) x (K, N) with fused bias (+ activation or BN-partial-stats)."""
    M, K = patches.shape
    N = w2.shape[1]
    tm = _pick_tile(M, TILE_M, 8)
    tk = _pick_tile(K, TILE_K, 128)
    n_m, n_k = M // tm, K // tk

    xb = patches.astype(jnp.bfloat16)        # MXU operands in bf16
    wb = w2.astype(jnp.bfloat16)
    b2 = b.reshape(1, N).astype(jnp.float32)

    in_specs = [
        pl.BlockSpec((tm, tk), lambda i, k: (i, k)),
        pl.BlockSpec((tk, N), lambda i, k: (k, 0)),
        pl.BlockSpec((1, N), lambda i, k: (0, 0)),
    ]
    scratch = [pltpu.VMEM((tm, N), jnp.float32)]
    cparams = pltpu.CompilerParams(dimension_semantics=("parallel", "arbitrary"))

    if with_stats:
        out_shape = (
            jax.ShapeDtypeStruct((M, N), jnp.float32),
            jax.ShapeDtypeStruct((n_m * 8, N), jnp.float32),
            jax.ShapeDtypeStruct((n_m * 8, N), jnp.float32),
        )
        out_specs = (
            pl.BlockSpec((tm, N), lambda i, k: (i, 0)),
            pl.BlockSpec((8, N), lambda i, k: (i, 0)),
            pl.BlockSpec((8, N), lambda i, k: (i, 0)),
        )
        return pl.pallas_call(
            _gemm_stats_kernel,
            out_shape=out_shape,
            grid=(n_m, n_k),
            in_specs=in_specs,
            out_specs=out_specs,
            scratch_shapes=scratch,
            compiler_params=cparams,
        )(xb, wb, b2)

    return pl.pallas_call(
        functools.partial(_gemm_act_kernel, act=act),
        out_shape=jax.ShapeDtypeStruct((M, N), jnp.float32),
        grid=(n_m, n_k),
        in_specs=in_specs,
        out_specs=pl.BlockSpec((tm, N), lambda i, k: (i, 0)),
        scratch_shapes=scratch,
        compiler_params=cparams,
    )(xb, wb, b2)


def affine_lrelu(y, scale, shift):
    """Per-channel affine (BatchNorm) + LeakyReLU(0.2), tiled over M."""
    M, N = y.shape
    tm = _pick_tile(M, 1024, 8)
    n_m = M // tm
    return pl.pallas_call(
        _affine_lrelu_kernel,
        out_shape=jax.ShapeDtypeStruct((M, N), jnp.float32),
        grid=(n_m,),
        in_specs=[
            pl.BlockSpec((tm, N), lambda i: (i, 0)),
            pl.BlockSpec((1, N), lambda i: (0, 0)),
            pl.BlockSpec((1, N), lambda i: (0, 0)),
        ],
        out_specs=pl.BlockSpec((tm, N), lambda i: (i, 0)),
        compiler_params=pltpu.CompilerParams(dimension_semantics=("parallel",)),
    )(y, scale.reshape(1, N).astype(jnp.float32), shift.reshape(1, N).astype(jnp.float32))


# ---------------------------------------------------------------------------
# Glue: NHWC im2col + layer plumbing (plain JAX, no transposes)
# ---------------------------------------------------------------------------
def im2col_nhwc(x, k, stride, pad):
    """x: (B, H, W, C) -> ((B*Ho*Wo, k*k*C), Ho, Wo); K flattened as (kh, kw, c)."""
    B, H, W, C = x.shape
    xp = jnp.pad(x, ((0, 0), (pad, pad), (pad, pad), (0, 0)))
    Ho = (H + 2 * pad - k) // stride + 1
    Wo = (W + 2 * pad - k) // stride + 1
    cols = []
    for i in range(k):
        for j in range(k):
            cols.append(xp[:, i : i + stride * Ho : stride, j : j + stride * Wo : stride, :])
    p = jnp.stack(cols, axis=3)                       # (B, Ho, Wo, k*k, C)
    return p.reshape(B * Ho * Wo, k * k * C), Ho, Wo


def conv_block(x_nhwc, w, b, stride, pad, act=None, with_stats=False):
    """x: NHWC, w: (Cout, Cin, k, k).  Returns flat (B*Ho*Wo, Cout) activations."""
    B, H, W, Cin = x_nhwc.shape
    Cout, _, k, _ = w.shape
    patches, Ho, Wo = im2col_nhwc(x_nhwc, k, stride, pad)
    w2 = w.transpose(2, 3, 1, 0).reshape(k * k * Cin, Cout)   # (K, N), matches patch layout

    b2 = b
    if Cout < 8:                                       # final 1-channel conv: lane-pad N to 128
        padn = 128 - Cout
        w2 = jnp.pad(w2, ((0, 0), (0, padn)))
        b2 = jnp.pad(b, ((0, padn),))

    if with_stats:
        y, sums, sqs = fused_conv_gemm(patches, w2, b2, with_stats=True)
        return y, (B, Ho, Wo, Cout), sums, sqs

    y = fused_conv_gemm(patches, w2, b2, act=act)
    if y.shape[1] != Cout:
        y = y[:, :Cout]
    return y, (B, Ho, Wo, Cout)


def dnet_forward(x_nchw, params):
    x = x_nchw.transpose(0, 2, 3, 1)                   # one-time NCHW -> NHWC

    # block 1: Conv(3->64, 4, 2, 1) + LeakyReLU(0.2)   (fused in GEMM epilogue)
    y, (B, Ho, Wo, C) = conv_block(x, params["w1"], params["b1"], 2, 1, act="leaky")
    x = y.reshape(B, Ho, Wo, C)

    # blocks 2-4: Conv + BatchNorm2d (training-mode batch stats) + LeakyReLU(0.2)
    for idx in (2, 3, 4):
        y, (B, Ho, Wo, C), sums, sqs = conv_block(
            x, params[f"w{idx}"], params[f"b{idx}"], 2, 1, with_stats=True
        )
        M = B * Ho * Wo
        s = jnp.sum(sums, axis=0) / 8.0                # total per-channel sum
        q = jnp.sum(sqs, axis=0) / 8.0                 # total per-channel sum of squares
        mean = s / M
        var = q / M - mean * mean                      # biased var (PyTorch BN normalization)
        scale = params[f"g{idx}"] / jnp.sqrt(var + BN_EPS)
        shift = params[f"beta{idx}"] - mean * scale
        y = affine_lrelu(y, scale, shift)
        x = y.reshape(B, Ho, Wo, C)

    # block 5: Conv(512->1, 4, 1, 0) + Sigmoid, then .view(-1, 1)
    y, _ = conv_block(x, params["w5"], params["b5"], 1, 0, act="sigmoid")
    return y.reshape(-1, 1)


# ---------------------------------------------------------------------------
# Deterministic parameter construction (DCGAN-style init: N(0, 0.02) convs,
# BN gamma ~ N(1, 0.02), beta = 0).
# ---------------------------------------------------------------------------
def make_params(key):
    chans = [CHANNEL, D_CHANNEL, 2 * D_CHANNEL, 4 * D_CHANNEL, 8 * D_CHANNEL, 1]
    params = {}
    keys = jax.random.split(key, 16)
    ki = 0
    for layer in range(1, 6):
        cin, cout = chans[layer - 1], chans[layer]
        params[f"w{layer}"] = 0.02 * jax.random.normal(
            keys[ki], (cout, cin, 4, 4), dtype=jnp.float32
        )
        ki += 1
        params[f"b{layer}"] = jnp.zeros((cout,), dtype=jnp.float32)
    for layer in (2, 3, 4):
        c = chans[layer]
        params[f"g{layer}"] = 1.0 + 0.02 * jax.random.normal(keys[ki], (c,), dtype=jnp.float32)
        ki += 1
        params[f"beta{layer}"] = jnp.zeros((c,), dtype=jnp.float32)
    return params


if __name__ == "__main__":
    key = jax.random.PRNGKey(0)
    k_x, k_p = jax.random.split(key)
    batch = 2
    x = jax.random.normal(k_x, (batch, CHANNEL, IMG_SIZE, IMG_SIZE), dtype=jnp.float32)
    params = make_params(k_p)

    out = jax.jit(dnet_forward)(x, params)
    out = jax.block_until_ready(out)

    assert out.shape == (batch, 1), out.shape
    assert bool(jnp.all(jnp.isfinite(out)))
    assert bool(jnp.all((out >= 0.0) & (out <= 1.0)))   # sigmoid range
    print("KERNEL_OK")
</pallas_src>

<mosaic_0001>
module attributes {stable_mosaic.version = 11 : i64} {
  func.func @_gemm_act_kernel(%arg0: i32, %arg1: i32, %arg2: memref<512x48xbf16, #tpu.memory_space<vmem>>, %arg3: memref<48x64xbf16, #tpu.memory_space<vmem>>, %arg4: memref<1x64xf32, #tpu.memory_space<vmem>>, %arg5: memref<512x64xf32, #tpu.memory_space<vmem>>, %arg6: memref<512x64xf32, #tpu.memory_space<vmem>>) attributes {dimension_semantics = [#tpu.dimension_semantics<parallel>, #tpu.dimension_semantics<arbitrary>], iteration_bounds = array<i64: 4, 1>, scalar_prefetch = 0 : i64, scratch_operands = 1 : i64, tpu.core_type = #tpu.core_type<tc>, window_params = [{transform_indices = @transform_0, window_bounds = array<i64: 512, 48>}, {transform_indices = @transform_1, window_bounds = array<i64: 48, 64>}, {pipeline_mode = #tpu.pipeline_mode<synchronous>, transform_indices = @transform_2, window_bounds = array<i64: 1, 64>}, {transform_indices = @transform_3, window_bounds = array<i64: 512, 64>}]} {
    %c0_i32 = arith.constant 0 : i32
    %0 = arith.cmpi eq, %arg1, %c0_i32 : i32
    %1 = arith.extui %0 : i1 to i32
    %c0_i32_0 = arith.constant 0 : i32
    %2 = arith.cmpi ne, %1, %c0_i32_0 : i32
    scf.if %2 {
      %cst_10 = arith.constant 0.000000e+00 : f32
      %12 = vector.broadcast %cst_10 : f32 to vector<512x64xf32>
      %c0_11 = arith.constant 0 : index
      %c0_12 = arith.constant 0 : index
      %13 = vector.load %arg6[%c0_11, %c0_12] : memref<512x64xf32, #tpu.memory_space<vmem>>, vector<512x64xf32>
      tpu.vector_store %arg6[%c0_11, %c0_12], %12 {strides = array<i32>} : memref<512x64xf32, #tpu.memory_space<vmem>>, vector<512x64xf32>,
    } else {
    }
    %c0 = arith.constant 0 : index
    %c0_1 = arith.constant 0 : index
    %3 = vector.load %arg6[%c0, %c0_1] : memref<512x64xf32, #tpu.memory_space<vmem>>, vector<512x64xf32>
    %c0_2 = arith.constant 0 : index
    %c0_3 = arith.constant 0 : index
    %4 = vector.load %arg2[%c0_2, %c0_3] : memref<512x48xbf16, #tpu.memory_space<vmem>>, vector<512x48xbf16>
    %c0_4 = arith.constant 0 : index
    %c0_5 = arith.constant 0 : index
    %5 = vector.load %arg3[%c0_4, %c0_5] : memref<48x64xbf16, #tpu.memory_space<vmem>>, vector<48x64xbf16>
    %cst = arith.constant dense<0.000000e+00> : vector<512x64xf32>
    %6 = tpu.matmul %4, %5, %cst {dimension_numbers = #tpu.dot_dimension_numbers<[1], [0], [0], [1], [0, 0, 1, 1], [], []>} : vector<512x48xbf16>, vector<48x64xbf16>, vector<512x64xf32> -> vector<512x64xf32>
    %7 = arith.addf %3, %6 : vector<512x64xf32>
    %c0_6 = arith.constant 0 : index
    %c0_7 = arith.constant 0 : index
    %8 = vector.load %arg6[%c0_6, %c0_7] : memref<512x64xf32, #tpu.memory_space<vmem>>, vector<512x64xf32>
    tpu.vector_store %arg6[%c0_6, %c0_7], %7 {strides = array<i32>} : memref<512x64xf32, #tpu.memory_space<vmem>>, vector<512x64xf32>,
    %c0_i32_8 = arith.constant 0 : i32
    %9 = arith.cmpi eq, %arg1, %c0_i32_8 : i32
    %10 = arith.extui %9 : i1 to i32
    %c0_i32_9 = arith.constant 0 : i32
    %11 = arith.cmpi ne, %10, %c0_i32_9 : i32
    scf.if %11 {
      %c0_10 = arith.constant 0 : index
      %c0_11 = arith.constant 0 : index
      %12 = vector.load %arg6[%c0_10, %c0_11] : memref<512x64xf32, #tpu.memory_space<vmem>>, vector<512x64xf32>
      %c0_12 = arith.constant 0 : index
      %c0_13 = arith.constant 0 : index
      %13 = vector.load %arg4[%c0_12, %c0_13] : memref<1x64xf32, #tpu.memory_space<vmem>>, vector<1x64xf32>
      %14 = vector.broadcast %13 : vector<1x64xf32> to vector<512x64xf32>
      %15 = arith.addf %12, %14 : vector<512x64xf32>
      %cst_14 = arith.constant 0.000000e+00 : f32
      %16 = vector.broadcast %cst_14 : f32 to vector<512x64xf32>
      %17 = arith.cmpf ogt, %15, %16 : vector<512x64xf32>
      %cst_15 = arith.constant 2.000000e-01 : f32
      %18 = vector.broadcast %cst_15 : f32 to vector<512x64xf32>
      %19 = arith.mulf %18, %15 : vector<512x64xf32>
      %20 = arith.select %17, %15, %19 : vector<512x64xi1>, vector<512x64xf32>
      %c0_16 = arith.constant 0 : index
      %c0_17 = arith.constant 0 : index
      %21 = vector.load %arg5[%c0_16, %c0_17] : memref<512x64xf32, #tpu.memory_space<vmem>>, vector<512x64xf32>
      tpu.vector_store %arg5[%c0_16, %c0_17], %20 {strides = array<i32>} : memref<512x64xf32, #tpu.memory_space<vmem>>, vector<512x64xf32>,
    } else {
    }
    return
  }
  func.func @transform_0(%arg0: i32, %arg1: i32) -> (i32, i32) {
    %c0_i32 = arith.constant 0 : i32
    return %arg0, %arg1 : i32, i32
  }
  func.func @transform_1(%arg0: i32, %arg1: i32) -> (i32, i32) {
    %c0_i32 = arith.constant 0 : i32
    %c0_i32_0 = arith.constant 0 : i32
    return %arg1, %c0_i32 : i32, i32
  }
  func.func @transform_2(%arg0: i32, %arg1: i32) -> (i32, i32) {
    %c0_i32 = arith.constant 0 : i32
    %c0_i32_0 = arith.constant 0 : i32
    %c0_i32_1 = arith.constant 0 : i32
    return %c0_i32, %c0_i32_0 : i32, i32
  }
  func.func @transform_3(%arg0: i32, %arg1: i32) -> (i32, i32) {
    %c0_i32 = arith.constant 0 : i32
    %c0_i32_0 = arith.constant 0 : i32
    return %arg0, %c0_i32 : i32, i32
  }
}

module attributes {stable_mosaic.version = 11 : i64} {
  func.func @_gemm_stats_kernel(%arg0: i32, %arg1: i32, %arg2: memref<512x512xbf16, #tpu.memory_space<vmem>>, %arg3: memref<512x128xbf16, #tpu.memory_space<vmem>>, %arg4: memref<1x128xf32, #tpu.memory_space<vmem>>, %arg5: memref<512x128xf32, #tpu.memory_space<vmem>>, %arg6: memref<8x128xf32, #tpu.memory_space<vmem>>, %arg7: memref<8x128xf32, #tpu.memory_space<vmem>>, %arg8: memref<512x128xf32, #tpu.memory_space<vmem>>) attributes {dimension_semantics = [#tpu.dimension_semantics<parallel>, #tpu.dimension_semantics<arbitrary>], iteration_bounds = array<i64: 1, 2>, scalar_prefetch = 0 : i64, scratch_operands = 1 : i64, tpu.core_type = #tpu.core_type<tc>, window_params = [{transform_indices = @transform_0, window_bounds = array<i64: 512, 512>}, {transform_indices = @transform_1, window_bounds = array<i64: 512, 128>}, {pipeline_mode = #tpu.pipeline_mode<synchronous>, transform_indices = @transform_2, window_bounds = array<i64: 1, 128>}, {transform_indices = @transform_3, window_bounds = array<i64: 512, 128>}, {transform_indices = @transform_4, window_bounds = array<i64: 8, 128>}, {transform_indices = @transform_5, window_bounds = array<i64: 8, 128>}]} {
    %c0_i32 = arith.constant 0 : i32
    %0 = arith.cmpi eq, %arg1, %c0_i32 : i32
    %1 = arith.extui %0 : i1 to i32
    %c0_i32_0 = arith.constant 0 : i32
    %2 = arith.cmpi ne, %1, %c0_i32_0 : i32
    scf.if %2 {
      %cst_9 = arith.constant 0.000000e+00 : f32
      %12 = vector.broadcast %cst_9 : f32 to vector<512x128xf32>
      %c0_10 = arith.constant 0 : index
      %c0_11 = arith.constant 0 : index
      %13 = vector.load %arg8[%c0_10, %c0_11] : memref<512x128xf32, #tpu.memory_space<vmem>>, vector<512x128xf32>
      tpu.vector_store %arg8[%c0_10, %c0_11], %12 {strides = array<i32>} : memref<512x128xf32, #tpu.memory_space<vmem>>, vector<512x128xf32>,
    } else {
    }
    %c0 = arith.constant 0 : index
    %c0_1 = arith.constant 0 : index
    %3 = vector.load %arg8[%c0, %c0_1] : memref<512x128xf32, #tpu.memory_space<vmem>>, vector<512x128xf32>
    %c0_2 = arith.constant 0 : index
    %c0_3 = arith.constant 0 : index
    %4 = vector.load %arg2[%c0_2, %c0_3] : memref<512x512xbf16, #tpu.memory_space<vmem>>, vector<512x512xbf16>
    %c0_4 = arith.constant 0 : index
    %c0_5 = arith.constant 0 : index
    %5 = vector.load %arg3[%c0_4, %c0_5] : memref<512x128xbf16, #tpu.memory_space<vmem>>, vector<512x128xbf16>
    %cst = arith.constant dense<0.000000e+00> : vector<512x128xf32>
    %6 = tpu.matmul %4, %5, %cst {dimension_numbers = #tpu.dot_dimension_numbers<[1], [0], [0], [1], [0, 0, 1, 1], [], []>} : vector<512x512xbf16>, vector<512x128xbf16>, vector<512x128xf32> -> vector<512x128xf32>
    %7 = arith.addf %3, %6 : vector<512x128xf32>
    %c0_6 = arith.constant 0 : index
    %c0_7 = arith.constant 0 : index
    %8 = vector.load %arg8[%c0_6, %c0_7] : memref<512x128xf32, #tpu.memory_space<vmem>>, vector<512x128xf32>
    tpu.vector_store %arg8[%c0_6, %c0_7], %7 {strides = array<i32>} : memref<512x128xf32, #tpu.memory_space<vmem>>, vector<512x128xf32>,
    %c1_i32 = arith.constant 1 : i32
    %9 = arith.cmpi eq, %arg1, %c1_i32 : i32
    %10 = arith.extui %9 : i1 to i32
    %c0_i32_8 = arith.constant 0 : i32
    %11 = arith.cmpi ne, %10, %c0_i32_8 : i32
    scf.if %11 {
      %c0_9 = arith.constant 0 : index
      %c0_10 = arith.constant 0 : index
      %12 = vector.load %arg8[%c0_9, %c0_10] : memref<512x128xf32, #tpu.memory_space<vmem>>, vector<512x128xf32>
      %c0_11 = arith.constant 0 : index
      %c0_12 = arith.constant 0 : index
      %13 = vector.load %arg4[%c0_11, %c0_12] : memref<1x128xf32, #tpu.memory_space<vmem>>, vector<1x128xf32>
      %14 = vector.broadcast %13 : vector<1x128xf32> to vector<512x128xf32>
      %15 = arith.addf %12, %14 : vector<512x128xf32>
      %c0_13 = arith.constant 0 : index
      %c0_14 = arith.constant 0 : index
      %16 = vector.load %arg5[%c0_13, %c0_14] : memref<512x128xf32, #tpu.memory_space<vmem>>, vector<512x128xf32>
      tpu.vector_store %arg5[%c0_13, %c0_14], %15 {strides = array<i32>} : memref<512x128xf32, #tpu.memory_space<vmem>>, vector<512x128xf32>,
      %cst_15 = arith.constant dense<0.000000e+00> : vector<128xf32>
      %17 = vector.multi_reduction <add>, %15, %cst_15 [0] : vector<512x128xf32> to vector<128xf32>
      %18 = vector.shape_cast %17 : vector<128xf32> to vector<1x128xf32>
      %19 = arith.mulf %15, %15 : vector<512x128xf32>
      %cst_16 = arith.constant dense<0.000000e+00> : vector<128xf32>
      %20 = vector.multi_reduction <add>, %19, %cst_16 [0] : vector<512x128xf32> to vector<128xf32>
      %21 = vector.shape_cast %20 : vector<128xf32> to vector<1x128xf32>
      %22 = vector.shape_cast %18 : vector<1x128xf32> to vector<1x128xf32>
      %23 = vector.broadcast %22 : vector<1x128xf32> to vector<8x128xf32>
      %c0_17 = arith.constant 0 : index
      %c0_18 = arith.constant 0 : index
      %24 = vector.load %arg6[%c0_17, %c0_18] : memref<8x128xf32, #tpu.memory_space<vmem>>, vector<8x128xf32>
      tpu.vector_store %arg6[%c0_17, %c0_18], %23 {strides = array<i32>} : memref<8x128xf32, #tpu.memory_space<vmem>>, vector<8x128xf32>,
      %25 = vector.shape_cast %21 : vector<1x128xf32> to vector<1x128xf32>
      %26 = vector.broadcast %25 : vector<1x128xf32> to vector<8x128xf32>
      %c0_19 = arith.constant 0 : index
      %c0_20 = arith.constant 0 : index
      %27 = vector.load %arg7[%c0_19, %c0_20] : memref<8x128xf32, #tpu.memory_space<vmem>>, vector<8x128xf32>
      tpu.vector_store %arg7[%c0_19, %c0_20], %26 {strides = array<i32>} : memref<8x128xf32, #tpu.memory_space<vmem>>, vector<8x128xf32>,
    } else {
    }
    return
  }
  func.func @transform_0(%arg0: i32, %arg1: i32) -> (i32, i32) {
    %c0_i32 = arith.constant 0 : i32
    return %arg0, %arg1 : i32, i32
  }
  func.func @transform_1(%arg0: i32, %arg1: i32) -> (i32, i32) {
    %c0_i32 = arith.constant 0 : i32
    %c0_i32_0 = arith.constant 0 : i32
    return %arg1, %c0_i32 : i32, i32
  }
  func.func @transform_2(%arg0: i32, %arg1: i32) -> (i32, i32) {
    %c0_i32 = arith.constant 0 : i32
    %c0_i32_0 = arith.constant 0 : i32
    %c0_i32_1 = arith.constant 0 : i32
    return %c0_i32, %c0_i32_0 : i32, i32
  }
  func.func @transform_3(%arg0: i32, %arg1: i32) -> (i32, i32) {
    %c0_i32 = arith.constant 0 : i32
    %c0_i32_0 = arith.constant 0 : i32
    return %arg0, %c0_i32 : i32, i32
  }
  func.func @transform_4(%arg0: i32, %arg1: i32) -> (i32, i32) {
    %c0_i32 = arith.constant 0 : i32
    %c0_i32_0 = arith.constant 0 : i32
    return %arg0, %c0_i32 : i32, i32
  }
  func.func @transform_5(%arg0: i32, %arg1: i32) -> (i32, i32) {
    %c0_i32 = arith.constant 0 : i32
    %c0_i32_0 = arith.constant 0 : i32
    return %arg0, %c0_i32 : i32, i32
  }
}

module attributes {stable_mosaic.version = 11 : i64} {
  func.func @_affine_lrelu_kernel(%arg0: i32, %arg1: memref<512x128xf32, #tpu.memory_space<vmem>>, %arg2: memref<1x128xf32, #tpu.memory_space<vmem>>, %arg3: memref<1x128xf32, #tpu.memory_space<vmem>>, %arg4: memref<512x128xf32, #tpu.memory_space<vmem>>) attributes {dimension_semantics = [#tpu.dimension_semantics<parallel>], iteration_bounds = array<i64: 1>, scalar_prefetch = 0 : i64, scratch_operands = 0 : i64, tpu.core_type = #tpu.core_type<tc>, window_params = [{transform_indices = @transform_0, window_bounds = array<i64: 512, 128>}, {pipeline_mode = #tpu.pipeline_mode<synchronous>, transform_indices = @transform_1, window_bounds = array<i64: 1, 128>}, {pipeline_mode = #tpu.pipeline_mode<synchronous>, transform_indices = @transform_2, window_bounds = array<i64: 1, 128>}, {transform_indices = @transform_3, window_bounds = array<i64: 512, 128>}]} {
    %c0 = arith.constant 0 : index
    %c0_0 = arith.constant 0 : index
    %0 = vector.load %arg1[%c0, %c0_0] : memref<512x128xf32, #tpu.memory_space<vmem>>, vector<512x128xf32>
    %c0_1 = arith.constant 0 : index
    %c0_2 = arith.constant 0 : index
    %1 = vector.load %arg2[%c0_1, %c0_2] : memref<1x128xf32, #tpu.memory_space<vmem>>, vector<1x128xf32>
    %2 = vector.broadcast %1 : vector<1x128xf32> to vector<512x128xf32>
    %3 = arith.mulf %0, %2 : vector<512x128xf32>
    %c0_3 = arith.constant 0 : index
    %c0_4 = arith.constant 0 : index
    %4 = vector.load %arg3[%c0_3, %c0_4] : memref<1x128xf32, #tpu.memory_space<vmem>>, vector<1x128xf32>
    %5 = vector.broadcast %4 : vector<1x128xf32> to vector<512x128xf32>
    %6 = arith.addf %3, %5 : vector<512x128xf32>
    %cst = arith.constant 0.000000e+00 : f32
    %7 = vector.broadcast %cst : f32 to vector<512x128xf32>
    %8 = arith.cmpf ogt, %6, %7 : vector<512x128xf32>
    %cst_5 = arith.constant 2.000000e-01 : f32
    %9 = vector.broadcast %cst_5 : f32 to vector<512x128xf32>
    %10 = arith.mulf %9, %6 : vector<512x128xf32>
    %11 = arith.select %8, %6, %10 : vector<512x128xi1>, vector<512x128xf32>
    %c0_6 = arith.constant 0 : index
    %c0_7 = arith.constant 0 : index
    %12 = vector.load %arg4[%c0_6, %c0_7] : memref<512x128xf32, #tpu.memory_space<vmem>>, vector<512x128xf32>
    tpu.vector_store %arg4[%c0_6, %c0_7], %11 {strides = array<i32>} : memref<512x128xf32, #tpu.memory_space<vmem>>, vector<512x128xf32>,
    return
  }
  func.func @transform_0(%arg0: i32) -> (i32, i32) {
    %c0_i32 = arith.constant 0 : i32
    %c0_i32_0 = arith.constant 0 : i32
    return %arg0, %c0_i32 : i32, i32
  }
  func.func @transform_1(%arg0: i32) -> (i32, i32) {
    %c0_i32 = arith.constant 0 : i32
    %c0_i32_0 = arith.constant 0 : i32
    %c0_i32_1 = arith.constant 0 : i32
    return %c0_i32, %c0_i32_0 : i32, i32
  }
  func.func @transform_2(%arg0: i32) -> (i32, i32) {
    %c0_i32 = arith.constant 0 : i32
    %c0_i32_0 = arith.constant 0 : i32
    %c0_i32_1 = arith.constant 0 : i32
    return %c0_i32, %c0_i32_0 : i32, i32
  }
  func.func @transform_3(%arg0: i32) -> (i32, i32) {
    %c0_i32 = arith.constant 0 : i32
    %c0_i32_0 = arith.constant 0 : i32
    return %arg0, %c0_i32 : i32, i32
  }
}

module attributes {stable_mosaic.version = 11 : i64} {
  func.func @_gemm_stats_kernel(%arg0: i32, %arg1: i32, %arg2: memref<128x512xbf16, #tpu.memory_space<vmem>>, %arg3: memref<512x256xbf16, #tpu.memory_space<vmem>>, %arg4: memref<1x256xf32, #tpu.memory_space<vmem>>, %arg5: memref<128x256xf32, #tpu.memory_space<vmem>>, %arg6: memref<8x256xf32, #tpu.memory_space<vmem>>, %arg7: memref<8x256xf32, #tpu.memory_space<vmem>>, %arg8: memref<128x256xf32, #tpu.memory_space<vmem>>) attributes {dimension_semantics = [#tpu.dimension_semantics<parallel>, #tpu.dimension_semantics<arbitrary>], iteration_bounds = array<i64: 1, 4>, scalar_prefetch = 0 : i64, scratch_operands = 1 : i64, tpu.core_type = #tpu.core_type<tc>, window_params = [{transform_indices = @transform_0, window_bounds = array<i64: 128, 512>}, {transform_indices = @transform_1, window_bounds = array<i64: 512, 256>}, {pipeline_mode = #tpu.pipeline_mode<synchronous>, transform_indices = @transform_2, window_bounds = array<i64: 1, 256>}, {transform_indices = @transform_3, window_bounds = array<i64: 128, 256>}, {transform_indices = @transform_4, window_bounds = array<i64: 8, 256>}, {transform_indices = @transform_5, window_bounds = array<i64: 8, 256>}]} {
    %c0_i32 = arith.constant 0 : i32
    %0 = arith.cmpi eq, %arg1, %c0_i32 : i32
    %1 = arith.extui %0 : i1 to i32
    %c0_i32_0 = arith.constant 0 : i32
    %2 = arith.cmpi ne, %1, %c0_i32_0 : i32
    scf.if %2 {
      %cst_9 = arith.constant 0.000000e+00 : f32
      %12 = vector.broadcast %cst_9 : f32 to vector<128x256xf32>
      %c0_10 = arith.constant 0 : index
      %c0_11 = arith.constant 0 : index
      %13 = vector.load %arg8[%c0_10, %c0_11] : memref<128x256xf32, #tpu.memory_space<vmem>>, vector<128x256xf32>
      tpu.vector_store %arg8[%c0_10, %c0_11], %12 {strides = array<i32>} : memref<128x256xf32, #tpu.memory_space<vmem>>, vector<128x256xf32>,
    } else {
    }
    %c0 = arith.constant 0 : index
    %c0_1 = arith.constant 0 : index
    %3 = vector.load %arg8[%c0, %c0_1] : memref<128x256xf32, #tpu.memory_space<vmem>>, vector<128x256xf32>
    %c0_2 = arith.constant 0 : index
    %c0_3 = arith.constant 0 : index
    %4 = vector.load %arg2[%c0_2, %c0_3] : memref<128x512xbf16, #tpu.memory_space<vmem>>, vector<128x512xbf16>
    %c0_4 = arith.constant 0 : index
    %c0_5 = arith.constant 0 : index
    %5 = vector.load %arg3[%c0_4, %c0_5] : memref<512x256xbf16, #tpu.memory_space<vmem>>, vector<512x256xbf16>
    %cst = arith.constant dense<0.000000e+00> : vector<128x256xf32>
    %6 = tpu.matmul %4, %5, %cst {dimension_numbers = #tpu.dot_dimension_numbers<[1], [0], [0], [1], [0, 0, 1, 1], [], []>} : vector<128x512xbf16>, vector<512x256xbf16>, vector<128x256xf32> -> vector<128x256xf32>
    %7 = arith.addf %3, %6 : vector<128x256xf32>
    %c0_6 = arith.constant 0 : index
    %c0_7 = arith.constant 0 : index
    %8 = vector.load %arg8[%c0_6, %c0_7] : memref<128x256xf32, #tpu.memory_space<vmem>>, vector<128x256xf32>
    tpu.vector_store %arg8[%c0_6, %c0_7], %7 {strides = array<i32>} : memref<128x256xf32, #tpu.memory_space<vmem>>, vector<128x256xf32>,
    %c3_i32 = arith.constant 3 : i32
    %9 = arith.cmpi eq, %arg1, %c3_i32 : i32
    %10 = arith.extui %9 : i1 to i32
    %c0_i32_8 = arith.constant 0 : i32
    %11 = arith.cmpi ne, %10, %c0_i32_8 : i32
    scf.if %11 {
      %c0_9 = arith.constant 0 : index
      %c0_10 = arith.constant 0 : index
      %12 = vector.load %arg8[%c0_9, %c0_10] : memref<128x256xf32, #tpu.memory_space<vmem>>, vector<128x256xf32>
      %c0_11 = arith.constant 0 : index
      %c0_12 = arith.constant 0 : index
      %13 = vector.load %arg4[%c0_11, %c0_12] : memref<1x256xf32, #tpu.memory_space<vmem>>, vector<1x256xf32>
      %14 = vector.broadcast %13 : vector<1x256xf32> to vector<128x256xf32>
      %15 = arith.addf %12, %14 : vector<128x256xf32>
      %c0_13 = arith.constant 0 : index
      %c0_14 = arith.constant 0 : index
      %16 = vector.load %arg5[%c0_13, %c0_14] : memref<128x256xf32, #tpu.memory_space<vmem>>, vector<128x256xf32>
      tpu.vector_store %arg5[%c0_13, %c0_14], %15 {strides = array<i32>} : memref<128x256xf32, #tpu.memory_space<vmem>>, vector<128x256xf32>,
      %cst_15 = arith.constant dense<0.000000e+00> : vector<256xf32>
      %17 = vector.multi_reduction <add>, %15, %cst_15 [0] : vector<128x256xf32> to vector<256xf32>
      %18 = vector.shape_cast %17 : vector<256xf32> to vector<1x256xf32>
      %19 = arith.mulf %15, %15 : vector<128x256xf32>
      %cst_16 = arith.constant dense<0.000000e+00> : vector<256xf32>
      %20 = vector.multi_reduction <add>, %19, %cst_16 [0] : vector<128x256xf32> to vector<256xf32>
      %21 = vector.shape_cast %20 : vector<256xf32> to vector<1x256xf32>
      %22 = vector.shape_cast %18 : vector<1x256xf32> to vector<1x256xf32>
      %23 = vector.broadcast %22 : vector<1x256xf32> to vector<8x256xf32>
      %c0_17 = arith.constant 0 : index
      %c0_18 = arith.constant 0 : index
      %24 = vector.load %arg6[%c0_17, %c0_18] : memref<8x256xf32, #tpu.memory_space<vmem>>, vector<8x256xf32>
      tpu.vector_store %arg6[%c0_17, %c0_18], %23 {strides = array<i32>} : memref<8x256xf32, #tpu.memory_space<vmem>>, vector<8x256xf32>,
      %25 = vector.shape_cast %21 : vector<1x256xf32> to vector<1x256xf32>
      %26 = vector.broadcast %25 : vector<1x256xf32> to vector<8x256xf32>
      %c0_19 = arith.constant 0 : index
      %c0_20 = arith.constant 0 : index
      %27 = vector.load %arg7[%c0_19, %c0_20] : memref<8x256xf32, #tpu.memory_space<vmem>>, vector<8x256xf32>
      tpu.vector_store %arg7[%c0_19, %c0_20], %26 {strides = array<i32>} : memref<8x256xf32, #tpu.memory_space<vmem>>, vector<8x256xf32>,
    } else {
    }
    return
  }
  func.func @transform_0(%arg0: i32, %arg1: i32) -> (i32, i32) {
    %c0_i32 = arith.constant 0 : i32
    return %arg0, %arg1 : i32, i32
  }
  func.func @transform_1(%arg0: i32, %arg1: i32) -> (i32, i32) {
    %c0_i32 = arith.constant 0 : i32
    %c0_i32_0 = arith.constant 0 : i32
    return %arg1, %c0_i32 : i32, i32
  }
  func.func @transform_2(%arg0: i32, %arg1: i32) -> (i32, i32) {
    %c0_i32 = arith.constant 0 : i32
    %c0_i32_0 = arith.constant 0 : i32
    %c0_i32_1 = arith.constant 0 : i32
    return %c0_i32, %c0_i32_0 : i32, i32
  }
  func.func @transform_3(%arg0: i32, %arg1: i32) -> (i32, i32) {
    %c0_i32 = arith.constant 0 : i32
    %c0_i32_0 = arith.constant 0 : i32
    return %arg0, %c0_i32 : i32, i32
  }
  func.func @transform_4(%arg0: i32, %arg1: i32) -> (i32, i32) {
    %c0_i32 = arith.constant 0 : i32
    %c0_i32_0 = arith.constant 0 : i32
    return %arg0, %c0_i32 : i32, i32
  }
  func.func @transform_5(%arg0: i32, %arg1: i32) -> (i32, i32) {
    %c0_i32 = arith.constant 0 : i32
    %c0_i32_0 = arith.constant 0 : i32
    return %arg0, %c0_i32 : i32, i32
  }
}

module attributes {stable_mosaic.version = 11 : i64} {
  func.func @_affine_lrelu_kernel(%arg0: i32, %arg1: memref<128x256xf32, #tpu.memory_space<vmem>>, %arg2: memref<1x256xf32, #tpu.memory_space<vmem>>, %arg3: memref<1x256xf32, #tpu.memory_space<vmem>>, %arg4: memref<128x256xf32, #tpu.memory_space<vmem>>) attributes {dimension_semantics = [#tpu.dimension_semantics<parallel>], iteration_bounds = array<i64: 1>, scalar_prefetch = 0 : i64, scratch_operands = 0 : i64, tpu.core_type = #tpu.core_type<tc>, window_params = [{transform_indices = @transform_0, window_bounds = array<i64: 128, 256>}, {pipeline_mode = #tpu.pipeline_mode<synchronous>, transform_indices = @transform_1, window_bounds = array<i64: 1, 256>}, {pipeline_mode = #tpu.pipeline_mode<synchronous>, transform_indices = @transform_2, window_bounds = array<i64: 1, 256>}, {transform_indices = @transform_3, window_bounds = array<i64: 128, 256>}]} {
    %c0 = arith.constant 0 : index
    %c0_0 = arith.constant 0 : index
    %0 = vector.load %arg1[%c0, %c0_0] : memref<128x256xf32, #tpu.memory_space<vmem>>, vector<128x256xf32>
    %c0_1 = arith.constant 0 : index
    %c0_2 = arith.constant 0 : index
    %1 = vector.load %arg2[%c0_1, %c0_2] : memref<1x256xf32, #tpu.memory_space<vmem>>, vector<1x256xf32>
    %2 = vector.broadcast %1 : vector<1x256xf32> to vector<128x256xf32>
    %3 = arith.mulf %0, %2 : vector<128x256xf32>
    %c0_3 = arith.constant 0 : index
    %c0_4 = arith.constant 0 : index
    %4 = vector.load %arg3[%c0_3, %c0_4] : memref<1x256xf32, #tpu.memory_space<vmem>>, vector<1x256xf32>
    %5 = vector.broadcast %4 : vector<1x256xf32> to vector<128x256xf32>
    %6 = arith.addf %3, %5 : vector<128x256xf32>
    %cst = arith.constant 0.000000e+00 : f32
    %7 = vector.broadcast %cst : f32 to vector<128x256xf32>
    %8 = arith.cmpf ogt, %6, %7 : vector<128x256xf32>
    %cst_5 = arith.constant 2.000000e-01 : f32
    %9 = vector.broadcast %cst_5 : f32 to vector<128x256xf32>
    %10 = arith.mulf %9, %6 : vector<128x256xf32>
    %11 = arith.select %8, %6, %10 : vector<128x256xi1>, vector<128x256xf32>
    %c0_6 = arith.constant 0 : index
    %c0_7 = arith.constant 0 : index
    %12 = vector.load %arg4[%c0_6, %c0_7] : memref<128x256xf32, #tpu.memory_space<vmem>>, vector<128x256xf32>
    tpu.vector_store %arg4[%c0_6, %c0_7], %11 {strides = array<i32>} : memref<128x256xf32, #tpu.memory_space<vmem>>, vector<128x256xf32>,
    return
  }
  func.func @transform_0(%arg0: i32) -> (i32, i32) {
    %c0_i32 = arith.constant 0 : i32
    %c0_i32_0 = arith.constant 0 : i32
    return %arg0, %c0_i32 : i32, i32
  }
  func.func @transform_1(%arg0: i32) -> (i32, i32) {
    %c0_i32 = arith.constant 0 : i32
    %c0_i32_0 = arith.constant 0 : i32
    %c0_i32_1 = arith.constant 0 : i32
    return %c0_i32, %c0_i32_0 : i32, i32
  }
  func.func @transform_2(%arg0: i32) -> (i32, i32) {
    %c0_i32 = arith.constant 0 : i32
    %c0_i32_0 = arith.constant 0 : i32
    %c0_i32_1 = arith.constant 0 : i32
    return %c0_i32, %c0_i32_0 : i32, i32
  }
  func.func @transform_3(%arg0: i32) -> (i32, i32) {
    %c0_i32 = arith.constant 0 : i32
    %c0_i32_0 = arith.constant 0 : i32
    return %arg0, %c0_i32 : i32, i32
  }
}

module attributes {stable_mosaic.version = 11 : i64} {
  func.func @_gemm_stats_kernel(%arg0: i32, %arg1: i32, %arg2: memref<32x512xbf16, #tpu.memory_space<vmem>>, %arg3: memref<512x512xbf16, #tpu.memory_space<vmem>>, %arg4: memref<1x512xf32, #tpu.memory_space<vmem>>, %arg5: memref<32x512xf32, #tpu.memory_space<vmem>>, %arg6: memref<8x512xf32, #tpu.memory_space<vmem>>, %arg7: memref<8x512xf32, #tpu.memory_space<vmem>>, %arg8: memref<32x512xf32, #tpu.memory_space<vmem>>) attributes {dimension_semantics = [#tpu.dimension_semantics<parallel>, #tpu.dimension_semantics<arbitrary>], iteration_bounds = array<i64: 1, 8>, scalar_prefetch = 0 : i64, scratch_operands = 1 : i64, tpu.core_type = #tpu.core_type<tc>, window_params = [{transform_indices = @transform_0, window_bounds = array<i64: 32, 512>}, {transform_indices = @transform_1, window_bounds = array<i64: 512, 512>}, {pipeline_mode = #tpu.pipeline_mode<synchronous>, transform_indices = @transform_2, window_bounds = array<i64: 1, 512>}, {transform_indices = @transform_3, window_bounds = array<i64: 32, 512>}, {transform_indices = @transform_4, window_bounds = array<i64: 8, 512>}, {transform_indices = @transform_5, window_bounds = array<i64: 8, 512>}]} {
    %c0_i32 = arith.constant 0 : i32
    %0 = arith.cmpi eq, %arg1, %c0_i32 : i32
    %1 = arith.extui %0 : i1 to i32
    %c0_i32_0 = arith.constant 0 : i32
    %2 = arith.cmpi ne, %1, %c0_i32_0 : i32
    scf.if %2 {
      %cst_9 = arith.constant 0.000000e+00 : f32
      %12 = vector.broadcast %cst_9 : f32 to vector<32x512xf32>
      %c0_10 = arith.constant 0 : index
      %c0_11 = arith.constant 0 : index
      %13 = vector.load %arg8[%c0_10, %c0_11] : memref<32x512xf32, #tpu.memory_space<vmem>>, vector<32x512xf32>
      tpu.vector_store %arg8[%c0_10, %c0_11], %12 {strides = array<i32>} : memref<32x512xf32, #tpu.memory_space<vmem>>, vector<32x512xf32>,
    } else {
    }
    %c0 = arith.constant 0 : index
    %c0_1 = arith.constant 0 : index
    %3 = vector.load %arg8[%c0, %c0_1] : memref<32x512xf32, #tpu.memory_space<vmem>>, vector<32x512xf32>
    %c0_2 = arith.constant 0 : index
    %c0_3 = arith.constant 0 : index
    %4 = vector.load %arg2[%c0_2, %c0_3] : memref<32x512xbf16, #tpu.memory_space<vmem>>, vector<32x512xbf16>
    %c0_4 = arith.constant 0 : index
    %c0_5 = arith.constant 0 : index
    %5 = vector.load %arg3[%c0_4, %c0_5] : memref<512x512xbf16, #tpu.memory_space<vmem>>, vector<512x512xbf16>
    %cst = arith.constant dense<0.000000e+00> : vector<32x512xf32>
    %6 = tpu.matmul %4, %5, %cst {dimension_numbers = #tpu.dot_dimension_numbers<[1], [0], [0], [1], [0, 0, 1, 1], [], []>} : vector<32x512xbf16>, vector<512x512xbf16>, vector<32x512xf32> -> vector<32x512xf32>
    %7 = arith.addf %3, %6 : vector<32x512xf32>
    %c0_6 = arith.constant 0 : index
    %c0_7 = arith.constant 0 : index
    %8 = vector.load %arg8[%c0_6, %c0_7] : memref<32x512xf32, #tpu.memory_space<vmem>>, vector<32x512xf32>
    tpu.vector_store %arg8[%c0_6, %c0_7], %7 {strides = array<i32>} : memref<32x512xf32, #tpu.memory_space<vmem>>, vector<32x512xf32>,
    %c7_i32 = arith.constant 7 : i32
    %9 = arith.cmpi eq, %arg1, %c7_i32 : i32
    %10 = arith.extui %9 : i1 to i32
    %c0_i32_8 = arith.constant 0 : i32
    %11 = arith.cmpi ne, %10, %c0_i32_8 : i32
    scf.if %11 {
      %c0_9 = arith.constant 0 : index
      %c0_10 = arith.constant 0 : index
      %12 = vector.load %arg8[%c0_9, %c0_10] : memref<32x512xf32, #tpu.memory_space<vmem>>, vector<32x512xf32>
      %c0_11 = arith.constant 0 : index
      %c0_12 = arith.constant 0 : index
      %13 = vector.load %arg4[%c0_11, %c0_12] : memref<1x512xf32, #tpu.memory_space<vmem>>, vector<1x512xf32>
      %14 = vector.broadcast %13 : vector<1x512xf32> to vector<32x512xf32>
      %15 = arith.addf %12, %14 : vector<32x512xf32>
      %c0_13 = arith.constant 0 : index
      %c0_14 = arith.constant 0 : index
      %16 = vector.load %arg5[%c0_13, %c0_14] : memref<32x512xf32, #tpu.memory_space<vmem>>, vector<32x512xf32>
      tpu.vector_store %arg5[%c0_13, %c0_14], %15 {strides = array<i32>} : memref<32x512xf32, #tpu.memory_space<vmem>>, vector<32x512xf32>,
      %cst_15 = arith.constant dense<0.000000e+00> : vector<512xf32>
      %17 = vector.multi_reduction <add>, %15, %cst_15 [0] : vector<32x512xf32> to vector<512xf32>
      %18 = vector.shape_cast %17 : vector<512xf32> to vector<1x512xf32>
      %19 = arith.mulf %15, %15 : vector<32x512xf32>
      %cst_16 = arith.constant dense<0.000000e+00> : vector<512xf32>
      %20 = vector.multi_reduction <add>, %19, %cst_16 [0] : vector<32x512xf32> to vector<512xf32>
      %21 = vector.shape_cast %20 : vector<512xf32> to vector<1x512xf32>
      %22 = vector.shape_cast %18 : vector<1x512xf32> to vector<1x512xf32>
      %23 = vector.broadcast %22 : vector<1x512xf32> to vector<8x512xf32>
      %c0_17 = arith.constant 0 : index
      %c0_18 = arith.constant 0 : index
      %24 = vector.load %arg6[%c0_17, %c0_18] : memref<8x512xf32, #tpu.memory_space<vmem>>, vector<8x512xf32>
      tpu.vector_store %arg6[%c0_17, %c0_18], %23 {strides = array<i32>} : memref<8x512xf32, #tpu.memory_space<vmem>>, vector<8x512xf32>,
      %25 = vector.shape_cast %21 : vector<1x512xf32> to vector<1x512xf32>
      %26 = vector.broadcast %25 : vector<1x512xf32> to vector<8x512xf32>
      %c0_19 = arith.constant 0 : index
      %c0_20 = arith.constant 0 : index
      %27 = vector.load %arg7[%c0_19, %c0_20] : memref<8x512xf32, #tpu.memory_space<vmem>>, vector<8x512xf32>
      tpu.vector_store %arg7[%c0_19, %c0_20], %26 {strides = array<i32>} : memref<8x512xf32, #tpu.memory_space<vmem>>, vector<8x512xf32>,
    } else {
    }
    return
  }
  func.func @transform_0(%arg0: i32, %arg1: i32) -> (i32, i32) {
    %c0_i32 = arith.constant 0 : i32
    return %arg0, %arg1 : i32, i32
  }
  func.func @transform_1(%arg0: i32, %arg1: i32) -> (i32, i32) {
    %c0_i32 = arith.constant 0 : i32
    %c0_i32_0 = arith.constant 0 : i32
    return %arg1, %c0_i32 : i32, i32
  }
  func.func @transform_2(%arg0: i32, %arg1: i32) -> (i32, i32) {
    %c0_i32 = arith.constant 0 : i32
    %c0_i32_0 = arith.constant 0 : i32
    %c0_i32_1 = arith.constant 0 : i32
    return %c0_i32, %c0_i32_0 : i32, i32
  }
  func.func @transform_3(%arg0: i32, %arg1: i32) -> (i32, i32) {
    %c0_i32 = arith.constant 0 : i32
    %c0_i32_0 = arith.constant 0 : i32
    return %arg0, %c0_i32 : i32, i32
  }
  func.func @transform_4(%arg0: i32, %arg1: i32) -> (i32, i32) {
    %c0_i32 = arith.constant 0 : i32
    %c0_i32_0 = arith.constant 0 : i32
    return %arg0, %c0_i32 : i32, i32
  }
  func.func @transform_5(%arg0: i32, %arg1: i32) -> (i32, i32) {
    %c0_i32 = arith.constant 0 : i32
    %c0_i32_0 = arith.constant 0 : i32
    return %arg0, %c0_i32 : i32, i32
  }
}

module attributes {stable_mosaic.version = 11 : i64} {
  func.func @_affine_lrelu_kernel(%arg0: i32, %arg1: memref<32x512xf32, #tpu.memory_space<vmem>>, %arg2: memref<1x512xf32, #tpu.memory_space<vmem>>, %arg3: memref<1x512xf32, #tpu.memory_space<vmem>>, %arg4: memref<32x512xf32, #tpu.memory_space<vmem>>) attributes {dimension_semantics = [#tpu.dimension_semantics<parallel>], iteration_bounds = array<i64: 1>, scalar_prefetch = 0 : i64, scratch_operands = 0 : i64, tpu.core_type = #tpu.core_type<tc>, window_params = [{transform_indices = @transform_0, window_bounds = array<i64: 32, 512>}, {pipeline_mode = #tpu.pipeline_mode<synchronous>, transform_indices = @transform_1, window_bounds = array<i64: 1, 512>}, {pipeline_mode = #tpu.pipeline_mode<synchronous>, transform_indices = @transform_2, window_bounds = array<i64: 1, 512>}, {transform_indices = @transform_3, window_bounds = array<i64: 32, 512>}]} {
    %c0 = arith.constant 0 : index
    %c0_0 = arith.constant 0 : index
    %0 = vector.load %arg1[%c0, %c0_0] : memref<32x512xf32, #tpu.memory_space<vmem>>, vector<32x512xf32>
    %c0_1 = arith.constant 0 : index
    %c0_2 = arith.constant 0 : index
    %1 = vector.load %arg2[%c0_1, %c0_2] : memref<1x512xf32, #tpu.memory_space<vmem>>, vector<1x512xf32>
    %2 = vector.broadcast %1 : vector<1x512xf32> to vector<32x512xf32>
    %3 = arith.mulf %0, %2 : vector<32x512xf32>
    %c0_3 = arith.constant 0 : index
    %c0_4 = arith.constant 0 : index
    %4 = vector.load %arg3[%c0_3, %c0_4] : memref<1x512xf32, #tpu.memory_space<vmem>>, vector<1x512xf32>
    %5 = vector.broadcast %4 : vector<1x512xf32> to vector<32x512xf32>
    %6 = arith.addf %3, %5 : vector<32x512xf32>
    %cst = arith.constant 0.000000e+00 : f32
    %7 = vector.broadcast %cst : f32 to vector<32x512xf32>
    %8 = arith.cmpf ogt, %6, %7 : vector<32x512xf32>
    %cst_5 = arith.constant 2.000000e-01 : f32
    %9 = vector.broadcast %cst_5 : f32 to vector<32x512xf32>
    %10 = arith.mulf %9, %6 : vector<32x512xf32>
    %11 = arith.select %8, %6, %10 : vector<32x512xi1>, vector<32x512xf32>
    %c0_6 = arith.constant 0 : index
    %c0_7 = arith.constant 0 : index
    %12 = vector.load %arg4[%c0_6, %c0_7] : memref<32x512xf32, #tpu.memory_space<vmem>>, vector<32x512xf32>
    tpu.vector_store %arg4[%c0_6, %c0_7], %11 {strides = array<i32>} : memref<32x512xf32, #tpu.memory_space<vmem>>, vector<32x512xf32>,
    return
  }
  func.func @transform_0(%arg0: i32) -> (i32, i32) {
    %c0_i32 = arith.constant 0 : i32
    %c0_i32_0 = arith.constant 0 : i32
    return %arg0, %c0_i32 : i32, i32
  }
  func.func @transform_1(%arg0: i32) -> (i32, i32) {
    %c0_i32 = arith.constant 0 : i32
    %c0_i32_0 = arith.constant 0 : i32
    %c0_i32_1 = arith.constant 0 : i32
    return %c0_i32, %c0_i32_0 : i32, i32
  }
  func.func @transform_2(%arg0: i32) -> (i32, i32) {
    %c0_i32 = arith.constant 0 : i32
    %c0_i32_0 = arith.constant 0 : i32
    %c0_i32_1 = arith.constant 0 : i32
    return %c0_i32, %c0_i32_0 : i32, i32
  }
  func.func @transform_3(%arg0: i32) -> (i32, i32) {
    %c0_i32 = arith.constant 0 : i32
    %c0_i32_0 = arith.constant 0 : i32
    return %arg0, %c0_i32 : i32, i32
  }
}

module attributes {stable_mosaic.version = 11 : i64} {
  func.func @_gemm_act_kernel(%arg0: i32, %arg1: i32, %arg2: memref<2x512xbf16, #tpu.memory_space<vmem>>, %arg3: memref<512x128xbf16, #tpu.memory_space<vmem>>, %arg4: memref<1x128xf32, #tpu.memory_space<vmem>>, %arg5: memref<2x128xf32, #tpu.memory_space<vmem>>, %arg6: memref<2x128xf32, #tpu.memory_space<vmem>>) attributes {dimension_semantics = [#tpu.dimension_semantics<parallel>, #tpu.dimension_semantics<arbitrary>], iteration_bounds = array<i64: 1, 16>, scalar_prefetch = 0 : i64, scratch_operands = 1 : i64, tpu.core_type = #tpu.core_type<tc>, window_params = [{transform_indices = @transform_0, window_bounds = array<i64: 2, 512>}, {transform_indices = @transform_1, window_bounds = array<i64: 512, 128>}, {pipeline_mode = #tpu.pipeline_mode<synchronous>, transform_indices = @transform_2, window_bounds = array<i64: 1, 128>}, {transform_indices = @transform_3, window_bounds = array<i64: 2, 128>}]} {
    %c0_i32 = arith.constant 0 : i32
    %0 = arith.cmpi eq, %arg1, %c0_i32 : i32
    %1 = arith.extui %0 : i1 to i32
    %c0_i32_0 = arith.constant 0 : i32
    %2 = arith.cmpi ne, %1, %c0_i32_0 : i32
    scf.if %2 {
      %cst_9 = arith.constant 0.000000e+00 : f32
      %12 = vector.broadcast %cst_9 : f32 to vector<2x128xf32>
      %c0_10 = arith.constant 0 : index
      %c0_11 = arith.constant 0 : index
      %13 = vector.load %arg6[%c0_10, %c0_11] : memref<2x128xf32, #tpu.memory_space<vmem>>, vector<2x128xf32>
      tpu.vector_store %arg6[%c0_10, %c0_11], %12 {strides = array<i32>} : memref<2x128xf32, #tpu.memory_space<vmem>>, vector<2x128xf32>,
    } else {
    }
    %c0 = arith.constant 0 : index
    %c0_1 = arith.constant 0 : index
    %3 = vector.load %arg6[%c0, %c0_1] : memref<2x128xf32, #tpu.memory_space<vmem>>, vector<2x128xf32>
    %c0_2 = arith.constant 0 : index
    %c0_3 = arith.constant 0 : index
    %4 = vector.load %arg2[%c0_2, %c0_3] : memref<2x512xbf16, #tpu.memory_space<vmem>>, vector<2x512xbf16>
    %c0_4 = arith.constant 0 : index
    %c0_5 = arith.constant 0 : index
    %5 = vector.load %arg3[%c0_4, %c0_5] : memref<512x128xbf16, #tpu.memory_space<vmem>>, vector<512x128xbf16>
    %cst = arith.constant dense<0.000000e+00> : vector<2x128xf32>
    %6 = tpu.matmul %4, %5, %cst {dimension_numbers = #tpu.dot_dimension_numbers<[1], [0], [0], [1], [0, 0, 1, 1], [], []>} : vector<2x512xbf16>, vector<512x128xbf16>, vector<2x128xf32> -> vector<2x128xf32>
    %7 = arith.addf %3, %6 : vector<2x128xf32>
    %c0_6 = arith.constant 0 : index
    %c0_7 = arith.constant 0 : index
    %8 = vector.load %arg6[%c0_6, %c0_7] : memref<2x128xf32, #tpu.memory_space<vmem>>, vector<2x128xf32>
    tpu.vector_store %arg6[%c0_6, %c0_7], %7 {strides = array<i32>} : memref<2x128xf32, #tpu.memory_space<vmem>>, vector<2x128xf32>,
    %c15_i32 = arith.constant 15 : i32
    %9 = arith.cmpi eq, %arg1, %c15_i32 : i32
    %10 = arith.extui %9 : i1 to i32
    %c0_i32_8 = arith.constant 0 : i32
    %11 = arith.cmpi ne, %10, %c0_i32_8 : i32
    scf.if %11 {
      %c0_9 = arith.constant 0 : index
      %c0_10 = arith.constant 0 : index
      %12 = vector.load %arg6[%c0_9, %c0_10] : memref<2x128xf32, #tpu.memory_space<vmem>>, vector<2x128xf32>
      %c0_11 = arith.constant 0 : index
      %c0_12 = arith.constant 0 : index
      %13 = vector.load %arg4[%c0_11, %c0_12] : memref<1x128xf32, #tpu.memory_space<vmem>>, vector<1x128xf32>
      %14 = vector.broadcast %13 : vector<1x128xf32> to vector<2x128xf32>
      %15 = arith.addf %12, %14 : vector<2x128xf32>
      %cst_13 = arith.constant 0.000000e+00 : f32
      %16 = vector.broadcast %cst_13 : f32 to vector<2x128xf32>
      %17 = arith.subf %16, %15 : vector<2x128xf32>
      %18 = math.exp %17 : vector<2x128xf32>
      %cst_14 = arith.constant 1.000000e+00 : f32
      %19 = vector.broadcast %cst_14 : f32 to vector<2x128xf32>
      %20 = arith.addf %19, %18 : vector<2x128xf32>
      %cst_15 = arith.constant 1.000000e+00 : f32
      %21 = vector.broadcast %cst_15 : f32 to vector<2x128xf32>
      %22 = arith.divf %21, %20 : vector<2x128xf32>
      %c0_16 = arith.constant 0 : index
      %c0_17 = arith.constant 0 : index
      %23 = vector.load %arg5[%c0_16, %c0_17] : memref<2x128xf32, #tpu.memory_space<vmem>>, vector<2x128xf32>
      tpu.vector_store %arg5[%c0_16, %c0_17], %22 {strides = array<i32>} : memref<2x128xf32, #tpu.memory_space<vmem>>, vector<2x128xf32>,
    } else {
    }
    return
  }
  func.func @transform_0(%arg0: i32, %arg1: i32) -> (i32, i32) {
    %c0_i32 = arith.constant 0 : i32
    return %arg0, %arg1 : i32, i32
  }
  func.func @transform_1(%arg0: i32, %arg1: i32) -> (i32, i32) {
    %c0_i32 = arith.constant 0 : i32
    %c0_i32_0 = arith.constant 0 : i32
    return %arg1, %c0_i32 : i32, i32
  }
  func.func @transform_2(%arg0: i32, %arg1: i32) -> (i32, i32) {
    %c0_i32 = arith.constant 0 : i32
    %c0_i32_0 = arith.constant 0 : i32
    %c0_i32_1 = arith.constant 0 : i32
    return %c0_i32, %c0_i32_0 : i32, i32
  }
  func.func @transform_3(%arg0: i32, %arg1: i32) -> (i32, i32) {
    %c0_i32 = arith.constant 0 : i32
    %c0_i32_0 = arith.constant 0 : i32
    return %arg0, %c0_i32 : i32, i32
  }
}

</mosaic_0001>

<llo_original>
// kernel: dnet_forward.8
$region0: #{dnet_forward.8}
  #allocation0 [shape = 'u32[]', space=smem, size = 0x4, offset = 0x4, fixed_abs, tag = 'smem constant byte address 0x4 - core index']
  #allocation1 [shape = 'u32[144,128]{1,0:T(1,128)}', space=vmem, size = 0x12000, scoped, tag = 'internal scratch']
  #allocation2 [shape = 'f32[512,64]{1,0:T(8,128)}', space=vmem, size = 0x40000, scoped, tag = 'scratch operand']
  %s0 = inlined_call_operand.vmem [shape: bf16[2048,48], index: 0, kind: input, shape index: {}]
  %s1 = inlined_call_operand.vmem [shape: bf16[48,64], index: 1, kind: input, shape index: {}]
  %s2 = inlined_call_operand.vmem [shape: f32[1,64], index: 2, kind: input, shape index: {}]
  %s3 = inlined_call_operand.vmem [shape: f32[2048,64], index: 3, kind: output, shape index: {}]
  %s4 = sld [smem:[#allocation0]]
  $region53: #{dnet_forward.8} parent=0
    _
  %s6 = ssub.s32 1, %s4
  %s7 = scalar_select 0, %s6, %s4
  loop: start=0, step=1, limit=6
  $region2: #{dnet_forward.8} parent=0 // loop_pre_header
    _
  $region3: #{dnet_forward.8} parent=0 // loop_header
    %s9 = sphi 0, %s13
    %p10 = scmp.ge.s32.totalorder %s9, 6
    %s16 = sphi 0, %s28
    %s17 = sphi 0, %s24
    %s18 = sphi 0, %s16
    %s19 = sphi 0, %s17
    %s20 = sphi 0, %s18
    %s21 = sphi 0, %s19
    %s33 = sphi 0, %s35
    %s36 = sphi 0, %s33
    %s37 = sphi 0, %s36
    %s53 = sphi 0, %s37
    %s59 = sphi 0, %s61
    %s62 = sphi 0, %s59
    %s63 = sphi 0, %s62
    %s79 = sphi 0, %s63
    %s83 = sphi 0, %s83
    %s85 = sphi 0, %s83
    %s86 = sphi 0, %s85
    %s100 = sphi 0, %s86
    %s106 = sphi 0, %s108
    %s109 = sphi 0, %s106
    %s110 = sphi 0, %s109
    %s126 = sphi 0, %s110
  $region4: #{dnet_forward.8} parent=0 // loop_header_branch
    %12 = sbr.rel (%p10) target = $region8
  $region5: #{dnet_forward.8} parent=0 // loop_body
    %s14 = ssub.s32 %s9, 1
    %s15 = ssub.s32 %s9, 2
    %s22 = sadd.s32 1, %s17
    %p23 = scmp.ge.s32.totalorder %s22, 1
    %s24 = scalar_select %p23, 0, %s22
    %s25 = sadd.s32 1, %s16
    %s26 = scalar_select %p23, %s25, %s16
    %p27 = scmp.ge.s32.totalorder %s26, 4
    %s28 = scalar_select %p27, 0, %s26
    %s29 = ssub.s32 %s16, %s28
    %s30 = ssub.s32 %s17, %s24
    %s31 = sor.u32 %s29, %s30
    %p32 = scmp.eq.s32.totalorder %s31, 0
    %s34 = sadd.s32 %s33, 1
    %s35 = scalar_select %p32, %s33, %s34
    %p38 = pneg %p32
    %p39 = scmp.eq.s32.totalorder %s9, 3
    %p40 = por %p38, %p39
    %p41 = scmp.ne.s32.totalorder %s33, %s36
    %p42 = scmp.eq.s32.totalorder %s9, 0
    %p43 = por %p41, %p42
    %p44 = scmp.ne.s32.totalorder %s33, %s36
    %p45 = scmp.eq.s32.totalorder %s14, 3
    %p46 = por %p44, %p45
    %p47 = scmp.ne.s32.totalorder %s36, %s37
    %p48 = scmp.eq.s32.totalorder %s14, 0
    %p49 = por %p47, %p48
    %p50 = scmp.ne.s32.totalorder %s36, %s37
    %p51 = scmp.eq.s32.totalorder %s15, 3
    %p52 = por %p50, %p51
    %p54 = scmp.ne.s32.totalorder %s37, %s53
    %p55 = scmp.eq.s32.totalorder %s15, 0
    %p56 = por %p54, %p55
    %s57 = ssub.s32 %s17, %s24
    %p58 = scmp.eq.s32.totalorder %s57, 0
    %s60 = sadd.s32 %s59, 1
    %s61 = scalar_select %p58, %s59, %s60
    %p64 = pneg %p58
    %p65 = scmp.eq.s32.totalorder %s9, 3
    %p66 = por %p64, %p65
    %p67 = scmp.ne.s32.totalorder %s59, %s62
    %p68 = scmp.eq.s32.totalorder %s9, 0
    %p69 = por %p67, %p68
    %p70 = scmp.ne.s32.totalorder %s59, %s62
    %p71 = scmp.eq.s32.totalorder %s14, 3
    %p72 = por %p70, %p71
    %p73 = scmp.ne.s32.totalorder %s62, %s63
    %p74 = scmp.eq.s32.totalorder %s14, 0
    %p75 = por %p73, %p74
    %p76 = scmp.ne.s32.totalorder %s62, %s63
    %p77 = scmp.eq.s32.totalorder %s15, 3
    %p78 = por %p76, %p77
    %p80 = scmp.ne.s32.totalorder %s63, %s79
    %p81 = scmp.eq.s32.totalorder %s15, 0
    %p82 = por %p80, %p81
    %s84 = sadd.s32 %s83, 1
    %p87 = scmp.eq.s32.totalorder %s9, 3
    %p88 = scmp.ne.s32.totalorder %s83, %s85
    %p89 = scmp.eq.s32.totalorder %s9, 0
    %p90 = por %p88, %p89
    %p91 = scmp.ne.s32.totalorder %s83, %s85
    %p92 = scmp.eq.s32.totalorder %s14, 3
    %p93 = por %p91, %p92
    %p94 = scmp.ne.s32.totalorder %s85, %s86
    %p95 = scmp.eq.s32.totalorder %s14, 0
    %p96 = por %p94, %p95
    %p97 = scmp.ne.s32.totalorder %s85, %s86
    %p98 = scmp.eq.s32.totalorder %s15, 3
    %p99 = por %p97, %p98
    %p101 = scmp.ne.s32.totalorder %s86, %s100
    %p102 = scmp.eq.s32.totalorder %s15, 0
    %p103 = por %p101, %p102
    %s104 = ssub.s32 %s16, %s28
    %p105 = scmp.eq.s32.totalorder %s104, 0
    %s107 = sadd.s32 %s106, 1
    %s108 = scalar_select %p105, %s106, %s107
    %p111 = pneg %p105
    %p112 = scmp.eq.s32.totalorder %s9, 3
    %p113 = por %p111, %p112
    %p114 = scmp.ne.s32.totalorder %s106, %s109
    %p115 = scmp.eq.s32.totalorder %s9, 0
    %p116 = por %p114, %p115
    %p117 = scmp.ne.s32.totalorder %s106, %s109
    %p118 = scmp.eq.s32.totalorder %s14, 3
    %p119 = por %p117, %p118
    %p120 = scmp.ne.s32.totalorder %s109, %s110
    %p121 = scmp.eq.s32.totalorder %s14, 0
    %p122 = por %p120, %p121
    %p123 = scmp.ne.s32.totalorder %s109, %s110
    %p124 = scmp.eq.s32.totalorder %s15, 3
    %p125 = por %p123, %p124
    %p127 = scmp.ne.s32.totalorder %s110, %s126
    %p128 = scmp.eq.s32.totalorder %s15, 0
    %p129 = por %p127, %p128
    %p130 = scmp.le.s32.totalorder 1, %s9
    %p131 = scmp.lt.s32.totalorder %s9, 5
    %p132 = pnand %p130, %p131
    %p133 = pneg %p132
    // Predicated region
    $region9: #{dnet_forward.8} parent=5 // pred_check
      _
    $region10: #{dnet_forward.8} parent=5 // pred_check_branch
      %135 = sbr.rel (%p132) target = $region12
    $region11: #{dnet_forward.8} parent=5 // pred_region
      %s136 = ssub.s32 %s9, 1
      // Predicated region
      $region13: #{dnet_forward.8} parent=11 // pred_check
        %p137 = pneg %p75
      $region14: #{dnet_forward.8} parent=11 // pred_check_branch
        %139 = sbr.rel (%p137) target = $region16
      $region15: #{dnet_forward.8} parent=11 // pred_region
        %s140 = smul.u32 6, %s19
        %p141 = scmp.lt.s32.totalorder %s140, 5
        %s142 = scalar_select %p141, %s140, 5
        %s143 = smul.addr %s142, 4
        %s144 = scalar_lea.vmem %s1, %s143
        %s145 = smul.u32 6, %s19
      $region16: #{dnet_forward.8} parent=11 // pred_fallthru
        _
      // Predicated region
      $region17: #{dnet_forward.8} parent=11 // pred_check
        %p146 = pneg %p96
      $region18: #{dnet_forward.8} parent=11 // pred_check_branch
        %148 = sbr.rel (%p146) target = $region20
      $region19: #{dnet_forward.8} parent=11 // pred_region
        _
      $region20: #{dnet_forward.8} parent=11 // pred_fallthru
        _
    $region12: #{dnet_forward.8} parent=5 // pred_fallthru
      _
    %p149 = scmp.lt.s32.totalorder %s9, 4
    // Predicated region
    $region21: #{dnet_forward.8} parent=5 // pred_check
      %p150 = pneg %p149
    $region22: #{dnet_forward.8} parent=5 // pred_check_branch
      %152 = sbr.rel (%p150) target = $region24
    $region23: #{dnet_forward.8} parent=5 // pred_region
      // Predicated region
      $region25: #{dnet_forward.8} parent=23 // pred_check
        %p153 = pneg %p43
      $region26: #{dnet_forward.8} parent=23 // pred_check_branch
        %155 = sbr.rel (%p153) target = $region28
      $region27: #{dnet_forward.8} parent=23 // pred_region
        %s156 = smul.u32 64, %s16
        %p157 = scmp.lt.s32.totalorder %s156, 255
        %s158 = scalar_select %p157, %s156, 255
        %p159 = scmp.lt.s32.totalorder %s17, 0
        %s160 = scalar_select %p159, %s17, 0
        %s161 = sadd.s32 %s160, %s158
        %s162 = smul.addr %s161, 4
        %s163 = scalar_lea.vmem %s0, %s162
        %s164 = smul.u32 64, %s16
      $region28: #{dnet_forward.8} parent=23 // pred_fallthru
        _
    $region24: #{dnet_forward.8} parent=5 // pred_fallthru
      _
    %p165 = scmp.le.s32.totalorder 1, %s9
    %p166 = scmp.lt.s32.totalorder %s9, 5
    %p167 = pnand %p165, %p166
    %p168 = pneg %p167
    // Predicated region
    $region29: #{dnet_forward.8} parent=5 // pred_check
      _
    $region30: #{dnet_forward.8} parent=5 // pred_check_branch
      %170 = sbr.rel (%p167) target = $region32
    $region31: #{dnet_forward.8} parent=5 // pred_region
      %s171 = ssub.s32 %s9, 1
      %s172 = smul.u32 64, %s18
      %p173 = scmp.lt.s32.totalorder %s172, 255
      %s174 = scalar_select %p173, %s172, 255
      %p175 = scmp.lt.s32.totalorder %s19, 0
      %s176 = scalar_select %p175, %s19, 0
      %s177 = sadd.s32 %s176, %s174
      %s178 = smul.addr %s177, 4
      %s179 = scalar_lea.vmem %s0, %s178
      %p180 = pneg %p49
      %p181 = pneg %p46
      %s182 = smul.u32 6, %s19
      %p183 = scmp.lt.s32.totalorder %s182, 5
      %s184 = scalar_select %p183, %s182, 5
      %s185 = smul.addr %s184, 4
      %s186 = scalar_lea.vmem %s1, %s185
      %p187 = pneg %p75
      %p188 = pneg %p72
      %p189 = pneg %p96
      %p190 = pneg %p93
      %p191 = pneg %p122
      %p192 = pneg %p119
      %s193 = smul.u32 64, %s18
      %p194 = scmp.lt.s32.totalorder %s193, 255
      %s195 = scalar_select %p194, %s193, 255
      %s196 = smul.addr %s195, 8
      %s197 = scalar_lea.vmem %s3, %s196
      %s198 = smul.u32 64, %s18
      %p199 = scmp.lt.s32.totalorder %s198, 255
      %s200 = scalar_select %p199, %s198, 255
      %p201 = scmp.lt.s32.totalorder %s19, 0
      %s202 = scalar_select %p201, %s19, 0
      %s203 = sadd.s32 %s202, %s200
      %s204 = smul.addr %s203, 4
      %s205 = scalar_lea.vmem %s0, %s204
      %s206 = smul.u32 64, %s18
      %s207 = smul.u32 6, %s19
      %p208 = scmp.lt.s32.totalorder %s207, 5
      %s209 = scalar_select %p208, %s207, 5
      %s210 = smul.addr %s209, 4
      %s211 = scalar_lea.vmem %s1, %s210
      %s212 = smul.u32 6, %s19
      %s213 = smul.u32 64, %s18
      %p214 = scmp.lt.s32.totalorder %s213, 255
      %s215 = scalar_select %p214, %s213, 255
      %s216 = smul.addr %s215, 8
      %s217 = scalar_lea.vmem %s3, %s216
      %s218 = smul.u32 64, %s18
      %p220 = scmp.eq.s32.totalorder %s19, 0
      // Predicated region
      $region33: #{dnet_forward.8} parent=31 // pred_check
        %p221 = pneg %p220
      $region34: #{dnet_forward.8} parent=31 // pred_check_branch
        %223 = sbr.rel (%p221) target = $region36
      $region35: #{dnet_forward.8} parent=31 // pred_region
        %vm224 = vcmask 523264
        %225 = vst.msk [vmem:[#allocation2] sm:$0xff] %vm224, 0.0
        %226 = vst.msk [vmem:[#allocation2 + $0x8] sm:$0xff] %vm224, 0.0
        %227 = vst.msk [vmem:[#allocation2 + $0x10] sm:$0xff] %vm224, 0.0
        %228 = vst.msk [vmem:[#allocation2 + $0x18] sm:$0xff] %vm224, 0.0
        %229 = vst.msk [vmem:[#allocation2 + $0x20] sm:$0xff] %vm224, 0.0
        %230 = vst.msk [vmem:[#allocation2 + $0x28] sm:$0xff] %vm224, 0.0
        %231 = vst.msk [vmem:[#allocation2 + $0x30] sm:$0xff] %vm224, 0.0
        %232 = vst.msk [vmem:[#allocation2 + $0x38] sm:$0xff] %vm224, 0.0
        %233 = vst.msk [vmem:[#allocation2 + $0x40] sm:$0xff] %vm224, 0.0
        %234 = vst.msk [vmem:[#allocation2 + $0x48] sm:$0xff] %vm224, 0.0
        %235 = vst.msk [vmem:[#allocation2 + $0x50] sm:$0xff] %vm224, 0.0
        %236 = vst.msk [vmem:[#allocation2 + $0x58] sm:$0xff] %vm224, 0.0
        %237 = vst.msk [vmem:[#allocation2 + $0x60] sm:$0xff] %vm224, 0.0
        %238 = vst.msk [vmem:[#allocation2 + $0x68] sm:$0xff] %vm224, 0.0
        %239 = vst.msk [vmem:[#allocation2 + $0x70] sm:$0xff] %vm224, 0.0
        %240 = vst.msk [vmem:[#allocation2 + $0x78] sm:$0xff] %vm224, 0.0
        %241 = vst.msk [vmem:[#allocation2 + $0x80] sm:$0xff] %vm224, 0.0
        %242 = vst.msk [vmem:[#allocation2 + $0x88] sm:$0xff] %vm224, 0.0
        %243 = vst.msk [vmem:[#allocation2 + $0x90] sm:$0xff] %vm224, 0.0
        %244 = vst.msk [vmem:[#allocation2 + $0x98] sm:$0xff] %vm224, 0.0
        %245 = vst.msk [vmem:[#allocation2 + $0xa0] sm:$0xff] %vm224, 0.0
        %246 = vst.msk [vmem:[#allocation2 + $0xa8] sm:$0xff] %vm224, 0.0
        %247 = vst.msk [vmem:[#allocation2 + $0xb0] sm:$0xff] %vm224, 0.0
        %248 = vst.msk [vmem:[#allocation2 + $0xb8] sm:$0xff] %vm224, 0.0
        %249 = vst.msk [vmem:[#allocation2 + $0xc0] sm:$0xff] %vm224, 0.0
        %250 = vst.msk [vmem:[#allocation2 + $0xc8] sm:$0xff] %vm224, 0.0
        %251 = vst.msk [vmem:[#allocation2 + $0xd0] sm:$0xff] %vm224, 0.0
        %252 = vst.msk [vmem:[#allocation2 + $0xd8] sm:$0xff] %vm224, 0.0
        %253 = vst.msk [vmem:[#allocation2 + $0xe0] sm:$0xff] %vm224, 0.0
        %254 = vst.msk [vmem:[#allocation2 + $0xe8] sm:$0xff] %vm224, 0.0
        %255 = vst.msk [vmem:[#allocation2 + $0xf0] sm:$0xff] %vm224, 0.0
        %256 = vst.msk [vmem:[#allocation2 + $0xf8] sm:$0xff] %vm224, 0.0
        %257 = vst.msk [vmem:[#allocation2 + $0x100] sm:$0xff] %vm224, 0.0
        %258 = vst.msk [vmem:[#allocation2 + $0x108] sm:$0xff] %vm224, 0.0
        %259 = vst.msk [vmem:[#allocation2 + $0x110] sm:$0xff] %vm224, 0.0
        %260 = vst.msk [vmem:[#allocation2 + $0x118] sm:$0xff] %vm224, 0.0
        %261 = vst.msk [vmem:[#allocation2 + $0x120] sm:$0xff] %vm224, 0.0
        %262 = vst.msk [vmem:[#allocation2 + $0x128] sm:$0xff] %vm224, 0.0
        %263 = vst.msk [vmem:[#allocation2 + $0x130] sm:$0xff] %vm224, 0.0
        %264 = vst.msk [vmem:[#allocation2 + $0x138] sm:$0xff] %vm224, 0.0
        %265 = vst.msk [vmem:[#allocation2 + $0x140] sm:$0xff] %vm224, 0.0
        %266 = vst.msk [vmem:[#allocation2 + $0x148] sm:$0xff] %vm224, 0.0
        %267 = vst.msk [vmem:[#allocation2 + $0x150] sm:$0xff] %vm224, 0.0
        %268 = vst.msk [vmem:[#allocation2 + $0x158] sm:$0xff] %vm224, 0.0
        %269 = vst.msk [vmem:[#allocation2 + $0x160] sm:$0xff] %vm224, 0.0
        %270 = vst.msk [vmem:[#allocation2 + $0x168] sm:$0xff] %vm224, 0.0
        %271 = vst.msk [vmem:[#allocation2 + $0x170] sm:$0xff] %vm224, 0.0
        %272 = vst.msk [vmem:[#allocation2 + $0x178] sm:$0xff] %vm224, 0.0
        %273 = vst.msk [vmem:[#allocation2 + $0x180] sm:$0xff] %vm224, 0.0
        %274 = vst.msk [vmem:[#allocation2 + $0x188] sm:$0xff] %vm224, 0.0
        %275 = vst.msk [vmem:[#allocation2 + $0x190] sm:$0xff] %vm224, 0.0
        %276 = vst.msk [vmem:[#allocation2 + $0x198] sm:$0xff] %vm224, 0.0
        %277 = vst.msk [vmem:[#allocation2 + $0x1a0] sm:$0xff] %vm224, 0.0
        %278 = vst.msk [vmem:[#allocation2 + $0x1a8] sm:$0xff] %vm224, 0.0
        %279 = vst.msk [vmem:[#allocation2 + $0x1b0] sm:$0xff] %vm224, 0.0
        %280 = vst.msk [vmem:[#allocation2 + $0x1b8] sm:$0xff] %vm224, 0.0
        %281 = vst.msk [vmem:[#allocation2 + $0x1c0] sm:$0xff] %vm224, 0.0
        %282 = vst.msk [vmem:[#allocation2 + $0x1c8] sm:$0xff] %vm224, 0.0
        %283 = vst.msk [vmem:[#allocation2 + $0x1d0] sm:$0xff] %vm224, 0.0
        %284 = vst.msk [vmem:[#allocation2 + $0x1d8] sm:$0xff] %vm224, 0.0
        %285 = vst.msk [vmem:[#allocation2 + $0x1e0] sm:$0xff] %vm224, 0.0
        %286 = vst.msk [vmem:[#allocation2 + $0x1e8] sm:$0xff] %vm224, 0.0
        %287 = vst.msk [vmem:[#allocation2 + $0x1f0] sm:$0xff] %vm224, 0.0
        %288 = vst.msk [vmem:[#allocation2 + $0x1f8] sm:$0xff] %vm224, 0.0
      $region36: #{dnet_forward.8} parent=31 // pred_fallthru
        _
      %v289 = vld [vmem:[#allocation2] sm:$0xff]
      %v290 = vld [vmem:[#allocation2 + $0x8] sm:$0xff]
      %v291 = vld [vmem:[#allocation2 + $0x10] sm:$0xff]
      %v292 = vld [vmem:[#allocation2 + $0x18] sm:$0xff]
      %v293 = vld [vmem:[#allocation2 + $0x20] sm:$0xff]
      %v294 = vld [vmem:[#allocation2 + $0x28] sm:$0xff]
      %v295 = vld [vmem:[#allocation2 + $0x30] sm:$0xff]
      %v296 = vld [vmem:[#allocation2 + $0x38] sm:$0xff]
      %v297 = vld [vmem:[#allocation2 + $0x40] sm:$0xff]
      %v298 = vld [vmem:[#allocation2 + $0x48] sm:$0xff]
      %v299 = vld [vmem:[#allocation2 + $0x50] sm:$0xff]
      %v300 = vld [vmem:[#allocation2 + $0x58] sm:$0xff]
      %v301 = vld [vmem:[#allocation2 + $0x60] sm:$0xff]
      %v302 = vld [vmem:[#allocation2 + $0x68] sm:$0xff]
      %v303 = vld [vmem:[#allocation2 + $0x70] sm:$0xff]
      %v304 = vld [vmem:[#allocation2 + $0x78] sm:$0xff]
      %v305 = vld [vmem:[#allocation2 + $0x80] sm:$0xff]
      %v306 = vld [vmem:[#allocation2 + $0x88] sm:$0xff]
      %v307 = vld [vmem:[#allocation2 + $0x90] sm:$0xff]
      %v308 = vld [vmem:[#allocation2 + $0x98] sm:$0xff]
      %v309 = vld [vmem:[#allocation2 + $0xa0] sm:$0xff]
      %v310 = vld [vmem:[#allocation2 + $0xa8] sm:$0xff]
      %v311 = vld [vmem:[#allocation2 + $0xb0] sm:$0xff]
      %v312 = vld [vmem:[#allocation2 + $0xb8] sm:$0xff]
      %v313 = vld [vmem:[#allocation2 + $0xc0] sm:$0xff]
      %v314 = vld [vmem:[#allocation2 + $0xc8] sm:$0xff]
      %v315 = vld [vmem:[#allocation2 + $0xd0] sm:$0xff]
      %v316 = vld [vmem:[#allocation2 + $0xd8] sm:$0xff]
      %v317 = vld [vmem:[#allocation2 + $0xe0] sm:$0xff]
      %v318 = vld [vmem:[#allocation2 + $0xe8] sm:$0xff]
      %v319 = vld [vmem:[#allocation2 + $0xf0] sm:$0xff]
      %v320 = vld [vmem:[#allocation2 + $0xf8] sm:$0xff]
      %v321 = vld [vmem:[#allocation2 + $0x100] sm:$0xff]
      %v322 = vld [vmem:[#allocation2 + $0x108] sm:$0xff]
      %v323 = vld [vmem:[#allocation2 + $0x110] sm:$0xff]
      %v324 = vld [vmem:[#allocation2 + $0x118] sm:$0xff]
      %v325 = vld [vmem:[#allocation2 + $0x120] sm:$0xff]
      %v326 = vld [vmem:[#allocation2 + $0x128] sm:$0xff]
      %v327 = vld [vmem:[#allocation2 + $0x130] sm:$0xff]
      %v328 = vld [vmem:[#allocation2 + $0x138] sm:$0xff]
      %v329 = vld [vmem:[#allocation2 + $0x140] sm:$0xff]
      %v330 = vld [vmem:[#allocation2 + $0x148] sm:$0xff]
      %v331 = vld [vmem:[#allocation2 + $0x150] sm:$0xff]
      %v332 = vld [vmem:[#allocation2 + $0x158] sm:$0xff]
      %v333 = vld [vmem:[#allocation2 + $0x160] sm:$0xff]
      %v334 = vld [vmem:[#allocation2 + $0x168] sm:$0xff]
      %v335 = vld [vmem:[#allocation2 + $0x170] sm:$0xff]
      %v336 = vld [vmem:[#allocation2 + $0x178] sm:$0xff]
      %v337 = vld [vmem:[#allocation2 + $0x180] sm:$0xff]
      %v338 = vld [vmem:[#allocation2 + $0x188] sm:$0xff]
      %v339 = vld [vmem:[#allocation2 + $0x190] sm:$0xff]
      %v340 = vld [vmem:[#allocation2 + $0x198] sm:$0xff]
      %v341 = vld [vmem:[#allocation2 + $0x1a0] sm:$0xff]
      %v342 = vld [vmem:[#allocation2 + $0x1a8] sm:$0xff]
      %v343 = vld [vmem:[#allocation2 + $0x1b0] sm:$0xff]
      %v344 = vld [vmem:[#allocation2 + $0x1b8] sm:$0xff]
      %v345 = vld [vmem:[#allocation2 + $0x1c0] sm:$0xff]
      %v346 = vld [vmem:[#allocation2 + $0x1c8] sm:$0xff]
      %v347 = vld [vmem:[#allocation2 + $0x1d0] sm:$0xff]
      %v348 = vld [vmem:[#allocation2 + $0x1d8] sm:$0xff]
      %v349 = vld [vmem:[#allocation2 + $0x1e0] sm:$0xff]
      %v350 = vld [vmem:[#allocation2 + $0x1e8] sm:$0xff]
      %v351 = vld [vmem:[#allocation2 + $0x1f0] sm:$0xff]
      %v352 = vld [vmem:[#allocation2 + $0x1f8] sm:$0xff]
      %v353 = vld [vmem:[%s205] sm:$0xf]
      %v354 = vld [vmem:[%s205 + $0x4] sm:$0xf]
      %v355 = vld [vmem:[%s205 + $0x8] sm:$0xf]
      %v356 = vld [vmem:[%s205 + $0xc] sm:$0xf]
      %v357 = vld [vmem:[%s205 + $0x10] sm:$0xf]
      %v358 = vld [vmem:[%s205 + $0x14] sm:$0xf]
      %v359 = vld [vmem:[%s205 + $0x18] sm:$0xf]
      %v360 = vld [vmem:[%s205 + $0x1c] sm:$0xf]
      %v361 = vld [vmem:[%s205 + $0x20] sm:$0xf]
      %v362 = vld [vmem:[%s205 + $0x24] sm:$0xf]
      %v363 = vld [vmem:[%s205 + $0x28] sm:$0xf]
      %v364 = vld [vmem:[%s205 + $0x2c] sm:$0xf]
      %v365 = vld [vmem:[%s205 + $0x30] sm:$0xf]
      %v366 = vld [vmem:[%s205 + $0x34] sm:$0xf]
      %v367 = vld [vmem:[%s205 + $0x38] sm:$0xf]
      %v368 = vld [vmem:[%s205 + $0x3c] sm:$0xf]
      %v369 = vld [vmem:[%s205 + $0x40] sm:$0xf]
      %v370 = vld [vmem:[%s205 + $0x44] sm:$0xf]
      %v371 = vld [vmem:[%s205 + $0x48] sm:$0xf]
      %v372 = vld [vmem:[%s205 + $0x4c] sm:$0xf]
      %v373 = vld [vmem:[%s205 + $0x50] sm:$0xf]
      %v374 = vld [vmem:[%s205 + $0x54] sm:$0xf]
      %v375 = vld [vmem:[%s205 + $0x58] sm:$0xf]
      %v376 = vld [vmem:[%s205 + $0x5c] sm:$0xf]
      %v377 = vld [vmem:[%s205 + $0x60] sm:$0xf]
      %v378 = vld [vmem:[%s205 + $0x64] sm:$0xf]
      %v379 = vld [vmem:[%s205 + $0x68] sm:$0xf]
      %v380 = vld [vmem:[%s205 + $0x6c] sm:$0xf]
      %v381 = vld [vmem:[%s205 + $0x70] sm:$0xf]
      %v382 = vld [vmem:[%s205 + $0x74] sm:$0xf]
      %v383 = vld [vmem:[%s205 + $0x78] sm:$0xf]
      %v384 = vld [vmem:[%s205 + $0x7c] sm:$0xf]
      %v385 = vld [vmem:[%s205 + $0x80] sm:$0xf]
      %v386 = vld [vmem:[%s205 + $0x84] sm:$0xf]
      %v387 = vld [vmem:[%s205 + $0x88] sm:$0xf]
      %v388 = vld [vmem:[%s205 + $0x8c] sm:$0xf]
      %v389 = vld [vmem:[%s205 + $0x90] sm:$0xf]
      %v390 = vld [vmem:[%s205 + $0x94] sm:$0xf]
      %v391 = vld [vmem:[%s205 + $0x98] sm:$0xf]
      %v392 = vld [vmem:[%s205 + $0x9c] sm:$0xf]
      %v393 = vld [vmem:[%s205 + $0xa0] sm:$0xf]
      %v394 = vld [vmem:[%s205 + $0xa4] sm:$0xf]
      %v395 = vld [vmem:[%s205 + $0xa8] sm:$0xf]
      %v396 = vld [vmem:[%s205 + $0xac] sm:$0xf]
      %v397 = vld [vmem:[%s205 + $0xb0] sm:$0xf]
      %v398 = vld [vmem:[%s205 + $0xb4] sm:$0xf]
      %v399 = vld [vmem:[%s205 + $0xb8] sm:$0xf]
      %v400 = vld [vmem:[%s205 + $0xbc] sm:$0xf]
      %v401 = vld [vmem:[%s205 + $0xc0] sm:$0xf]
      %v402 = vld [vmem:[%s205 + $0xc4] sm:$0xf]
      %v403 = vld [vmem:[%s205 + $0xc8] sm:$0xf]
      %v404 = vld [vmem:[%s205 + $0xcc] sm:$0xf]
      %v405 = vld [vmem:[%s205 + $0xd0] sm:$0xf]
      %v406 = vld [vmem:[%s205 + $0xd4] sm:$0xf]
      %v407 = vld [vmem:[%s205 + $0xd8] sm:$0xf]
      %v408 = vld [vmem:[%s205 + $0xdc] sm:$0xf]
      %v409 = vld [vmem:[%s205 + $0xe0] sm:$0xf]
      %v410 = vld [vmem:[%s205 + $0xe4] sm:$0xf]
      %v411 = vld [vmem:[%s205 + $0xe8] sm:$0xf]
      %v412 = vld [vmem:[%s205 + $0xec] sm:$0xf]
      %v413 = vld [vmem:[%s205 + $0xf0] sm:$0xf]
      %v414 = vld [vmem:[%s205 + $0xf4] sm:$0xf]
      %v415 = vld [vmem:[%s205 + $0xf8] sm:$0xf]
      %v416 = vld [vmem:[%s205 + $0xfc] sm:$0xf]
      %v417 = vld [vmem:[%s211] sm:$0xf]
      %v418 = vld [vmem:[%s211 + $0x4] sm:$0xf]
      %v419 = vld [vmem:[%s211 + $0x8] sm:$0xf]
      %v420 = vld [vmem:[%s211 + $0xc] sm:$0xf]
      %v421 = vld [vmem:[%s211 + $0x10] sm:$0xf]
      %v422 = vld [vmem:[%s211 + $0x14] sm:$0xf]
      %v487 = vunpack.c.l.b16 %v353
      %v488 = vunpack.c.l.b16 %v354
      %v489 = vunpack.c.l.b16 %v355
      %v490 = vunpack.c.l.b16 %v356
      %v491 = vunpack.c.l.b16 %v357
      %v492 = vunpack.c.l.b16 %v358
      %v493 = vunpack.c.l.b16 %v359
      %v494 = vunpack.c.l.b16 %v360
      %v495 = vunpack.c.l.b16 %v361
      %v496 = vunpack.c.l.b16 %v362
      %v497 = vunpack.c.l.b16 %v363
      %v498 = vunpack.c.l.b16 %v364
      %v499 = vunpack.c.l.b16 %v365
      %v500 = vunpack.c.l.b16 %v366
      %v501 = vunpack.c.l.b16 %v367
      %v502 = vunpack.c.l.b16 %v368
      %v503 = vunpack.c.l.b16 %v369
      %v504 = vunpack.c.l.b16 %v370
      %v505 = vunpack.c.l.b16 %v371
      %v506 = vunpack.c.l.b16 %v372
      %v507 = vunpack.c.l.b16 %v373
      %v508 = vunpack.c.l.b16 %v374
      %v509 = vunpack.c.l.b16 %v375
      %v510 = vunpack.c.l.b16 %v376
      %v511 = vunpack.c.l.b16 %v377
      %v512 = vunpack.c.l.b16 %v378
      %v513 = vunpack.c.l.b16 %v379
      %v514 = vunpack.c.l.b16 %v380
      %v515 = vunpack.c.l.b16 %v381
      %v516 = vunpack.c.l.b16 %v382
      %v517 = vunpack.c.l.b16 %v383
      %v518 = vunpack.c.l.b16 %v384
      %v519 = vunpack.c.l.b16 %v385
      %v520 = vunpack.c.l.b16 %v386
      %v521 = vunpack.c.l.b16 %v387
      %v522 = vunpack.c.l.b16 %v388
      %v523 = vunpack.c.l.b16 %v389
      %v524 = vunpack.c.l.b16 %v390
      %v525 = vunpack.c.l.b16 %v391
      %v526 = vunpack.c.l.b16 %v392
      %v527 = vunpack.c.l.b16 %v393
      %v528 = vunpack.c.l.b16 %v394
      %v529 = vunpack.c.l.b16 %v395
      %v530 = vunpack.c.l.b16 %v396
      %v531 = vunpack.c.l.b16 %v397
      %v532 = vunpack.c.l.b16 %v398
      %v533 = vunpack.c.l.b16 %v399
      %v534 = vunpack.c.l.b16 %v400
      %v535 = vunpack.c.l.b16 %v401
      %v536 = vunpack.c.l.b16 %v402
      %v537 = vunpack.c.l.b16 %v403
      %v538 = vunpack.c.l.b16 %v404
      %v539 = vunpack.c.l.b16 %v405
      %v540 = vunpack.c.l.b16 %v406
      %v541 = vunpack.c.l.b16 %v407
      %v542 = vunpack.c.l.b16 %v408
      %v543 = vunpack.c.l.b16 %v409
      %v544 = vunpack.c.l.b16 %v410
      %v545 = vunpack.c.l.b16 %v411
      %v546 = vunpack.c.l.b16 %v412
      %v547 = vunpack.c.l.b16 %v413
      %v548 = vunpack.c.l.b16 %v414
      %v549 = vunpack.c.l.b16 %v415
      %v550 = vunpack.c.l.b16 %v416
      %v551 = vpack.c.b16 %v488, %v487
      %v552 = vpack.c.b16 %v490, %v489
      %v553 = vpack.c.b16 %v492, %v491
      %v554 = vpack.c.b16 %v494, %v493
      %v555 = vpack.c.b16 %v496, %v495
      %v556 = vpack.c.b16 %v498, %v497
      %v557 = vpack.c.b16 %v500, %v499
      %v558 = vpack.c.b16 %v502, %v501
      %v559 = vpack.c.b16 %v504, %v503
      %v560 = vpack.c.b16 %v506, %v505
      %v561 = vpack.c.b16 %v508, %v507
      %v562 = vpack.c.b16 %v510, %v509
      %v563 = vpack.c.b16 %v512, %v511
      %v564 = vpack.c.b16 %v514, %v513
      %v565 = vpack.c.b16 %v516, %v515
      %v566 = vpack.c.b16 %v518, %v517
      %v567 = vpack.c.b16 %v520, %v519
      %v568 = vpack.c.b16 %v522, %v521
      %v569 = vpack.c.b16 %v524, %v523
      %v570 = vpack.c.b16 %v526, %v525
      %v571 = vpack.c.b16 %v528, %v527
      %v572 = vpack.c.b16 %v530, %v529
      %v573 = vpack.c.b16 %v532, %v531
      %v574 = vpack.c.b16 %v534, %v533
      %v575 = vpack.c.b16 %v536, %v535
      %v576 = vpack.c.b16 %v538, %v537
      %v577 = vpack.c.b16 %v540, %v539
      %v578 = vpack.c.b16 %v542, %v541
      %v579 = vpack.c.b16 %v544, %v543
      %v580 = vpack.c.b16 %v546, %v545
      %v581 = vpack.c.b16 %v548, %v547
      %v582 = vpack.c.b16 %v550, %v549
      %v589 = vunpack.c.l.b16 %v417
      %v590 = vunpack.c.l.b16 %v418
      %v591 = vunpack.c.l.b16 %v419
      %v592 = vunpack.c.l.b16 %v420
      %v593 = vunpack.c.l.b16 %v421
      %v594 = vunpack.c.l.b16 %v422
      %v595 = vpack.c.b16 %v590, %v589
      %v596 = vpack.c.b16 %v592, %v591
      %v597 = vpack.c.b16 %v594, %v593
      %vm601 = vcmask 392192
      %v603 = vsel %vm601, %v551, 0
      %v606 = vsel %vm601, %v552, 0
      %v609 = vsel %vm601, %v553, 0
      %v612 = vsel %vm601, %v554, 0
      %v615 = vsel %vm601, %v555, 0
      %v618 = vsel %vm601, %v556, 0
      %v621 = vsel %vm601, %v557, 0
      %v624 = vsel %vm601, %v558, 0
      %v627 = vsel %vm601, %v559, 0
      %v630 = vsel %vm601, %v560, 0
      %v633 = vsel %vm601, %v561, 0
      %v636 = vsel %vm601, %v562, 0
      %v639 = vsel %vm601, %v563, 0
      %v642 = vsel %vm601, %v564, 0
      %v645 = vsel %vm601, %v565, 0
      %v648 = vsel %vm601, %v566, 0
      %v651 = vsel %vm601, %v567, 0
      %v654 = vsel %vm601, %v568, 0
      %v657 = vsel %vm601, %v569, 0
      %v660 = vsel %vm601, %v570, 0
      %v663 = vsel %vm601, %v571, 0
      %v666 = vsel %vm601, %v572, 0
      %v669 = vsel %vm601, %v573, 0
      %v672 = vsel %vm601, %v574, 0
      %v675 = vsel %vm601, %v575, 0
      %v678 = vsel %vm601, %v576, 0
      %v681 = vsel %vm601, %v577, 0
      %v684 = vsel %vm601, %v578, 0
      %v687 = vsel %vm601, %v579, 0
      %v690 = vsel %vm601, %v580, 0
      %v693 = vsel %vm601, %v581, 0
      %v696 = vsel %vm601, %v582, 0
      %698 = vmatprep.subr.bf16.mxu0 0
      %699 = vmatpush1.bf16.msra.mxu0 %v595
      %700 = vmatprep.subr.bf16.mxu0 0
      %701 = vmatpush1.bf16.msra.mxu0 %v596
      %702 = vmatprep.subr.bf16.mxu0 0
      %703 = vmatpush1.bf16.msra.mxu0 %v597
      %704 = vmatprep.subr.bf16.mxu0 0
      %705 = vmatpush1.bf16.msra.mxu0 0
      %706 = vmatprep.subr.bf16.mxu0 0
      %707 = vmatpush1.bf16.msra.mxu0 0
      %708 = vmatprep.subr.bf16.mxu0 0
      %709 = vmatpush1.bf16.msra.mxu0 0
      %710 = vmatprep.subr.bf16.mxu0 0
      %711 = vmatpush1.bf16.msra.mxu0 0
      %712 = vmatprep.subr.bf16.mxu0 0
      %713 = vmatpush1.bf16.msra.mxu0 0
      %714 = vmatprep.subr.bf16.mxu0 0
      %715 = vmatpush1.bf16.msra.mxu0 0
      %716 = vmatprep.subr.bf16.mxu0 0
      %717 = vmatpush1.bf16.msra.mxu0 0
      %718 = vmatprep.subr.bf16.mxu0 0
      %719 = vmatpush1.bf16.msra.mxu0 0
      %720 = vmatprep.subr.bf16.mxu0 0
      %721 = vmatpush1.bf16.msra.mxu0 0
      %722 = vmatprep.subr.bf16.mxu0 0
      %723 = vmatpush1.bf16.msra.mxu0 0
      %724 = vmatprep.subr.bf16.mxu0 0
      %725 = vmatpush1.bf16.msra.mxu0 0
      %726 = vmatprep.subr.bf16.mxu0 0
      %727 = vmatpush1.bf16.msra.mxu0 0
      %728 = vmatprep.subr.bf16.mxu0 0
      %729 = vmatpush1.bf16.msra.mxu0 0
      %730 = vmatprep.mubr.bf16.mxu0 0
      %731 = vmatmul.mubr.bf16.gmra.mrb[0].mxu0 %v603
      %v732 = vpop.f32.mrb[0].mxu0
      %v733 = vadd.f32 0.0, %v732
      %v734 = vpop.f32.mrb[0].mxu0
      %v735 = vpop.f32.mrb[0].mxu0
      %v736 = vadd.f32 0.0, %v735
      %v737 = vpop.f32.mrb[0].mxu0
      %738 = vmatprep.mubr.bf16.mxu0 0
      %739 = vmatmul.mubr.bf16.gmra.mrb[0].mxu0 %v606
      %v740 = vpop.f32.mrb[0].mxu0
      %v741 = vadd.f32 0.0, %v740
      %v742 = vpop.f32.mrb[0].mxu0
      %v743 = vpop.f32.mrb[0].mxu0
      %v744 = vadd.f32 0.0, %v743
      %v745 = vpop.f32.mrb[0].mxu0
      %746 = vmatprep.mubr.bf16.mxu0 0
      %747 = vmatmul.mubr.bf16.gmra.mrb[0].mxu0 %v609
      %v748 = vpop.f32.mrb[0].mxu0
      %v749 = vadd.f32 0.0, %v748
      %v750 = vpop.f32.mrb[0].mxu0
      %v751 = vpop.f32.mrb[0].mxu0
      %v752 = vadd.f32 0.0, %v751
      %v753 = vpop.f32.mrb[0].mxu0
      %754 = vmatprep.mubr.bf16.mxu0 0
      %755 = vmatmul.mubr.bf16.gmra.mrb[0].mxu0 %v612
      %v756 = vpop.f32.mrb[0].mxu0
      %v757 = vadd.f32 0.0, %v756
      %v758 = vpop.f32.mrb[0].mxu0
      %v759 = vpop.f32.mrb[0].mxu0
      %v760 = vadd.f32 0.0, %v759
      %v761 = vpop.f32.mrb[0].mxu0
      %762 = vmatprep.mubr.bf16.mxu0 0
      %763 = vmatmul.mubr.bf16.gmra.mrb[0].mxu0 %v615
      %v764 = vpop.f32.mrb[0].mxu0
      %v765 = vadd.f32 0.0, %v764
      %v766 = vpop.f32.mrb[0].mxu0
      %v767 = vpop.f32.mrb[0].mxu0
      %v768 = vadd.f32 0.0, %v767
      %v769 = vpop.f32.mrb[0].mxu0
      %770 = vmatprep.mubr.bf16.mxu0 0
      %771 = vmatmul.mubr.bf16.gmra.mrb[0].mxu0 %v618
      %v772 = vpop.f32.mrb[0].mxu0
      %v773 = vadd.f32 0.0, %v772
      %v774 = vpop.f32.mrb[0].mxu0
      %v775 = vpop.f32.mrb[0].mxu0
      %v776 = vadd.f32 0.0, %v775
      %v777 = vpop.f32.mrb[0].mxu0
      %778 = vmatprep.mubr.bf16.mxu0 0
      %779 = vmatmul.mubr.bf16.gmra.mrb[0].mxu0 %v621
      %v780 = vpop.f32.mrb[0].mxu0
      %v781 = vadd.f32 0.0, %v780
      %v782 = vpop.f32.mrb[0].mxu0
      %v783 = vpop.f32.mrb[0].mxu0
      %v784 = vadd.f32 0.0, %v783
      %v785 = vpop.f32.mrb[0].mxu0
      %786 = vmatprep.mubr.bf16.mxu0 0
      %787 = vmatmul.mubr.bf16.gmra.mrb[0].mxu0 %v624
      %v788 = vpop.f32.mrb[0].mxu0
      %v789 = vadd.f32 0.0, %v788
      %v790 = vpop.f32.mrb[0].mxu0
      %v791 = vpop.f32.mrb[0].mxu0
      %v792 = vadd.f32 0.0, %v791
      %v793 = vpop.f32.mrb[0].mxu0
      %794 = vmatprep.mubr.bf16.mxu0 0
      %795 = vmatmul.mubr.bf16.gmra.mrb[0].mxu0 %v627
      %v796 = vpop.f32.mrb[0].mxu0
      %v797 = vadd.f32 0.0, %v796
      %v798 = vpop.f32.mrb[0].mxu0
      %v799 = vpop.f32.mrb[0].mxu0
      %v800 = vadd.f32 0.0, %v799
      %v801 = vpop.f32.mrb[0].mxu0
      %802 = vmatprep.mubr.bf16.mxu0 0
      %803 = vmatmul.mubr.bf16.gmra.mrb[0].mxu0 %v630
      %v804 = vpop.f32.mrb[0].mxu0
      %v805 = vadd.f32 0.0, %v804
      %v806 = vpop.f32.mrb[0].mxu0
      %v807 = vpop.f32.mrb[0].mxu0
      %v808 = vadd.f32 0.0, %v807
      %v809 = vpop.f32.mrb[0].mxu0
      %810 = vmatprep.mubr.bf16.mxu0 0
      %811 = vmatmul.mubr.bf16.gmra.mrb[0].mxu0 %v633
      %v812 = vpop.f32.mrb[0].mxu0
      %v813 = vadd.f32 0.0, %v812
      %v814 = vpop.f32.mrb[0].mxu0
      %v815 = vpop.f32.mrb[0].mxu0
      %v816 = vadd.f32 0.0, %v815
      %v817 = vpop.f32.mrb[0].mxu0
      %818 = vmatprep.mubr.bf16.mxu0 0
      %819 = vmatmul.mubr.bf16.gmra.mrb[0].mxu0 %v636
      %v820 = vpop.f32.mrb[0].mxu0
      %v821 = vadd.f32 0.0, %v820
      %v822 = vpop.f32.mrb[0].mxu0
      %v823 = vpop.f32.mrb[0].mxu0
      %v824 = vadd.f32 0.0, %v823
      %v825 = vpop.f32.mrb[0].mxu0
      %826 = vmatprep.mubr.bf16.mxu0 0
      %827 = vmatmul.mubr.bf16.gmra.mrb[0].mxu0 %v639
      %v828 = vpop.f32.mrb[0].mxu0
      %v829 = vadd.f32 0.0, %v828
      %v830 = vpop.f32.mrb[0].mxu0
      %v831 = vpop.f32.mrb[0].mxu0
      %v832 = vadd.f32 0.0, %v831
      %v833 = vpop.f32.mrb[0].mxu0
      %834 = vmatprep.mubr.bf16.mxu0 0
      %835 = vmatmul.mubr.bf16.gmra.mrb[0].mxu0 %v642
      %v836 = vpop.f32.mrb[0].mxu0
      %v837 = vadd.f32 0.0, %v836
      %v838 = vpop.f32.mrb[0].mxu0
      %v839 = vpop.f32.mrb[0].mxu0
      %v840 = vadd.f32 0.0, %v839
      %v841 = vpop.f32.mrb[0].mxu0
      %842 = vmatprep.mubr.bf16.mxu0 0
      %843 = vmatmul.mubr.bf16.gmra.mrb[0].mxu0 %v645
      %v844 = vpop.f32.mrb[0].mxu0
      %v845 = vadd.f32 0.0, %v844
      %v846 = vpop.f32.mrb[0].mxu0
      %v847 = vpop.f32.mrb[0].mxu0
      %v848 = vadd.f32 0.0, %v847
      %v849 = vpop.f32.mrb[0].mxu0
      %850 = vmatprep.mubr.bf16.mxu0 0
      %851 = vmatmul.mubr.bf16.gmra.mrb[0].mxu0 %v648
      %v852 = vpop.f32.mrb[0].mxu0
      %v853 = vadd.f32 0.0, %v852
      %v854 = vpop.f32.mrb[0].mxu0
      %v855 = vpop.f32.mrb[0].mxu0
      %v856 = vadd.f32 0.0, %v855
      %v857 = vpop.f32.mrb[0].mxu0
      %858 = vmatprep.mubr.bf16.mxu0 0
      %859 = vmatmul.mubr.bf16.gmra.mrb[0].mxu0 %v651
      %v860 = vpop.f32.mrb[0].mxu0
      %v861 = vadd.f32 0.0, %v860
      %v862 = vpop.f32.mrb[0].mxu0
      %v863 = vpop.f32.mrb[0].mxu0
      %v864 = vadd.f32 0.0, %v863
      %v865 = vpop.f32.mrb[0].mxu0
      %866 = vmatprep.mubr.bf16.mxu0 0
      %867 = vmatmul.mubr.bf16.gmra.mrb[0].mxu0 %v654
      %v868 = vpop.f32.mrb[0].mxu0
      %v869 = vadd.f32 0.0, %v868
      %v870 = vpop.f32.mrb[0].mxu0
      %v871 = vpop.f32.mrb[0].mxu0
      %v872 = vadd.f32 0.0, %v871
      %v873 = vpop.f32.mrb[0].mxu0
      %874 = vmatprep.mubr.bf16.mxu0 0
      %875 = vmatmul.mubr.bf16.gmra.mrb[0].mxu0 %v657
      %v876 = vpop.f32.mrb[0].mxu0
      %v877 = vadd.f32 0.0, %v876
      %v878 = vpop.f32.mrb[0].mxu0
      %v879 = vpop.f32.mrb[0].mxu0
      %v880 = vadd.f32 0.0, %v879
      %v881 = vpop.f32.mrb[0].mxu0
      %882 = vmatprep.mubr.bf16.mxu0 0
      %883 = vmatmul.mubr.bf16.gmra.mrb[0].mxu0 %v660
      %v884 = vpop.f32.mrb[0].mxu0
      %v885 = vadd.f32 0.0, %v884
      %v886 = vpop.f32.mrb[0].mxu0
      %v887 = vpop.f32.mrb[0].mxu0
      %v888 = vadd.f32 0.0, %v887
      %v889 = vpop.f32.mrb[0].mxu0
      %890 = vmatprep.mubr.bf16.mxu0 0
      %891 = vmatmul.mubr.bf16.gmra.mrb[0].mxu0 %v663
      %v892 = vpop.f32.mrb[0].mxu0
      %v893 = vadd.f32 0.0, %v892
      %v894 = vpop.f32.mrb[0].mxu0
      %v895 = vpop.f32.mrb[0].mxu0
      %v896 = vadd.f32 0.0, %v895
      %v897 = vpop.f32.mrb[0].mxu0
      %898 = vmatprep.mubr.bf16.mxu0 0
      %899 = vmatmul.mubr.bf16.gmra.mrb[0].mxu0 %v666
      %v900 = vpop.f32.mrb[0].mxu0
      %v901 = vadd.f32 0.0, %v900
      %v902 = vpop.f32.mrb[0].mxu0
      %v903 = vpop.f32.mrb[0].mxu0
      %v904 = vadd.f32 0.0, %v903
      %v905 = vpop.f32.mrb[0].mxu0
      %906 = vmatprep.mubr.bf16.mxu0 0
      %907 = vmatmul.mubr.bf16.gmra.mrb[0].mxu0 %v669
      %v908 = vpop.f32.mrb[0].mxu0
      %v909 = vadd.f32 0.0, %v908
      %v910 = vpop.f32.mrb[0].mxu0
      %v911 = vpop.f32.mrb[0].mxu0
      %v912 = vadd.f32 0.0, %v911
      %v913 = vpop.f32.mrb[0].mxu0
      %914 = vmatprep.mubr.bf16.mxu0 0
      %915 = vmatmul.mubr.bf16.gmra.mrb[0].mxu0 %v672
      %v916 = vpop.f32.mrb[0].mxu0
      %v917 = vadd.f32 0.0, %v916
      %v918 = vpop.f32.mrb[0].mxu0
      %v919 = vpop.f32.mrb[0].mxu0
      %v920 = vadd.f32 0.0, %v919
      %v921 = vpop.f32.mrb[0].mxu0
      %922 = vmatprep.mubr.bf16.mxu0 0
      %923 = vmatmul.mubr.bf16.gmra.mrb[0].mxu0 %v675
      %v924 = vpop.f32.mrb[0].mxu0
      %v925 = vadd.f32 0.0, %v924
      %v926 = vpop.f32.mrb[0].mxu0
      %v927 = vpop.f32.mrb[0].mxu0
      %v928 = vadd.f32 0.0, %v927
      %v929 = vpop.f32.mrb[0].mxu0
      %930 = vmatprep.mubr.bf16.mxu0 0
      %931 = vmatmul.mubr.bf16.gmra.mrb[0].mxu0 %v678
      %v932 = vpop.f32.mrb[0].mxu0
      %v933 = vadd.f32 0.0, %v932
      %v934 = vpop.f32.mrb[0].mxu0
      %v935 = vpop.f32.mrb[0].mxu0
      %v936 = vadd.f32 0.0, %v935
      %v937 = vpop.f32.mrb[0].mxu0
      %938 = vmatprep.mubr.bf16.mxu0 0
      %939 = vmatmul.mubr.bf16.gmra.mrb[0].mxu0 %v681
      %v940 = vpop.f32.mrb[0].mxu0
      %v941 = vadd.f32 0.0, %v940
      %v942 = vpop.f32.mrb[0].mxu0
      %v943 = vpop.f32.mrb[0].mxu0
      %v944 = vadd.f32 0.0, %v943
      %v945 = vpop.f32.mrb[0].mxu0
      %946 = vmatprep.mubr.bf16.mxu0 0
      %947 = vmatmul.mubr.bf16.gmra.mrb[0].mxu0 %v684
      %v948 = vpop.f32.mrb[0].mxu0
      %v949 = vadd.f32 0.0, %v948
      %v950 = vpop.f32.mrb[0].mxu0
      %v951 = vpop.f32.mrb[0].mxu0
      %v952 = vadd.f32 0.0, %v951
      %v953 = vpop.f32.mrb[0].mxu0
      %954 = vmatprep.mubr.bf16.mxu0 0
      %955 = vmatmul.mubr.bf16.gmra.mrb[0].mxu0 %v687
      %v956 = vpop.f32.mrb[0].mxu0
      %v957 = vadd.f32 0.0, %v956
      %v958 = vpop.f32.mrb[0].mxu0
      %v959 = vpop.f32.mrb[0].mxu0
      %v960 = vadd.f32 0.0, %v959
      %v961 = vpop.f32.mrb[0].mxu0
      %962 = vmatprep.mubr.bf16.mxu0 0
      %963 = vmatmul.mubr.bf16.gmra.mrb[0].mxu0 %v690
      %v964 = vpop.f32.mrb[0].mxu0
      %v965 = vadd.f32 0.0, %v964
      %v966 = vpop.f32.mrb[0].mxu0
      %v967 = vpop.f32.mrb[0].mxu0
      %v968 = vadd.f32 0.0, %v967
      %v969 = vpop.f32.mrb[0].mxu0
      %970 = vmatprep.mubr.bf16.mxu0 0
      %971 = vmatmul.mubr.bf16.gmra.mrb[0].mxu0 %v693
      %v972 = vpop.f32.mrb[0].mxu0
      %v973 = vadd.f32 0.0, %v972
      %v974 = vpop.f32.mrb[0].mxu0
      %v975 = vpop.f32.mrb[0].mxu0
      %v976 = vadd.f32 0.0, %v975
      %v977 = vpop.f32.mrb[0].mxu0
      %978 = vmatprep.mubr.bf16.mxu0 0
      %979 = vmatmul.mubr.bf16.gmra.mrb[0].mxu0 %v696
      %v980 = vpop.f32.mrb[0].mxu0
      %v981 = vadd.f32 0.0, %v980
      %v982 = vpop.f32.mrb[0].mxu0
      %v983 = vpop.f32.mrb[0].mxu0
      %v984 = vadd.f32 0.0, %v983
      %v985 = vpop.f32.mrb[0].mxu0
      %986 = vdwg.mxu0
      %v987 = vadd.f32 %v289, %v733
      %v988 = vadd.f32 %v290, %v736
      %v989 = vadd.f32 %v291, %v741
      %v990 = vadd.f32 %v292, %v744
      %v991 = vadd.f32 %v293, %v749
      %v992 = vadd.f32 %v294, %v752
      %v993 = vadd.f32 %v295, %v757
      %v994 = vadd.f32 %v296, %v760
      %v995 = vadd.f32 %v297, %v765
      %v996 = vadd.f32 %v298, %v768
      %v997 = vadd.f32 %v299, %v773
      %v998 = vadd.f32 %v300, %v776
      %v999 = vadd.f32 %v301, %v781
      %v1000 = vadd.f32 %v302, %v784
      %v1001 = vadd.f32 %v303, %v789
      %v1002 = vadd.f32 %v304, %v792
      %v1003 = vadd.f32 %v305, %v797
      %v1004 = vadd.f32 %v306, %v800
      %v1005 = vadd.f32 %v307, %v805
      %v1006 = vadd.f32 %v308, %v808
      %v1007 = vadd.f32 %v309, %v813
      %v1008 = vadd.f32 %v310, %v816
      %v1009 = vadd.f32 %v311, %v821
      %v1010 = vadd.f32 %v312, %v824
      %v1011 = vadd.f32 %v313, %v829
      %v1012 = vadd.f32 %v314, %v832
      %v1013 = vadd.f32 %v315, %v837
      %v1014 = vadd.f32 %v316, %v840
      %v1015 = vadd.f32 %v317, %v845
      %v1016 = vadd.f32 %v318, %v848
      %v1017 = vadd.f32 %v319, %v853
      %v1018 = vadd.f32 %v320, %v856
      %v1019 = vadd.f32 %v321, %v861
      %v1020 = vadd.f32 %v322, %v864
      %v1021 = vadd.f32 %v323, %v869
      %v1022 = vadd.f32 %v324, %v872
      %v1023 = vadd.f32 %v325, %v877
      %v1024 = vadd.f32 %v326, %v880
      %v1025 = vadd.f32 %v327, %v885
      %v1026 = vadd.f32 %v328, %v888
      %v1027 = vadd.f32 %v329, %v893
      %v1028 = vadd.f32 %v330, %v896
      %v1029 = vadd.f32 %v331, %v901
      %v1030 = vadd.f32 %v332, %v904
      %v1031 = vadd.f32 %v333, %v909
      %v1032 = vadd.f32 %v334, %v912
      %v1033 = vadd.f32 %v335, %v917
      %v1034 = vadd.f32 %v336, %v920
      %v1035 = vadd.f32 %v337, %v925
      %v1036 = vadd.f32 %v338, %v928
      %v1037 = vadd.f32 %v339, %v933
      %v1038 = vadd.f32 %v340, %v936
      %v1039 = vadd.f32 %v341, %v941
      %v1040 = vadd.f32 %v342, %v944
      %v1041 = vadd.f32 %v343, %v949
      %v1042 = vadd.f32 %v344, %v952
      %v1043 = vadd.f32 %v345, %v957
      %v1044 = vadd.f32 %v346, %v960
      %v1045 = vadd.f32 %v347, %v965
      %v1046 = vadd.f32 %v348, %v968
      %v1047 = vadd.f32 %v349, %v973
      %v1048 = vadd.f32 %v350, %v976
      %v1049 = vadd.f32 %v351, %v981
      %v1050 = vadd.f32 %v352, %v984
      %vm1051 = vcmask 523264
      %1052 = vst.msk [vmem:[#allocation2] sm:$0xff] %vm1051, %v987
      %1053 = vst.msk [vmem:[#allocation2 + $0x8] sm:$0xff] %vm1051, %v988
      %1054 = vst.msk [vmem:[#allocation2 + $0x10] sm:$0xff] %vm1051, %v989
      %1055 = vst.msk [vmem:[#allocation2 + $0x18] sm:$0xff] %vm1051, %v990
      %1056 = vst.msk [vmem:[#allocation2 + $0x20] sm:$0xff] %vm1051, %v991
      %1057 = vst.msk [vmem:[#allocation2 + $0x28] sm:$0xff] %vm1051, %v992
      %1058 = vst.msk [vmem:[#allocation2 + $0x30] sm:$0xff] %vm1051, %v993
      %1059 = vst.msk [vmem:[#allocation2 + $0x38] sm:$0xff] %vm1051, %v994
      %1060 = vst.msk [vmem:[#allocation2 + $0x40] sm:$0xff] %vm1051, %v995
      %1061 = vst.msk [vmem:[#allocation2 + $0x48] sm:$0xff] %vm1051, %v996
      %1062 = vst.msk [vmem:[#allocation2 + $0x50] sm:$0xff] %vm1051, %v997
      %1063 = vst.msk [vmem:[#allocation2 + $0x58] sm:$0xff] %vm1051, %v998
      %1064 = vst.msk [vmem:[#allocation2 + $0x60] sm:$0xff] %vm1051, %v999
      %1065 = vst.msk [vmem:[#allocation2 + $0x68] sm:$0xff] %vm1051, %v1000
      %1066 = vst.msk [vmem:[#allocation2 + $0x70] sm:$0xff] %vm1051, %v1001
      %1067 = vst.msk [vmem:[#allocation2 + $0x78] sm:$0xff] %vm1051, %v1002
      %1068 = vst.msk [vmem:[#allocation2 + $0x80] sm:$0xff] %vm1051, %v1003
      %1069 = vst.msk [vmem:[#allocation2 + $0x88] sm:$0xff] %vm1051, %v1004
      %1070 = vst.msk [vmem:[#allocation2 + $0x90] sm:$0xff] %vm1051, %v1005
      %1071 = vst.msk [vmem:[#allocation2 + $0x98] sm:$0xff] %vm1051, %v1006
      %1072 = vst.msk [vmem:[#allocation2 + $0xa0] sm:$0xff] %vm1051, %v1007
      %1073 = vst.msk [vmem:[#allocation2 + $0xa8] sm:$0xff] %vm1051, %v1008
      %1074 = vst.msk [vmem:[#allocation2 + $0xb0] sm:$0xff] %vm1051, %v1009
      %1075 = vst.msk [vmem:[#allocation2 + $0xb8] sm:$0xff] %vm1051, %v1010
      %1076 = vst.msk [vmem:[#allocation2 + $0xc0] sm:$0xff] %vm1051, %v1011
      %1077 = vst.msk [vmem:[#allocation2 + $0xc8] sm:$0xff] %vm1051, %v1012
      %1078 = vst.msk [vmem:[#allocation2 + $0xd0] sm:$0xff] %vm1051, %v1013
      %1079 = vst.msk [vmem:[#allocation2 + $0xd8] sm:$0xff] %vm1051, %v1014
      %1080 = vst.msk [vmem:[#allocation2 + $0xe0] sm:$0xff] %vm1051, %v1015
      %1081 = vst.msk [vmem:[#allocation2 + $0xe8] sm:$0xff] %vm1051, %v1016
      %1082 = vst.msk [vmem:[#allocation2 + $0xf0] sm:$0xff] %vm1051, %v1017
      %1083 = vst.msk [vmem:[#allocation2 + $0xf8] sm:$0xff] %vm1051, %v1018
      %1084 = vst.msk [vmem:[#allocation2 + $0x100] sm:$0xff] %vm1051, %v1019
      %1085 = vst.msk [vmem:[#allocation2 + $0x108] sm:$0xff] %vm1051, %v1020
      %1086 = vst.msk [vmem:[#allocation2 + $0x110] sm:$0xff] %vm1051, %v1021
      %1087 = vst.msk [vmem:[#allocation2 + $0x118] sm:$0xff] %vm1051, %v1022
      %1088 = vst.msk [vmem:[#allocation2 + $0x120] sm:$0xff] %vm1051, %v1023
      %1089 = vst.msk [vmem:[#allocation2 + $0x128] sm:$0xff] %vm1051, %v1024
      %1090 = vst.msk [vmem:[#allocation2 + $0x130] sm:$0xff] %vm1051, %v1025
      %1091 = vst.msk [vmem:[#allocation2 + $0x138] sm:$0xff] %vm1051, %v1026
      %1092 = vst.msk [vmem:[#allocation2 + $0x140] sm:$0xff] %vm1051, %v1027
      %1093 = vst.msk [vmem:[#allocation2 + $0x148] sm:$0xff] %vm1051, %v1028
      %1094 = vst.msk [vmem:[#allocation2 + $0x150] sm:$0xff] %vm1051, %v1029
      %1095 = vst.msk [vmem:[#allocation2 + $0x158] sm:$0xff] %vm1051, %v1030
      %1096 = vst.msk [vmem:[#allocation2 + $0x160] sm:$0xff] %vm1051, %v1031
      %1097 = vst.msk [vmem:[#allocation2 + $0x168] sm:$0xff] %vm1051, %v1032
      %1098 = vst.msk [vmem:[#allocation2 + $0x170] sm:$0xff] %vm1051, %v1033
      %1099 = vst.msk [vmem:[#allocation2 + $0x178] sm:$0xff] %vm1051, %v1034
      %1100 = vst.msk [vmem:[#allocation2 + $0x180] sm:$0xff] %vm1051, %v1035
      %1101 = vst.msk [vmem:[#allocation2 + $0x188] sm:$0xff] %vm1051, %v1036
      %1102 = vst.msk [vmem:[#allocation2 + $0x190] sm:$0xff] %vm1051, %v1037
      %1103 = vst.msk [vmem:[#allocation2 + $0x198] sm:$0xff] %vm1051, %v1038
      %1104 = vst.msk [vmem:[#allocation2 + $0x1a0] sm:$0xff] %vm1051, %v1039
      %1105 = vst.msk [vmem:[#allocation2 + $0x1a8] sm:$0xff] %vm1051, %v1040
      %1106 = vst.msk [vmem:[#allocation2 + $0x1b0] sm:$0xff] %vm1051, %v1041
      %1107 = vst.msk [vmem:[#allocation2 + $0x1b8] sm:$0xff] %vm1051, %v1042
      %1108 = vst.msk [vmem:[#allocation2 + $0x1c0] sm:$0xff] %vm1051, %v1043
      %1109 = vst.msk [vmem:[#allocation2 + $0x1c8] sm:$0xff] %vm1051, %v1044
      %1110 = vst.msk [vmem:[#allocation2 + $0x1d0] sm:$0xff] %vm1051, %v1045
      %1111 = vst.msk [vmem:[#allocation2 + $0x1d8] sm:$0xff] %vm1051, %v1046
      %1112 = vst.msk [vmem:[#allocation2 + $0x1e0] sm:$0xff] %vm1051, %v1047
      %1113 = vst.msk [vmem:[#allocation2 + $0x1e8] sm:$0xff] %vm1051, %v1048
      %1114 = vst.msk [vmem:[#allocation2 + $0x1f0] sm:$0xff] %vm1051, %v1049
      %1115 = vst.msk [vmem:[#allocation2 + $0x1f8] sm:$0xff] %vm1051, %v1050
      // Predicated region
      $region37: #{dnet_forward.8} parent=31 // pred_check
        %p1116 = pneg %p220
      $region38: #{dnet_forward.8} parent=31 // pred_check_branch
        %1118 = sbr.rel (%p1116) target = $region40
      $region39: #{dnet_forward.8} parent=31 // pred_region
        %v1119 = vld [vmem:[#allocation2] sm:$0xff]
        %v1120 = vld [vmem:[#allocation2 + $0x8] sm:$0xff]
        %v1121 = vld [vmem:[#allocation2 + $0x10] sm:$0xff]
        %v1122 = vld [vmem:[#allocation2 + $0x18] sm:$0xff]
        %v1123 = vld [vmem:[#allocation2 + $0x20] sm:$0xff]
        %v1124 = vld [vmem:[#allocation2 + $0x28] sm:$0xff]
        %v1125 = vld [vmem:[#allocation2 + $0x30] sm:$0xff]
        %v1126 = vld [vmem:[#allocation2 + $0x38] sm:$0xff]
        %v1127 = vld [vmem:[#allocation2 + $0x40] sm:$0xff]
        %v1128 = vld [vmem:[#allocation2 + $0x48] sm:$0xff]
        %v1129 = vld [vmem:[#allocation2 + $0x50] sm:$0xff]
        %v1130 = vld [vmem:[#allocation2 + $0x58] sm:$0xff]
        %v1131 = vld [vmem:[#allocation2 + $0x60] sm:$0xff]
        %v1132 = vld [vmem:[#allocation2 + $0x68] sm:$0xff]
        %v1133 = vld [vmem:[#allocation2 + $0x70] sm:$0xff]
        %v1134 = vld [vmem:[#allocation2 + $0x78] sm:$0xff]
        %v1135 = vld [vmem:[#allocation2 + $0x80] sm:$0xff]
        %v1136 = vld [vmem:[#allocation2 + $0x88] sm:$0xff]
        %v1137 = vld [vmem:[#allocation2 + $0x90] sm:$0xff]
        %v1138 = vld [vmem:[#allocation2 + $0x98] sm:$0xff]
        %v1139 = vld [vmem:[#allocation2 + $0xa0] sm:$0xff]
        %v1140 = vld [vmem:[#allocation2 + $0xa8] sm:$0xff]
        %v1141 = vld [vmem:[#allocation2 + $0xb0] sm:$0xff]
        %v1142 = vld [vmem:[#allocation2 + $0xb8] sm:$0xff]
        %v1143 = vld [vmem:[#allocation2 + $0xc0] sm:$0xff]
        %v1144 = vld [vmem:[#allocation2 + $0xc8] sm:$0xff]
        %v1145 = vld [vmem:[#allocation2 + $0xd0] sm:$0xff]
        %v1146 = vld [vmem:[#allocation2 + $0xd8] sm:$0xff]
        %v1147 = vld [vmem:[#allocation2 + $0xe0] sm:$0xff]
        %v1148 = vld [vmem:[#allocation2 + $0xe8] sm:$0xff]
        %v1149 = vld [vmem:[#allocation2 + $0xf0] sm:$0xff]
        %v1150 = vld [vmem:[#allocation2 + $0xf8] sm:$0xff]
        %v1151 = vld [vmem:[#allocation2 + $0x100] sm:$0xff]
        %v1152 = vld [vmem:[#allocation2 + $0x108] sm:$0xff]
        %v1153 = vld [vmem:[#allocation2 + $0x110] sm:$0xff]
        %v1154 = vld [vmem:[#allocation2 + $0x118] sm:$0xff]
        %v1155 = vld [vmem:[#allocation2 + $0x120] sm:$0xff]
        %v1156 = vld [vmem:[#allocation2 + $0x128] sm:$0xff]
        %v1157 = vld [vmem:[#allocation2 + $0x130] sm:$0xff]
        %v1158 = vld [vmem:[#allocation2 + $0x138] sm:$0xff]
        %v1159 = vld [vmem:[#allocation2 + $0x140] sm:$0xff]
        %v1160 = vld [vmem:[#allocation2 + $0x148] sm:$0xff]
        %v1161 = vld [vmem:[#allocation2 + $0x150] sm:$0xff]
        %v1162 = vld [vmem:[#allocation2 + $0x158] sm:$0xff]
        %v1163 = vld [vmem:[#allocation2 + $0x160] sm:$0xff]
        %v1164 = vld [vmem:[#allocation2 + $0x168] sm:$0xff]
        %v1165 = vld [vmem:[#allocation2 + $0x170] sm:$0xff]
        %v1166 = vld [vmem:[#allocation2 + $0x178] sm:$0xff]
        %v1167 = vld [vmem:[#allocation2 + $0x180] sm:$0xff]
        %v1168 = vld [vmem:[#allocation2 + $0x188] sm:$0xff]
        %v1169 = vld [vmem:[#allocation2 + $0x190] sm:$0xff]
        %v1170 = vld [vmem:[#allocation2 + $0x198] sm:$0xff]
        %v1171 = vld [vmem:[#allocation2 + $0x1a0] sm:$0xff]
        %v1172 = vld [vmem:[#allocation2 + $0x1a8] sm:$0xff]
        %v1173 = vld [vmem:[#allocation2 + $0x1b0] sm:$0xff]
        %v1174 = vld [vmem:[#allocation2 + $0x1b8] sm:$0xff]
        %v1175 = vld [vmem:[#allocation2 + $0x1c0] sm:$0xff]
        %v1176 = vld [vmem:[#allocation2 + $0x1c8] sm:$0xff]
        %v1177 = vld [vmem:[#allocation2 + $0x1d0] sm:$0xff]
        %v1178 = vld [vmem:[#allocation2 + $0x1d8] sm:$0xff]
        %v1179 = vld [vmem:[#allocation2 + $0x1e0] sm:$0xff]
        %v1180 = vld [vmem:[#allocation2 + $0x1e8] sm:$0xff]
        %v1181 = vld [vmem:[#allocation2 + $0x1f0] sm:$0xff]
        %v1182 = vld [vmem:[#allocation2 + $0x1f8] sm:$0xff]
        %v1183 = vld [vmem:[%s2] sm:$0x1]
        %v1185 = vlaneseq
        %v1186 = vshrl.u32 %v1185, 7
        %v1187 = vsub.s32 0, %v1186
        %v1188 = vrot.slane %v1183, %v1187
        %v1190 = vadd.f32 %v1119, %v1188
        %v1191 = vadd.f32 %v1120, %v1188
        %v1192 = vadd.f32 %v1121, %v1188
        %v1193 = vadd.f32 %v1122, %v1188
        %v1194 = vadd.f32 %v1123, %v1188
        %v1195 = vadd.f32 %v1124, %v1188
        %v1196 = vadd.f32 %v1125, %v1188
        %v1197 = vadd.f32 %v1126, %v1188
        %v1198 = vadd.f32 %v1127, %v1188
        %v1199 = vadd.f32 %v1128, %v1188
        %v1200 = vadd.f32 %v1129, %v1188
        %v1201 = vadd.f32 %v1130, %v1188
        %v1202 = vadd.f32 %v1131, %v1188
        %v1203 = vadd.f32 %v1132, %v1188
        %v1204 = vadd.f32 %v1133, %v1188
        %v1205 = vadd.f32 %v1134, %v1188
        %v1206 = vadd.f32 %v1135, %v1188
        %v1207 = vadd.f32 %v1136, %v1188
        %v1208 = vadd.f32 %v1137, %v1188
        %v1209 = vadd.f32 %v1138, %v1188
        %v1210 = vadd.f32 %v1139, %v1188
        %v1211 = vadd.f32 %v1140, %v1188
        %v1212 = vadd.f32 %v1141, %v1188
        %v1213 = vadd.f32 %v1142, %v1188
        %v1214 = vadd.f32 %v1143, %v1188
        %v1215 = vadd.f32 %v1144, %v1188
        %v1216 = vadd.f32 %v1145, %v1188
        %v1217 = vadd.f32 %v1146, %v1188
        %v1218 = vadd.f32 %v1147, %v1188
        %v1219 = vadd.f32 %v1148, %v1188
        %v1220 = vadd.f32 %v1149, %v1188
        %v1221 = vadd.f32 %v1150, %v1188
        %v1222 = vadd.f32 %v1151, %v1188
        %v1223 = vadd.f32 %v1152, %v1188
        %v1224 = vadd.f32 %v1153, %v1188
        %v1225 = vadd.f32 %v1154, %v1188
        %v1226 = vadd.f32 %v1155, %v1188
        %v1227 = vadd.f32 %v1156, %v1188
        %v1228 = vadd.f32 %v1157, %v1188
        %v1229 = vadd.f32 %v1158, %v1188
        %v1230 = vadd.f32 %v1159, %v1188
        %v1231 = vadd.f32 %v1160, %v1188
        %v1232 = vadd.f32 %v1161, %v1188
        %v1233 = vadd.f32 %v1162, %v1188
        %v1234 = vadd.f32 %v1163, %v1188
        %v1235 = vadd.f32 %v1164, %v1188
        %v1236 = vadd.f32 %v1165, %v1188
        %v1237 = vadd.f32 %v1166, %v1188
        %v1238 = vadd.f32 %v1167, %v1188
        %v1239 = vadd.f32 %v1168, %v1188
        %v1240 = vadd.f32 %v1169, %v1188
        %v1241 = vadd.f32 %v1170, %v1188
        %v1242 = vadd.f32 %v1171, %v1188
        %v1243 = vadd.f32 %v1172, %v1188
        %v1244 = vadd.f32 %v1173, %v1188
        %v1245 = vadd.f32 %v1174, %v1188
        %v1246 = vadd.f32 %v1175, %v1188
        %v1247 = vadd.f32 %v1176, %v1188
        %v1248 = vadd.f32 %v1177, %v1188
        %v1249 = vadd.f32 %v1178, %v1188
        %v1250 = vadd.f32 %v1179, %v1188
        %v1251 = vadd.f32 %v1180, %v1188
        %v1252 = vadd.f32 %v1181, %v1188
        %v1253 = vadd.f32 %v1182, %v1188
        %vm1254 = vcmp.gt.f32.partialorder %v1190, 0.0
        %vm1255 = vcmp.gt.f32.partialorder %v1191, 0.0
        %vm1256 = vcmp.gt.f32.partialorder %v1192, 0.0
        %vm1257 = vcmp.gt.f32.partialorder %v1193, 0.0
        %vm1258 = vcmp.gt.f32.partialorder %v1194, 0.0
        %vm1259 = vcmp.gt.f32.partialorder %v1195, 0.0
        %vm1260 = vcmp.gt.f32.partialorder %v1196, 0.0
        %vm1261 = vcmp.gt.f32.partialorder %v1197, 0.0
        %vm1262 = vcmp.gt.f32.partialorder %v1198, 0.0
        %vm1263 = vcmp.gt.f32.partialorder %v1199, 0.0
        %vm1264 = vcmp.gt.f32.partialorder %v1200, 0.0
        %vm1265 = vcmp.gt.f32.partialorder %v1201, 0.0
        %vm1266 = vcmp.gt.f32.partialorder %v1202, 0.0
        %vm1267 = vcmp.gt.f32.partialorder %v1203, 0.0
        %vm1268 = vcmp.gt.f32.partialorder %v1204, 0.0
        %vm1269 = vcmp.gt.f32.partialorder %v1205, 0.0
        %vm1270 = vcmp.gt.f32.partialorder %v1206, 0.0
        %vm1271 = vcmp.gt.f32.partialorder %v1207, 0.0
        %vm1272 = vcmp.gt.f32.partialorder %v1208, 0.0
        %vm1273 = vcmp.gt.f32.partialorder %v1209, 0.0
        %vm1274 = vcmp.gt.f32.partialorder %v1210, 0.0
        %vm1275 = vcmp.gt.f32.partialorder %v1211, 0.0
        %vm1276 = vcmp.gt.f32.partialorder %v1212, 0.0
        %vm1277 = vcmp.gt.f32.partialorder %v1213, 0.0
        %vm1278 = vcmp.gt.f32.partialorder %v1214, 0.0
        %vm1279 = vcmp.gt.f32.partialorder %v1215, 0.0
        %vm1280 = vcmp.gt.f32.partialorder %v1216, 0.0
        %vm1281 = vcmp.gt.f32.partialorder %v1217, 0.0
        %vm1282 = vcmp.gt.f32.partialorder %v1218, 0.0
        %vm1283 = vcmp.gt.f32.partialorder %v1219, 0.0
        %vm1284 = vcmp.gt.f32.partialorder %v1220, 0.0
        %vm1285 = vcmp.gt.f32.partialorder %v1221, 0.0
        %vm1286 = vcmp.gt.f32.partialorder %v1222, 0.0
        %vm1287 = vcmp.gt.f32.partialorder %v1223, 0.0
        %vm1288 = vcmp.gt.f32.partialorder %v1224, 0.0
        %vm1289 = vcmp.gt.f32.partialorder %v1225, 0.0
        %vm1290 = vcmp.gt.f32.partialorder %v1226, 0.0
        %vm1291 = vcmp.gt.f32.partialorder %v1227, 0.0
        %vm1292 = vcmp.gt.f32.partialorder %v1228, 0.0
        %vm1293 = vcmp.gt.f32.partialorder %v1229, 0.0
        %vm1294 = vcmp.gt.f32.partialorder %v1230, 0.0
        %vm1295 = vcmp.gt.f32.partialorder %v1231, 0.0
        %vm1296 = vcmp.gt.f32.partialorder %v1232, 0.0
        %vm1297 = vcmp.gt.f32.partialorder %v1233, 0.0
        %vm1298 = vcmp.gt.f32.partialorder %v1234, 0.0
        %vm1299 = vcmp.gt.f32.partialorder %v1235, 0.0
        %vm1300 = vcmp.gt.f32.partialorder %v1236, 0.0
        %vm1301 = vcmp.gt.f32.partialorder %v1237, 0.0
        %vm1302 = vcmp.gt.f32.partialorder %v1238, 0.0
        %vm1303 = vcmp.gt.f32.partialorder %v1239, 0.0
        %vm1304 = vcmp.gt.f32.partialorder %v1240, 0.0
        %vm1305 = vcmp.gt.f32.partialorder %v1241, 0.0
        %vm1306 = vcmp.gt.f32.partialorder %v1242, 0.0
        %vm1307 = vcmp.gt.f32.partialorder %v1243, 0.0
        %vm1308 = vcmp.gt.f32.partialorder %v1244, 0.0
        %vm1309 = vcmp.gt.f32.partialorder %v1245, 0.0
        %vm1310 = vcmp.gt.f32.partialorder %v1246, 0.0
        %vm1311 = vcmp.gt.f32.partialorder %v1247, 0.0
        %vm1312 = vcmp.gt.f32.partialorder %v1248, 0.0
        %vm1313 = vcmp.gt.f32.partialorder %v1249, 0.0
        %vm1314 = vcmp.gt.f32.partialorder %v1250, 0.0
        %vm1315 = vcmp.gt.f32.partialorder %v1251, 0.0
        %vm1316 = vcmp.gt.f32.partialorder %v1252, 0.0
        %vm1317 = vcmp.gt.f32.partialorder %v1253, 0.0
        %v1318 = vmul.f32 %v1190, 0.2
        %v1319 = vmul.f32 %v1191, 0.2
        %v1320 = vmul.f32 %v1192, 0.2
        %v1321 = vmul.f32 %v1193, 0.2
        %v1322 = vmul.f32 %v1194, 0.2
        %v1323 = vmul.f32 %v1195, 0.2
        %v1324 = vmul.f32 %v1196, 0.2
        %v1325 = vmul.f32 %v1197, 0.2
        %v1326 = vmul.f32 %v1198, 0.2
        %v1327 = vmul.f32 %v1199, 0.2
        %v1328 = vmul.f32 %v1200, 0.2
        %v1329 = vmul.f32 %v1201, 0.2
        %v1330 = vmul.f32 %v1202, 0.2
        %v1331 = vmul.f32 %v1203, 0.2
        %v1332 = vmul.f32 %v1204, 0.2
        %v1333 = vmul.f32 %v1205, 0.2
        %v1334 = vmul.f32 %v1206, 0.2
        %v1335 = vmul.f32 %v1207, 0.2
        %v1336 = vmul.f32 %v1208, 0.2
        %v1337 = vmul.f32 %v1209, 0.2
        %v1338 = vmul.f32 %v1210, 0.2
        %v1339 = vmul.f32 %v1211, 0.2
        %v1340 = vmul.f32 %v1212, 0.2
        %v1341 = vmul.f32 %v1213, 0.2
        %v1342 = vmul.f32 %v1214, 0.2
        %v1343 = vmul.f32 %v1215, 0.2
        %v1344 = vmul.f32 %v1216, 0.2
        %v1345 = vmul.f32 %v1217, 0.2
        %v1346 = vmul.f32 %v1218, 0.2
        %v1347 = vmul.f32 %v1219, 0.2
        %v1348 = vmul.f32 %v1220, 0.2
        %v1349 = vmul.f32 %v1221, 0.2
        %v1350 = vmul.f32 %v1222, 0.2
        %v1351 = vmul.f32 %v1223, 0.2
        %v1352 = vmul.f32 %v1224, 0.2
        %v1353 = vmul.f32 %v1225, 0.2
        %v1354 = vmul.f32 %v1226, 0.2
        %v1355 = vmul.f32 %v1227, 0.2
        %v1356 = vmul.f32 %v1228, 0.2
        %v1357 = vmul.f32 %v1229, 0.2
        %v1358 = vmul.f32 %v1230, 0.2
        %v1359 = vmul.f32 %v1231, 0.2
        %v1360 = vmul.f32 %v1232, 0.2
        %v1361 = vmul.f32 %v1233, 0.2
        %v1362 = vmul.f32 %v1234, 0.2
        %v1363 = vmul.f32 %v1235, 0.2
        %v1364 = vmul.f32 %v1236, 0.2
        %v1365 = vmul.f32 %v1237, 0.2
        %v1366 = vmul.f32 %v1238, 0.2
        %v1367 = vmul.f32 %v1239, 0.2
        %v1368 = vmul.f32 %v1240, 0.2
        %v1369 = vmul.f32 %v1241, 0.2
        %v1370 = vmul.f32 %v1242, 0.2
        %v1371 = vmul.f32 %v1243, 0.2
        %v1372 = vmul.f32 %v1244, 0.2
        %v1373 = vmul.f32 %v1245, 0.2
        %v1374 = vmul.f32 %v1246, 0.2
        %v1375 = vmul.f32 %v1247, 0.2
        %v1376 = vmul.f32 %v1248, 0.2
        %v1377 = vmul.f32 %v1249, 0.2
        %v1378 = vmul.f32 %v1250, 0.2
        %v1379 = vmul.f32 %v1251, 0.2
        %v1380 = vmul.f32 %v1252, 0.2
        %v1381 = vmul.f32 %v1253, 0.2
        %v1382 = vsel %vm1254, %v1190, %v1318
        %v1383 = vsel %vm1255, %v1191, %v1319
        %v1384 = vsel %vm1256, %v1192, %v1320
        %v1385 = vsel %vm1257, %v1193, %v1321
        %v1386 = vsel %vm1258, %v1194, %v1322
        %v1387 = vsel %vm1259, %v1195, %v1323
        %v1388 = vsel %vm1260, %v1196, %v1324
        %v1389 = vsel %vm1261, %v1197, %v1325
        %v1390 = vsel %vm1262, %v1198, %v1326
        %v1391 = vsel %vm1263, %v1199, %v1327
        %v1392 = vsel %vm1264, %v1200, %v1328
        %v1393 = vsel %vm1265, %v1201, %v1329
        %v1394 = vsel %vm1266, %v1202, %v1330
        %v1395 = vsel %vm1267, %v1203, %v1331
        %v1396 = vsel %vm1268, %v1204, %v1332
        %v1397 = vsel %vm1269, %v1205, %v1333
        %v1398 = vsel %vm1270, %v1206, %v1334
        %v1399 = vsel %vm1271, %v1207, %v1335
        %v1400 = vsel %vm1272, %v1208, %v1336
        %v1401 = vsel %vm1273, %v1209, %v1337
        %v1402 = vsel %vm1274, %v1210, %v1338
        %v1403 = vsel %vm1275, %v1211, %v1339
        %v1404 = vsel %vm1276, %v1212, %v1340
        %v1405 = vsel %vm1277, %v1213, %v1341
        %v1406 = vsel %vm1278, %v1214, %v1342
        %v1407 = vsel %vm1279, %v1215, %v1343
        %v1408 = vsel %vm1280, %v1216, %v1344
        %v1409 = vsel %vm1281, %v1217, %v1345
        %v1410 = vsel %vm1282, %v1218, %v1346
        %v1411 = vsel %vm1283, %v1219, %v1347
        %v1412 = vsel %vm1284, %v1220, %v1348
        %v1413 = vsel %vm1285, %v1221, %v1349
        %v1414 = vsel %vm1286, %v1222, %v1350
        %v1415 = vsel %vm1287, %v1223, %v1351
        %v1416 = vsel %vm1288, %v1224, %v1352
        %v1417 = vsel %vm1289, %v1225, %v1353
        %v1418 = vsel %vm1290, %v1226, %v1354
        %v1419 = vsel %vm1291, %v1227, %v1355
        %v1420 = vsel %vm1292, %v1228, %v1356
        %v1421 = vsel %vm1293, %v1229, %v1357
        %v1422 = vsel %vm1294, %v1230, %v1358
        %v1423 = vsel %vm1295, %v1231, %v1359
        %v1424 = vsel %vm1296, %v1232, %v1360
        %v1425 = vsel %vm1297, %v1233, %v1361
        %v1426 = vsel %vm1298, %v1234, %v1362
        %v1427 = vsel %vm1299, %v1235, %v1363
        %v1428 = vsel %vm1300, %v1236, %v1364
        %v1429 = vsel %vm1301, %v1237, %v1365
        %v1430 = vsel %vm1302, %v1238, %v1366
        %v1431 = vsel %vm1303, %v1239, %v1367
        %v1432 = vsel %vm1304, %v1240, %v1368
        %v1433 = vsel %vm1305, %v1241, %v1369
        %v1434 = vsel %vm1306, %v1242, %v1370
        %v1435 = vsel %vm1307, %v1243, %v1371
        %v1436 = vsel %vm1308, %v1244, %v1372
        %v1437 = vsel %vm1309, %v1245, %v1373
        %v1438 = vsel %vm1310, %v1246, %v1374
        %v1439 = vsel %vm1311, %v1247, %v1375
        %v1440 = vsel %vm1312, %v1248, %v1376
        %v1441 = vsel %vm1313, %v1249, %v1377
        %v1442 = vsel %vm1314, %v1250, %v1378
        %v1443 = vsel %vm1315, %v1251, %v1379
        %v1444 = vsel %vm1316, %v1252, %v1380
        %v1445 = vsel %vm1317, %v1253, %v1381
        %1446 = vst.msk [vmem:[%s217] sm:$0xff] %vm1051, %v1382
        %1447 = vst.msk [vmem:[%s217 + $0x8] sm:$0xff] %vm1051, %v1383
        %1448 = vst.msk [vmem:[%s217 + $0x10] sm:$0xff] %vm1051, %v1384
        %1449 = vst.msk [vmem:[%s217 + $0x18] sm:$0xff] %vm1051, %v1385
        %1450 = vst.msk [vmem:[%s217 + $0x20] sm:$0xff] %vm1051, %v1386
        %1451 = vst.msk [vmem:[%s217 + $0x28] sm:$0xff] %vm1051, %v1387
        %1452 = vst.msk [vmem:[%s217 + $0x30] sm:$0xff] %vm1051, %v1388
        %1453 = vst.msk [vmem:[%s217 + $0x38] sm:$0xff] %vm1051, %v1389
        %1454 = vst.msk [vmem:[%s217 + $0x40] sm:$0xff] %vm1051, %v1390
        %1455 = vst.msk [vmem:[%s217 + $0x48] sm:$0xff] %vm1051, %v1391
        %1456 = vst.msk [vmem:[%s217 + $0x50] sm:$0xff] %vm1051, %v1392
        %1457 = vst.msk [vmem:[%s217 + $0x58] sm:$0xff] %vm1051, %v1393
        %1458 = vst.msk [vmem:[%s217 + $0x60] sm:$0xff] %vm1051, %v1394
        %1459 = vst.msk [vmem:[%s217 + $0x68] sm:$0xff] %vm1051, %v1395
        %1460 = vst.msk [vmem:[%s217 + $0x70] sm:$0xff] %vm1051, %v1396
        %1461 = vst.msk [vmem:[%s217 + $0x78] sm:$0xff] %vm1051, %v1397
        %1462 = vst.msk [vmem:[%s217 + $0x80] sm:$0xff] %vm1051, %v1398
        %1463 = vst.msk [vmem:[%s217 + $0x88] sm:$0xff] %vm1051, %v1399
        %1464 = vst.msk [vmem:[%s217 + $0x90] sm:$0xff] %vm1051, %v1400
        %1465 = vst.msk [vmem:[%s217 + $0x98] sm:$0xff] %vm1051, %v1401
        %1466 = vst.msk [vmem:[%s217 + $0xa0] sm:$0xff] %vm1051, %v1402
        %1467 = vst.msk [vmem:[%s217 + $0xa8] sm:$0xff] %vm1051, %v1403
        %1468 = vst.msk [vmem:[%s217 + $0xb0] sm:$0xff] %vm1051, %v1404
        %1469 = vst.msk [vmem:[%s217 + $0xb8] sm:$0xff] %vm1051, %v1405
        %1470 = vst.msk [vmem:[%s217 + $0xc0] sm:$0xff] %vm1051, %v1406
        %1471 = vst.msk [vmem:[%s217 + $0xc8] sm:$0xff] %vm1051, %v1407
        %1472 = vst.msk [vmem:[%s217 + $0xd0] sm:$0xff] %vm1051, %v1408
        %1473 = vst.msk [vmem:[%s217 + $0xd8] sm:$0xff] %vm1051, %v1409
        %1474 = vst.msk [vmem:[%s217 + $0xe0] sm:$0xff] %vm1051, %v1410
        %1475 = vst.msk [vmem:[%s217 + $0xe8] sm:$0xff] %vm1051, %v1411
        %1476 = vst.msk [vmem:[%s217 + $0xf0] sm:$0xff] %vm1051, %v1412
        %1477 = vst.msk [vmem:[%s217 + $0xf8] sm:$0xff] %vm1051, %v1413
        %1478 = vst.msk [vmem:[%s217 + $0x100] sm:$0xff] %vm1051, %v1414
        %1479 = vst.msk [vmem:[%s217 + $0x108] sm:$0xff] %vm1051, %v1415
        %1480 = vst.msk [vmem:[%s217 + $0x110] sm:$0xff] %vm1051, %v1416
        %1481 = vst.msk [vmem:[%s217 + $0x118] sm:$0xff] %vm1051, %v1417
        %1482 = vst.msk [vmem:[%s217 + $0x120] sm:$0xff] %vm1051, %v1418
        %1483 = vst.msk [vmem:[%s217 + $0x128] sm:$0xff] %vm1051, %v1419
        %1484 = vst.msk [vmem:[%s217 + $0x130] sm:$0xff] %vm1051, %v1420
        %1485 = vst.msk [vmem:[%s217 + $0x138] sm:$0xff] %vm1051, %v1421
        %1486 = vst.msk [vmem:[%s217 + $0x140] sm:$0xff] %vm1051, %v1422
        %1487 = vst.msk [vmem:[%s217 + $0x148] sm:$0xff] %vm1051, %v1423
        %1488 = vst.msk [vmem:[%s217 + $0x150] sm:$0xff] %vm1051, %v1424
        %1489 = vst.msk [vmem:[%s217 + $0x158] sm:$0xff] %vm1051, %v1425
        %1490 = vst.msk [vmem:[%s217 + $0x160] sm:$0xff] %vm1051, %v1426
        %1491 = vst.msk [vmem:[%s217 + $0x168] sm:$0xff] %vm1051, %v1427
        %1492 = vst.msk [vmem:[%s217 + $0x170] sm:$0xff] %vm1051, %v1428
        %1493 = vst.msk [vmem:[%s217 + $0x178] sm:$0xff] %vm1051, %v1429
        %1494 = vst.msk [vmem:[%s217 + $0x180] sm:$0xff] %vm1051, %v1430
        %1495 = vst.msk [vmem:[%s217 + $0x188] sm:$0xff] %vm1051, %v1431
        %1496 = vst.msk [vmem:[%s217 + $0x190] sm:$0xff] %vm1051, %v1432
        %1497 = vst.msk [vmem:[%s217 + $0x198] sm:$0xff] %vm1051, %v1433
        %1498 = vst.msk [vmem:[%s217 + $0x1a0] sm:$0xff] %vm1051, %v1434
        %1499 = vst.msk [vmem:[%s217 + $0x1a8] sm:$0xff] %vm1051, %v1435
        %1500 = vst.msk [vmem:[%s217 + $0x1b0] sm:$0xff] %vm1051, %v1436
        %1501 = vst.msk [vmem:[%s217 + $0x1b8] sm:$0xff] %vm1051, %v1437
        %1502 = vst.msk [vmem:[%s217 + $0x1c0] sm:$0xff] %vm1051, %v1438
        %1503 = vst.msk [vmem:[%s217 + $0x1c8] sm:$0xff] %vm1051, %v1439
        %1504 = vst.msk [vmem:[%s217 + $0x1d0] sm:$0xff] %vm1051, %v1440
        %1505 = vst.msk [vmem:[%s217 + $0x1d8] sm:$0xff] %vm1051, %v1441
        %1506 = vst.msk [vmem:[%s217 + $0x1e0] sm:$0xff] %vm1051, %v1442
        %1507 = vst.msk [vmem:[%s217 + $0x1e8] sm:$0xff] %vm1051, %v1443
        %1508 = vst.msk [vmem:[%s217 + $0x1f0] sm:$0xff] %vm1051, %v1444
        %1509 = vst.msk [vmem:[%s217 + $0x1f8] sm:$0xff] %vm1051, %v1445
      $region40: #{dnet_forward.8} parent=31 // pred_fallthru
        _
      %s1510 = smul.u32 64, %s18
      %p1511 = scmp.lt.s32.totalorder %s1510, 255
      %s1512 = scalar_select %p1511, %s1510, 255
      %s1513 = smul.addr %s1512, 8
      %s1514 = scalar_lea.vmem %s3, %s1513
      // Predicated region
      $region41: #{dnet_forward.8} parent=31 // pred_check
        %p1515 = pneg %p119
      $region42: #{dnet_forward.8} parent=31 // pred_check_branch
        %1517 = sbr.rel (%p1515) target = $region44
      $region43: #{dnet_forward.8} parent=31 // pred_region
        %s1518 = smul.u32 64, %s18
      $region44: #{dnet_forward.8} parent=31 // pred_fallthru
        _
    $region32: #{dnet_forward.8} parent=5 // pred_fallthru
      _
    %p1519 = scmp.le.s32.totalorder 2, %s9
    // Predicated region
    $region45: #{dnet_forward.8} parent=5 // pred_check
      %p1520 = pneg %p1519
    $region46: #{dnet_forward.8} parent=5 // pred_check_branch
      %1522 = sbr.rel (%p1520) target = $region48
    $region47: #{dnet_forward.8} parent=5 // pred_region
      %s1523 = ssub.s32 %s9, 2
      // Predicated region
      $region49: #{dnet_forward.8} parent=47 // pred_check
        %p1524 = pneg %p125
      $region50: #{dnet_forward.8} parent=47 // pred_check_branch
        %1526 = sbr.rel (%p1524) target = $region52
      $region51: #{dnet_forward.8} parent=47 // pred_region
        %s1527 = smul.u32 64, %s20
        %p1528 = scmp.lt.s32.totalorder %s1527, 255
        %s1529 = scalar_select %p1528, %s1527, 255
        %s1530 = smul.addr %s1529, 8
        %s1531 = scalar_lea.vmem %s3, %s1530
      $region52: #{dnet_forward.8} parent=47 // pred_fallthru
        _
    $region48: #{dnet_forward.8} parent=5 // pred_fallthru
      _
  $region6: #{dnet_forward.8} parent=0 // loop_footer
    %s13 = sadd.s32 1, %s9
  $region7: #{dnet_forward.8} parent=0 // loop_footer_branch
    %8 = sbr.rel target = $region3
  $region8: #{dnet_forward.8} parent=0 // loop_exit
    _

// kernel: dnet_forward.9
$region0: #{dnet_forward.9}
  #allocation0 [shape = 'u32[]', space=smem, size = 0x4, offset = 0x4, fixed_abs, tag = 'smem constant byte address 0x4 - core index']
  #allocation1 [shape = 'u32[144,128]{1,0:T(1,128)}', space=vmem, size = 0x12000, scoped, tag = 'internal scratch']
  #allocation2 [shape = 'f32[512,128]{1,0:T(8,128)}', space=vmem, size = 0x40000, scoped, tag = 'scratch operand']
  %s0 = inlined_call_operand.vmem [shape: bf16[512,1024], index: 0, kind: input, shape index: {}]
  %s1 = inlined_call_operand.vmem [shape: bf16[1024,128], index: 1, kind: input, shape index: {}]
  %s2 = inlined_call_operand.vmem [shape: f32[1,128], index: 2, kind: input, shape index: {}]
  %s3 = inlined_call_operand.vmem [shape: f32[512,128], index: 3, kind: output, shape index: {0}]
  %s4 = inlined_call_operand.vmem [shape: f32[8,128], index: 4, kind: output, shape index: {1}]
  %s5 = inlined_call_operand.vmem [shape: f32[8,128], index: 5, kind: output, shape index: {2}]
  %6 = xla_tuple %s3, %s4, %s5
  %s7 = sld [smem:[#allocation0]]
  $region92: #{dnet_forward.9} parent=0
    _
  %s9 = ssub.s32 1, %s7
  %s10 = scalar_select 0, %s9, %s7
  $region1: #{dnet_forward.9} parent=0
    #allocation3 [shape = 'u8[1048576]{0}', space=vmem, size = 0x100000, scoped, tag = 'input window, operand 0']
    loop: start=0, step=1, limit=4
    $region2: #{dnet_forward.9} parent=1 // loop_pre_header
      _
    $region3: #{dnet_forward.9} parent=1 // loop_header
      %s12 = sphi 0, %s16
      %p13 = scmp.ge.s32.totalorder %s12, 4
      %s19 = sphi 0, %s31
      %s20 = sphi 0, %s27
      %s21 = sphi 0, %s19
      %s22 = sphi 0, %s20
      %s23 = sphi 0, %s21
      %s24 = sphi 0, %s22
      %s36 = sphi 0, %s38
      %s39 = sphi 0, %s36
      %s40 = sphi 0, %s39
      %s56 = sphi 0, %s40
      %s62 = sphi 0, %s64
      %s65 = sphi 0, %s62
      %s66 = sphi 0, %s65
      %s82 = sphi 0, %s66
      %s86 = sphi 0, %s86
      %s88 = sphi 0, %s86
      %s89 = sphi 0, %s88
      %s103 = sphi 0, %s89
      %s109 = sphi 0, %s111
      %s112 = sphi 0, %s109
      %s113 = sphi 0, %s112
      %s129 = sphi 0, %s113
      %s135 = sphi 0, %s137
      %s138 = sphi 0, %s135
      %s139 = sphi 0, %s138
      %s155 = sphi 0, %s139
      %s161 = sphi 0, %s163
      %s164 = sphi 0, %s161
      %s165 = sphi 0, %s164
      %s181 = sphi 0, %s165
    $region4: #{dnet_forward.9} parent=1 // loop_header_branch
      %15 = sbr.rel (%p13) target = $region8
    $region5: #{dnet_forward.9} parent=1 // loop_body
      %s17 = ssub.s32 %s12, 1
      %s18 = ssub.s32 %s12, 2
      %s25 = sadd.s32 1, %s20
      %p26 = scmp.ge.s32.totalorder %s25, 2
      %s27 = scalar_select %p26, 0, %s25
      %s28 = sadd.s32 1, %s19
      %s29 = scalar_select %p26, %s28, %s19
      %p30 = scmp.ge.s32.totalorder %s29, 1
      %s31 = scalar_select %p30, 0, %s29
      %s32 = ssub.s32 %s19, %s31
      %s33 = ssub.s32 %s20, %s27
      %s34 = sor.u32 %s32, %s33
      %p35 = scmp.eq.s32.totalorder %s34, 0
      %s37 = sadd.s32 %s36, 1
      %s38 = scalar_select %p35, %s36, %s37
      %p41 = pneg %p35
      %p42 = scmp.eq.s32.totalorder %s12, 1
      %p43 = por %p41, %p42
      %p44 = scmp.ne.s32.totalorder %s36, %s39
      %p45 = scmp.eq.s32.totalorder %s12, 0
      %p46 = por %p44, %p45
      %p47 = scmp.ne.s32.totalorder %s36, %s39
      %p48 = scmp.eq.s32.totalorder %s17, 1
      %p49 = por %p47, %p48
      %p50 = scmp.ne.s32.totalorder %s39, %s40
      %p51 = scmp.eq.s32.totalorder %s17, 0
      %p52 = por %p50, %p51
      %p53 = scmp.ne.s32.totalorder %s39, %s40
      %p54 = scmp.eq.s32.totalorder %s18, 1
      %p55 = por %p53, %p54
      %p57 = scmp.ne.s32.totalorder %s40, %s56
      %p58 = scmp.eq.s32.totalorder %s18, 0
      %p59 = por %p57, %p58
      %s60 = ssub.s32 %s20, %s27
      %p61 = scmp.eq.s32.totalorder %s60, 0
      %s63 = sadd.s32 %s62, 1
      %s64 = scalar_select %p61, %s62, %s63
      %p67 = pneg %p61
      %p68 = scmp.eq.s32.totalorder %s12, 1
      %p69 = por %p67, %p68
      %p70 = scmp.ne.s32.totalorder %s62, %s65
      %p71 = scmp.eq.s32.totalorder %s12, 0
      %p72 = por %p70, %p71
      %p73 = scmp.ne.s32.totalorder %s62, %s65
      %p74 = scmp.eq.s32.totalorder %s17, 1
      %p75 = por %p73, %p74
      %p76 = scmp.ne.s32.totalorder %s65, %s66
      %p77 = scmp.eq.s32.totalorder %s17, 0
      %p78 = por %p76, %p77
      %p79 = scmp.ne.s32.totalorder %s65, %s66
      %p80 = scmp.eq.s32.totalorder %s18, 1
      %p81 = por %p79, %p80
      %p83 = scmp.ne.s32.totalorder %s66, %s82
      %p84 = scmp.eq.s32.totalorder %s18, 0
      %p85 = por %p83, %p84
      %s87 = sadd.s32 %s86, 1
      %p90 = scmp.eq.s32.totalorder %s12, 1
      %p91 = scmp.ne.s32.totalorder %s86, %s88
      %p92 = scmp.eq.s32.totalorder %s12, 0
      %p93 = por %p91, %p92
      %p94 = scmp.ne.s32.totalorder %s86, %s88
      %p95 = scmp.eq.s32.totalorder %s17, 1
      %p96 = por %p94, %p95
      %p97 = scmp.ne.s32.totalorder %s88, %s89
      %p98 = scmp.eq.s32.totalorder %s17, 0
      %p99 = por %p97, %p98
      %p100 = scmp.ne.s32.totalorder %s88, %s89
      %p101 = scmp.eq.s32.totalorder %s18, 1
      %p102 = por %p100, %p101
      %p104 = scmp.ne.s32.totalorder %s89, %s103
      %p105 = scmp.eq.s32.totalorder %s18, 0
      %p106 = por %p104, %p105
      %s107 = ssub.s32 %s19, %s31
      %p108 = scmp.eq.s32.totalorder %s107, 0
      %s110 = sadd.s32 %s109, 1
      %s111 = scalar_select %p108, %s109, %s110
      %p114 = pneg %p108
      %p115 = scmp.eq.s32.totalorder %s12, 1
      %p116 = por %p114, %p115
      %p117 = scmp.ne.s32.totalorder %s109, %s112
      %p118 = scmp.eq.s32.totalorder %s12, 0
      %p119 = por %p117, %p118
      %p120 = scmp.ne.s32.totalorder %s109, %s112
      %p121 = scmp.eq.s32.totalorder %s17, 1
      %p122 = por %p120, %p121
      %p123 = scmp.ne.s32.totalorder %s112, %s113
      %p124 = scmp.eq.s32.totalorder %s17, 0
      %p125 = por %p123, %p124
      %p126 = scmp.ne.s32.totalorder %s112, %s113
      %p127 = scmp.eq.s32.totalorder %s18, 1
      %p128 = por %p126, %p127
      %p130 = scmp.ne.s32.totalorder %s113, %s129
      %p131 = scmp.eq.s32.totalorder %s18, 0
      %p132 = por %p130, %p131
      %s133 = ssub.s32 %s19, %s31
      %p134 = scmp.eq.s32.totalorder %s133, 0
      %s136 = sadd.s32 %s135, 1
      %s137 = scalar_select %p134, %s135, %s136
      %p140 = pneg %p134
      %p141 = scmp.eq.s32.totalorder %s12, 1
      %p142 = por %p140, %p141
      %p143 = scmp.ne.s32.totalorder %s135, %s138
      %p144 = scmp.eq.s32.totalorder %s12, 0
      %p145 = por %p143, %p144
      %p146 = scmp.ne.s32.totalorder %s135, %s138
      %p147 = scmp.eq.s32.totalorder %s17, 1
      %p148 = por %p146, %p147
      %p149 = scmp.ne.s32.totalorder %s138, %s139
      %p150 = scmp.eq.s32.totalorder %s17, 0
      %p151 = por %p149, %p150
      %p152 = scmp.ne.s32.totalorder %s138, %s139
      %p153 = scmp.eq.s32.totalorder %s18, 1
      %p154 = por %p152, %p153
      %p156 = scmp.ne.s32.totalorder %s139, %s155
      %p157 = scmp.eq.s32.totalorder %s18, 0
      %p158 = por %p156, %p157
      %s159 = ssub.s32 %s19, %s31
      %p160 = scmp.eq.s32.totalorder %s159, 0
      %s162 = sadd.s32 %s161, 1
      %s163 = scalar_select %p160, %s161, %s162
      %p166 = pneg %p160
      %p167 = scmp.eq.s32.totalorder %s12, 1
      %p168 = por %p166, %p167
      %p169 = scmp.ne.s32.totalorder %s161, %s164
      %p170 = scmp.eq.s32.totalorder %s12, 0
      %p171 = por %p169, %p170
      %p172 = scmp.ne.s32.totalorder %s161, %s164
      %p173 = scmp.eq.s32.totalorder %s17, 1
      %p174 = por %p172, %p173
      %p175 = scmp.ne.s32.totalorder %s164, %s165
      %p176 = scmp.eq.s32.totalorder %s17, 0
      %p177 = por %p175, %p176
      %p178 = scmp.ne.s32.totalorder %s164, %s165
      %p179 = scmp.eq.s32.totalorder %s18, 1
      %p180 = por %p178, %p179
      %p182 = scmp.ne.s32.totalorder %s165, %s181
      %p183 = scmp.eq.s32.totalorder %s18, 0
      %p184 = por %p182, %p183
      %p185 = scmp.le.s32.totalorder 1, %s12
      %p186 = scmp.lt.s32.totalorder %s12, 3
      %p187 = pnand %p185, %p186
      %p188 = pneg %p187
      // Predicated region
      $region9: #{dnet_forward.9} parent=5 // pred_check
        _
      $region10: #{dnet_forward.9} parent=5 // pred_check_branch
        %190 = sbr.rel (%p187) target = $region12
      $region11: #{dnet_forward.9} parent=5 // pred_region
        %s191 = ssub.s32 %s12, 1
        // Predicated region
        $region13: #{dnet_forward.9} parent=11 // pred_check
          %p192 = pneg %p99
        $region14: #{dnet_forward.9} parent=11 // pred_check_branch
          %194 = sbr.rel (%p192) target = $region16
        $region15: #{dnet_forward.9} parent=11 // pred_region
          _
        $region16: #{dnet_forward.9} parent=11 // pred_fallthru
          _
      $region12: #{dnet_forward.9} parent=5 // pred_fallthru
        _
      %p195 = scmp.lt.s32.totalorder %s12, 2
      // Predicated region
      $region17: #{dnet_forward.9} parent=5 // pred_check
        %p196 = pneg %p195
      $region18: #{dnet_forward.9} parent=5 // pred_check_branch
        %198 = sbr.rel (%p196) target = $region20
      $region19: #{dnet_forward.9} parent=5 // pred_region
        // Predicated region
        $region21: #{dnet_forward.9} parent=19 // pred_check
          %p199 = pneg %p46
        $region22: #{dnet_forward.9} parent=19 // pred_check_branch
          %201 = sbr.rel (%p199) target = $region24
        $region23: #{dnet_forward.9} parent=19 // pred_region
          %s202 = sand.u32 %s36, 1
          %s203 = sand.u32 %s36, 1
          %s204 = smul.addr %s203, 1024
          %s205 = scalar_lea.vmem [#allocation3], %s204
          %s206 = smul.u32 64, %s19
          %s207 = smul.u32 4, %s20
          %s208 = smul.addr %s206, 8
          %s209 = sadd.s32 %s207, %s208
          %s210 = smul.addr %s209, 4
          %s211 = scalar_lea.vmem %s0, %s210
          // Predicated region
          $region25: #{dnet_forward.9} parent=23 // pred_check
            _
          $region26: #{dnet_forward.9} parent=23 // pred_check_branch
            %213 = sbr.rel (0) target = $region28
          $region27: #{dnet_forward.9} parent=23 // pred_region
            // Predicated region
            $region29: #{dnet_forward.9} parent=27 // pred_check
              _
            $region30: #{dnet_forward.9} parent=27 // pred_check_branch
              %215 = sbr.rel (0) target = $region32
            $region31: #{dnet_forward.9} parent=27 // pred_region
              loop: start=0, step=1, limit=1
              $region33: #{dnet_forward.9} parent=31 // loop_pre_header
                _
              $region34: #{dnet_forward.9} parent=31 // loop_header
                %s217 = sphi 0, %s221
                %p218 = scmp.ge.s32.totalorder %s217, 1
                %s222 = sphi %s211, %s211
                %s223 = sphi %s205, %s205
              $region35: #{dnet_forward.9} parent=31 // loop_header_branch
                %220 = sbr.rel (%p218) target = $region39
              $region36: #{dnet_forward.9} parent=31 // loop_body
                %v224 = vld [vmem:[%s222] sm:$0xff]
                %225 = vst [vmem:[%s223] sm:$0xff] %v224
                %v226 = vld [vmem:[%s222 + $0x8] sm:$0xff]
                %227 = vst [vmem:[%s223 + $0x8] sm:$0xff] %v226
                %v228 = vld [vmem:[%s222 + $0x20] sm:$0xff]
                %229 = vst [vmem:[%s223 + $0x10] sm:$0xff] %v228
                %v230 = vld [vmem:[%s222 + $0x28] sm:$0xff]
                %231 = vst [vmem:[%s223 + $0x18] sm:$0xff] %v230
                %v232 = vld [vmem:[%s222 + $0x40] sm:$0xff]
                %233 = vst [vmem:[%s223 + $0x20] sm:$0xff] %v232
                %v234 = vld [vmem:[%s222 + $0x48] sm:$0xff]
                %235 = vst [vmem:[%s223 + $0x28] sm:$0xff] %v234
                %v236 = vld [vmem:[%s222 + $0x60] sm:$0xff]
                %237 = vst [vmem:[%s223 + $0x30] sm:$0xff] %v236
                %v238 = vld [vmem:[%s222 + $0x68] sm:$0xff]
                %239 = vst [vmem:[%s223 + $0x38] sm:$0xff] %v238
                %v240 = vld [vmem:[%s222 + $0x80] sm:$0xff]
                %241 = vst [vmem:[%s223 + $0x40] sm:$0xff] %v240
                %v242 = vld [vmem:[%s222 + $0x88] sm:$0xff]
                %243 = vst [vmem:[%s223 + $0x48] sm:$0xff] %v242
                %v244 = vld [vmem:[%s222 + $0xa0] sm:$0xff]
                %245 = vst [vmem:[%s223 + $0x50] sm:$0xff] %v244
                %v246 = vld [vmem:[%s222 + $0xa8] sm:$0xff]
                %247 = vst [vmem:[%s223 + $0x58] sm:$0xff] %v246
                %v248 = vld [vmem:[%s222 + $0xc0] sm:$0xff]
                %249 = vst [vmem:[%s223 + $0x60] sm:$0xff] %v248
                %v250 = vld [vmem:[%s222 + $0xc8] sm:$0xff]
                %251 = vst [vmem:[%s223 + $0x68] sm:$0xff] %v250
                %v252 = vld [vmem:[%s222 + $0xe0] sm:$0xff]
                %253 = vst [vmem:[%s223 + $0x70] sm:$0xff] %v252
                %v254 = vld [vmem:[%s222 + $0xe8] sm:$0xff]
                %255 = vst [vmem:[%s223 + $0x78] sm:$0xff] %v254
                %v256 = vld [vmem:[%s222 + $0x100] sm:$0xff]
                %257 = vst [vmem:[%s223 + $0x80] sm:$0xff] %v256
                %v258 = vld [vmem:[%s222 + $0x108] sm:$0xff]
                %259 = vst [vmem:[%s223 + $0x88] sm:$0xff] %v258
                %v260 = vld [vmem:[%s222 + $0x120] sm:$0xff]
                %261 = vst [vmem:[%s223 + $0x90] sm:$0xff] %v260
                %v262 = vld [vmem:[%s222 + $0x128] sm:$0xff]
                %263 = vst [vmem:[%s223 + $0x98] sm:$0xff] %v262
                %v264 = vld [vmem:[%s222 + $0x140] sm:$0xff]
                %265 = vst [vmem:[%s223 + $0xa0] sm:$0xff] %v264
                %v266 = vld [vmem:[%s222 + $0x148] sm:$0xff]
                %267 = vst [vmem:[%s223 + $0xa8] sm:$0xff] %v266
                %v268 = vld [vmem:[%s222 + $0x160] sm:$0xff]
                %269 = vst [vmem:[%s223 + $0xb0] sm:$0xff] %v268
                %v270 = vld [vmem:[%s222 + $0x168] sm:$0xff]
                %271 = vst [vmem:[%s223 + $0xb8] sm:$0xff] %v270
                %v272 = vld [vmem:[%s222 + $0x180] sm:$0xff]
                %273 = vst [vmem:[%s223 + $0xc0] sm:$0xff] %v272
                %v274 = vld [vmem:[%s222 + $0x188] sm:$0xff]
                %275 = vst [vmem:[%s223 + $0xc8] sm:$0xff] %v274
                %v276 = vld [vmem:[%s222 + $0x1a0] sm:$0xff]
                %277 = vst [vmem:[%s223 + $0xd0] sm:$0xff] %v276
                %v278 = vld [vmem:[%s222 + $0x1a8] sm:$0xff]
                %279 = vst [vmem:[%s223 + $0xd8] sm:$0xff] %v278
                %v280 = vld [vmem:[%s222 + $0x1c0] sm:$0xff]
                %281 = vst [vmem:[%s223 + $0xe0] sm:$0xff] %v280
                %v282 = vld [vmem:[%s222 + $0x1c8] sm:$0xff]
                %283 = vst [vmem:[%s223 + $0xe8] sm:$0xff] %v282
                %v284 = vld [vmem:[%s222 + $0x1e0] sm:$0xff]
                %285 = vst [vmem:[%s223 + $0xf0] sm:$0xff] %v284
                %v286 = vld [vmem:[%s222 + $0x1e8] sm:$0xff]
                %287 = vst [vmem:[%s223 + $0xf8] sm:$0xff] %v286
                %v288 = vld [vmem:[%s222 + $0x200] sm:$0xff]
                %289 = vst [vmem:[%s223 + $0x100] sm:$0xff] %v288
                %v290 = vld [vmem:[%s222 + $0x208] sm:$0xff]
                %291 = vst [vmem:[%s223 + $0x108] sm:$0xff] %v290
                %v292 = vld [vmem:[%s222 + $0x220] sm:$0xff]
                %293 = vst [vmem:[%s223 + $0x110] sm:$0xff] %v292
                %v294 = vld [vmem:[%s222 + $0x228] sm:$0xff]
                %295 = vst [vmem:[%s223 + $0x118] sm:$0xff] %v294
                %v296 = vld [vmem:[%s222 + $0x240] sm:$0xff]
                %297 = vst [vmem:[%s223 + $0x120] sm:$0xff] %v296
                %v298 = vld [vmem:[%s222 + $0x248] sm:$0xff]
                %299 = vst [vmem:[%s223 + $0x128] sm:$0xff] %v298
                %v300 = vld [vmem:[%s222 + $0x260] sm:$0xff]
                %301 = vst [vmem:[%s223 + $0x130] sm:$0xff] %v300
                %v302 = vld [vmem:[%s222 + $0x268] sm:$0xff]
                %303 = vst [vmem:[%s223 + $0x138] sm:$0xff] %v302
                %v304 = vld [vmem:[%s222 + $0x280] sm:$0xff]
                %305 = vst [vmem:[%s223 + $0x140] sm:$0xff] %v304
                %v306 = vld [vmem:[%s222 + $0x288] sm:$0xff]
                %307 = vst [vmem:[%s223 + $0x148] sm:$0xff] %v306
                %v308 = vld [vmem:[%s222 + $0x2a0] sm:$0xff]
                %309 = vst [vmem:[%s223 + $0x150] sm:$0xff] %v308
                %v310 = vld [vmem:[%s222 + $0x2a8] sm:$0xff]
                %311 = vst [vmem:[%s223 + $0x158] sm:$0xff] %v310
                %v312 = vld [vmem:[%s222 + $0x2c0] sm:$0xff]
                %313 = vst [vmem:[%s223 + $0x160] sm:$0xff] %v312
                %v314 = vld [vmem:[%s222 + $0x2c8] sm:$0xff]
                %315 = vst [vmem:[%s223 + $0x168] sm:$0xff] %v314
                %v316 = vld [vmem:[%s222 + $0x2e0] sm:$0xff]
                %317 = vst [vmem:[%s223 + $0x170] sm:$0xff] %v316
                %v318 = vld [vmem:[%s222 + $0x2e8] sm:$0xff]
                %319 = vst [vmem:[%s223 + $0x178] sm:$0xff] %v318
                %v320 = vld [vmem:[%s222 + $0x300] sm:$0xff]
                %321 = vst [vmem:[%s223 + $0x180] sm:$0xff] %v320
                %v322 = vld [vmem:[%s222 + $0x308] sm:$0xff]
                %323 = vst [vmem:[%s223 + $0x188] sm:$0xff] %v322
                %v324 = vld [vmem:[%s222 + $0x320] sm:$0xff]
                %325 = vst [vmem:[%s223 + $0x190] sm:$0xff] %v324
                %v326 = vld [vmem:[%s222 + $0x328] sm:$0xff]
                %327 = vst [vmem:[%s223 + $0x198] sm:$0xff] %v326
                %v328 = vld [vmem:[%s222 + $0x340] sm:$0xff]
                %329 = vst [vmem:[%s223 + $0x1a0] sm:$0xff] %v328
                %v330 = vld [vmem:[%s222 + $0x348] sm:$0xff]
                %331 = vst [vmem:[%s223 + $0x1a8] sm:$0xff] %v330
                %v332 = vld [vmem:[%s222 + $0x360] sm:$0xff]
                %333 = vst [vmem:[%s223 + $0x1b0] sm:$0xff] %v332
                %v334 = vld [vmem:[%s222 + $0x368] sm:$0xff]
                %335 = vst [vmem:[%s223 + $0x1b8] sm:$0xff] %v334
                %v336 = vld [vmem:[%s222 + $0x380] sm:$0xff]
                %337 = vst [vmem:[%s223 + $0x1c0] sm:$0xff] %v336
                %v338 = vld [vmem:[%s222 + $0x388] sm:$0xff]
                %339 = vst [vmem:[%s223 + $0x1c8] sm:$0xff] %v338
                %v340 = vld [vmem:[%s222 + $0x3a0] sm:$0xff]
                %341 = vst [vmem:[%s223 + $0x1d0] sm:$0xff] %v340
                %v342 = vld [vmem:[%s222 + $0x3a8] sm:$0xff]
                %343 = vst [vmem:[%s223 + $0x1d8] sm:$0xff] %v342
                %v344 = vld [vmem:[%s222 + $0x3c0] sm:$0xff]
                %345 = vst [vmem:[%s223 + $0x1e0] sm:$0xff] %v344
                %v346 = vld [vmem:[%s222 + $0x3c8] sm:$0xff]
                %347 = vst [vmem:[%s223 + $0x1e8] sm:$0xff] %v346
                %v348 = vld [vmem:[%s222 + $0x3e0] sm:$0xff]
                %349 = vst [vmem:[%s223 + $0x1f0] sm:$0xff] %v348
                %v350 = vld [vmem:[%s222 + $0x3e8] sm:$0xff]
                %351 = vst [vmem:[%s223 + $0x1f8] sm:$0xff] %v350
                %v352 = vld [vmem:[%s222 + $0x400] sm:$0xff]
                %353 = vst [vmem:[%s223 + $0x200] sm:$0xff] %v352
                %v354 = vld [vmem:[%s222 + $0x408] sm:$0xff]
                %355 = vst [vmem:[%s223 + $0x208] sm:$0xff] %v354
                %v356 = vld [vmem:[%s222 + $0x420] sm:$0xff]
                %357 = vst [vmem:[%s223 + $0x210] sm:$0xff] %v356
                %v358 = vld [vmem:[%s222 + $0x428] sm:$0xff]
                %359 = vst [vmem:[%s223 + $0x218] sm:$0xff] %v358
                %v360 = vld [vmem:[%s222 + $0x440] sm:$0xff]
                %361 = vst [vmem:[%s223 + $0x220] sm:$0xff] %v360
                %v362 = vld [vmem:[%s222 + $0x448] sm:$0xff]
                %363 = vst [vmem:[%s223 + $0x228] sm:$0xff] %v362
                %v364 = vld [vmem:[%s222 + $0x460] sm:$0xff]
                %365 = vst [vmem:[%s223 + $0x230] sm:$0xff] %v364
                %v366 = vld [vmem:[%s222 + $0x468] sm:$0xff]
                %367 = vst [vmem:[%s223 + $0x238] sm:$0xff] %v366
                %v368 = vld [vmem:[%s222 + $0x480] sm:$0xff]
                %369 = vst [vmem:[%s223 + $0x240] sm:$0xff] %v368
                %v370 = vld [vmem:[%s222 + $0x488] sm:$0xff]
                %371 = vst [vmem:[%s223 + $0x248] sm:$0xff] %v370
                %v372 = vld [vmem:[%s222 + $0x4a0] sm:$0xff]
                %373 = vst [vmem:[%s223 + $0x250] sm:$0xff] %v372
                %v374 = vld [vmem:[%s222 + $0x4a8] sm:$0xff]
                %375 = vst [vmem:[%s223 + $0x258] sm:$0xff] %v374
                %v376 = vld [vmem:[%s222 + $0x4c0] sm:$0xff]
                %377 = vst [vmem:[%s223 + $0x260] sm:$0xff] %v376
                %v378 = vld [vmem:[%s222 + $0x4c8] sm:$0xff]
                %379 = vst [vmem:[%s223 + $0x268] sm:$0xff] %v378
                %v380 = vld [vmem:[%s222 + $0x4e0] sm:$0xff]
                %381 = vst [vmem:[%s223 + $0x270] sm:$0xff] %v380
                %v382 = vld [vmem:[%s222 + $0x4e8] sm:$0xff]
                %383 = vst [vmem:[%s223 + $0x278] sm:$0xff] %v382
                %v384 = vld [vmem:[%s222 + $0x500] sm:$0xff]
                %385 = vst [vmem:[%s223 + $0x280] sm:$0xff] %v384
                %v386 = vld [vmem:[%s222 + $0x508] sm:$0xff]
                %387 = vst [vmem:[%s223 + $0x288] sm:$0xff] %v386
                %v388 = vld [vmem:[%s222 + $0x520] sm:$0xff]
                %389 = vst [vmem:[%s223 + $0x290] sm:$0xff] %v388
                %v390 = vld [vmem:[%s222 + $0x528] sm:$0xff]
                %391 = vst [vmem:[%s223 + $0x298] sm:$0xff] %v390
                %v392 = vld [vmem:[%s222 + $0x540] sm:$0xff]
                %393 = vst [vmem:[%s223 + $0x2a0] sm:$0xff] %v392
                %v394 = vld [vmem:[%s222 + $0x548] sm:$0xff]
                %395 = vst [vmem:[%s223 + $0x2a8] sm:$0xff] %v394
                %v396 = vld [vmem:[%s222 + $0x560] sm:$0xff]
                %397 = vst [vmem:[%s223 + $0x2b0] sm:$0xff] %v396
                %v398 = vld [vmem:[%s222 + $0x568] sm:$0xff]
                %399 = vst [vmem:[%s223 + $0x2b8] sm:$0xff] %v398
                %v400 = vld [vmem:[%s222 + $0x580] sm:$0xff]
                %401 = vst [vmem:[%s223 + $0x2c0] sm:$0xff] %v400
                %v402 = vld [vmem:[%s222 + $0x588] sm:$0xff]
                %403 = vst [vmem:[%s223 + $0x2c8] sm:$0xff] %v402
                %v404 = vld [vmem:[%s222 + $0x5a0] sm:$0xff]
                %405 = vst [vmem:[%s223 + $0x2d0] sm:$0xff] %v404
                %v406 = vld [vmem:[%s222 + $0x5a8] sm:$0xff]
                %407 = vst [vmem:[%s223 + $0x2d8] sm:$0xff] %v406
                %v408 = vld [vmem:[%s222 + $0x5c0] sm:$0xff]
                %409 = vst [vmem:[%s223 + $0x2e0] sm:$0xff] %v408
                %v410 = vld [vmem:[%s222 + $0x5c8] sm:$0xff]
                %411 = vst [vmem:[%s223 + $0x2e8] sm:$0xff] %v410
                %v412 = vld [vmem:[%s222 + $0x5e0] sm:$0xff]
                %413 = vst [vmem:[%s223 + $0x2f0] sm:$0xff] %v412
                %v414 = vld [vmem:[%s222 + $0x5e8] sm:$0xff]
                %415 = vst [vmem:[%s223 + $0x2f8] sm:$0xff] %v414
                %v416 = vld [vmem:[%s222 + $0x600] sm:$0xff]
                %417 = vst [vmem:[%s223 + $0x300] sm:$0xff] %v416
                %v418 = vld [vmem:[%s222 + $0x608] sm:$0xff]
                %419 = vst [vmem:[%s223 + $0x308] sm:$0xff] %v418
                %v420 = vld [vmem:[%s222 + $0x620] sm:$0xff]
                %421 = vst [vmem:[%s223 + $0x310] sm:$0xff] %v420
                %v422 = vld [vmem:[%s222 + $0x628] sm:$0xff]
                %423 = vst [vmem:[%s223 + $0x318] sm:$0xff] %v422
                %v424 = vld [vmem:[%s222 + $0x640] sm:$0xff]
                %425 = vst [vmem:[%s223 + $0x320] sm:$0xff] %v424
                %v426 = vld [vmem:[%s222 + $0x648] sm:$0xff]
                %427 = vst [vmem:[%s223 + $0x328] sm:$0xff] %v426
                %v428 = vld [vmem:[%s222 + $0x660] sm:$0xff]
                %429 = vst [vmem:[%s223 + $0x330] sm:$0xff] %v428
                %v430 = vld [vmem:[%s222 + $0x668] sm:$0xff]
                %431 = vst [vmem:[%s223 + $0x338] sm:$0xff] %v430
                %v432 = vld [vmem:[%s222 + $0x680] sm:$0xff]
                %433 = vst [vmem:[%s223 + $0x340] sm:$0xff] %v432
                %v434 = vld [vmem:[%s222 + $0x688] sm:$0xff]
                %435 = vst [vmem:[%s223 + $0x348] sm:$0xff] %v434
                %v436 = vld [vmem:[%s222 + $0x6a0] sm:$0xff]
                %437 = vst [vmem:[%s223 + $0x350] sm:$0xff] %v436
                %v438 = vld [vmem:[%s222 + $0x6a8] sm:$0xff]
                %439 = vst [vmem:[%s223 + $0x358] sm:$0xff] %v438
                %v440 = vld [vmem:[%s222 + $0x6c0] sm:$0xff]
                %441 = vst [vmem:[%s223 + $0x360] sm:$0xff] %v440
                %v442 = vld [vmem:[%s222 + $0x6c8] sm:$0xff]
                %443 = vst [vmem:[%s223 + $0x368] sm:$0xff] %v442
                %v444 = vld [vmem:[%s222 + $0x6e0] sm:$0xff]
                %445 = vst [vmem:[%s223 + $0x370] sm:$0xff] %v444
                %v446 = vld [vmem:[%s222 + $0x6e8] sm:$0xff]
                %447 = vst [vmem:[%s223 + $0x378] sm:$0xff] %v446
                %v448 = vld [vmem:[%s222 + $0x700] sm:$0xff]
                %449 = vst [vmem:[%s223 + $0x380] sm:$0xff] %v448
                %v450 = vld [vmem:[%s222 + $0x708] sm:$0xff]
                %451 = vst [vmem:[%s223 + $0x388] sm:$0xff] %v450
                %v452 = vld [vmem:[%s222 + $0x720] sm:$0xff]
                %453 = vst [vmem:[%s223 + $0x390] sm:$0xff] %v452
                %v454 = vld [vmem:[%s222 + $0x728] sm:$0xff]
                %455 = vst [vmem:[%s223 + $0x398] sm:$0xff] %v454
                %v456 = vld [vmem:[%s222 + $0x740] sm:$0xff]
                %457 = vst [vmem:[%s223 + $0x3a0] sm:$0xff] %v456
                %v458 = vld [vmem:[%s222 + $0x748] sm:$0xff]
                %459 = vst [vmem:[%s223 + $0x3a8] sm:$0xff] %v458
                %v460 = vld [vmem:[%s222 + $0x760] sm:$0xff]
                %461 = vst [vmem:[%s223 + $0x3b0] sm:$0xff] %v460
                %v462 = vld [vmem:[%s222 + $0x768] sm:$0xff]
                %463 = vst [vmem:[%s223 + $0x3b8] sm:$0xff] %v462
                %v464 = vld [vmem:[%s222 + $0x780] sm:$0xff]
                %465 = vst [vmem:[%s223 + $0x3c0] sm:$0xff] %v464
                %v466 = vld [vmem:[%s222 + $0x788] sm:$0xff]
                %467 = vst [vmem:[%s223 + $0x3c8] sm:$0xff] %v466
                %v468 = vld [vmem:[%s222 + $0x7a0] sm:$0xff]
                %469 = vst [vmem:[%s223 + $0x3d0] sm:$0xff] %v468
                %v470 = vld [vmem:[%s222 + $0x7a8] sm:$0xff]
                %471 = vst [vmem:[%s223 + $0x3d8] sm:$0xff] %v470
                %v472 = vld [vmem:[%s222 + $0x7c0] sm:$0xff]
                %473 = vst [vmem:[%s223 + $0x3e0] sm:$0xff] %v472
                %v474 = vld [vmem:[%s222 + $0x7c8] sm:$0xff]
                %475 = vst [vmem:[%s223 + $0x3e8] sm:$0xff] %v474
                %v476 = vld [vmem:[%s222 + $0x7e0] sm:$0xff]
                %477 = vst [vmem:[%s223 + $0x3f0] sm:$0xff] %v476
                %v478 = vld [vmem:[%s222 + $0x7e8] sm:$0xff]
                %479 = vst [vmem:[%s223 + $0x3f8] sm:$0xff] %v478
              $region37: #{dnet_forward.9} parent=31 // loop_footer
                %s221 = sadd.s32 1, %s217
              $region38: #{dnet_forward.9} parent=31 // loop_footer_branch
                %216 = sbr.rel target = $region34
              $region39: #{dnet_forward.9} parent=31 // loop_exit
                _
            $region32: #{dnet_forward.9} parent=27 // pred_fallthru
              _
            // Predicated region
            $region40: #{dnet_forward.9} parent=27 // pred_check
              _
            $region41: #{dnet_forward.9} parent=27 // pred_check_branch
              %481 = sbr.rel target = $region43
            $region42: #{dnet_forward.9} parent=27 // pred_region
              _
            $region43: #{dnet_forward.9} parent=27 // pred_fallthru
              _
          $region28: #{dnet_forward.9} parent=23 // pred_fallthru
            _
          %482 = vnop
        $region24: #{dnet_forward.9} parent=19 // pred_fallthru
          _
        // Predicated region
        $region44: #{dnet_forward.9} parent=19 // pred_check
          %p483 = pneg %p72
        $region45: #{dnet_forward.9} parent=19 // pred_check_branch
          %485 = sbr.rel (%p483) target = $region47
        $region46: #{dnet_forward.9} parent=19 // pred_region
          %s486 = smul.u32 64, %s20
          %p487 = scmp.lt.s32.totalorder %s486, 127
          %s488 = scalar_select %p487, %s486, 127
          %s489 = smul.addr %s488, 4
          %s490 = scalar_lea.vmem %s1, %s489
          %s491 = smul.u32 64, %s20
        $region47: #{dnet_forward.9} parent=19 // pred_fallthru
          _
      $region20: #{dnet_forward.9} parent=5 // pred_fallthru
        _
      %p492 = scmp.le.s32.totalorder 1, %s12
      %p493 = scmp.lt.s32.totalorder %s12, 3
      %p494 = pnand %p492, %p493
      %p495 = pneg %p494
      // Predicated region
      $region48: #{dnet_forward.9} parent=5 // pred_check
        _
      $region49: #{dnet_forward.9} parent=5 // pred_check_branch
        %497 = sbr.rel (%p494) target = $region51
      $region50: #{dnet_forward.9} parent=5 // pred_region
        %s498 = ssub.s32 %s12, 1
        %s499 = sand.u32 %s39, 1
        %s500 = sand.u32 %s39, 1
        %s501 = smul.addr %s500, 1024
        %s502 = scalar_lea.vmem [#allocation3], %s501
        // Predicated region
        $region52: #{dnet_forward.9} parent=50 // pred_check
          %p503 = pneg %p52
        $region53: #{dnet_forward.9} parent=50 // pred_check_branch
          %505 = sbr.rel (%p503) target = $region55
        $region54: #{dnet_forward.9} parent=50 // pred_region
          _
        $region55: #{dnet_forward.9} parent=50 // pred_fallthru
          _
        %s506 = sand.u32 %s39, 1
        %s507 = sand.u32 %s39, 1
        %s508 = smul.addr %s507, 1024
        %s509 = scalar_lea.vmem [#allocation3], %s508
        %p510 = pneg %p52
        %p511 = pneg %p49
        %s512 = smul.u32 64, %s22
        %p513 = scmp.lt.s32.totalorder %s512, 127
        %s514 = scalar_select %p513, %s512, 127
        %s515 = smul.addr %s514, 4
        %s516 = scalar_lea.vmem %s1, %s515
        %p517 = pneg %p78
        %p518 = pneg %p75
        %p519 = pneg %p99
        %p520 = pneg %p96
        %p521 = pneg %p125
        %p522 = pneg %p122
        %s523 = smul.u32 64, %s21
        %p524 = scmp.lt.s32.totalorder %s523, 63
        %s525 = scalar_select %p524, %s523, 63
        %s526 = smul.addr %s525, 8
        %s527 = scalar_lea.vmem %s3, %s526
        %p528 = pneg %p151
        %p529 = pneg %p148
        %p530 = scmp.lt.s32.totalorder %s21, 0
        %s531 = scalar_select %p530, %s21, 0
        %s532 = smul.addr %s531, 8
        %s533 = scalar_lea.vmem %s4, %s532
        %p534 = pneg %p177
        %p535 = pneg %p174
        %p536 = scmp.lt.s32.totalorder %s21, 0
        %s537 = scalar_select %p536, %s21, 0
        %s538 = smul.addr %s537, 8
        %s539 = scalar_lea.vmem %s5, %s538
        %s540 = smul.u32 64, %s21
        %s541 = smul.u32 4, %s22
        %s542 = smul.u32 64, %s22
        %p543 = scmp.lt.s32.totalorder %s542, 127
        %s544 = scalar_select %p543, %s542, 127
        %s545 = smul.addr %s544, 4
        %s546 = scalar_lea.vmem %s1, %s545
        %s547 = smul.u32 64, %s22
        %s548 = smul.u32 64, %s21
        %p549 = scmp.lt.s32.totalorder %s548, 63
        %s550 = scalar_select %p549, %s548, 63
        %s551 = smul.addr %s550, 8
        %s552 = scalar_lea.vmem %s3, %s551
        %s553 = smul.u32 64, %s21
        %p554 = scmp.lt.s32.totalorder %s21, 0
        %s555 = scalar_select %p554, %s21, 0
        %s556 = smul.addr %s555, 8
        %s557 = scalar_lea.vmem %s4, %s556
        %p558 = scmp.lt.s32.totalorder %s21, 0
        %s559 = scalar_select %p558, %s21, 0
        %s560 = smul.addr %s559, 8
        %s561 = scalar_lea.vmem %s5, %s560
        %p563 = scmp.eq.s32.totalorder %s22, 0
        // Predicated region
        $region56: #{dnet_forward.9} parent=50 // pred_check
          %p564 = pneg %p563
        $region57: #{dnet_forward.9} parent=50 // pred_check_branch
          %566 = sbr.rel (%p564) target = $region59
        $region58: #{dnet_forward.9} parent=50 // pred_region
          %567 = vst [vmem:[#allocation2] sm:$0xff] 0.0
          %568 = vst [vmem:[#allocation2 + $0x8] sm:$0xff] 0.0
          %569 = vst [vmem:[#allocation2 + $0x10] sm:$0xff] 0.0
          %570 = vst [vmem:[#allocation2 + $0x18] sm:$0xff] 0.0
          %571 = vst [vmem:[#allocation2 + $0x20] sm:$0xff] 0.0
          %572 = vst [vmem:[#allocation2 + $0x28] sm:$0xff] 0.0
          %573 = vst [vmem:[#allocation2 + $0x30] sm:$0xff] 0.0
          %574 = vst [vmem:[#allocation2 + $0x38] sm:$0xff] 0.0
          %575 = vst [vmem:[#allocation2 + $0x40] sm:$0xff] 0.0
          %576 = vst [vmem:[#allocation2 + $0x48] sm:$0xff] 0.0
          %577 = vst [vmem:[#allocation2 + $0x50] sm:$0xff] 0.0
          %578 = vst [vmem:[#allocation2 + $0x58] sm:$0xff] 0.0
          %579 = vst [vmem:[#allocation2 + $0x60] sm:$0xff] 0.0
          %580 = vst [vmem:[#allocation2 + $0x68] sm:$0xff] 0.0
          %581 = vst [vmem:[#allocation2 + $0x70] sm:$0xff] 0.0
          %582 = vst [vmem:[#allocation2 + $0x78] sm:$0xff] 0.0
          %583 = vst [vmem:[#allocation2 + $0x80] sm:$0xff] 0.0
          %584 = vst [vmem:[#allocation2 + $0x88] sm:$0xff] 0.0
          %585 = vst [vmem:[#allocation2 + $0x90] sm:$0xff] 0.0
          %586 = vst [vmem:[#allocation2 + $0x98] sm:$0xff] 0.0
          %587 = vst [vmem:[#allocation2 + $0xa0] sm:$0xff] 0.0
          %588 = vst [vmem:[#allocation2 + $0xa8] sm:$0xff] 0.0
          %589 = vst [vmem:[#allocation2 + $0xb0] sm:$0xff] 0.0
          %590 = vst [vmem:[#allocation2 + $0xb8] sm:$0xff] 0.0
          %591 = vst [vmem:[#allocation2 + $0xc0] sm:$0xff] 0.0
          %592 = vst [vmem:[#allocation2 + $0xc8] sm:$0xff] 0.0
          %593 = vst [vmem:[#allocation2 + $0xd0] sm:$0xff] 0.0
          %594 = vst [vmem:[#allocation2 + $0xd8] sm:$0xff] 0.0
          %595 = vst [vmem:[#allocation2 + $0xe0] sm:$0xff] 0.0
          %596 = vst [vmem:[#allocation2 + $0xe8] sm:$0xff] 0.0
          %597 = vst [vmem:[#allocation2 + $0xf0] sm:$0xff] 0.0
          %598 = vst [vmem:[#allocation2 + $0xf8] sm:$0xff] 0.0
          %599 = vst [vmem:[#allocation2 + $0x100] sm:$0xff] 0.0
          %600 = vst [vmem:[#allocation2 + $0x108] sm:$0xff] 0.0
          %601 = vst [vmem:[#allocation2 + $0x110] sm:$0xff] 0.0
          %602 = vst [vmem:[#allocation2 + $0x118] sm:$0xff] 0.0
          %603 = vst [vmem:[#allocation2 + $0x120] sm:$0xff] 0.0
          %604 = vst [vmem:[#allocation2 + $0x128] sm:$0xff] 0.0
          %605 = vst [vmem:[#allocation2 + $0x130] sm:$0xff] 0.0
          %606 = vst [vmem:[#allocation2 + $0x138] sm:$0xff] 0.0
          %607 = vst [vmem:[#allocation2 + $0x140] sm:$0xff] 0.0
          %608 = vst [vmem:[#allocation2 + $0x148] sm:$0xff] 0.0
          %609 = vst [vmem:[#allocation2 + $0x150] sm:$0xff] 0.0
          %610 = vst [vmem:[#allocation2 + $0x158] sm:$0xff] 0.0
          %611 = vst [vmem:[#allocation2 + $0x160] sm:$0xff] 0.0
          %612 = vst [vmem:[#allocation2 + $0x168] sm:$0xff] 0.0
          %613 = vst [vmem:[#allocation2 + $0x170] sm:$0xff] 0.0
          %614 = vst [vmem:[#allocation2 + $0x178] sm:$0xff] 0.0
          %615 = vst [vmem:[#allocation2 + $0x180] sm:$0xff] 0.0
          %616 = vst [vmem:[#allocation2 + $0x188] sm:$0xff] 0.0
          %617 = vst [vmem:[#allocation2 + $0x190] sm:$0xff] 0.0
          %618 = vst [vmem:[#allocation2 + $0x198] sm:$0xff] 0.0
          %619 = vst [vmem:[#allocation2 + $0x1a0] sm:$0xff] 0.0
          %620 = vst [vmem:[#allocation2 + $0x1a8] sm:$0xff] 0.0
          %621 = vst [vmem:[#allocation2 + $0x1b0] sm:$0xff] 0.0
          %622 = vst [vmem:[#allocation2 + $0x1b8] sm:$0xff] 0.0
          %623 = vst [vmem:[#allocation2 + $0x1c0] sm:$0xff] 0.0
          %624 = vst [vmem:[#allocation2 + $0x1c8] sm:$0xff] 0.0
          %625 = vst [vmem:[#allocation2 + $0x1d0] sm:$0xff] 0.0
          %626 = vst [vmem:[#allocation2 + $0x1d8] sm:$0xff] 0.0
          %627 = vst [vmem:[#allocation2 + $0x1e0] sm:$0xff] 0.0
          %628 = vst [vmem:[#allocation2 + $0x1e8] sm:$0xff] 0.0
          %629 = vst [vmem:[#allocation2 + $0x1f0] sm:$0xff] 0.0
          %630 = vst [vmem:[#allocation2 + $0x1f8] sm:$0xff] 0.0
        $region59: #{dnet_forward.9} parent=50 // pred_fallthru
          _
        %v631 = vld [vmem:[#allocation2] sm:$0xff]
        %v632 = vld [vmem:[#allocation2 + $0x8] sm:$0xff]
        %v633 = vld [vmem:[#allocation2 + $0x10] sm:$0xff]
        %v634 = vld [vmem:[#allocation2 + $0x18] sm:$0xff]
        %v635 = vld [vmem:[#allocation2 + $0x20] sm:$0xff]
        %v636 = vld [vmem:[#allocation2 + $0x28] sm:$0xff]
        %v637 = vld [vmem:[#allocation2 + $0x30] sm:$0xff]
        %v638 = vld [vmem:[#allocation2 + $0x38] sm:$0xff]
        %v639 = vld [vmem:[#allocation2 + $0x40] sm:$0xff]
        %v640 = vld [vmem:[#allocation2 + $0x48] sm:$0xff]
        %v641 = vld [vmem:[#allocation2 + $0x50] sm:$0xff]
        %v642 = vld [vmem:[#allocation2 + $0x58] sm:$0xff]
        %v643 = vld [vmem:[#allocation2 + $0x60] sm:$0xff]
        %v644 = vld [vmem:[#allocation2 + $0x68] sm:$0xff]
        %v645 = vld [vmem:[#allocation2 + $0x70] sm:$0xff]
        %v646 = vld [vmem:[#allocation2 + $0x78] sm:$0xff]
        %v647 = vld [vmem:[#allocation2 + $0x80] sm:$0xff]
        %v648 = vld [vmem:[#allocation2 + $0x88] sm:$0xff]
        %v649 = vld [vmem:[#allocation2 + $0x90] sm:$0xff]
        %v650 = vld [vmem:[#allocation2 + $0x98] sm:$0xff]
        %v651 = vld [vmem:[#allocation2 + $0xa0] sm:$0xff]
        %v652 = vld [vmem:[#allocation2 + $0xa8] sm:$0xff]
        %v653 = vld [vmem:[#allocation2 + $0xb0] sm:$0xff]
        %v654 = vld [vmem:[#allocation2 + $0xb8] sm:$0xff]
        %v655 = vld [vmem:[#allocation2 + $0xc0] sm:$0xff]
        %v656 = vld [vmem:[#allocation2 + $0xc8] sm:$0xff]
        %v657 = vld [vmem:[#allocation2 + $0xd0] sm:$0xff]
        %v658 = vld [vmem:[#allocation2 + $0xd8] sm:$0xff]
        %v659 = vld [vmem:[#allocation2 + $0xe0] sm:$0xff]
        %v660 = vld [vmem:[#allocation2 + $0xe8] sm:$0xff]
        %v661 = vld [vmem:[#allocation2 + $0xf0] sm:$0xff]
        %v662 = vld [vmem:[#allocation2 + $0xf8] sm:$0xff]
        %v663 = vld [vmem:[#allocation2 + $0x100] sm:$0xff]
        %v664 = vld [vmem:[#allocation2 + $0x108] sm:$0xff]
        %v665 = vld [vmem:[#allocation2 + $0x110] sm:$0xff]
        %v666 = vld [vmem:[#allocation2 + $0x118] sm:$0xff]
        %v667 = vld [vmem:[#allocation2 + $0x120] sm:$0xff]
        %v668 = vld [vmem:[#allocation2 + $0x128] sm:$0xff]
        %v669 = vld [vmem:[#allocation2 + $0x130] sm:$0xff]
        %v670 = vld [vmem:[#allocation2 + $0x138] sm:$0xff]
        %v671 = vld [vmem:[#allocation2 + $0x140] sm:$0xff]
        %v672 = vld [vmem:[#allocation2 + $0x148] sm:$0xff]
        %v673 = vld [vmem:[#allocation2 + $0x150] sm:$0xff]
        %v674 = vld [vmem:[#allocation2 + $0x158] sm:$0xff]
        %v675 = vld [vmem:[#allocation2 + $0x160] sm:$0xff]
        %v676 = vld [vmem:[#allocation2 + $0x168] sm:$0xff]
        %v677 = vld [vmem:[#allocation2 + $0x170] sm:$0xff]
        %v678 = vld [vmem:[#allocation2 + $0x178] sm:$0xff]
        %v679 = vld [vmem:[#allocation2 + $0x180] sm:$0xff]
        %v680 = vld [vmem:[#allocation2 + $0x188] sm:$0xff]
        %v681 = vld [vmem:[#allocation2 + $0x190] sm:$0xff]
        %v682 = vld [vmem:[#allocation2 + $0x198] sm:$0xff]
        %v683 = vld [vmem:[#allocation2 + $0x1a0] sm:$0xff]
        %v684 = vld [vmem:[#allocation2 + $0x1a8] sm:$0xff]
        %v685 = vld [vmem:[#allocation2 + $0x1b0] sm:$0xff]
        %v686 = vld [vmem:[#allocation2 + $0x1b8] sm:$0xff]
        %v687 = vld [vmem:[#allocation2 + $0x1c0] sm:$0xff]
        %v688 = vld [vmem:[#allocation2 + $0x1c8] sm:$0xff]
        %v689 = vld [vmem:[#allocation2 + $0x1d0] sm:$0xff]
        %v690 = vld [vmem:[#allocation2 + $0x1d8] sm:$0xff]
        %v691 = vld [vmem:[#allocation2 + $0x1e0] sm:$0xff]
        %v692 = vld [vmem:[#allocation2 + $0x1e8] sm:$0xff]
        %v693 = vld [vmem:[#allocation2 + $0x1f0] sm:$0xff]
        %v694 = vld [vmem:[#allocation2 + $0x1f8] sm:$0xff]
        %v695 = vld [vmem:[%s502] sm:$0xff]
        %v696 = vld [vmem:[%s502 + $0x8] sm:$0xff]
        %v697 = vld [vmem:[%s502 + $0x10] sm:$0xff]
        %v698 = vld [vmem:[%s502 + $0x18] sm:$0xff]
        %v699 = vld [vmem:[%s502 + $0x20] sm:$0xff]
        %v700 = vld [vmem:[%s502 + $0x28] sm:$0xff]
        %v701 = vld [vmem:[%s502 + $0x30] sm:$0xff]
        %v702 = vld [vmem:[%s502 + $0x38] sm:$0xff]
        %v703 = vld [vmem:[%s502 + $0x40] sm:$0xff]
        %v704 = vld [vmem:[%s502 + $0x48] sm:$0xff]
        %v705 = vld [vmem:[%s502 + $0x50] sm:$0xff]
        %v706 = vld [vmem:[%s502 + $0x58] sm:$0xff]
        %v707 = vld [vmem:[%s502 + $0x60] sm:$0xff]
        %v708 = vld [vmem:[%s502 + $0x68] sm:$0xff]
        %v709 = vld [vmem:[%s502 + $0x70] sm:$0xff]
        %v710 = vld [vmem:[%s502 + $0x78] sm:$0xff]
        %v711 = vld [vmem:[%s502 + $0x80] sm:$0xff]
        %v712 = vld [vmem:[%s502 + $0x88] sm:$0xff]
        %v713 = vld [vmem:[%s502 + $0x90] sm:$0xff]
        %v714 = vld [vmem:[%s502 + $0x98] sm:$0xff]
        %v715 = vld [vmem:[%s502 + $0xa0] sm:$0xff]
        %v716 = vld [vmem:[%s502 + $0xa8] sm:$0xff]
        %v717 = vld [vmem:[%s502 + $0xb0] sm:$0xff]
        %v718 = vld [vmem:[%s502 + $0xb8] sm:$0xff]
        %v719 = vld [vmem:[%s502 + $0xc0] sm:$0xff]
        %v720 = vld [vmem:[%s502 + $0xc8] sm:$0xff]
        %v721 = vld [vmem:[%s502 + $0xd0] sm:$0xff]
        %v722 = vld [vmem:[%s502 + $0xd8] sm:$0xff]
        %v723 = vld [vmem:[%s502 + $0xe0] sm:$0xff]
        %v724 = vld [vmem:[%s502 + $0xe8] sm:$0xff]
        %v725 = vld [vmem:[%s502 + $0xf0] sm:$0xff]
        %v726 = vld [vmem:[%s502 + $0xf8] sm:$0xff]
        %v727 = vld [vmem:[%s502 + $0x100] sm:$0xff]
        %v728 = vld [vmem:[%s502 + $0x108] sm:$0xff]
        %v729 = vld [vmem:[%s502 + $0x110] sm:$0xff]
        %v730 = vld [vmem:[%s502 + $0x118] sm:$0xff]
        %v731 = vld [vmem:[%s502 + $0x120] sm:$0xff]
        %v732 = vld [vmem:[%s502 + $0x128] sm:$0xff]
        %v733 = vld [vmem:[%s502 + $0x130] sm:$0xff]
        %v734 = vld [vmem:[%s502 + $0x138] sm:$0xff]
        %v735 = vld [vmem:[%s502 + $0x140] sm:$0xff]
        %v736 = vld [vmem:[%s502 + $0x148] sm:$0xff]
        %v737 = vld [vmem:[%s502 + $0x150] sm:$0xff]
        %v738 = vld [vmem:[%s502 + $0x158] sm:$0xff]
        %v739 = vld [vmem:[%s502 + $0x160] sm:$0xff]
        %v740 = vld [vmem:[%s502 + $0x168] sm:$0xff]
        %v741 = vld [vmem:[%s502 + $0x170] sm:$0xff]
        %v742 = vld [vmem:[%s502 + $0x178] sm:$0xff]
        %v743 = vld [vmem:[%s502 + $0x180] sm:$0xff]
        %v744 = vld [vmem:[%s502 + $0x188] sm:$0xff]
        %v745 = vld [vmem:[%s502 + $0x190] sm:$0xff]
        %v746 = vld [vmem:[%s502 + $0x198] sm:$0xff]
        %v747 = vld [vmem:[%s502 + $0x1a0] sm:$0xff]
        %v748 = vld [vmem:[%s502 + $0x1a8] sm:$0xff]
        %v749 = vld [vmem:[%s502 + $0x1b0] sm:$0xff]
        %v750 = vld [vmem:[%s502 + $0x1b8] sm:$0xff]
        %v751 = vld [vmem:[%s502 + $0x1c0] sm:$0xff]
        %v752 = vld [vmem:[%s502 + $0x1c8] sm:$0xff]
        %v753 = vld [vmem:[%s502 + $0x1d0] sm:$0xff]
        %v754 = vld [vmem:[%s502 + $0x1d8] sm:$0xff]
        %v755 = vld [vmem:[%s502 + $0x1e0] sm:$0xff]
        %v756 = vld [vmem:[%s502 + $0x1e8] sm:$0xff]
        %v757 = vld [vmem:[%s502 + $0x1f0] sm:$0xff]
        %v758 = vld [vmem:[%s502 + $0x1f8] sm:$0xff]
        %v759 = vld [vmem:[%s502 + $0x200] sm:$0xff]
        %v760 = vld [vmem:[%s502 + $0x208] sm:$0xff]
        %v761 = vld [vmem:[%s502 + $0x210] sm:$0xff]
        %v762 = vld [vmem:[%s502 + $0x218] sm:$0xff]
        %v763 = vld [vmem:[%s502 + $0x220] sm:$0xff]
        %v764 = vld [vmem:[%s502 + $0x228] sm:$0xff]
        %v765 = vld [vmem:[%s502 + $0x230] sm:$0xff]
        %v766 = vld [vmem:[%s502 + $0x238] sm:$0xff]
        %v767 = vld [vmem:[%s502 + $0x240] sm:$0xff]
        %v768 = vld [vmem:[%s502 + $0x248] sm:$0xff]
        %v769 = vld [vmem:[%s502 + $0x250] sm:$0xff]
        %v770 = vld [vmem:[%s502 + $0x258] sm:$0xff]
        %v771 = vld [vmem:[%s502 + $0x260] sm:$0xff]
        %v772 = vld [vmem:[%s502 + $0x268] sm:$0xff]
        %v773 = vld [vmem:[%s502 + $0x270] sm:$0xff]
        %v774 = vld [vmem:[%s502 + $0x278] sm:$0xff]
        %v775 = vld [vmem:[%s502 + $0x280] sm:$0xff]
        %v776 = vld [vmem:[%s502 + $0x288] sm:$0xff]
        %v777 = vld [vmem:[%s502 + $0x290] sm:$0xff]
        %v778 = vld [vmem:[%s502 + $0x298] sm:$0xff]
        %v779 = vld [vmem:[%s502 + $0x2a0] sm:$0xff]
        %v780 = vld [vmem:[%s502 + $0x2a8] sm:$0xff]
        %v781 = vld [vmem:[%s502 + $0x2b0] sm:$0xff]
        %v782 = vld [vmem:[%s502 + $0x2b8] sm:$0xff]
        %v783 = vld [vmem:[%s502 + $0x2c0] sm:$0xff]
        %v784 = vld [vmem:[%s502 + $0x2c8] sm:$0xff]
        %v785 = vld [vmem:[%s502 + $0x2d0] sm:$0xff]
        %v786 = vld [vmem:[%s502 + $0x2d8] sm:$0xff]
        %v787 = vld [vmem:[%s502 + $0x2e0] sm:$0xff]
        %v788 = vld [vmem:[%s502 + $0x2e8] sm:$0xff]
        %v789 = vld [vmem:[%s502 + $0x2f0] sm:$0xff]
        %v790 = vld [vmem:[%s502 + $0x2f8] sm:$0xff]
        %v791 = vld [vmem:[%s502 + $0x300] sm:$0xff]
        %v792 = vld [vmem:[%s502 + $0x308] sm:$0xff]
        %v793 = vld [vmem:[%s502 + $0x310] sm:$0xff]
        %v794 = vld [vmem:[%s502 + $0x318] sm:$0xff]
        %v795 = vld [vmem:[%s502 + $0x320] sm:$0xff]
        %v796 = vld [vmem:[%s502 + $0x328] sm:$0xff]
        %v797 = vld [vmem:[%s502 + $0x330] sm:$0xff]
        %v798 = vld [vmem:[%s502 + $0x338] sm:$0xff]
        %v799 = vld [vmem:[%s502 + $0x340] sm:$0xff]
        %v800 = vld [vmem:[%s502 + $0x348] sm:$0xff]
        %v801 = vld [vmem:[%s502 + $0x350] sm:$0xff]
        %v802 = vld [vmem:[%s502 + $0x358] sm:$0xff]
        %v803 = vld [vmem:[%s502 + $0x360] sm:$0xff]
        %v804 = vld [vmem:[%s502 + $0x368] sm:$0xff]
        %v805 = vld [vmem:[%s502 + $0x370] sm:$0xff]
        %v806 = vld [vmem:[%s502 + $0x378] sm:$0xff]
        %v807 = vld [vmem:[%s502 + $0x380] sm:$0xff]
        %v808 = vld [vmem:[%s502 + $0x388] sm:$0xff]
        %v809 = vld [vmem:[%s502 + $0x390] sm:$0xff]
        %v810 = vld [vmem:[%s502 + $0x398] sm:$0xff]
        %v811 = vld [vmem:[%s502 + $0x3a0] sm:$0xff]
        %v812 = vld [vmem:[%s502 + $0x3a8] sm:$0xff]
        %v813 = vld [vmem:[%s502 + $0x3b0] sm:$0xff]
        %v814 = vld [vmem:[%s502 + $0x3b8] sm:$0xff]
        %v815 = vld [vmem:[%s502 + $0x3c0] sm:$0xff]
        %v816 = vld [vmem:[%s502 + $0x3c8] sm:$0xff]
        %v817 = vld [vmem:[%s502 + $0x3d0] sm:$0xff]
        %v818 = vld [vmem:[%s502 + $0x3d8] sm:$0xff]
        %v819 = vld [vmem:[%s502 + $0x3e0] sm:$0xff]
        %v820 = vld [vmem:[%s502 + $0x3e8] sm:$0xff]
        %v821 = vld [vmem:[%s502 + $0x3f0] sm:$0xff]
        %v822 = vld [vmem:[%s502 + $0x3f8] sm:$0xff]
        %v823 = vld [vmem:[%s546] sm:$0xf]
        %v824 = vld [vmem:[%s546 + $0x4] sm:$0xf]
        %v825 = vld [vmem:[%s546 + $0x8] sm:$0xf]
        %v826 = vld [vmem:[%s546 + $0xc] sm:$0xf]
        %v827 = vld [vmem:[%s546 + $0x10] sm:$0xf]
        %v828 = vld [vmem:[%s546 + $0x14] sm:$0xf]
        %v829 = vld [vmem:[%s546 + $0x18] sm:$0xf]
        %v830 = vld [vmem:[%s546 + $0x1c] sm:$0xf]
        %v831 = vld [vmem:[%s546 + $0x20] sm:$0xf]
        %v832 = vld [vmem:[%s546 + $0x24] sm:$0xf]
        %v833 = vld [vmem:[%s546 + $0x28] sm:$0xf]
        %v834 = vld [vmem:[%s546 + $0x2c] sm:$0xf]
        %v835 = vld [vmem:[%s546 + $0x30] sm:$0xf]
        %v836 = vld [vmem:[%s546 + $0x34] sm:$0xf]
        %v837 = vld [vmem:[%s546 + $0x38] sm:$0xf]
        %v838 = vld [vmem:[%s546 + $0x3c] sm:$0xf]
        %v839 = vld [vmem:[%s546 + $0x40] sm:$0xf]
        %v840 = vld [vmem:[%s546 + $0x44] sm:$0xf]
        %v841 = vld [vmem:[%s546 + $0x48] sm:$0xf]
        %v842 = vld [vmem:[%s546 + $0x4c] sm:$0xf]
        %v843 = vld [vmem:[%s546 + $0x50] sm:$0xf]
        %v844 = vld [vmem:[%s546 + $0x54] sm:$0xf]
        %v845 = vld [vmem:[%s546 + $0x58] sm:$0xf]
        %v846 = vld [vmem:[%s546 + $0x5c] sm:$0xf]
        %v847 = vld [vmem:[%s546 + $0x60] sm:$0xf]
        %v848 = vld [vmem:[%s546 + $0x64] sm:$0xf]
        %v849 = vld [vmem:[%s546 + $0x68] sm:$0xf]
        %v850 = vld [vmem:[%s546 + $0x6c] sm:$0xf]
        %v851 = vld [vmem:[%s546 + $0x70] sm:$0xf]
        %v852 = vld [vmem:[%s546 + $0x74] sm:$0xf]
        %v853 = vld [vmem:[%s546 + $0x78] sm:$0xf]
        %v854 = vld [vmem:[%s546 + $0x7c] sm:$0xf]
        %v855 = vld [vmem:[%s546 + $0x80] sm:$0xf]
        %v856 = vld [vmem:[%s546 + $0x84] sm:$0xf]
        %v857 = vld [vmem:[%s546 + $0x88] sm:$0xf]
        %v858 = vld [vmem:[%s546 + $0x8c] sm:$0xf]
        %v859 = vld [vmem:[%s546 + $0x90] sm:$0xf]
        %v860 = vld [vmem:[%s546 + $0x94] sm:$0xf]
        %v861 = vld [vmem:[%s546 + $0x98] sm:$0xf]
        %v862 = vld [vmem:[%s546 + $0x9c] sm:$0xf]
        %v863 = vld [vmem:[%s546 + $0xa0] sm:$0xf]
        %v864 = vld [vmem:[%s546 + $0xa4] sm:$0xf]
        %v865 = vld [vmem:[%s546 + $0xa8] sm:$0xf]
        %v866 = vld [vmem:[%s546 + $0xac] sm:$0xf]
        %v867 = vld [vmem:[%s546 + $0xb0] sm:$0xf]
        %v868 = vld [vmem:[%s546 + $0xb4] sm:$0xf]
        %v869 = vld [vmem:[%s546 + $0xb8] sm:$0xf]
        %v870 = vld [vmem:[%s546 + $0xbc] sm:$0xf]
        %v871 = vld [vmem:[%s546 + $0xc0] sm:$0xf]
        %v872 = vld [vmem:[%s546 + $0xc4] sm:$0xf]
        %v873 = vld [vmem:[%s546 + $0xc8] sm:$0xf]
        %v874 = vld [vmem:[%s546 + $0xcc] sm:$0xf]
        %v875 = vld [vmem:[%s546 + $0xd0] sm:$0xf]
        %v876 = vld [vmem:[%s546 + $0xd4] sm:$0xf]
        %v877 = vld [vmem:[%s546 + $0xd8] sm:$0xf]
        %v878 = vld [vmem:[%s546 + $0xdc] sm:$0xf]
        %v879 = vld [vmem:[%s546 + $0xe0] sm:$0xf]
        %v880 = vld [vmem:[%s546 + $0xe4] sm:$0xf]
        %v881 = vld [vmem:[%s546 + $0xe8] sm:$0xf]
        %v882 = vld [vmem:[%s546 + $0xec] sm:$0xf]
        %v883 = vld [vmem:[%s546 + $0xf0] sm:$0xf]
        %v884 = vld [vmem:[%s546 + $0xf4] sm:$0xf]
        %v885 = vld [vmem:[%s546 + $0xf8] sm:$0xf]
        %v886 = vld [vmem:[%s546 + $0xfc] sm:$0xf]
        %v1015 = vunpack.c.l.b16 %v695
        %v1016 = vunpack.c.h.b16 %v695
        %v1017 = vunpack.c.l.b16 %v696
        %v1018 = vunpack.c.h.b16 %v696
        %v1019 = vunpack.c.l.b16 %v697
        %v1020 = vunpack.c.h.b16 %v697
        %v1021 = vunpack.c.l.b16 %v698
        %v1022 = vunpack.c.h.b16 %v698
        %v1023 = vunpack.c.l.b16 %v699
        %v1024 = vunpack.c.h.b16 %v699
        %v1025 = vunpack.c.l.b16 %v700
        %v1026 = vunpack.c.h.b16 %v700
        %v1027 = vunpack.c.l.b16 %v701
        %v1028 = vunpack.c.h.b16 %v701
        %v1029 = vunpack.c.l.b16 %v702
        %v1030 = vunpack.c.h.b16 %v702
        %v1031 = vunpack.c.l.b16 %v703
        %v1032 = vunpack.c.h.b16 %v703
        %v1033 = vunpack.c.l.b16 %v704
        %v1034 = vunpack.c.h.b16 %v704
        %v1035 = vunpack.c.l.b16 %v705
        %v1036 = vunpack.c.h.b16 %v705
        %v1037 = vunpack.c.l.b16 %v706
        %v1038 = vunpack.c.h.b16 %v706
        %v1039 = vunpack.c.l.b16 %v707
        %v1040 = vunpack.c.h.b16 %v707
        %v1041 = vunpack.c.l.b16 %v708
        %v1042 = vunpack.c.h.b16 %v708
        %v1043 = vunpack.c.l.b16 %v709
        %v1044 = vunpack.c.h.b16 %v709
        %v1045 = vunpack.c.l.b16 %v710
        %v1046 = vunpack.c.h.b16 %v710
        %v1047 = vunpack.c.l.b16 %v711
        %v1048 = vunpack.c.h.b16 %v711
        %v1049 = vunpack.c.l.b16 %v712
        %v1050 = vunpack.c.h.b16 %v712
        %v1051 = vunpack.c.l.b16 %v713
        %v1052 = vunpack.c.h.b16 %v713
        %v1053 = vunpack.c.l.b16 %v714
        %v1054 = vunpack.c.h.b16 %v714
        %v1055 = vunpack.c.l.b16 %v715
        %v1056 = vunpack.c.h.b16 %v715
        %v1057 = vunpack.c.l.b16 %v716
        %v1058 = vunpack.c.h.b16 %v716
        %v1059 = vunpack.c.l.b16 %v717
        %v1060 = vunpack.c.h.b16 %v717
        %v1061 = vunpack.c.l.b16 %v718
        %v1062 = vunpack.c.h.b16 %v718
        %v1063 = vunpack.c.l.b16 %v719
        %v1064 = vunpack.c.h.b16 %v719
        %v1065 = vunpack.c.l.b16 %v720
        %v1066 = vunpack.c.h.b16 %v720
        %v1067 = vunpack.c.l.b16 %v721
        %v1068 = vunpack.c.h.b16 %v721
        %v1069 = vunpack.c.l.b16 %v722
        %v1070 = vunpack.c.h.b16 %v722
        %v1071 = vunpack.c.l.b16 %v723
        %v1072 = vunpack.c.h.b16 %v723
        %v1073 = vunpack.c.l.b16 %v724
        %v1074 = vunpack.c.h.b16 %v724
        %v1075 = vunpack.c.l.b16 %v725
        %v1076 = vunpack.c.h.b16 %v725
        %v1077 = vunpack.c.l.b16 %v726
        %v1078 = vunpack.c.h.b16 %v726
        %v1079 = vunpack.c.l.b16 %v727
        %v1080 = vunpack.c.h.b16 %v727
        %v1081 = vunpack.c.l.b16 %v728
        %v1082 = vunpack.c.h.b16 %v728
        %v1083 = vunpack.c.l.b16 %v729
        %v1084 = vunpack.c.h.b16 %v729
        %v1085 = vunpack.c.l.b16 %v730
        %v1086 = vunpack.c.h.b16 %v730
        %v1087 = vunpack.c.l.b16 %v731
        %v1088 = vunpack.c.h.b16 %v731
        %v1089 = vunpack.c.l.b16 %v732
        %v1090 = vunpack.c.h.b16 %v732
        %v1091 = vunpack.c.l.b16 %v733
        %v1092 = vunpack.c.h.b16 %v733
        %v1093 = vunpack.c.l.b16 %v734
        %v1094 = vunpack.c.h.b16 %v734
        %v1095 = vunpack.c.l.b16 %v735
        %v1096 = vunpack.c.h.b16 %v735
        %v1097 = vunpack.c.l.b16 %v736
        %v1098 = vunpack.c.h.b16 %v736
        %v1099 = vunpack.c.l.b16 %v737
        %v1100 = vunpack.c.h.b16 %v737
        %v1101 = vunpack.c.l.b16 %v738
        %v1102 = vunpack.c.h.b16 %v738
        %v1103 = vunpack.c.l.b16 %v739
        %v1104 = vunpack.c.h.b16 %v739
        %v1105 = vunpack.c.l.b16 %v740
        %v1106 = vunpack.c.h.b16 %v740
        %v1107 = vunpack.c.l.b16 %v741
        %v1108 = vunpack.c.h.b16 %v741
        %v1109 = vunpack.c.l.b16 %v742
        %v1110 = vunpack.c.h.b16 %v742
        %v1111 = vunpack.c.l.b16 %v743
        %v1112 = vunpack.c.h.b16 %v743
        %v1113 = vunpack.c.l.b16 %v744
        %v1114 = vunpack.c.h.b16 %v744
        %v1115 = vunpack.c.l.b16 %v745
        %v1116 = vunpack.c.h.b16 %v745
        %v1117 = vunpack.c.l.b16 %v746
        %v1118 = vunpack.c.h.b16 %v746
        %v1119 = vunpack.c.l.b16 %v747
        %v1120 = vunpack.c.h.b16 %v747
        %v1121 = vunpack.c.l.b16 %v748
        %v1122 = vunpack.c.h.b16 %v748
        %v1123 = vunpack.c.l.b16 %v749
        %v1124 = vunpack.c.h.b16 %v749
        %v1125 = vunpack.c.l.b16 %v750
        %v1126 = vunpack.c.h.b16 %v750
        %v1127 = vunpack.c.l.b16 %v751
        %v1128 = vunpack.c.h.b16 %v751
        %v1129 = vunpack.c.l.b16 %v752
        %v1130 = vunpack.c.h.b16 %v752
        %v1131 = vunpack.c.l.b16 %v753
        %v1132 = vunpack.c.h.b16 %v753
        %v1133 = vunpack.c.l.b16 %v754
        %v1134 = vunpack.c.h.b16 %v754
        %v1135 = vunpack.c.l.b16 %v755
        %v1136 = vunpack.c.h.b16 %v755
        %v1137 = vunpack.c.l.b16 %v756
        %v1138 = vunpack.c.h.b16 %v756
        %v1139 = vunpack.c.l.b16 %v757
        %v1140 = vunpack.c.h.b16 %v757
        %v1141 = vunpack.c.l.b16 %v758
        %v1142 = vunpack.c.h.b16 %v758
        %v1143 = vunpack.c.l.b16 %v759
        %v1144 = vunpack.c.h.b16 %v759
        %v1145 = vunpack.c.l.b16 %v760
        %v1146 = vunpack.c.h.b16 %v760
        %v1147 = vunpack.c.l.b16 %v761
        %v1148 = vunpack.c.h.b16 %v761
        %v1149 = vunpack.c.l.b16 %v762
        %v1150 = vunpack.c.h.b16 %v762
        %v1151 = vunpack.c.l.b16 %v763
        %v1152 = vunpack.c.h.b16 %v763
        %v1153 = vunpack.c.l.b16 %v764
        %v1154 = vunpack.c.h.b16 %v764
        %v1155 = vunpack.c.l.b16 %v765
        %v1156 = vunpack.c.h.b16 %v765
        %v1157 = vunpack.c.l.b16 %v766
        %v1158 = vunpack.c.h.b16 %v766
        %v1159 = vunpack.c.l.b16 %v767
        %v1160 = vunpack.c.h.b16 %v767
        %v1161 = vunpack.c.l.b16 %v768
        %v1162 = vunpack.c.h.b16 %v768
        %v1163 = vunpack.c.l.b16 %v769
        %v1164 = vunpack.c.h.b16 %v769
        %v1165 = vunpack.c.l.b16 %v770
        %v1166 = vunpack.c.h.b16 %v770
        %v1167 = vunpack.c.l.b16 %v771
        %v1168 = vunpack.c.h.b16 %v771
        %v1169 = vunpack.c.l.b16 %v772
        %v1170 = vunpack.c.h.b16 %v772
        %v1171 = vunpack.c.l.b16 %v773
        %v1172 = vunpack.c.h.b16 %v773
        %v1173 = vunpack.c.l.b16 %v774
        %v1174 = vunpack.c.h.b16 %v774
        %v1175 = vunpack.c.l.b16 %v775
        %v1176 = vunpack.c.h.b16 %v775
        %v1177 = vunpack.c.l.b16 %v776
        %v1178 = vunpack.c.h.b16 %v776
        %v1179 = vunpack.c.l.b16 %v777
        %v1180 = vunpack.c.h.b16 %v777
        %v1181 = vunpack.c.l.b16 %v778
        %v1182 = vunpack.c.h.b16 %v778
        %v1183 = vunpack.c.l.b16 %v779
        %v1184 = vunpack.c.h.b16 %v779
        %v1185 = vunpack.c.l.b16 %v780
        %v1186 = vunpack.c.h.b16 %v780
        %v1187 = vunpack.c.l.b16 %v781
        %v1188 = vunpack.c.h.b16 %v781
        %v1189 = vunpack.c.l.b16 %v782
        %v1190 = vunpack.c.h.b16 %v782
        %v1191 = vunpack.c.l.b16 %v783
        %v1192 = vunpack.c.h.b16 %v783
        %v1193 = vunpack.c.l.b16 %v784
        %v1194 = vunpack.c.h.b16 %v784
        %v1195 = vunpack.c.l.b16 %v785
        %v1196 = vunpack.c.h.b16 %v785
        %v1197 = vunpack.c.l.b16 %v786
        %v1198 = vunpack.c.h.b16 %v786
        %v1199 = vunpack.c.l.b16 %v787
        %v1200 = vunpack.c.h.b16 %v787
        %v1201 = vunpack.c.l.b16 %v788
        %v1202 = vunpack.c.h.b16 %v788
        %v1203 = vunpack.c.l.b16 %v789
        %v1204 = vunpack.c.h.b16 %v789
        %v1205 = vunpack.c.l.b16 %v790
        %v1206 = vunpack.c.h.b16 %v790
        %v1207 = vunpack.c.l.b16 %v791
        %v1208 = vunpack.c.h.b16 %v791
        %v1209 = vunpack.c.l.b16 %v792
        %v1210 = vunpack.c.h.b16 %v792
        %v1211 = vunpack.c.l.b16 %v793
        %v1212 = vunpack.c.h.b16 %v793
        %v1213 = vunpack.c.l.b16 %v794
        %v1214 = vunpack.c.h.b16 %v794
        %v1215 = vunpack.c.l.b16 %v795
        %v1216 = vunpack.c.h.b16 %v795
        %v1217 = vunpack.c.l.b16 %v796
        %v1218 = vunpack.c.h.b16 %v796
        %v1219 = vunpack.c.l.b16 %v797
        %v1220 = vunpack.c.h.b16 %v797
        %v1221 = vunpack.c.l.b16 %v798
        %v1222 = vunpack.c.h.b16 %v798
        %v1223 = vunpack.c.l.b16 %v799
        %v1224 = vunpack.c.h.b16 %v799
        %v1225 = vunpack.c.l.b16 %v800
        %v1226 = vunpack.c.h.b16 %v800
        %v1227 = vunpack.c.l.b16 %v801
        %v1228 = vunpack.c.h.b16 %v801
        %v1229 = vunpack.c.l.b16 %v802
        %v1230 = vunpack.c.h.b16 %v802
        %v1231 = vunpack.c.l.b16 %v803
        %v1232 = vunpack.c.h.b16 %v803
        %v1233 = vunpack.c.l.b16 %v804
        %v1234 = vunpack.c.h.b16 %v804
        %v1235 = vunpack.c.l.b16 %v805
        %v1236 = vunpack.c.h.b16 %v805
        %v1237 = vunpack.c.l.b16 %v806
        %v1238 = vunpack.c.h.b16 %v806
        %v1239 = vunpack.c.l.b16 %v807
        %v1240 = vunpack.c.h.b16 %v807
        %v1241 = vunpack.c.l.b16 %v808
        %v1242 = vunpack.c.h.b16 %v808
        %v1243 = vunpack.c.l.b16 %v809
        %v1244 = vunpack.c.h.b16 %v809
        %v1245 = vunpack.c.l.b16 %v810
        %v1246 = vunpack.c.h.b16 %v810
        %v1247 = vunpack.c.l.b16 %v811
        %v1248 = vunpack.c.h.b16 %v811
        %v1249 = vunpack.c.l.b16 %v812
        %v1250 = vunpack.c.h.b16 %v812
        %v1251 = vunpack.c.l.b16 %v813
        %v1252 = vunpack.c.h.b16 %v813
        %v1253 = vunpack.c.l.b16 %v814
        %v1254 = vunpack.c.h.b16 %v814
        %v1255 = vunpack.c.l.b16 %v815
        %v1256 = vunpack.c.h.b16 %v815
        %v1257 = vunpack.c.l.b16 %v816
        %v1258 = vunpack.c.h.b16 %v816
        %v1259 = vunpack.c.l.b16 %v817
        %v1260 = vunpack.c.h.b16 %v817
        %v1261 = vunpack.c.l.b16 %v818
        %v1262 = vunpack.c.h.b16 %v818
        %v1263 = vunpack.c.l.b16 %v819
        %v1264 = vunpack.c.h.b16 %v819
        %v1265 = vunpack.c.l.b16 %v820
        %v1266 = vunpack.c.h.b16 %v820
        %v1267 = vunpack.c.l.b16 %v821
        %v1268 = vunpack.c.h.b16 %v821
        %v1269 = vunpack.c.l.b16 %v822
        %v1270 = vunpack.c.h.b16 %v822
        %v1271 = vpack.c.b16 %v1019, %v1015
        %v1272 = vpack.c.b16 %v1020, %v1016
        %v1273 = vpack.c.b16 %v1021, %v1017
        %v1274 = vpack.c.b16 %v1022, %v1018
        %v1275 = vpack.c.b16 %v1027, %v1023
        %v1276 = vpack.c.b16 %v1028, %v1024
        %v1277 = vpack.c.b16 %v1029, %v1025
        %v1278 = vpack.c.b16 %v1030, %v1026
        %v1279 = vpack.c.b16 %v1035, %v1031
        %v1280 = vpack.c.b16 %v1036, %v1032
        %v1281 = vpack.c.b16 %v1037, %v1033
        %v1282 = vpack.c.b16 %v1038, %v1034
        %v1283 = vpack.c.b16 %v1043, %v1039
        %v1284 = vpack.c.b16 %v1044, %v1040
        %v1285 = vpack.c.b16 %v1045, %v1041
        %v1286 = vpack.c.b16 %v1046, %v1042
        %v1287 = vpack.c.b16 %v1051, %v1047
        %v1288 = vpack.c.b16 %v1052, %v1048
        %v1289 = vpack.c.b16 %v1053, %v1049
        %v1290 = vpack.c.b16 %v1054, %v1050
        %v1291 = vpack.c.b16 %v1059, %v1055
        %v1292 = vpack.c.b16 %v1060, %v1056
        %v1293 = vpack.c.b16 %v1061, %v1057
        %v1294 = vpack.c.b16 %v1062, %v1058
        %v1295 = vpack.c.b16 %v1067, %v1063
        %v1296 = vpack.c.b16 %v1068, %v1064
        %v1297 = vpack.c.b16 %v1069, %v1065
        %v1298 = vpack.c.b16 %v1070, %v1066
        %v1299 = vpack.c.b16 %v1075, %v1071
        %v1300 = vpack.c.b16 %v1076, %v1072
        %v1301 = vpack.c.b16 %v1077, %v1073
        %v1302 = vpack.c.b16 %v1078, %v1074
        %v1303 = vpack.c.b16 %v1083, %v1079
        %v1304 = vpack.c.b16 %v1084, %v1080
        %v1305 = vpack.c.b16 %v1085, %v1081
        %v1306 = vpack.c.b16 %v1086, %v1082
        %v1307 = vpack.c.b16 %v1091, %v1087
        %v1308 = vpack.c.b16 %v1092, %v1088
        %v1309 = vpack.c.b16 %v1093, %v1089
        %v1310 = vpack.c.b16 %v1094, %v1090
        %v1311 = vpack.c.b16 %v1099, %v1095
        %v1312 = vpack.c.b16 %v1100, %v1096
        %v1313 = vpack.c.b16 %v1101, %v1097
        %v1314 = vpack.c.b16 %v1102, %v1098
        %v1315 = vpack.c.b16 %v1107, %v1103
        %v1316 = vpack.c.b16 %v1108, %v1104
        %v1317 = vpack.c.b16 %v1109, %v1105
        %v1318 = vpack.c.b16 %v1110, %v1106
        %v1319 = vpack.c.b16 %v1115, %v1111
        %v1320 = vpack.c.b16 %v1116, %v1112
        %v1321 = vpack.c.b16 %v1117, %v1113
        %v1322 = vpack.c.b16 %v1118, %v1114
        %v1323 = vpack.c.b16 %v1123, %v1119
        %v1324 = vpack.c.b16 %v1124, %v1120
        %v1325 = vpack.c.b16 %v1125, %v1121
        %v1326 = vpack.c.b16 %v1126, %v1122
        %v1327 = vpack.c.b16 %v1131, %v1127
        %v1328 = vpack.c.b16 %v1132, %v1128
        %v1329 = vpack.c.b16 %v1133, %v1129
        %v1330 = vpack.c.b16 %v1134, %v1130
        %v1331 = vpack.c.b16 %v1139, %v1135
        %v1332 = vpack.c.b16 %v1140, %v1136
        %v1333 = vpack.c.b16 %v1141, %v1137
        %v1334 = vpack.c.b16 %v1142, %v1138
        %v1335 = vpack.c.b16 %v1147, %v1143
        %v1336 = vpack.c.b16 %v1148, %v1144
        %v1337 = vpack.c.b16 %v1149, %v1145
        %v1338 = vpack.c.b16 %v1150, %v1146
        %v1339 = vpack.c.b16 %v1155, %v1151
        %v1340 = vpack.c.b16 %v1156, %v1152
        %v1341 = vpack.c.b16 %v1157, %v1153
        %v1342 = vpack.c.b16 %v1158, %v1154
        %v1343 = vpack.c.b16 %v1163, %v1159
        %v1344 = vpack.c.b16 %v1164, %v1160
        %v1345 = vpack.c.b16 %v1165, %v1161
        %v1346 = vpack.c.b16 %v1166, %v1162
        %v1347 = vpack.c.b16 %v1171, %v1167
        %v1348 = vpack.c.b16 %v1172, %v1168
        %v1349 = vpack.c.b16 %v1173, %v1169
        %v1350 = vpack.c.b16 %v1174, %v1170
        %v1351 = vpack.c.b16 %v1179, %v1175
        %v1352 = vpack.c.b16 %v1180, %v1176
        %v1353 = vpack.c.b16 %v1181, %v1177
        %v1354 = vpack.c.b16 %v1182, %v1178
        %v1355 = vpack.c.b16 %v1187, %v1183
        %v1356 = vpack.c.b16 %v1188, %v1184
        %v1357 = vpack.c.b16 %v1189, %v1185
        %v1358 = vpack.c.b16 %v1190, %v1186
        %v1359 = vpack.c.b16 %v1195, %v1191
        %v1360 = vpack.c.b16 %v1196, %v1192
        %v1361 = vpack.c.b16 %v1197, %v1193
        %v1362 = vpack.c.b16 %v1198, %v1194
        %v1363 = vpack.c.b16 %v1203, %v1199
        %v1364 = vpack.c.b16 %v1204, %v1200
        %v1365 = vpack.c.b16 %v1205, %v1201
        %v1366 = vpack.c.b16 %v1206, %v1202
        %v1367 = vpack.c.b16 %v1211, %v1207
        %v1368 = vpack.c.b16 %v1212, %v1208
        %v1369 = vpack.c.b16 %v1213, %v1209
        %v1370 = vpack.c.b16 %v1214, %v1210
        %v1371 = vpack.c.b16 %v1219, %v1215
        %v1372 = vpack.c.b16 %v1220, %v1216
        %v1373 = vpack.c.b16 %v1221, %v1217
        %v1374 = vpack.c.b16 %v1222, %v1218
        %v1375 = vpack.c.b16 %v1227, %v1223
        %v1376 = vpack.c.b16 %v1228, %v1224
        %v1377 = vpack.c.b16 %v1229, %v1225
        %v1378 = vpack.c.b16 %v1230, %v1226
        %v1379 = vpack.c.b16 %v1235, %v1231
        %v1380 = vpack.c.b16 %v1236, %v1232
        %v1381 = vpack.c.b16 %v1237, %v1233
        %v1382 = vpack.c.b16 %v1238, %v1234
        %v1383 = vpack.c.b16 %v1243, %v1239
        %v1384 = vpack.c.b16 %v1244, %v1240
        %v1385 = vpack.c.b16 %v1245, %v1241
        %v1386 = vpack.c.b16 %v1246, %v1242
        %v1387 = vpack.c.b16 %v1251, %v1247
        %v1388 = vpack.c.b16 %v1252, %v1248
        %v1389 = vpack.c.b16 %v1253, %v1249
        %v1390 = vpack.c.b16 %v1254, %v1250
        %v1391 = vpack.c.b16 %v1259, %v1255
        %v1392 = vpack.c.b16 %v1260, %v1256
        %v1393 = vpack.c.b16 %v1261, %v1257
        %v1394 = vpack.c.b16 %v1262, %v1258
        %v1395 = vpack.c.b16 %v1267, %v1263
        %v1396 = vpack.c.b16 %v1268, %v1264
        %v1397 = vpack.c.b16 %v1269, %v1265
        %v1398 = vpack.c.b16 %v1270, %v1266
        %v1591 = vunpack.c.l.b16 %v823
        %v1592 = vunpack.c.l.b16 %v824
        %v1593 = vunpack.c.l.b16 %v825
        %v1594 = vunpack.c.l.b16 %v826
        %v1595 = vunpack.c.l.b16 %v827
        %v1596 = vunpack.c.l.b16 %v828
        %v1597 = vunpack.c.l.b16 %v829
        %v1598 = vunpack.c.l.b16 %v830
        %v1599 = vunpack.c.l.b16 %v831
        %v1600 = vunpack.c.l.b16 %v832
        %v1601 = vunpack.c.l.b16 %v833
        %v1602 = vunpack.c.l.b16 %v834
        %v1603 = vunpack.c.l.b16 %v835
        %v1604 = vunpack.c.l.b16 %v836
        %v1605 = vunpack.c.l.b16 %v837
        %v1606 = vunpack.c.l.b16 %v838
        %v1607 = vunpack.c.l.b16 %v839
        %v1608 = vunpack.c.l.b16 %v840
        %v1609 = vunpack.c.l.b16 %v841
        %v1610 = vunpack.c.l.b16 %v842
        %v1611 = vunpack.c.l.b16 %v843
        %v1612 = vunpack.c.l.b16 %v844
        %v1613 = vunpack.c.l.b16 %v845
        %v1614 = vunpack.c.l.b16 %v846
        %v1615 = vunpack.c.l.b16 %v847
        %v1616 = vunpack.c.l.b16 %v848
        %v1617 = vunpack.c.l.b16 %v849
        %v1618 = vunpack.c.l.b16 %v850
        %v1619 = vunpack.c.l.b16 %v851
        %v1620 = vunpack.c.l.b16 %v852
        %v1621 = vunpack.c.l.b16 %v853
        %v1622 = vunpack.c.l.b16 %v854
        %v1623 = vunpack.c.l.b16 %v855
        %v1624 = vunpack.c.l.b16 %v856
        %v1625 = vunpack.c.l.b16 %v857
        %v1626 = vunpack.c.l.b16 %v858
        %v1627 = vunpack.c.l.b16 %v859
        %v1628 = vunpack.c.l.b16 %v860
        %v1629 = vunpack.c.l.b16 %v861
        %v1630 = vunpack.c.l.b16 %v862
        %v1631 = vunpack.c.l.b16 %v863
        %v1632 = vunpack.c.l.b16 %v864
        %v1633 = vunpack.c.l.b16 %v865
        %v1634 = vunpack.c.l.b16 %v866
        %v1635 = vunpack.c.l.b16 %v867
        %v1636 = vunpack.c.l.b16 %v868
        %v1637 = vunpack.c.l.b16 %v869
        %v1638 = vunpack.c.l.b16 %v870
        %v1639 = vunpack.c.l.b16 %v871
        %v1640 = vunpack.c.l.b16 %v872
        %v1641 = vunpack.c.l.b16 %v873
        %v1642 = vunpack.c.l.b16 %v874
        %v1643 = vunpack.c.l.b16 %v875
        %v1644 = vunpack.c.l.b16 %v876
        %v1645 = vunpack.c.l.b16 %v877
        %v1646 = vunpack.c.l.b16 %v878
        %v1647 = vunpack.c.l.b16 %v879
        %v1648 = vunpack.c.l.b16 %v880
        %v1649 = vunpack.c.l.b16 %v881
        %v1650 = vunpack.c.l.b16 %v882
        %v1651 = vunpack.c.l.b16 %v883
        %v1652 = vunpack.c.l.b16 %v884
        %v1653 = vunpack.c.l.b16 %v885
        %v1654 = vunpack.c.l.b16 %v886
        %v1655 = vpack.c.b16 %v1592, %v1591
        %v1656 = vpack.c.b16 %v1594, %v1593
        %v1657 = vpack.c.b16 %v1596, %v1595
        %v1658 = vpack.c.b16 %v1598, %v1597
        %v1659 = vpack.c.b16 %v1600, %v1599
        %v1660 = vpack.c.b16 %v1602, %v1601
        %v1661 = vpack.c.b16 %v1604, %v1603
        %v1662 = vpack.c.b16 %v1606, %v1605
        %v1663 = vpack.c.b16 %v1608, %v1607
        %v1664 = vpack.c.b16 %v1610, %v1609
        %v1665 = vpack.c.b16 %v1612, %v1611
        %v1666 = vpack.c.b16 %v1614, %v1613
        %v1667 = vpack.c.b16 %v1616, %v1615
        %v1668 = vpack.c.b16 %v1618, %v1617
        %v1669 = vpack.c.b16 %v1620, %v1619
        %v1670 = vpack.c.b16 %v1622, %v1621
        %v1671 = vpack.c.b16 %v1624, %v1623
        %v1672 = vpack.c.b16 %v1626, %v1625
        %v1673 = vpack.c.b16 %v1628, %v1627
        %v1674 = vpack.c.b16 %v1630, %v1629
        %v1675 = vpack.c.b16 %v1632, %v1631
        %v1676 = vpack.c.b16 %v1634, %v1633
        %v1677 = vpack.c.b16 %v1636, %v1635
        %v1678 = vpack.c.b16 %v1638, %v1637
        %v1679 = vpack.c.b16 %v1640, %v1639
        %v1680 = vpack.c.b16 %v1642, %v1641
        %v1681 = vpack.c.b16 %v1644, %v1643
        %v1682 = vpack.c.b16 %v1646, %v1645
        %v1683 = vpack.c.b16 %v1648, %v1647
        %v1684 = vpack.c.b16 %v1650, %v1649
        %v1685 = vpack.c.b16 %v1652, %v1651
        %v1686 = vpack.c.b16 %v1654, %v1653
        %1719 = vmatprep.subr.bf16.mxu0 0
        %1720 = vmatpush1.bf16.msra.mxu0 %v1655
        %1721 = vmatprep.subr.bf16.mxu0 0
        %1722 = vmatpush1.bf16.msra.mxu0 %v1656
        %1723 = vmatprep.subr.bf16.mxu0 0
        %1724 = vmatpush1.bf16.msra.mxu0 %v1657
        %1725 = vmatprep.subr.bf16.mxu0 0
        %1726 = vmatpush1.bf16.msra.mxu0 %v1658
        %1727 = vmatprep.subr.bf16.mxu0 0
        %1728 = vmatpush1.bf16.msra.mxu0 %v1659
        %1729 = vmatprep.subr.bf16.mxu0 0
        %1730 = vmatpush1.bf16.msra.mxu0 %v1660
        %1731 = vmatprep.subr.bf16.mxu0 0
        %1732 = vmatpush1.bf16.msra.mxu0 %v1661
        %1733 = vmatprep.subr.bf16.mxu0 0
        %1734 = vmatpush1.bf16.msra.mxu0 %v1662
        %1735 = vmatprep.subr.bf16.mxu0 0
        %1736 = vmatpush1.bf16.msra.mxu0 %v1663
        %1737 = vmatprep.subr.bf16.mxu0 0
        %1738 = vmatpush1.bf16.msra.mxu0 %v1664
        %1739 = vmatprep.subr.bf16.mxu0 0
        %1740 = vmatpush1.bf16.msra.mxu0 %v1665
        %1741 = vmatprep.subr.bf16.mxu0 0
        %1742 = vmatpush1.bf16.msra.mxu0 %v1666
        %1743 = vmatprep.subr.bf16.mxu0 0
        %1744 = vmatpush1.bf16.msra.mxu0 %v1667
        %1745 = vmatprep.subr.bf16.mxu0 0
        %1746 = vmatpush1.bf16.msra.mxu0 %v1668
        %1747 = vmatprep.subr.bf16.mxu0 0
        %1748 = vmatpush1.bf16.msra.mxu0 %v1669
        %1749 = vmatprep.subr.bf16.mxu0 0
        %1750 = vmatpush1.bf16.msra.mxu0 %v1670
        %1751 = vmatprep.mubr.bf16.mxu0 %v1272
        %1752 = vmatmul.mubr.bf16.gmra.mrb[0].mxu0 %v1271
        %v1753 = vpop.f32.mrb[0].mxu0
        %v1754 = vadd.f32 0.0, %v1753
        %v1755 = vpop.f32.mrb[0].mxu0
        %v1756 = vpop.f32.mrb[0].mxu0
        %v1757 = vadd.f32 0.0, %v1756
        %v1758 = vpop.f32.mrb[0].mxu0
        %1759 = vmatprep.mubr.bf16.mxu0 %v1276
        %1760 = vmatmul.mubr.bf16.gmra.mrb[0].mxu0 %v1275
        %v1761 = vpop.f32.mrb[0].mxu0
        %v1762 = vadd.f32 0.0, %v1761
        %v1763 = vpop.f32.mrb[0].mxu0
        %v1764 = vpop.f32.mrb[0].mxu0
        %v1765 = vadd.f32 0.0, %v1764
        %v1766 = vpop.f32.mrb[0].mxu0
        %1767 = vmatprep.mubr.bf16.mxu0 %v1280
        %1768 = vmatmul.mubr.bf16.gmra.mrb[0].mxu0 %v1279
        %v1769 = vpop.f32.mrb[0].mxu0
        %v1770 = vadd.f32 0.0, %v1769
        %v1771 = vpop.f32.mrb[0].mxu0
        %v1772 = vpop.f32.mrb[0].mxu0
        %v1773 = vadd.f32 0.0, %v1772
        %v1774 = vpop.f32.mrb[0].mxu0
        %1775 = vmatprep.mubr.bf16.mxu0 %v1284
        %1776 = vmatmul.mubr.bf16.gmra.mrb[0].mxu0 %v1283
        %v1777 = vpop.f32.mrb[0].mxu0
        %v1778 = vadd.f32 0.0, %v1777
        %v1779 = vpop.f32.mrb[0].mxu0
        %v1780 = vpop.f32.mrb[0].mxu0
        %v1781 = vadd.f32 0.0, %v1780
        %v1782 = vpop.f32.mrb[0].mxu0
        %1783 = vmatprep.mubr.bf16.mxu0 %v1288
        %1784 = vmatmul.mubr.bf16.gmra.mrb[0].mxu0 %v1287
        %v1785 = vpop.f32.mrb[0].mxu0
        %v1786 = vadd.f32 0.0, %v1785
        %v1787 = vpop.f32.mrb[0].mxu0
        %v1788 = vpop.f32.mrb[0].mxu0
        %v1789 = vadd.f32 0.0, %v1788
        %v1790 = vpop.f32.mrb[0].mxu0
        %1791 = vmatprep.mubr.bf16.mxu0 %v1292
        %1792 = vmatmul.mubr.bf16.gmra.mrb[0].mxu0 %v1291
        %v1793 = vpop.f32.mrb[0].mxu0
        %v1794 = vadd.f32 0.0, %v1793
        %v1795 = vpop.f32.mrb[0].mxu0
        %v1796 = vpop.f32.mrb[0].mxu0
        %v1797 = vadd.f32 0.0, %v1796
        %v1798 = vpop.f32.mrb[0].mxu0
        %1799 = vmatprep.mubr.bf16.mxu0 %v1296
        %1800 = vmatmul.mubr.bf16.gmra.mrb[0].mxu0 %v1295
        %v1801 = vpop.f32.mrb[0].mxu0
        %v1802 = vadd.f32 0.0, %v1801
        %v1803 = vpop.f32.mrb[0].mxu0
        %v1804 = vpop.f32.mrb[0].mxu0
        %v1805 = vadd.f32 0.0, %v1804
        %v1806 = vpop.f32.mrb[0].mxu0
        %1807 = vmatprep.mubr.bf16.mxu0 %v1300
        %1808 = vmatmul.mubr.bf16.gmra.mrb[0].mxu0 %v1299
        %v1809 = vpop.f32.mrb[0].mxu0
        %v1810 = vadd.f32 0.0, %v1809
        %v1811 = vpop.f32.mrb[0].mxu0
        %v1812 = vpop.f32.mrb[0].mxu0
        %v1813 = vadd.f32 0.0, %v1812
        %v1814 = vpop.f32.mrb[0].mxu0
        %1815 = vmatprep.mubr.bf16.mxu0 %v1304
        %1816 = vmatmul.mubr.bf16.gmra.mrb[0].mxu0 %v1303
        %v1817 = vpop.f32.mrb[0].mxu0
        %v1818 = vadd.f32 0.0, %v1817
        %v1819 = vpop.f32.mrb[0].mxu0
        %v1820 = vpop.f32.mrb[0].mxu0
        %v1821 = vadd.f32 0.0, %v1820
        %v1822 = vpop.f32.mrb[0].mxu0
        %1823 = vmatprep.mubr.bf16.mxu0 %v1308
        %1824 = vmatmul.mubr.bf16.gmra.mrb[0].mxu0 %v1307
        %v1825 = vpop.f32.mrb[0].mxu0
        %v1826 = vadd.f32 0.0, %v1825
        %v1827 = vpop.f32.mrb[0].mxu0
        %v1828 = vpop.f32.mrb[0].mxu0
        %v1829 = vadd.f32 0.0, %v1828
        %v1830 = vpop.f32.mrb[0].mxu0
        %1831 = vmatprep.mubr.bf16.mxu0 %v1312
        %1832 = vmatmul.mubr.bf16.gmra.mrb[0].mxu0 %v1311
        %v1833 = vpop.f32.mrb[0].mxu0
        %v1834 = vadd.f32 0.0, %v1833
        %v1835 = vpop.f32.mrb[0].mxu0
        %v1836 = vpop.f32.mrb[0].mxu0
        %v1837 = vadd.f32 0.0, %v1836
        %v1838 = vpop.f32.mrb[0].mxu0
        %1839 = vmatprep.mubr.bf16.mxu0 %v1316
        %1840 = vmatmul.mubr.bf16.gmra.mrb[0].mxu0 %v1315
        %v1841 = vpop.f32.mrb[0].mxu0
        %v1842 = vadd.f32 0.0, %v1841
        %v1843 = vpop.f32.mrb[0].mxu0
        %v1844 = vpop.f32.mrb[0].mxu0
        %v1845 = vadd.f32 0.0, %v1844
        %v1846 = vpop.f32.mrb[0].mxu0
        %1847 = vmatprep.mubr.bf16.mxu0 %v1320
        %1848 = vmatmul.mubr.bf16.gmra.mrb[0].mxu0 %v1319
        %v1849 = vpop.f32.mrb[0].mxu0
        %v1850 = vadd.f32 0.0, %v1849
        %v1851 = vpop.f32.mrb[0].mxu0
        %v1852 = vpop.f32.mrb[0].mxu0
        %v1853 = vadd.f32 0.0, %v1852
        %v1854 = vpop.f32.mrb[0].mxu0
        %1855 = vmatprep.mubr.bf16.mxu0 %v1324
        %1856 = vmatmul.mubr.bf16.gmra.mrb[0].mxu0 %v1323
        %v1857 = vpop.f32.mrb[0].mxu0
        %v1858 = vadd.f32 0.0, %v1857
        %v1859 = vpop.f32.mrb[0].mxu0
        %v1860 = vpop.f32.mrb[0].mxu0
        %v1861 = vadd.f32 0.0, %v1860
        %v1862 = vpop.f32.mrb[0].mxu0
        %1863 = vmatprep.mubr.bf16.mxu0 %v1328
        %1864 = vmatmul.mubr.bf16.gmra.mrb[0].mxu0 %v1327
        %v1865 = vpop.f32.mrb[0].mxu0
        %v1866 = vadd.f32 0.0, %v1865
        %v1867 = vpop.f32.mrb[0].mxu0
        %v1868 = vpop.f32.mrb[0].mxu0
        %v1869 = vadd.f32 0.0, %v1868
        %v1870 = vpop.f32.mrb[0].mxu0
        %1871 = vmatprep.mubr.bf16.mxu0 %v1332
        %1872 = vmatmul.mubr.bf16.gmra.mrb[0].mxu0 %v1331
        %v1873 = vpop.f32.mrb[0].mxu0
        %v1874 = vadd.f32 0.0, %v1873
        %v1875 = vpop.f32.mrb[0].mxu0
        %v1876 = vpop.f32.mrb[0].mxu0
        %v1877 = vadd.f32 0.0, %v1876
        %v1878 = vpop.f32.mrb[0].mxu0
        %1879 = vmatprep.mubr.bf16.mxu0 %v1336
        %1880 = vmatmul.mubr.bf16.gmra.mrb[0].mxu0 %v1335
        %v1881 = vpop.f32.mrb[0].mxu0
        %v1882 = vadd.f32 0.0, %v1881
        %v1883 = vpop.f32.mrb[0].mxu0
        %v1884 = vpop.f32.mrb[0].mxu0
        %v1885 = vadd.f32 0.0, %v1884
        %v1886 = vpop.f32.mrb[0].mxu0
        %1887 = vmatprep.mubr.bf16.mxu0 %v1340
        %1888 = vmatmul.mubr.bf16.gmra.mrb[0].mxu0 %v1339
        %v1889 = vpop.f32.mrb[0].mxu0
        %v1890 = vadd.f32 0.0, %v1889
        %v1891 = vpop.f32.mrb[0].mxu0
        %v1892 = vpop.f32.mrb[0].mxu0
        %v1893 = vadd.f32 0.0, %v1892
        %v1894 = vpop.f32.mrb[0].mxu0
        %1895 = vmatprep.mubr.bf16.mxu0 %v1344
        %1896 = vmatmul.mubr.bf16.gmra.mrb[0].mxu0 %v1343
        %v1897 = vpop.f32.mrb[0].mxu0
        %v1898 = vadd.f32 0.0, %v1897
        %v1899 = vpop.f32.mrb[0].mxu0
        %v1900 = vpop.f32.mrb[0].mxu0
        %v1901 = vadd.f32 0.0, %v1900
        %v1902 = vpop.f32.mrb[0].mxu0
        %1903 = vmatprep.mubr.bf16.mxu0 %v1348
        %1904 = vmatmul.mubr.bf16.gmra.mrb[0].mxu0 %v1347
        %v1905 = vpop.f32.mrb[0].mxu0
        %v1906 = vadd.f32 0.0, %v1905
        %v1907 = vpop.f32.mrb[0].mxu0
        %v1908 = vpop.f32.mrb[0].mxu0
        %v1909 = vadd.f32 0.0, %v1908
        %v1910 = vpop.f32.mrb[0].mxu0
        %1911 = vmatprep.mubr.bf16.mxu0 %v1352
        %1912 = vmatmul.mubr.bf16.gmra.mrb[0].mxu0 %v1351
        %v1913 = vpop.f32.mrb[0].mxu0
        %v1914 = vadd.f32 0.0, %v1913
        %v1915 = vpop.f32.mrb[0].mxu0
        %v1916 = vpop.f32.mrb[0].mxu0
        %v1917 = vadd.f32 0.0, %v1916
        %v1918 = vpop.f32.mrb[0].mxu0
        %1919 = vmatprep.mubr.bf16.mxu0 %v1356
        %1920 = vmatmul.mubr.bf16.gmra.mrb[0].mxu0 %v1355
        %v1921 = vpop.f32.mrb[0].mxu0
        %v1922 = vadd.f32 0.0, %v1921
        %v1923 = vpop.f32.mrb[0].mxu0
        %v1924 = vpop.f32.mrb[0].mxu0
        %v1925 = vadd.f32 0.0, %v1924
        %v1926 = vpop.f32.mrb[0].mxu0
        %1927 = vmatprep.mubr.bf16.mxu0 %v1360
        %1928 = vmatmul.mubr.bf16.gmra.mrb[0].mxu0 %v1359
        %v1929 = vpop.f32.mrb[0].mxu0
        %v1930 = vadd.f32 0.0, %v1929
        %v1931 = vpop.f32.mrb[0].mxu0
        %v1932 = vpop.f32.mrb[0].mxu0
        %v1933 = vadd.f32 0.0, %v1932
        %v1934 = vpop.f32.mrb[0].mxu0
        %1935 = vmatprep.mubr.bf16.mxu0 %v1364
        %1936 = vmatmul.mubr.bf16.gmra.mrb[0].mxu0 %v1363
        %v1937 = vpop.f32.mrb[0].mxu0
        %v1938 = vadd.f32 0.0, %v1937
        %v1939 = vpop.f32.mrb[0].mxu0
        %v1940 = vpop.f32.mrb[0].mxu0
        %v1941 = vadd.f32 0.0, %v1940
        %v1942 = vpop.f32.mrb[0].mxu0
        %1943 = vmatprep.mubr.bf16.mxu0 %v1368
        %1944 = vmatmul.mubr.bf16.gmra.mrb[0].mxu0 %v1367
        %v1945 = vpop.f32.mrb[0].mxu0
        %v1946 = vadd.f32 0.0, %v1945
        %v1947 = vpop.f32.mrb[0].mxu0
        %v1948 = vpop.f32.mrb[0].mxu0
        %v1949 = vadd.f32 0.0, %v1948
        %v1950 = vpop.f32.mrb[0].mxu0
        %1951 = vmatprep.mubr.bf16.mxu0 %v1372
        %1952 = vmatmul.mubr.bf16.gmra.mrb[0].mxu0 %v1371
        %v1953 = vpop.f32.mrb[0].mxu0
        %v1954 = vadd.f32 0.0, %v1953
        %v1955 = vpop.f32.mrb[0].mxu0
        %v1956 = vpop.f32.mrb[0].mxu0
        %v1957 = vadd.f32 0.0, %v1956
        %v1958 = vpop.f32.mrb[0].mxu0
        %1959 = vmatprep.mubr.bf16.mxu0 %v1376
        %1960 = vmatmul.mubr.bf16.gmra.mrb[0].mxu0 %v1375
        %v1961 = vpop.f32.mrb[0].mxu0
        %v1962 = vadd.f32 0.0, %v1961
        %v1963 = vpop.f32.mrb[0].mxu0
        %v1964 = vpop.f32.mrb[0].mxu0
        %v1965 = vadd.f32 0.0, %v1964
        %v1966 = vpop.f32.mrb[0].mxu0
        %1967 = vmatprep.mubr.bf16.mxu0 %v1380
        %1968 = vmatmul.mubr.bf16.gmra.mrb[0].mxu0 %v1379
        %v1969 = vpop.f32.mrb[0].mxu0
        %v1970 = vadd.f32 0.0, %v1969
        %v1971 = vpop.f32.mrb[0].mxu0
        %v1972 = vpop.f32.mrb[0].mxu0
        %v1973 = vadd.f32 0.0, %v1972
        %v1974 = vpop.f32.mrb[0].mxu0
        %1975 = vmatprep.mubr.bf16.mxu0 %v1384
        %1976 = vmatmul.mubr.bf16.gmra.mrb[0].mxu0 %v1383
        %v1977 = vpop.f32.mrb[0].mxu0
        %v1978 = vadd.f32 0.0, %v1977
        %v1979 = vpop.f32.mrb[0].mxu0
        %v1980 = vpop.f32.mrb[0].mxu0
        %v1981 = vadd.f32 0.0, %v1980
        %v1982 = vpop.f32.mrb[0].mxu0
        %1983 = vmatprep.mubr.bf16.mxu0 %v1388
        %1984 = vmatmul.mubr.bf16.gmra.mrb[0].mxu0 %v1387
        %v1985 = vpop.f32.mrb[0].mxu0
        %v1986 = vadd.f32 0.0, %v1985
        %v1987 = vpop.f32.mrb[0].mxu0
        %v1988 = vpop.f32.mrb[0].mxu0
        %v1989 = vadd.f32 0.0, %v1988
        %v1990 = vpop.f32.mrb[0].mxu0
        %1991 = vmatprep.mubr.bf16.mxu0 %v1392
        %1992 = vmatmul.mubr.bf16.gmra.mrb[0].mxu0 %v1391
        %v1993 = vpop.f32.mrb[0].mxu0
        %v1994 = vadd.f32 0.0, %v1993
        %v1995 = vpop.f32.mrb[0].mxu0
        %v1996 = vpop.f32.mrb[0].mxu0
        %v1997 = vadd.f32 0.0, %v1996
        %v1998 = vpop.f32.mrb[0].mxu0
        %1999 = vmatprep.mubr.bf16.mxu0 %v1396
        %2000 = vmatmul.mubr.bf16.gmra.mrb[0].mxu0 %v1395
        %v2001 = vpop.f32.mrb[0].mxu0
        %v2002 = vadd.f32 0.0, %v2001
        %v2003 = vpop.f32.mrb[0].mxu0
        %v2004 = vpop.f32.mrb[0].mxu0
        %v2005 = vadd.f32 0.0, %v2004
        %v2006 = vpop.f32.mrb[0].mxu0
        %2007 = vdwg.mxu0
        %2008 = vmatprep.subr.bf16.mxu0 0
        %2009 = vmatpush1.bf16.msra.mxu0 %v1671
        %2010 = vmatprep.subr.bf16.mxu0 0
        %2011 = vmatpush1.bf16.msra.mxu0 %v1672
        %2012 = vmatprep.subr.bf16.mxu0 0
        %2013 = vmatpush1.bf16.msra.mxu0 %v1673
        %2014 = vmatprep.subr.bf16.mxu0 0
        %2015 = vmatpush1.bf16.msra.mxu0 %v1674
        %2016 = vmatprep.subr.bf16.mxu0 0
        %2017 = vmatpush1.bf16.msra.mxu0 %v1675
        %2018 = vmatprep.subr.bf16.mxu0 0
        %2019 = vmatpush1.bf16.msra.mxu0 %v1676
        %2020 = vmatprep.subr.bf16.mxu0 0
        %2021 = vmatpush1.bf16.msra.mxu0 %v1677
        %2022 = vmatprep.subr.bf16.mxu0 0
        %2023 = vmatpush1.bf16.msra.mxu0 %v1678
        %2024 = vmatprep.subr.bf16.mxu0 0
        %2025 = vmatpush1.bf16.msra.mxu0 %v1679
        %2026 = vmatprep.subr.bf16.mxu0 0
        %2027 = vmatpush1.bf16.msra.mxu0 %v1680
        %2028 = vmatprep.subr.bf16.mxu0 0
        %2029 = vmatpush1.bf16.msra.mxu0 %v1681
        %2030 = vmatprep.subr.bf16.mxu0 0
        %2031 = vmatpush1.bf16.msra.mxu0 %v1682
        %2032 = vmatprep.subr.bf16.mxu0 0
        %2033 = vmatpush1.bf16.msra.mxu0 %v1683
        %2034 = vmatprep.subr.bf16.mxu0 0
        %2035 = vmatpush1.bf16.msra.mxu0 %v1684
        %2036 = vmatprep.subr.bf16.mxu0 0
        %2037 = vmatpush1.bf16.msra.mxu0 %v1685
        %2038 = vmatprep.subr.bf16.mxu0 0
        %2039 = vmatpush1.bf16.msra.mxu0 %v1686
        %2040 = vmatprep.mubr.bf16.mxu0 %v1274
        %2041 = vmatmul.mubr.bf16.gmra.mrb[0].mxu0 %v1273
        %v2042 = vpop.f32.mrb[0].mxu0
        %v2043 = vadd.f32 %v1754, %v2042
        %v2044 = vpop.f32.mrb[0].mxu0
        %v2045 = vpop.f32.mrb[0].mxu0
        %v2046 = vadd.f32 %v1757, %v2045
        %v2047 = vpop.f32.mrb[0].mxu0
        %2048 = vmatprep.mubr.bf16.mxu0 %v1278
        %2049 = vmatmul.mubr.bf16.gmra.mrb[0].mxu0 %v1277
        %v2050 = vpop.f32.mrb[0].mxu0
        %v2051 = vadd.f32 %v1762, %v2050
        %v2052 = vpop.f32.mrb[0].mxu0
        %v2053 = vpop.f32.mrb[0].mxu0
        %v2054 = vadd.f32 %v1765, %v2053
        %v2055 = vpop.f32.mrb[0].mxu0
        %2056 = vmatprep.mubr.bf16.mxu0 %v1282
        %2057 = vmatmul.mubr.bf16.gmra.mrb[0].mxu0 %v1281
        %v2058 = vpop.f32.mrb[0].mxu0
        %v2059 = vadd.f32 %v1770, %v2058
        %v2060 = vpop.f32.mrb[0].mxu0
        %v2061 = vpop.f32.mrb[0].mxu0
        %v2062 = vadd.f32 %v1773, %v2061
        %v2063 = vpop.f32.mrb[0].mxu0
        %2064 = vmatprep.mubr.bf16.mxu0 %v1286
        %2065 = vmatmul.mubr.bf16.gmra.mrb[0].mxu0 %v1285
        %v2066 = vpop.f32.mrb[0].mxu0
        %v2067 = vadd.f32 %v1778, %v2066
        %v2068 = vpop.f32.mrb[0].mxu0
        %v2069 = vpop.f32.mrb[0].mxu0
        %v2070 = vadd.f32 %v1781, %v2069
        %v2071 = vpop.f32.mrb[0].mxu0
        %2072 = vmatprep.mubr.bf16.mxu0 %v1290
        %2073 = vmatmul.mubr.bf16.gmra.mrb[0].mxu0 %v1289
        %v2074 = vpop.f32.mrb[0].mxu0
        %v2075 = vadd.f32 %v1786, %v2074
        %v2076 = vpop.f32.mrb[0].mxu0
        %v2077 = vpop.f32.mrb[0].mxu0
        %v2078 = vadd.f32 %v1789, %v2077
        %v2079 = vpop.f32.mrb[0].mxu0
        %2080 = vmatprep.mubr.bf16.mxu0 %v1294
        %2081 = vmatmul.mubr.bf16.gmra.mrb[0].mxu0 %v1293
        %v2082 = vpop.f32.mrb[0].mxu0
        %v2083 = vadd.f32 %v1794, %v2082
        %v2084 = vpop.f32.mrb[0].mxu0
        %v2085 = vpop.f32.mrb[0].mxu0
        %v2086 = vadd.f32 %v1797, %v2085
        %v2087 = vpop.f32.mrb[0].mxu0
        %2088 = vmatprep.mubr.bf16.mxu0 %v1298
        %2089 = vmatmul.mubr.bf16.gmra.mrb[0].mxu0 %v1297
        %v2090 = vpop.f32.mrb[0].mxu0
        %v2091 = vadd.f32 %v1802, %v2090
        %v2092 = vpop.f32.mrb[0].mxu0
        %v2093 = vpop.f32.mrb[0].mxu0
        %v2094 = vadd.f32 %v1805, %v2093
        %v2095 = vpop.f32.mrb[0].mxu0
        %2096 = vmatprep.mubr.bf16.mxu0 %v1302
        %2097 = vmatmul.mubr.bf16.gmra.mrb[0].mxu0 %v1301
        %v2098 = vpop.f32.mrb[0].mxu0
        %v2099 = vadd.f32 %v1810, %v2098
        %v2100 = vpop.f32.mrb[0].mxu0
        %v2101 = vpop.f32.mrb[0].mxu0
        %v2102 = vadd.f32 %v1813, %v2101
        %v2103 = vpop.f32.mrb[0].mxu0
        %2104 = vmatprep.mubr.bf16.mxu0 %v1306
        %2105 = vmatmul.mubr.bf16.gmra.mrb[0].mxu0 %v1305
        %v2106 = vpop.f32.mrb[0].mxu0
        %v2107 = vadd.f32 %v1818, %v2106
        %v2108 = vpop.f32.mrb[0].mxu0
        %v2109 = vpop.f32.mrb[0].mxu0
        %v2110 = vadd.f32 %v1821, %v2109
        %v2111 = vpop.f32.mrb[0].mxu0
        %2112 = vmatprep.mubr.bf16.mxu0 %v1310
        %2113 = vmatmul.mubr.bf16.gmra.mrb[0].mxu0 %v1309
        %v2114 = vpop.f32.mrb[0].mxu0
        %v2115 = vadd.f32 %v1826, %v2114
        %v2116 = vpop.f32.mrb[0].mxu0
        %v2117 = vpop.f32.mrb[0].mxu0
        %v2118 = vadd.f32 %v1829, %v2117
        %v2119 = vpop.f32.mrb[0].mxu0
        %2120 = vmatprep.mubr.bf16.mxu0 %v1314
        %2121 = vmatmul.mubr.bf16.gmra.mrb[0].mxu0 %v1313
        %v2122 = vpop.f32.mrb[0].mxu0
        %v2123 = vadd.f32 %v1834, %v2122
        %v2124 = vpop.f32.mrb[0].mxu0
        %v2125 = vpop.f32.mrb[0].mxu0
        %v2126 = vadd.f32 %v1837, %v2125
        %v2127 = vpop.f32.mrb[0].mxu0
        %2128 = vmatprep.mubr.bf16.mxu0 %v1318
        %2129 = vmatmul.mubr.bf16.gmra.mrb[0].mxu0 %v1317
        %v2130 = vpop.f32.mrb[0].mxu0
        %v2131 = vadd.f32 %v1842, %v2130
        %v2132 = vpop.f32.mrb[0].mxu0
        %v2133 = vpop.f32.mrb[0].mxu0
        %v2134 = vadd.f32 %v1845, %v2133
        %v2135 = vpop.f32.mrb[0].mxu0
        %2136 = vmatprep.mubr.bf16.mxu0 %v1322
        %2137 = vmatmul.mubr.bf16.gmra.mrb[0].mxu0 %v1321
        %v2138 = vpop.f32.mrb[0].mxu0
        %v2139 = vadd.f32 %v1850, %v2138
        %v2140 = vpop.f32.mrb[0].mxu0
        %v2141 = vpop.f32.mrb[0].mxu0
        %v2142 = vadd.f32 %v1853, %v2141
        %v2143 = vpop.f32.mrb[0].mxu0
        %2144 = vmatprep.mubr.bf16.mxu0 %v1326
        %2145 = vmatmul.mubr.bf16.gmra.mrb[0].mxu0 %v1325
        %v2146 = vpop.f32.mrb[0].mxu0
        %v2147 = vadd.f32 %v1858, %v2146
        %v2148 = vpop.f32.mrb[0].mxu0
        %v2149 = vpop.f32.mrb[0].mxu0
        %v2150 = vadd.f32 %v1861, %v2149
        %v2151 = vpop.f32.mrb[0].mxu0
        %2152 = vmatprep.mubr.bf16.mxu0 %v1330
        %2153 = vmatmul.mubr.bf16.gmra.mrb[0].mxu0 %v1329
        %v2154 = vpop.f32.mrb[0].mxu0
        %v2155 = vadd.f32 %v1866, %v2154
        %v2156 = vpop.f32.mrb[0].mxu0
        %v2157 = vpop.f32.mrb[0].mxu0
        %v2158 = vadd.f32 %v1869, %v2157
        %v2159 = vpop.f32.mrb[0].mxu0
        %2160 = vmatprep.mubr.bf16.mxu0 %v1334
        %2161 = vmatmul.mubr.bf16.gmra.mrb[0].mxu0 %v1333
        %v2162 = vpop.f32.mrb[0].mxu0
        %v2163 = vadd.f32 %v1874, %v2162
        %v2164 = vpop.f32.mrb[0].mxu0
        %v2165 = vpop.f32.mrb[0].mxu0
        %v2166 = vadd.f32 %v1877, %v2165
        %v2167 = vpop.f32.mrb[0].mxu0
        %2168 = vmatprep.mubr.bf16.mxu0 %v1338
        %2169 = vmatmul.mubr.bf16.gmra.mrb[0].mxu0 %v1337
        %v2170 = vpop.f32.mrb[0].mxu0
        %v2171 = vadd.f32 %v1882, %v2170
        %v2172 = vpop.f32.mrb[0].mxu0
        %v2173 = vpop.f32.mrb[0].mxu0
        %v2174 = vadd.f32 %v1885, %v2173
        %v2175 = vpop.f32.mrb[0].mxu0
        %2176 = vmatprep.mubr.bf16.mxu0 %v1342
        %2177 = vmatmul.mubr.bf16.gmra.mrb[0].mxu0 %v1341
        %v2178 = vpop.f32.mrb[0].mxu0
        %v2179 = vadd.f32 %v1890, %v2178
        %v2180 = vpop.f32.mrb[0].mxu0
        %v2181 = vpop.f32.mrb[0].mxu0
        %v2182 = vadd.f32 %v1893, %v2181
        %v2183 = vpop.f32.mrb[0].mxu0
        %2184 = vmatprep.mubr.bf16.mxu0 %v1346
        %2185 = vmatmul.mubr.bf16.gmra.mrb[0].mxu0 %v1345
        %v2186 = vpop.f32.mrb[0].mxu0
        %v2187 = vadd.f32 %v1898, %v2186
        %v2188 = vpop.f32.mrb[0].mxu0
        %v2189 = vpop.f32.mrb[0].mxu0
        %v2190 = vadd.f32 %v1901, %v2189
        %v2191 = vpop.f32.mrb[0].mxu0
        %2192 = vmatprep.mubr.bf16.mxu0 %v1350
        %2193 = vmatmul.mubr.bf16.gmra.mrb[0].mxu0 %v1349
        %v2194 = vpop.f32.mrb[0].mxu0
        %v2195 = vadd.f32 %v1906, %v2194
        %v2196 = vpop.f32.mrb[0].mxu0
        %v2197 = vpop.f32.mrb[0].mxu0
        %v2198 = vadd.f32 %v1909, %v2197
        %v2199 = vpop.f32.mrb[0].mxu0
        %2200 = vmatprep.mubr.bf16.mxu0 %v1354
        %2201 = vmatmul.mubr.bf16.gmra.mrb[0].mxu0 %v1353
        %v2202 = vpop.f32.mrb[0].mxu0
        %v2203 = vadd.f32 %v1914, %v2202
        %v2204 = vpop.f32.mrb[0].mxu0
        %v2205 = vpop.f32.mrb[0].mxu0
        %v2206 = vadd.f32 %v1917, %v2205
        %v2207 = vpop.f32.mrb[0].mxu0
        %2208 = vmatprep.mubr.bf16.mxu0 %v1358
        %2209 = vmatmul.mubr.bf16.gmra.mrb[0].mxu0 %v1357
        %v2210 = vpop.f32.mrb[0].mxu0
        %v2211 = vadd.f32 %v1922, %v2210
        %v2212 = vpop.f32.mrb[0].mxu0
        %v2213 = vpop.f32.mrb[0].mxu0
        %v2214 = vadd.f32 %v1925, %v2213
        %v2215 = vpop.f32.mrb[0].mxu0
        %2216 = vmatprep.mubr.bf16.mxu0 %v1362
        %2217 = vmatmul.mubr.bf16.gmra.mrb[0].mxu0 %v1361
        %v2218 = vpop.f32.mrb[0].mxu0
        %v2219 = vadd.f32 %v1930, %v2218
        %v2220 = vpop.f32.mrb[0].mxu0
        %v2221 = vpop.f32.mrb[0].mxu0
        %v2222 = vadd.f32 %v1933, %v2221
        %v2223 = vpop.f32.mrb[0].mxu0
        %2224 = vmatprep.mubr.bf16.mxu0 %v1366
        %2225 = vmatmul.mubr.bf16.gmra.mrb[0].mxu0 %v1365
        %v2226 = vpop.f32.mrb[0].mxu0
        %v2227 = vadd.f32 %v1938, %v2226
        %v2228 = vpop.f32.mrb[0].mxu0
        %v2229 = vpop.f32.mrb[0].mxu0
        %v2230 = vadd.f32 %v1941, %v2229
        %v2231 = vpop.f32.mrb[0].mxu0
        %2232 = vmatprep.mubr.bf16.mxu0 %v1370
        %2233 = vmatmul.mubr.bf16.gmra.mrb[0].mxu0 %v1369
        %v2234 = vpop.f32.mrb[0].mxu0
        %v2235 = vadd.f32 %v1946, %v2234
        %v2236 = vpop.f32.mrb[0].mxu0
        %v2237 = vpop.f32.mrb[0].mxu0
        %v2238 = vadd.f32 %v1949, %v2237
        %v2239 = vpop.f32.mrb[0].mxu0
        %2240 = vmatprep.mubr.bf16.mxu0 %v1374
        %2241 = vmatmul.mubr.bf16.gmra.mrb[0].mxu0 %v1373
        %v2242 = vpop.f32.mrb[0].mxu0
        %v2243 = vadd.f32 %v1954, %v2242
        %v2244 = vpop.f32.mrb[0].mxu0
        %v2245 = vpop.f32.mrb[0].mxu0
        %v2246 = vadd.f32 %v1957, %v2245
        %v2247 = vpop.f32.mrb[0].mxu0
        %2248 = vmatprep.mubr.bf16.mxu0 %v1378
        %2249 = vmatmul.mubr.bf16.gmra.mrb[0].mxu0 %v1377
        %v2250 = vpop.f32.mrb[0].mxu0
        %v2251 = vadd.f32 %v1962, %v2250
        %v2252 = vpop.f32.mrb[0].mxu0
        %v2253 = vpop.f32.mrb[0].mxu0
        %v2254 = vadd.f32 %v1965, %v2253
        %v2255 = vpop.f32.mrb[0].mxu0
        %2256 = vmatprep.mubr.bf16.mxu0 %v1382
        %2257 = vmatmul.mubr.bf16.gmra.mrb[0].mxu0 %v1381
        %v2258 = vpop.f32.mrb[0].mxu0
        %v2259 = vadd.f32 %v1970, %v2258
        %v2260 = vpop.f32.mrb[0].mxu0
        %v2261 = vpop.f32.mrb[0].mxu0
        %v2262 = vadd.f32 %v1973, %v2261
        %v2263 = vpop.f32.mrb[0].mxu0
        %2264 = vmatprep.mubr.bf16.mxu0 %v1386
        %2265 = vmatmul.mubr.bf16.gmra.mrb[0].mxu0 %v1385
        %v2266 = vpop.f32.mrb[0].mxu0
        %v2267 = vadd.f32 %v1978, %v2266
        %v2268 = vpop.f32.mrb[0].mxu0
        %v2269 = vpop.f32.mrb[0].mxu0
        %v2270 = vadd.f32 %v1981, %v2269
        %v2271 = vpop.f32.mrb[0].mxu0
        %2272 = vmatprep.mubr.bf16.mxu0 %v1390
        %2273 = vmatmul.mubr.bf16.gmra.mrb[0].mxu0 %v1389
        %v2274 = vpop.f32.mrb[0].mxu0
        %v2275 = vadd.f32 %v1986, %v2274
        %v2276 = vpop.f32.mrb[0].mxu0
        %v2277 = vpop.f32.mrb[0].mxu0
        %v2278 = vadd.f32 %v1989, %v2277
        %v2279 = vpop.f32.mrb[0].mxu0
        %2280 = vmatprep.mubr.bf16.mxu0 %v1394
        %2281 = vmatmul.mubr.bf16.gmra.mrb[0].mxu0 %v1393
        %v2282 = vpop.f32.mrb[0].mxu0
        %v2283 = vadd.f32 %v1994, %v2282
        %v2284 = vpop.f32.mrb[0].mxu0
        %v2285 = vpop.f32.mrb[0].mxu0
        %v2286 = vadd.f32 %v1997, %v2285
        %v2287 = vpop.f32.mrb[0].mxu0
        %2288 = vmatprep.mubr.bf16.mxu0 %v1398
        %2289 = vmatmul.mubr.bf16.gmra.mrb[0].mxu0 %v1397
        %v2290 = vpop.f32.mrb[0].mxu0
        %v2291 = vadd.f32 %v2002, %v2290
        %v2292 = vpop.f32.mrb[0].mxu0
        %v2293 = vpop.f32.mrb[0].mxu0
        %v2294 = vadd.f32 %v2005, %v2293
        %v2295 = vpop.f32.mrb[0].mxu0
        %2296 = vdwg.mxu0
        %v2297 = vadd.f32 %v631, %v2043
        %v2298 = vadd.f32 %v632, %v2046
        %v2299 = vadd.f32 %v633, %v2051
        %v2300 = vadd.f32 %v634, %v2054
        %v2301 = vadd.f32 %v635, %v2059
        %v2302 = vadd.f32 %v636, %v2062
        %v2303 = vadd.f32 %v637, %v2067
        %v2304 = vadd.f32 %v638, %v2070
        %v2305 = vadd.f32 %v639, %v2075
        %v2306 = vadd.f32 %v640, %v2078
        %v2307 = vadd.f32 %v641, %v2083
        %v2308 = vadd.f32 %v642, %v2086
        %v2309 = vadd.f32 %v643, %v2091
        %v2310 = vadd.f32 %v644, %v2094
        %v2311 = vadd.f32 %v645, %v2099
        %v2312 = vadd.f32 %v646, %v2102
        %v2313 = vadd.f32 %v647, %v2107
        %v2314 = vadd.f32 %v648, %v2110
        %v2315 = vadd.f32 %v649, %v2115
        %v2316 = vadd.f32 %v650, %v2118
        %v2317 = vadd.f32 %v651, %v2123
        %v2318 = vadd.f32 %v652, %v2126
        %v2319 = vadd.f32 %v653, %v2131
        %v2320 = vadd.f32 %v654, %v2134
        %v2321 = vadd.f32 %v655, %v2139
        %v2322 = vadd.f32 %v656, %v2142
        %v2323 = vadd.f32 %v657, %v2147
        %v2324 = vadd.f32 %v658, %v2150
        %v2325 = vadd.f32 %v659, %v2155
        %v2326 = vadd.f32 %v660, %v2158
        %v2327 = vadd.f32 %v661, %v2163
        %v2328 = vadd.f32 %v662, %v2166
        %v2329 = vadd.f32 %v663, %v2171
        %v2330 = vadd.f32 %v664, %v2174
        %v2331 = vadd.f32 %v665, %v2179
        %v2332 = vadd.f32 %v666, %v2182
        %v2333 = vadd.f32 %v667, %v2187
        %v2334 = vadd.f32 %v668, %v2190
        %v2335 = vadd.f32 %v669, %v2195
        %v2336 = vadd.f32 %v670, %v2198
        %v2337 = vadd.f32 %v671, %v2203
        %v2338 = vadd.f32 %v672, %v2206
        %v2339 = vadd.f32 %v673, %v2211
        %v2340 = vadd.f32 %v674, %v2214
        %v2341 = vadd.f32 %v675, %v2219
        %v2342 = vadd.f32 %v676, %v2222
        %v2343 = vadd.f32 %v677, %v2227
        %v2344 = vadd.f32 %v678, %v2230
        %v2345 = vadd.f32 %v679, %v2235
        %v2346 = vadd.f32 %v680, %v2238
        %v2347 = vadd.f32 %v681, %v2243
        %v2348 = vadd.f32 %v682, %v2246
        %v2349 = vadd.f32 %v683, %v2251
        %v2350 = vadd.f32 %v684, %v2254
        %v2351 = vadd.f32 %v685, %v2259
        %v2352 = vadd.f32 %v686, %v2262
        %v2353 = vadd.f32 %v687, %v2267
        %v2354 = vadd.f32 %v688, %v2270
        %v2355 = vadd.f32 %v689, %v2275
        %v2356 = vadd.f32 %v690, %v2278
        %v2357 = vadd.f32 %v691, %v2283
        %v2358 = vadd.f32 %v692, %v2286
        %v2359 = vadd.f32 %v693, %v2291
        %v2360 = vadd.f32 %v694, %v2294
        %2361 = vst [vmem:[#allocation2] sm:$0xff] %v2297
        %2362 = vst [vmem:[#allocation2 + $0x8] sm:$0xff] %v2298
        %2363 = vst [vmem:[#allocation2 + $0x10] sm:$0xff] %v2299
        %2364 = vst [vmem:[#allocation2 + $0x18] sm:$0xff] %v2300
        %2365 = vst [vmem:[#allocation2 + $0x20] sm:$0xff] %v2301
        %2366 = vst [vmem:[#allocation2 + $0x28] sm:$0xff] %v2302
        %2367 = vst [vmem:[#allocation2 + $0x30] sm:$0xff] %v2303
        %2368 = vst [vmem:[#allocation2 + $0x38] sm:$0xff] %v2304
        %2369 = vst [vmem:[#allocation2 + $0x40] sm:$0xff] %v2305
        %2370 = vst [vmem:[#allocation2 + $0x48] sm:$0xff] %v2306
        %2371 = vst [vmem:[#allocation2 + $0x50] sm:$0xff] %v2307
        %2372 = vst [vmem:[#allocation2 + $0x58] sm:$0xff] %v2308
        %2373 = vst [vmem:[#allocation2 + $0x60] sm:$0xff] %v2309
        %2374 = vst [vmem:[#allocation2 + $0x68] sm:$0xff] %v2310
        %2375 = vst [vmem:[#allocation2 + $0x70] sm:$0xff] %v2311
        %2376 = vst [vmem:[#allocation2 + $0x78] sm:$0xff] %v2312
        %2377 = vst [vmem:[#allocation2 + $0x80] sm:$0xff] %v2313
        %2378 = vst [vmem:[#allocation2 + $0x88] sm:$0xff] %v2314
        %2379 = vst [vmem:[#allocation2 + $0x90] sm:$0xff] %v2315
        %2380 = vst [vmem:[#allocation2 + $0x98] sm:$0xff] %v2316
        %2381 = vst [vmem:[#allocation2 + $0xa0] sm:$0xff] %v2317
        %2382 = vst [vmem:[#allocation2 + $0xa8] sm:$0xff] %v2318
        %2383 = vst [vmem:[#allocation2 + $0xb0] sm:$0xff] %v2319
        %2384 = vst [vmem:[#allocation2 + $0xb8] sm:$0xff] %v2320
        %2385 = vst [vmem:[#allocation2 + $0xc0] sm:$0xff] %v2321
        %2386 = vst [vmem:[#allocation2 + $0xc8] sm:$0xff] %v2322
        %2387 = vst [vmem:[#allocation2 + $0xd0] sm:$0xff] %v2323
        %2388 = vst [vmem:[#allocation2 + $0xd8] sm:$0xff] %v2324
        %2389 = vst [vmem:[#allocation2 + $0xe0] sm:$0xff] %v2325
        %2390 = vst [vmem:[#allocation2 + $0xe8] sm:$0xff] %v2326
        %2391 = vst [vmem:[#allocation2 + $0xf0] sm:$0xff] %v2327
        %2392 = vst [vmem:[#allocation2 + $0xf8] sm:$0xff] %v2328
        %2393 = vst [vmem:[#allocation2 + $0x100] sm:$0xff] %v2329
        %2394 = vst [vmem:[#allocation2 + $0x108] sm:$0xff] %v2330
        %2395 = vst [vmem:[#allocation2 + $0x110] sm:$0xff] %v2331
        %2396 = vst [vmem:[#allocation2 + $0x118] sm:$0xff] %v2332
        %2397 = vst [vmem:[#allocation2 + $0x120] sm:$0xff] %v2333
        %2398 = vst [vmem:[#allocation2 + $0x128] sm:$0xff] %v2334
        %2399 = vst [vmem:[#allocation2 + $0x130] sm:$0xff] %v2335
        %2400 = vst [vmem:[#allocation2 + $0x138] sm:$0xff] %v2336
        %2401 = vst [vmem:[#allocation2 + $0x140] sm:$0xff] %v2337
        %2402 = vst [vmem:[#allocation2 + $0x148] sm:$0xff] %v2338
        %2403 = vst [vmem:[#allocation2 + $0x150] sm:$0xff] %v2339
        %2404 = vst [vmem:[#allocation2 + $0x158] sm:$0xff] %v2340
        %2405 = vst [vmem:[#allocation2 + $0x160] sm:$0xff] %v2341
        %2406 = vst [vmem:[#allocation2 + $0x168] sm:$0xff] %v2342
        %2407 = vst [vmem:[#allocation2 + $0x170] sm:$0xff] %v2343
        %2408 = vst [vmem:[#allocation2 + $0x178] sm:$0xff] %v2344
        %2409 = vst [vmem:[#allocation2 + $0x180] sm:$0xff] %v2345
        %2410 = vst [vmem:[#allocation2 + $0x188] sm:$0xff] %v2346
        %2411 = vst [vmem:[#allocation2 + $0x190] sm:$0xff] %v2347
        %2412 = vst [vmem:[#allocation2 + $0x198] sm:$0xff] %v2348
        %2413 = vst [vmem:[#allocation2 + $0x1a0] sm:$0xff] %v2349
        %2414 = vst [vmem:[#allocation2 + $0x1a8] sm:$0xff] %v2350
        %2415 = vst [vmem:[#allocation2 + $0x1b0] sm:$0xff] %v2351
        %2416 = vst [vmem:[#allocation2 + $0x1b8] sm:$0xff] %v2352
        %2417 = vst [vmem:[#allocation2 + $0x1c0] sm:$0xff] %v2353
        %2418 = vst [vmem:[#allocation2 + $0x1c8] sm:$0xff] %v2354
        %2419 = vst [vmem:[#allocation2 + $0x1d0] sm:$0xff] %v2355
        %2420 = vst [vmem:[#allocation2 + $0x1d8] sm:$0xff] %v2356
        %2421 = vst [vmem:[#allocation2 + $0x1e0] sm:$0xff] %v2357
        %2422 = vst [vmem:[#allocation2 + $0x1e8] sm:$0xff] %v2358
        %2423 = vst [vmem:[#allocation2 + $0x1f0] sm:$0xff] %v2359
        %2424 = vst [vmem:[#allocation2 + $0x1f8] sm:$0xff] %v2360
        %p2425 = scmp.eq.s32.totalorder %s22, 1
        // Predicated region
        $region60: #{dnet_forward.9} parent=50 // pred_check
          %p2426 = pneg %p2425
        $region61: #{dnet_forward.9} parent=50 // pred_check_branch
          %2428 = sbr.rel (%p2426) target = $region63
        $region62: #{dnet_forward.9} parent=50 // pred_region
          %v2429 = vld [vmem:[#allocation2] sm:$0xff]
          %v2430 = vld [vmem:[#allocation2 + $0x8] sm:$0xff]
          %v2431 = vld [vmem:[#allocation2 + $0x10] sm:$0xff]
          %v2432 = vld [vmem:[#allocation2 + $0x18] sm:$0xff]
          %v2433 = vld [vmem:[#allocation2 + $0x20] sm:$0xff]
          %v2434 = vld [vmem:[#allocation2 + $0x28] sm:$0xff]
          %v2435 = vld [vmem:[#allocation2 + $0x30] sm:$0xff]
          %v2436 = vld [vmem:[#allocation2 + $0x38] sm:$0xff]
          %v2437 = vld [vmem:[#allocation2 + $0x40] sm:$0xff]
          %v2438 = vld [vmem:[#allocation2 + $0x48] sm:$0xff]
          %v2439 = vld [vmem:[#allocation2 + $0x50] sm:$0xff]
          %v2440 = vld [vmem:[#allocation2 + $0x58] sm:$0xff]
          %v2441 = vld [vmem:[#allocation2 + $0x60] sm:$0xff]
          %v2442 = vld [vmem:[#allocation2 + $0x68] sm:$0xff]
          %v2443 = vld [vmem:[#allocation2 + $0x70] sm:$0xff]
          %v2444 = vld [vmem:[#allocation2 + $0x78] sm:$0xff]
          %v2445 = vld [vmem:[#allocation2 + $0x80] sm:$0xff]
          %v2446 = vld [vmem:[#allocation2 + $0x88] sm:$0xff]
          %v2447 = vld [vmem:[#allocation2 + $0x90] sm:$0xff]
          %v2448 = vld [vmem:[#allocation2 + $0x98] sm:$0xff]
          %v2449 = vld [vmem:[#allocation2 + $0xa0] sm:$0xff]
          %v2450 = vld [vmem:[#allocation2 + $0xa8] sm:$0xff]
          %v2451 = vld [vmem:[#allocation2 + $0xb0] sm:$0xff]
          %v2452 = vld [vmem:[#allocation2 + $0xb8] sm:$0xff]
          %v2453 = vld [vmem:[#allocation2 + $0xc0] sm:$0xff]
          %v2454 = vld [vmem:[#allocation2 + $0xc8] sm:$0xff]
          %v2455 = vld [vmem:[#allocation2 + $0xd0] sm:$0xff]
          %v2456 = vld [vmem:[#allocation2 + $0xd8] sm:$0xff]
          %v2457 = vld [vmem:[#allocation2 + $0xe0] sm:$0xff]
          %v2458 = vld [vmem:[#allocation2 + $0xe8] sm:$0xff]
          %v2459 = vld [vmem:[#allocation2 + $0xf0] sm:$0xff]
          %v2460 = vld [vmem:[#allocation2 + $0xf8] sm:$0xff]
          %v2461 = vld [vmem:[#allocation2 + $0x100] sm:$0xff]
          %v2462 = vld [vmem:[#allocation2 + $0x108] sm:$0xff]
          %v2463 = vld [vmem:[#allocation2 + $0x110] sm:$0xff]
          %v2464 = vld [vmem:[#allocation2 + $0x118] sm:$0xff]
          %v2465 = vld [vmem:[#allocation2 + $0x120] sm:$0xff]
          %v2466 = vld [vmem:[#allocation2 + $0x128] sm:$0xff]
          %v2467 = vld [vmem:[#allocation2 + $0x130] sm:$0xff]
          %v2468 = vld [vmem:[#allocation2 + $0x138] sm:$0xff]
          %v2469 = vld [vmem:[#allocation2 + $0x140] sm:$0xff]
          %v2470 = vld [vmem:[#allocation2 + $0x148] sm:$0xff]
          %v2471 = vld [vmem:[#allocation2 + $0x150] sm:$0xff]
          %v2472 = vld [vmem:[#allocation2 + $0x158] sm:$0xff]
          %v2473 = vld [vmem:[#allocation2 + $0x160] sm:$0xff]
          %v2474 = vld [vmem:[#allocation2 + $0x168] sm:$0xff]
          %v2475 = vld [vmem:[#allocation2 + $0x170] sm:$0xff]
          %v2476 = vld [vmem:[#allocation2 + $0x178] sm:$0xff]
          %v2477 = vld [vmem:[#allocation2 + $0x180] sm:$0xff]
          %v2478 = vld [vmem:[#allocation2 + $0x188] sm:$0xff]
          %v2479 = vld [vmem:[#allocation2 + $0x190] sm:$0xff]
          %v2480 = vld [vmem:[#allocation2 + $0x198] sm:$0xff]
          %v2481 = vld [vmem:[#allocation2 + $0x1a0] sm:$0xff]
          %v2482 = vld [vmem:[#allocation2 + $0x1a8] sm:$0xff]
          %v2483 = vld [vmem:[#allocation2 + $0x1b0] sm:$0xff]
          %v2484 = vld [vmem:[#allocation2 + $0x1b8] sm:$0xff]
          %v2485 = vld [vmem:[#allocation2 + $0x1c0] sm:$0xff]
          %v2486 = vld [vmem:[#allocation2 + $0x1c8] sm:$0xff]
          %v2487 = vld [vmem:[#allocation2 + $0x1d0] sm:$0xff]
          %v2488 = vld [vmem:[#allocation2 + $0x1d8] sm:$0xff]
          %v2489 = vld [vmem:[#allocation2 + $0x1e0] sm:$0xff]
          %v2490 = vld [vmem:[#allocation2 + $0x1e8] sm:$0xff]
          %v2491 = vld [vmem:[#allocation2 + $0x1f0] sm:$0xff]
          %v2492 = vld [vmem:[#allocation2 + $0x1f8] sm:$0xff]
          %v2493 = vld [vmem:[%s2] sm:$0x1]
          %v2495 = vlaneseq
          %v2496 = vshrl.u32 %v2495, 7
          %v2497 = vsub.s32 0, %v2496
          %v2498 = vrot.slane %v2493, %v2497
          %v2500 = vadd.f32 %v2429, %v2498
          %v2501 = vadd.f32 %v2430, %v2498
          %v2502 = vadd.f32 %v2431, %v2498
          %v2503 = vadd.f32 %v2432, %v2498
          %v2504 = vadd.f32 %v2433, %v2498
          %v2505 = vadd.f32 %v2434, %v2498
          %v2506 = vadd.f32 %v2435, %v2498
          %v2507 = vadd.f32 %v2436, %v2498
          %v2508 = vadd.f32 %v2437, %v2498
          %v2509 = vadd.f32 %v2438, %v2498
          %v2510 = vadd.f32 %v2439, %v2498
          %v2511 = vadd.f32 %v2440, %v2498
          %v2512 = vadd.f32 %v2441, %v2498
          %v2513 = vadd.f32 %v2442, %v2498
          %v2514 = vadd.f32 %v2443, %v2498
          %v2515 = vadd.f32 %v2444, %v2498
          %v2516 = vadd.f32 %v2445, %v2498
          %v2517 = vadd.f32 %v2446, %v2498
          %v2518 = vadd.f32 %v2447, %v2498
          %v2519 = vadd.f32 %v2448, %v2498
          %v2520 = vadd.f32 %v2449, %v2498
          %v2521 = vadd.f32 %v2450, %v2498
          %v2522 = vadd.f32 %v2451, %v2498
          %v2523 = vadd.f32 %v2452, %v2498
          %v2524 = vadd.f32 %v2453, %v2498
          %v2525 = vadd.f32 %v2454, %v2498
          %v2526 = vadd.f32 %v2455, %v2498
          %v2527 = vadd.f32 %v2456, %v2498
          %v2528 = vadd.f32 %v2457, %v2498
          %v2529 = vadd.f32 %v2458, %v2498
          %v2530 = vadd.f32 %v2459, %v2498
          %v2531 = vadd.f32 %v2460, %v2498
          %v2532 = vadd.f32 %v2461, %v2498
          %v2533 = vadd.f32 %v2462, %v2498
          %v2534 = vadd.f32 %v2463, %v2498
          %v2535 = vadd.f32 %v2464, %v2498
          %v2536 = vadd.f32 %v2465, %v2498
          %v2537 = vadd.f32 %v2466, %v2498
          %v2538 = vadd.f32 %v2467, %v2498
          %v2539 = vadd.f32 %v2468, %v2498
          %v2540 = vadd.f32 %v2469, %v2498
          %v2541 = vadd.f32 %v2470, %v2498
          %v2542 = vadd.f32 %v2471, %v2498
          %v2543 = vadd.f32 %v2472, %v2498
          %v2544 = vadd.f32 %v2473, %v2498
          %v2545 = vadd.f32 %v2474, %v2498
          %v2546 = vadd.f32 %v2475, %v2498
          %v2547 = vadd.f32 %v2476, %v2498
          %v2548 = vadd.f32 %v2477, %v2498
          %v2549 = vadd.f32 %v2478, %v2498
          %v2550 = vadd.f32 %v2479, %v2498
          %v2551 = vadd.f32 %v2480, %v2498
          %v2552 = vadd.f32 %v2481, %v2498
          %v2553 = vadd.f32 %v2482, %v2498
          %v2554 = vadd.f32 %v2483, %v2498
          %v2555 = vadd.f32 %v2484, %v2498
          %v2556 = vadd.f32 %v2485, %v2498
          %v2557 = vadd.f32 %v2486, %v2498
          %v2558 = vadd.f32 %v2487, %v2498
          %v2559 = vadd.f32 %v2488, %v2498
          %v2560 = vadd.f32 %v2489, %v2498
          %v2561 = vadd.f32 %v2490, %v2498
          %v2562 = vadd.f32 %v2491, %v2498
          %v2563 = vadd.f32 %v2492, %v2498
          %2564 = vst [vmem:[%s552] sm:$0xff] %v2500
          %2565 = vst [vmem:[%s552 + $0x8] sm:$0xff] %v2501
          %2566 = vst [vmem:[%s552 + $0x10] sm:$0xff] %v2502
          %2567 = vst [vmem:[%s552 + $0x18] sm:$0xff] %v2503
          %2568 = vst [vmem:[%s552 + $0x20] sm:$0xff] %v2504
          %2569 = vst [vmem:[%s552 + $0x28] sm:$0xff] %v2505
          %2570 = vst [vmem:[%s552 + $0x30] sm:$0xff] %v2506
          %2571 = vst [vmem:[%s552 + $0x38] sm:$0xff] %v2507
          %2572 = vst [vmem:[%s552 + $0x40] sm:$0xff] %v2508
          %2573 = vst [vmem:[%s552 + $0x48] sm:$0xff] %v2509
          %2574 = vst [vmem:[%s552 + $0x50] sm:$0xff] %v2510
          %2575 = vst [vmem:[%s552 + $0x58] sm:$0xff] %v2511
          %2576 = vst [vmem:[%s552 + $0x60] sm:$0xff] %v2512
          %2577 = vst [vmem:[%s552 + $0x68] sm:$0xff] %v2513
          %2578 = vst [vmem:[%s552 + $0x70] sm:$0xff] %v2514
          %2579 = vst [vmem:[%s552 + $0x78] sm:$0xff] %v2515
          %2580 = vst [vmem:[%s552 + $0x80] sm:$0xff] %v2516
          %2581 = vst [vmem:[%s552 + $0x88] sm:$0xff] %v2517
          %2582 = vst [vmem:[%s552 + $0x90] sm:$0xff] %v2518
          %2583 = vst [vmem:[%s552 + $0x98] sm:$0xff] %v2519
          %2584 = vst [vmem:[%s552 + $0xa0] sm:$0xff] %v2520
          %2585 = vst [vmem:[%s552 + $0xa8] sm:$0xff] %v2521
          %2586 = vst [vmem:[%s552 + $0xb0] sm:$0xff] %v2522
          %2587 = vst [vmem:[%s552 + $0xb8] sm:$0xff] %v2523
          %2588 = vst [vmem:[%s552 + $0xc0] sm:$0xff] %v2524
          %2589 = vst [vmem:[%s552 + $0xc8] sm:$0xff] %v2525
          %2590 = vst [vmem:[%s552 + $0xd0] sm:$0xff] %v2526
          %2591 = vst [vmem:[%s552 + $0xd8] sm:$0xff] %v2527
          %2592 = vst [vmem:[%s552 + $0xe0] sm:$0xff] %v2528
          %2593 = vst [vmem:[%s552 + $0xe8] sm:$0xff] %v2529
          %2594 = vst [vmem:[%s552 + $0xf0] sm:$0xff] %v2530
          %2595 = vst [vmem:[%s552 + $0xf8] sm:$0xff] %v2531
          %2596 = vst [vmem:[%s552 + $0x100] sm:$0xff] %v2532
          %2597 = vst [vmem:[%s552 + $0x108] sm:$0xff] %v2533
          %2598 = vst [vmem:[%s552 + $0x110] sm:$0xff] %v2534
          %2599 = vst [vmem:[%s552 + $0x118] sm:$0xff] %v2535
          %2600 = vst [vmem:[%s552 + $0x120] sm:$0xff] %v2536
          %2601 = vst [vmem:[%s552 + $0x128] sm:$0xff] %v2537
          %2602 = vst [vmem:[%s552 + $0x130] sm:$0xff] %v2538
          %2603 = vst [vmem:[%s552 + $0x138] sm:$0xff] %v2539
          %2604 = vst [vmem:[%s552 + $0x140] sm:$0xff] %v2540
          %2605 = vst [vmem:[%s552 + $0x148] sm:$0xff] %v2541
          %2606 = vst [vmem:[%s552 + $0x150] sm:$0xff] %v2542
          %2607 = vst [vmem:[%s552 + $0x158] sm:$0xff] %v2543
          %2608 = vst [vmem:[%s552 + $0x160] sm:$0xff] %v2544
          %2609 = vst [vmem:[%s552 + $0x168] sm:$0xff] %v2545
          %2610 = vst [vmem:[%s552 + $0x170] sm:$0xff] %v2546
          %2611 = vst [vmem:[%s552 + $0x178] sm:$0xff] %v2547
          %2612 = vst [vmem:[%s552 + $0x180] sm:$0xff] %v2548
          %2613 = vst [vmem:[%s552 + $0x188] sm:$0xff] %v2549
          %2614 = vst [vmem:[%s552 + $0x190] sm:$0xff] %v2550
          %2615 = vst [vmem:[%s552 + $0x198] sm:$0xff] %v2551
          %2616 = vst [vmem:[%s552 + $0x1a0] sm:$0xff] %v2552
          %2617 = vst [vmem:[%s552 + $0x1a8] sm:$0xff] %v2553
          %2618 = vst [vmem:[%s552 + $0x1b0] sm:$0xff] %v2554
          %2619 = vst [vmem:[%s552 + $0x1b8] sm:$0xff] %v2555
          %2620 = vst [vmem:[%s552 + $0x1c0] sm:$0xff] %v2556
          %2621 = vst [vmem:[%s552 + $0x1c8] sm:$0xff] %v2557
          %2622 = vst [vmem:[%s552 + $0x1d0] sm:$0xff] %v2558
          %2623 = vst [vmem:[%s552 + $0x1d8] sm:$0xff] %v2559
          %2624 = vst [vmem:[%s552 + $0x1e0] sm:$0xff] %v2560
          %2625 = vst [vmem:[%s552 + $0x1e8] sm:$0xff] %v2561
          %2626 = vst [vmem:[%s552 + $0x1f0] sm:$0xff] %v2562
          %2627 = vst [vmem:[%s552 + $0x1f8] sm:$0xff] %v2563
          %v2628 = vadd.f32 %v2500, %v2501
          %v2629 = vadd.f32 %v2628, %v2502
          %v2630 = vadd.f32 %v2629, %v2503
          %v2631 = vadd.f32 %v2630, %v2504
          %v2632 = vadd.f32 %v2631, %v2505
          %v2633 = vadd.f32 %v2632, %v2506
          %v2634 = vadd.f32 %v2633, %v2507
          %v2635 = vadd.f32 %v2634, %v2508
          %v2636 = vadd.f32 %v2635, %v2509
          %v2637 = vadd.f32 %v2636, %v2510
          %v2638 = vadd.f32 %v2637, %v2511
          %v2639 = vadd.f32 %v2638, %v2512
          %v2640 = vadd.f32 %v2639, %v2513
          %v2641 = vadd.f32 %v2640, %v2514
          %v2642 = vadd.f32 %v2641, %v2515
          %v2643 = vadd.f32 %v2642, %v2516
          %v2644 = vadd.f32 %v2643, %v2517
          %v2645 = vadd.f32 %v2644, %v2518
          %v2646 = vadd.f32 %v2645, %v2519
          %v2647 = vadd.f32 %v2646, %v2520
          %v2648 = vadd.f32 %v2647, %v2521
          %v2649 = vadd.f32 %v2648, %v2522
          %v2650 = vadd.f32 %v2649, %v2523
          %v2651 = vadd.f32 %v2650, %v2524
          %v2652 = vadd.f32 %v2651, %v2525
          %v2653 = vadd.f32 %v2652, %v2526
          %v2654 = vadd.f32 %v2653, %v2527
          %v2655 = vadd.f32 %v2654, %v2528
          %v2656 = vadd.f32 %v2655, %v2529
          %v2657 = vadd.f32 %v2656, %v2530
          %v2658 = vadd.f32 %v2657, %v2531
          %v2659 = vadd.f32 %v2658, %v2532
          %v2660 = vadd.f32 %v2659, %v2533
          %v2661 = vadd.f32 %v2660, %v2534
          %v2662 = vadd.f32 %v2661, %v2535
          %v2663 = vadd.f32 %v2662, %v2536
          %v2664 = vadd.f32 %v2663, %v2537
          %v2665 = vadd.f32 %v2664, %v2538
          %v2666 = vadd.f32 %v2665, %v2539
          %v2667 = vadd.f32 %v2666, %v2540
          %v2668 = vadd.f32 %v2667, %v2541
          %v2669 = vadd.f32 %v2668, %v2542
          %v2670 = vadd.f32 %v2669, %v2543
          %v2671 = vadd.f32 %v2670, %v2544
          %v2672 = vadd.f32 %v2671, %v2545
          %v2673 = vadd.f32 %v2672, %v2546
          %v2674 = vadd.f32 %v2673, %v2547
          %v2675 = vadd.f32 %v2674, %v2548
          %v2676 = vadd.f32 %v2675, %v2549
          %v2677 = vadd.f32 %v2676, %v2550
          %v2678 = vadd.f32 %v2677, %v2551
          %v2679 = vadd.f32 %v2678, %v2552
          %v2680 = vadd.f32 %v2679, %v2553
          %v2681 = vadd.f32 %v2680, %v2554
          %v2682 = vadd.f32 %v2681, %v2555
          %v2683 = vadd.f32 %v2682, %v2556
          %v2684 = vadd.f32 %v2683, %v2557
          %v2685 = vadd.f32 %v2684, %v2558
          %v2686 = vadd.f32 %v2685, %v2559
          %v2687 = vadd.f32 %v2686, %v2560
          %v2688 = vadd.f32 %v2687, %v2561
          %v2689 = vadd.f32 %v2688, %v2562
          %v2690 = vadd.f32 %v2689, %v2563
          %v2691 = vrot.slane %v2690, 4
          %v2692 = vadd.f32 %v2690, %v2691
          %v2693 = vrot.slane %v2692, 2
          %v2694 = vadd.f32 %v2692, %v2693
          %v2695 = vrot.slane %v2694, 1
          %v2696 = vadd.f32 %v2694, %v2695
          %v2697 = vmul.f32 %v2500, %v2500
          %v2698 = vmul.f32 %v2501, %v2501
          %v2699 = vmul.f32 %v2502, %v2502
          %v2700 = vmul.f32 %v2503, %v2503
          %v2701 = vmul.f32 %v2504, %v2504
          %v2702 = vmul.f32 %v2505, %v2505
          %v2703 = vmul.f32 %v2506, %v2506
          %v2704 = vmul.f32 %v2507, %v2507
          %v2705 = vmul.f32 %v2508, %v2508
          %v2706 = vmul.f32 %v2509, %v2509
          %v2707 = vmul.f32 %v2510, %v2510
          %v2708 = vmul.f32 %v2511, %v2511
          %v2709 = vmul.f32 %v2512, %v2512
          %v2710 = vmul.f32 %v2513, %v2513
          %v2711 = vmul.f32 %v2514, %v2514
          %v2712 = vmul.f32 %v2515, %v2515
          %v2713 = vmul.f32 %v2516, %v2516
          %v2714 = vmul.f32 %v2517, %v2517
          %v2715 = vmul.f32 %v2518, %v2518
          %v2716 = vmul.f32 %v2519, %v2519
          %v2717 = vmul.f32 %v2520, %v2520
          %v2718 = vmul.f32 %v2521, %v2521
          %v2719 = vmul.f32 %v2522, %v2522
          %v2720 = vmul.f32 %v2523, %v2523
          %v2721 = vmul.f32 %v2524, %v2524
          %v2722 = vmul.f32 %v2525, %v2525
          %v2723 = vmul.f32 %v2526, %v2526
          %v2724 = vmul.f32 %v2527, %v2527
          %v2725 = vmul.f32 %v2528, %v2528
          %v2726 = vmul.f32 %v2529, %v2529
          %v2727 = vmul.f32 %v2530, %v2530
          %v2728 = vmul.f32 %v2531, %v2531
          %v2729 = vmul.f32 %v2532, %v2532
          %v2730 = vmul.f32 %v2533, %v2533
          %v2731 = vmul.f32 %v2534, %v2534
          %v2732 = vmul.f32 %v2535, %v2535
          %v2733 = vmul.f32 %v2536, %v2536
          %v2734 = vmul.f32 %v2537, %v2537
          %v2735 = vmul.f32 %v2538, %v2538
          %v2736 = vmul.f32 %v2539, %v2539
          %v2737 = vmul.f32 %v2540, %v2540
          %v2738 = vmul.f32 %v2541, %v2541
          %v2739 = vmul.f32 %v2542, %v2542
          %v2740 = vmul.f32 %v2543, %v2543
          %v2741 = vmul.f32 %v2544, %v2544
          %v2742 = vmul.f32 %v2545, %v2545
          %v2743 = vmul.f32 %v2546, %v2546
          %v2744 = vmul.f32 %v2547, %v2547
          %v2745 = vmul.f32 %v2548, %v2548
          %v2746 = vmul.f32 %v2549, %v2549
          %v2747 = vmul.f32 %v2550, %v2550
          %v2748 = vmul.f32 %v2551, %v2551
          %v2749 = vmul.f32 %v2552, %v2552
          %v2750 = vmul.f32 %v2553, %v2553
          %v2751 = vmul.f32 %v2554, %v2554
          %v2752 = vmul.f32 %v2555, %v2555
          %v2753 = vmul.f32 %v2556, %v2556
          %v2754 = vmul.f32 %v2557, %v2557
          %v2755 = vmul.f32 %v2558, %v2558
          %v2756 = vmul.f32 %v2559, %v2559
          %v2757 = vmul.f32 %v2560, %v2560
          %v2758 = vmul.f32 %v2561, %v2561
          %v2759 = vmul.f32 %v2562, %v2562
          %v2760 = vmul.f32 %v2563, %v2563
          %v2761 = vadd.f32 %v2697, %v2698
          %v2762 = vadd.f32 %v2761, %v2699
          %v2763 = vadd.f32 %v2762, %v2700
          %v2764 = vadd.f32 %v2763, %v2701
          %v2765 = vadd.f32 %v2764, %v2702
          %v2766 = vadd.f32 %v2765, %v2703
          %v2767 = vadd.f32 %v2766, %v2704
          %v2768 = vadd.f32 %v2767, %v2705
          %v2769 = vadd.f32 %v2768, %v2706
          %v2770 = vadd.f32 %v2769, %v2707
          %v2771 = vadd.f32 %v2770, %v2708
          %v2772 = vadd.f32 %v2771, %v2709
          %v2773 = vadd.f32 %v2772, %v2710
          %v2774 = vadd.f32 %v2773, %v2711
          %v2775 = vadd.f32 %v2774, %v2712
          %v2776 = vadd.f32 %v2775, %v2713
          %v2777 = vadd.f32 %v2776, %v2714
          %v2778 = vadd.f32 %v2777, %v2715
          %v2779 = vadd.f32 %v2778, %v2716
          %v2780 = vadd.f32 %v2779, %v2717
          %v2781 = vadd.f32 %v2780, %v2718
          %v2782 = vadd.f32 %v2781, %v2719
          %v2783 = vadd.f32 %v2782, %v2720
          %v2784 = vadd.f32 %v2783, %v2721
          %v2785 = vadd.f32 %v2784, %v2722
          %v2786 = vadd.f32 %v2785, %v2723
          %v2787 = vadd.f32 %v2786, %v2724
          %v2788 = vadd.f32 %v2787, %v2725
          %v2789 = vadd.f32 %v2788, %v2726
          %v2790 = vadd.f32 %v2789, %v2727
          %v2791 = vadd.f32 %v2790, %v2728
          %v2792 = vadd.f32 %v2791, %v2729
          %v2793 = vadd.f32 %v2792, %v2730
          %v2794 = vadd.f32 %v2793, %v2731
          %v2795 = vadd.f32 %v2794, %v2732
          %v2796 = vadd.f32 %v2795, %v2733
          %v2797 = vadd.f32 %v2796, %v2734
          %v2798 = vadd.f32 %v2797, %v2735
          %v2799 = vadd.f32 %v2798, %v2736
          %v2800 = vadd.f32 %v2799, %v2737
          %v2801 = vadd.f32 %v2800, %v2738
          %v2802 = vadd.f32 %v2801, %v2739
          %v2803 = vadd.f32 %v2802, %v2740
          %v2804 = vadd.f32 %v2803, %v2741
          %v2805 = vadd.f32 %v2804, %v2742
          %v2806 = vadd.f32 %v2805, %v2743
          %v2807 = vadd.f32 %v2806, %v2744
          %v2808 = vadd.f32 %v2807, %v2745
          %v2809 = vadd.f32 %v2808, %v2746
          %v2810 = vadd.f32 %v2809, %v2747
          %v2811 = vadd.f32 %v2810, %v2748
          %v2812 = vadd.f32 %v2811, %v2749
          %v2813 = vadd.f32 %v2812, %v2750
          %v2814 = vadd.f32 %v2813, %v2751
          %v2815 = vadd.f32 %v2814, %v2752
          %v2816 = vadd.f32 %v2815, %v2753
          %v2817 = vadd.f32 %v2816, %v2754
          %v2818 = vadd.f32 %v2817, %v2755
          %v2819 = vadd.f32 %v2818, %v2756
          %v2820 = vadd.f32 %v2819, %v2757
          %v2821 = vadd.f32 %v2820, %v2758
          %v2822 = vadd.f32 %v2821, %v2759
          %v2823 = vadd.f32 %v2822, %v2760
          %v2824 = vrot.slane %v2823, 4
          %v2825 = vadd.f32 %v2823, %v2824
          %v2826 = vrot.slane %v2825, 2
          %v2827 = vadd.f32 %v2825, %v2826
          %v2828 = vrot.slane %v2827, 1
          %v2829 = vadd.f32 %v2827, %v2828
          %2830 = vst [vmem:[%s557] sm:$0xff] %v2696
          %2831 = vst [vmem:[%s561] sm:$0xff] %v2829
        $region63: #{dnet_forward.9} parent=50 // pred_fallthru
          _
        %s2832 = smul.u32 64, %s21
        %p2833 = scmp.lt.s32.totalorder %s2832, 63
        %s2834 = scalar_select %p2833, %s2832, 63
        %s2835 = smul.addr %s2834, 8
        %s2836 = scalar_lea.vmem %s3, %s2835
        %p2837 = scmp.lt.s32.totalorder %s21, 0
        %s2838 = scalar_select %p2837, %s21, 0
        %s2839 = smul.addr %s2838, 8
        %s2840 = scalar_lea.vmem %s4, %s2839
        %p2841 = scmp.lt.s32.totalorder %s21, 0
        %s2842 = scalar_select %p2841, %s21, 0
        %s2843 = smul.addr %s2842, 8
        %s2844 = scalar_lea.vmem %s5, %s2843
        // Predicated region
        $region64: #{dnet_forward.9} parent=50 // pred_check
          %p2845 = pneg %p122
        $region65: #{dnet_forward.9} parent=50 // pred_check_branch
          %2847 = sbr.rel (%p2845) target = $region67
        $region66: #{dnet_forward.9} parent=50 // pred_region
          %s2848 = smul.u32 64, %s21
        $region67: #{dnet_forward.9} parent=50 // pred_fallthru
          _
        // Predicated region
        $region68: #{dnet_forward.9} parent=50 // pred_check
          %p2849 = pneg %p148
        $region69: #{dnet_forward.9} parent=50 // pred_check_branch
          %2851 = sbr.rel (%p2849) target = $region71
        $region70: #{dnet_forward.9} parent=50 // pred_region
          _
        $region71: #{dnet_forward.9} parent=50 // pred_fallthru
          _
        // Predicated region
        $region72: #{dnet_forward.9} parent=50 // pred_check
          %p2852 = pneg %p174
        $region73: #{dnet_forward.9} parent=50 // pred_check_branch
          %2854 = sbr.rel (%p2852) target = $region75
        $region74: #{dnet_forward.9} parent=50 // pred_region
          _
        $region75: #{dnet_forward.9} parent=50 // pred_fallthru
          _
        // Predicated region
        $region76: #{dnet_forward.9} parent=50 // pred_check
          %p2855 = pneg %p122
        $region77: #{dnet_forward.9} parent=50 // pred_check_branch
          %2857 = sbr.rel (%p2855) target = $region79
        $region78: #{dnet_forward.9} parent=50 // pred_region
          %s2858 = smul.u32 64, %s21
          %p2859 = scmp.lt.s32.totalorder %s2858, 63
          %s2860 = scalar_select %p2859, %s2858, 63
          %s2861 = smul.addr %s2860, 8
          %s2862 = scalar_lea.vmem %s3, %s2861
        $region79: #{dnet_forward.9} parent=50 // pred_fallthru
          _
        // Predicated region
        $region80: #{dnet_forward.9} parent=50 // pred_check
          %p2863 = pneg %p148
        $region81: #{dnet_forward.9} parent=50 // pred_check_branch
          %2865 = sbr.rel (%p2863) target = $region83
        $region82: #{dnet_forward.9} parent=50 // pred_region
          %p2866 = scmp.lt.s32.totalorder %s21, 0
          %s2867 = scalar_select %p2866, %s21, 0
          %s2868 = smul.addr %s2867, 8
          %s2869 = scalar_lea.vmem %s4, %s2868
        $region83: #{dnet_forward.9} parent=50 // pred_fallthru
          _
        // Predicated region
        $region84: #{dnet_forward.9} parent=50 // pred_check
          %p2870 = pneg %p174
        $region85: #{dnet_forward.9} parent=50 // pred_check_branch
          %2872 = sbr.rel (%p2870) target = $region87
        $region86: #{dnet_forward.9} parent=50 // pred_region
          %p2873 = scmp.lt.s32.totalorder %s21, 0
          %s2874 = scalar_select %p2873, %s21, 0
          %s2875 = smul.addr %s2874, 8
          %s2876 = scalar_lea.vmem %s5, %s2875
        $region87: #{dnet_forward.9} parent=50 // pred_fallthru
          _
      $region51: #{dnet_forward.9} parent=5 // pred_fallthru
        _
      %p2877 = scmp.le.s32.totalorder 2, %s12
      // Predicated region
      $region88: #{dnet_forward.9} parent=5 // pred_check
        %p2878 = pneg %p2877
      $region89: #{dnet_forward.9} parent=5 // pred_check_branch
        %2880 = sbr.rel (%p2878) target = $region91
      $region90: #{dnet_forward.9} parent=5 // pred_region
        %s2881 = ssub.s32 %s12, 2
      $region91: #{dnet_forward.9} parent=5 // pred_fallthru
        _
    $region6: #{dnet_forward.9} parent=1 // loop_footer
      %s16 = sadd.s32 1, %s12
    $region7: #{dnet_forward.9} parent=1 // loop_footer_branch
      %11 = sbr.rel target = $region3
    $region8: #{dnet_forward.9} parent=1 // loop_exit
      _

// kernel: dnet_forward.10
$region0: #{dnet_forward.10}
  #allocation0 [shape = 'u32[]', space=smem, size = 0x4, offset = 0x4, fixed_abs, tag = 'smem constant byte address 0x4 - core index']
  #allocation1 [shape = 'u32[144,128]{1,0:T(1,128)}', space=vmem, size = 0x12000, scoped, tag = 'internal scratch']
  %s0 = inlined_call_operand.vmem [shape: f32[512,128], index: 0, kind: input, shape index: {}]
  %s1 = inlined_call_operand.vmem [shape: f32[1,128], index: 1, kind: input, shape index: {}]
  %s2 = inlined_call_operand.vmem [shape: f32[1,128], index: 2, kind: input, shape index: {}]
  %s3 = inlined_call_operand.vmem [shape: f32[512,128], index: 3, kind: output, shape index: {}]
  %s4 = sld [smem:[#allocation0]]
  $region22: #{dnet_forward.10} parent=0
    _
  %s6 = ssub.s32 1, %s4
  %s7 = scalar_select 0, %s6, %s4
  // Predicated region
  $region2: #{dnet_forward.10} parent=0 // pred_check
    _
  $region3: #{dnet_forward.10} parent=0 // pred_check_branch
    %9 = sbr.rel (0) target = $region5
  $region4: #{dnet_forward.10} parent=0 // pred_region
    _
  $region5: #{dnet_forward.10} parent=0 // pred_fallthru
    _
  // Predicated region
  $region6: #{dnet_forward.10} parent=0 // pred_check
    _
  $region7: #{dnet_forward.10} parent=0 // pred_check_branch
    %11 = sbr.rel (0) target = $region9
  $region8: #{dnet_forward.10} parent=0 // pred_region
    _
  $region9: #{dnet_forward.10} parent=0 // pred_fallthru
    _
  // Predicated region
  $region10: #{dnet_forward.10} parent=0 // pred_check
    _
  $region11: #{dnet_forward.10} parent=0 // pred_check_branch
    %13 = sbr.rel (0) target = $region13
  $region12: #{dnet_forward.10} parent=0 // pred_region
    _
  $region13: #{dnet_forward.10} parent=0 // pred_fallthru
    _
  %v14 = vld [vmem:[%s0] sm:$0xff]
  %v15 = vld [vmem:[%s0 + $0x8] sm:$0xff]
  %v16 = vld [vmem:[%s0 + $0x10] sm:$0xff]
  %v17 = vld [vmem:[%s0 + $0x18] sm:$0xff]
  %v18 = vld [vmem:[%s0 + $0x20] sm:$0xff]
  %v19 = vld [vmem:[%s0 + $0x28] sm:$0xff]
  %v20 = vld [vmem:[%s0 + $0x30] sm:$0xff]
  %v21 = vld [vmem:[%s0 + $0x38] sm:$0xff]
  %v22 = vld [vmem:[%s0 + $0x40] sm:$0xff]
  %v23 = vld [vmem:[%s0 + $0x48] sm:$0xff]
  %v24 = vld [vmem:[%s0 + $0x50] sm:$0xff]
  %v25 = vld [vmem:[%s0 + $0x58] sm:$0xff]
  %v26 = vld [vmem:[%s0 + $0x60] sm:$0xff]
  %v27 = vld [vmem:[%s0 + $0x68] sm:$0xff]
  %v28 = vld [vmem:[%s0 + $0x70] sm:$0xff]
  %v29 = vld [vmem:[%s0 + $0x78] sm:$0xff]
  %v30 = vld [vmem:[%s0 + $0x80] sm:$0xff]
  %v31 = vld [vmem:[%s0 + $0x88] sm:$0xff]
  %v32 = vld [vmem:[%s0 + $0x90] sm:$0xff]
  %v33 = vld [vmem:[%s0 + $0x98] sm:$0xff]
  %v34 = vld [vmem:[%s0 + $0xa0] sm:$0xff]
  %v35 = vld [vmem:[%s0 + $0xa8] sm:$0xff]
  %v36 = vld [vmem:[%s0 + $0xb0] sm:$0xff]
  %v37 = vld [vmem:[%s0 + $0xb8] sm:$0xff]
  %v38 = vld [vmem:[%s0 + $0xc0] sm:$0xff]
  %v39 = vld [vmem:[%s0 + $0xc8] sm:$0xff]
  %v40 = vld [vmem:[%s0 + $0xd0] sm:$0xff]
  %v41 = vld [vmem:[%s0 + $0xd8] sm:$0xff]
  %v42 = vld [vmem:[%s0 + $0xe0] sm:$0xff]
  %v43 = vld [vmem:[%s0 + $0xe8] sm:$0xff]
  %v44 = vld [vmem:[%s0 + $0xf0] sm:$0xff]
  %v45 = vld [vmem:[%s0 + $0xf8] sm:$0xff]
  %v46 = vld [vmem:[%s0 + $0x100] sm:$0xff]
  %v47 = vld [vmem:[%s0 + $0x108] sm:$0xff]
  %v48 = vld [vmem:[%s0 + $0x110] sm:$0xff]
  %v49 = vld [vmem:[%s0 + $0x118] sm:$0xff]
  %v50 = vld [vmem:[%s0 + $0x120] sm:$0xff]
  %v51 = vld [vmem:[%s0 + $0x128] sm:$0xff]
  %v52 = vld [vmem:[%s0 + $0x130] sm:$0xff]
  %v53 = vld [vmem:[%s0 + $0x138] sm:$0xff]
  %v54 = vld [vmem:[%s0 + $0x140] sm:$0xff]
  %v55 = vld [vmem:[%s0 + $0x148] sm:$0xff]
  %v56 = vld [vmem:[%s0 + $0x150] sm:$0xff]
  %v57 = vld [vmem:[%s0 + $0x158] sm:$0xff]
  %v58 = vld [vmem:[%s0 + $0x160] sm:$0xff]
  %v59 = vld [vmem:[%s0 + $0x168] sm:$0xff]
  %v60 = vld [vmem:[%s0 + $0x170] sm:$0xff]
  %v61 = vld [vmem:[%s0 + $0x178] sm:$0xff]
  %v62 = vld [vmem:[%s0 + $0x180] sm:$0xff]
  %v63 = vld [vmem:[%s0 + $0x188] sm:$0xff]
  %v64 = vld [vmem:[%s0 + $0x190] sm:$0xff]
  %v65 = vld [vmem:[%s0 + $0x198] sm:$0xff]
  %v66 = vld [vmem:[%s0 + $0x1a0] sm:$0xff]
  %v67 = vld [vmem:[%s0 + $0x1a8] sm:$0xff]
  %v68 = vld [vmem:[%s0 + $0x1b0] sm:$0xff]
  %v69 = vld [vmem:[%s0 + $0x1b8] sm:$0xff]
  %v70 = vld [vmem:[%s0 + $0x1c0] sm:$0xff]
  %v71 = vld [vmem:[%s0 + $0x1c8] sm:$0xff]
  %v72 = vld [vmem:[%s0 + $0x1d0] sm:$0xff]
  %v73 = vld [vmem:[%s0 + $0x1d8] sm:$0xff]
  %v74 = vld [vmem:[%s0 + $0x1e0] sm:$0xff]
  %v75 = vld [vmem:[%s0 + $0x1e8] sm:$0xff]
  %v76 = vld [vmem:[%s0 + $0x1f0] sm:$0xff]
  %v77 = vld [vmem:[%s0 + $0x1f8] sm:$0xff]
  %v78 = vld [vmem:[%s1] sm:$0x1]
  %v80 = vlaneseq
  %v81 = vshrl.u32 %v80, 7
  %v82 = vsub.s32 0, %v81
  %v83 = vrot.slane %v78, %v82
  %v85 = vmul.f32 %v14, %v83
  %v86 = vmul.f32 %v15, %v83
  %v87 = vmul.f32 %v16, %v83
  %v88 = vmul.f32 %v17, %v83
  %v89 = vmul.f32 %v18, %v83
  %v90 = vmul.f32 %v19, %v83
  %v91 = vmul.f32 %v20, %v83
  %v92 = vmul.f32 %v21, %v83
  %v93 = vmul.f32 %v22, %v83
  %v94 = vmul.f32 %v23, %v83
  %v95 = vmul.f32 %v24, %v83
  %v96 = vmul.f32 %v25, %v83
  %v97 = vmul.f32 %v26, %v83
  %v98 = vmul.f32 %v27, %v83
  %v99 = vmul.f32 %v28, %v83
  %v100 = vmul.f32 %v29, %v83
  %v101 = vmul.f32 %v30, %v83
  %v102 = vmul.f32 %v31, %v83
  %v103 = vmul.f32 %v32, %v83
  %v104 = vmul.f32 %v33, %v83
  %v105 = vmul.f32 %v34, %v83
  %v106 = vmul.f32 %v35, %v83
  %v107 = vmul.f32 %v36, %v83
  %v108 = vmul.f32 %v37, %v83
  %v109 = vmul.f32 %v38, %v83
  %v110 = vmul.f32 %v39, %v83
  %v111 = vmul.f32 %v40, %v83
  %v112 = vmul.f32 %v41, %v83
  %v113 = vmul.f32 %v42, %v83
  %v114 = vmul.f32 %v43, %v83
  %v115 = vmul.f32 %v44, %v83
  %v116 = vmul.f32 %v45, %v83
  %v117 = vmul.f32 %v46, %v83
  %v118 = vmul.f32 %v47, %v83
  %v119 = vmul.f32 %v48, %v83
  %v120 = vmul.f32 %v49, %v83
  %v121 = vmul.f32 %v50, %v83
  %v122 = vmul.f32 %v51, %v83
  %v123 = vmul.f32 %v52, %v83
  %v124 = vmul.f32 %v53, %v83
  %v125 = vmul.f32 %v54, %v83
  %v126 = vmul.f32 %v55, %v83
  %v127 = vmul.f32 %v56, %v83
  %v128 = vmul.f32 %v57, %v83
  %v129 = vmul.f32 %v58, %v83
  %v130 = vmul.f32 %v59, %v83
  %v131 = vmul.f32 %v60, %v83
  %v132 = vmul.f32 %v61, %v83
  %v133 = vmul.f32 %v62, %v83
  %v134 = vmul.f32 %v63, %v83
  %v135 = vmul.f32 %v64, %v83
  %v136 = vmul.f32 %v65, %v83
  %v137 = vmul.f32 %v66, %v83
  %v138 = vmul.f32 %v67, %v83
  %v139 = vmul.f32 %v68, %v83
  %v140 = vmul.f32 %v69, %v83
  %v141 = vmul.f32 %v70, %v83
  %v142 = vmul.f32 %v71, %v83
  %v143 = vmul.f32 %v72, %v83
  %v144 = vmul.f32 %v73, %v83
  %v145 = vmul.f32 %v74, %v83
  %v146 = vmul.f32 %v75, %v83
  %v147 = vmul.f32 %v76, %v83
  %v148 = vmul.f32 %v77, %v83
  %v149 = vld [vmem:[%s2] sm:$0x1]
  %v151 = vlaneseq
  %v152 = vshrl.u32 %v151, 7
  %v153 = vsub.s32 0, %v152
  %v154 = vrot.slane %v149, %v153
  %v156 = vadd.f32 %v85, %v154
  %v157 = vadd.f32 %v86, %v154
  %v158 = vadd.f32 %v87, %v154
  %v159 = vadd.f32 %v88, %v154
  %v160 = vadd.f32 %v89, %v154
  %v161 = vadd.f32 %v90, %v154
  %v162 = vadd.f32 %v91, %v154
  %v163 = vadd.f32 %v92, %v154
  %v164 = vadd.f32 %v93, %v154
  %v165 = vadd.f32 %v94, %v154
  %v166 = vadd.f32 %v95, %v154
  %v167 = vadd.f32 %v96, %v154
  %v168 = vadd.f32 %v97, %v154
  %v169 = vadd.f32 %v98, %v154
  %v170 = vadd.f32 %v99, %v154
  %v171 = vadd.f32 %v100, %v154
  %v172 = vadd.f32 %v101, %v154
  %v173 = vadd.f32 %v102, %v154
  %v174 = vadd.f32 %v103, %v154
  %v175 = vadd.f32 %v104, %v154
  %v176 = vadd.f32 %v105, %v154
  %v177 = vadd.f32 %v106, %v154
  %v178 = vadd.f32 %v107, %v154
  %v179 = vadd.f32 %v108, %v154
  %v180 = vadd.f32 %v109, %v154
  %v181 = vadd.f32 %v110, %v154
  %v182 = vadd.f32 %v111, %v154
  %v183 = vadd.f32 %v112, %v154
  %v184 = vadd.f32 %v113, %v154
  %v185 = vadd.f32 %v114, %v154
  %v186 = vadd.f32 %v115, %v154
  %v187 = vadd.f32 %v116, %v154
  %v188 = vadd.f32 %v117, %v154
  %v189 = vadd.f32 %v118, %v154
  %v190 = vadd.f32 %v119, %v154
  %v191 = vadd.f32 %v120, %v154
  %v192 = vadd.f32 %v121, %v154
  %v193 = vadd.f32 %v122, %v154
  %v194 = vadd.f32 %v123, %v154
  %v195 = vadd.f32 %v124, %v154
  %v196 = vadd.f32 %v125, %v154
  %v197 = vadd.f32 %v126, %v154
  %v198 = vadd.f32 %v127, %v154
  %v199 = vadd.f32 %v128, %v154
  %v200 = vadd.f32 %v129, %v154
  %v201 = vadd.f32 %v130, %v154
  %v202 = vadd.f32 %v131, %v154
  %v203 = vadd.f32 %v132, %v154
  %v204 = vadd.f32 %v133, %v154
  %v205 = vadd.f32 %v134, %v154
  %v206 = vadd.f32 %v135, %v154
  %v207 = vadd.f32 %v136, %v154
  %v208 = vadd.f32 %v137, %v154
  %v209 = vadd.f32 %v138, %v154
  %v210 = vadd.f32 %v139, %v154
  %v211 = vadd.f32 %v140, %v154
  %v212 = vadd.f32 %v141, %v154
  %v213 = vadd.f32 %v142, %v154
  %v214 = vadd.f32 %v143, %v154
  %v215 = vadd.f32 %v144, %v154
  %v216 = vadd.f32 %v145, %v154
  %v217 = vadd.f32 %v146, %v154
  %v218 = vadd.f32 %v147, %v154
  %v219 = vadd.f32 %v148, %v154
  %vm220 = vcmp.gt.f32.partialorder %v156, 0.0
  %vm221 = vcmp.gt.f32.partialorder %v157, 0.0
  %vm222 = vcmp.gt.f32.partialorder %v158, 0.0
  %vm223 = vcmp.gt.f32.partialorder %v159, 0.0
  %vm224 = vcmp.gt.f32.partialorder %v160, 0.0
  %vm225 = vcmp.gt.f32.partialorder %v161, 0.0
  %vm226 = vcmp.gt.f32.partialorder %v162, 0.0
  %vm227 = vcmp.gt.f32.partialorder %v163, 0.0
  %vm228 = vcmp.gt.f32.partialorder %v164, 0.0
  %vm229 = vcmp.gt.f32.partialorder %v165, 0.0
  %vm230 = vcmp.gt.f32.partialorder %v166, 0.0
  %vm231 = vcmp.gt.f32.partialorder %v167, 0.0
  %vm232 = vcmp.gt.f32.partialorder %v168, 0.0
  %vm233 = vcmp.gt.f32.partialorder %v169, 0.0
  %vm234 = vcmp.gt.f32.partialorder %v170, 0.0
  %vm235 = vcmp.gt.f32.partialorder %v171, 0.0
  %vm236 = vcmp.gt.f32.partialorder %v172, 0.0
  %vm237 = vcmp.gt.f32.partialorder %v173, 0.0
  %vm238 = vcmp.gt.f32.partialorder %v174, 0.0
  %vm239 = vcmp.gt.f32.partialorder %v175, 0.0
  %vm240 = vcmp.gt.f32.partialorder %v176, 0.0
  %vm241 = vcmp.gt.f32.partialorder %v177, 0.0
  %vm242 = vcmp.gt.f32.partialorder %v178, 0.0
  %vm243 = vcmp.gt.f32.partialorder %v179, 0.0
  %vm244 = vcmp.gt.f32.partialorder %v180, 0.0
  %vm245 = vcmp.gt.f32.partialorder %v181, 0.0
  %vm246 = vcmp.gt.f32.partialorder %v182, 0.0
  %vm247 = vcmp.gt.f32.partialorder %v183, 0.0
  %vm248 = vcmp.gt.f32.partialorder %v184, 0.0
  %vm249 = vcmp.gt.f32.partialorder %v185, 0.0
  %vm250 = vcmp.gt.f32.partialorder %v186, 0.0
  %vm251 = vcmp.gt.f32.partialorder %v187, 0.0
  %vm252 = vcmp.gt.f32.partialorder %v188, 0.0
  %vm253 = vcmp.gt.f32.partialorder %v189, 0.0
  %vm254 = vcmp.gt.f32.partialorder %v190, 0.0
  %vm255 = vcmp.gt.f32.partialorder %v191, 0.0
  %vm256 = vcmp.gt.f32.partialorder %v192, 0.0
  %vm257 = vcmp.gt.f32.partialorder %v193, 0.0
  %vm258 = vcmp.gt.f32.partialorder %v194, 0.0
  %vm259 = vcmp.gt.f32.partialorder %v195, 0.0
  %vm260 = vcmp.gt.f32.partialorder %v196, 0.0
  %vm261 = vcmp.gt.f32.partialorder %v197, 0.0
  %vm262 = vcmp.gt.f32.partialorder %v198, 0.0
  %vm263 = vcmp.gt.f32.partialorder %v199, 0.0
  %vm264 = vcmp.gt.f32.partialorder %v200, 0.0
  %vm265 = vcmp.gt.f32.partialorder %v201, 0.0
  %vm266 = vcmp.gt.f32.partialorder %v202, 0.0
  %vm267 = vcmp.gt.f32.partialorder %v203, 0.0
  %vm268 = vcmp.gt.f32.partialorder %v204, 0.0
  %vm269 = vcmp.gt.f32.partialorder %v205, 0.0
  %vm270 = vcmp.gt.f32.partialorder %v206, 0.0
  %vm271 = vcmp.gt.f32.partialorder %v207, 0.0
  %vm272 = vcmp.gt.f32.partialorder %v208, 0.0
  %vm273 = vcmp.gt.f32.partialorder %v209, 0.0
  %vm274 = vcmp.gt.f32.partialorder %v210, 0.0
  %vm275 = vcmp.gt.f32.partialorder %v211, 0.0
  %vm276 = vcmp.gt.f32.partialorder %v212, 0.0
  %vm277 = vcmp.gt.f32.partialorder %v213, 0.0
  %vm278 = vcmp.gt.f32.partialorder %v214, 0.0
  %vm279 = vcmp.gt.f32.partialorder %v215, 0.0
  %vm280 = vcmp.gt.f32.partialorder %v216, 0.0
  %vm281 = vcmp.gt.f32.partialorder %v217, 0.0
  %vm282 = vcmp.gt.f32.partialorder %v218, 0.0
  %vm283 = vcmp.gt.f32.partialorder %v219, 0.0
  %v284 = vmul.f32 %v156, 0.2
  %v285 = vmul.f32 %v157, 0.2
  %v286 = vmul.f32 %v158, 0.2
  %v287 = vmul.f32 %v159, 0.2
  %v288 = vmul.f32 %v160, 0.2
  %v289 = vmul.f32 %v161, 0.2
  %v290 = vmul.f32 %v162, 0.2
  %v291 = vmul.f32 %v163, 0.2
  %v292 = vmul.f32 %v164, 0.2
  %v293 = vmul.f32 %v165, 0.2
  %v294 = vmul.f32 %v166, 0.2
  %v295 = vmul.f32 %v167, 0.2
  %v296 = vmul.f32 %v168, 0.2
  %v297 = vmul.f32 %v169, 0.2
  %v298 = vmul.f32 %v170, 0.2
  %v299 = vmul.f32 %v171, 0.2
  %v300 = vmul.f32 %v172, 0.2
  %v301 = vmul.f32 %v173, 0.2
  %v302 = vmul.f32 %v174, 0.2
  %v303 = vmul.f32 %v175, 0.2
  %v304 = vmul.f32 %v176, 0.2
  %v305 = vmul.f32 %v177, 0.2
  %v306 = vmul.f32 %v178, 0.2
  %v307 = vmul.f32 %v179, 0.2
  %v308 = vmul.f32 %v180, 0.2
  %v309 = vmul.f32 %v181, 0.2
  %v310 = vmul.f32 %v182, 0.2
  %v311 = vmul.f32 %v183, 0.2
  %v312 = vmul.f32 %v184, 0.2
  %v313 = vmul.f32 %v185, 0.2
  %v314 = vmul.f32 %v186, 0.2
  %v315 = vmul.f32 %v187, 0.2
  %v316 = vmul.f32 %v188, 0.2
  %v317 = vmul.f32 %v189, 0.2
  %v318 = vmul.f32 %v190, 0.2
  %v319 = vmul.f32 %v191, 0.2
  %v320 = vmul.f32 %v192, 0.2
  %v321 = vmul.f32 %v193, 0.2
  %v322 = vmul.f32 %v194, 0.2
  %v323 = vmul.f32 %v195, 0.2
  %v324 = vmul.f32 %v196, 0.2
  %v325 = vmul.f32 %v197, 0.2
  %v326 = vmul.f32 %v198, 0.2
  %v327 = vmul.f32 %v199, 0.2
  %v328 = vmul.f32 %v200, 0.2
  %v329 = vmul.f32 %v201, 0.2
  %v330 = vmul.f32 %v202, 0.2
  %v331 = vmul.f32 %v203, 0.2
  %v332 = vmul.f32 %v204, 0.2
  %v333 = vmul.f32 %v205, 0.2
  %v334 = vmul.f32 %v206, 0.2
  %v335 = vmul.f32 %v207, 0.2
  %v336 = vmul.f32 %v208, 0.2
  %v337 = vmul.f32 %v209, 0.2
  %v338 = vmul.f32 %v210, 0.2
  %v339 = vmul.f32 %v211, 0.2
  %v340 = vmul.f32 %v212, 0.2
  %v341 = vmul.f32 %v213, 0.2
  %v342 = vmul.f32 %v214, 0.2
  %v343 = vmul.f32 %v215, 0.2
  %v344 = vmul.f32 %v216, 0.2
  %v345 = vmul.f32 %v217, 0.2
  %v346 = vmul.f32 %v218, 0.2
  %v347 = vmul.f32 %v219, 0.2
  %v348 = vsel %vm220, %v156, %v284
  %v349 = vsel %vm221, %v157, %v285
  %v350 = vsel %vm222, %v158, %v286
  %v351 = vsel %vm223, %v159, %v287
  %v352 = vsel %vm224, %v160, %v288
  %v353 = vsel %vm225, %v161, %v289
  %v354 = vsel %vm226, %v162, %v290
  %v355 = vsel %vm227, %v163, %v291
  %v356 = vsel %vm228, %v164, %v292
  %v357 = vsel %vm229, %v165, %v293
  %v358 = vsel %vm230, %v166, %v294
  %v359 = vsel %vm231, %v167, %v295
  %v360 = vsel %vm232, %v168, %v296
  %v361 = vsel %vm233, %v169, %v297
  %v362 = vsel %vm234, %v170, %v298
  %v363 = vsel %vm235, %v171, %v299
  %v364 = vsel %vm236, %v172, %v300
  %v365 = vsel %vm237, %v173, %v301
  %v366 = vsel %vm238, %v174, %v302
  %v367 = vsel %vm239, %v175, %v303
  %v368 = vsel %vm240, %v176, %v304
  %v369 = vsel %vm241, %v177, %v305
  %v370 = vsel %vm242, %v178, %v306
  %v371 = vsel %vm243, %v179, %v307
  %v372 = vsel %vm244, %v180, %v308
  %v373 = vsel %vm245, %v181, %v309
  %v374 = vsel %vm246, %v182, %v310
  %v375 = vsel %vm247, %v183, %v311
  %v376 = vsel %vm248, %v184, %v312
  %v377 = vsel %vm249, %v185, %v313
  %v378 = vsel %vm250, %v186, %v314
  %v379 = vsel %vm251, %v187, %v315
  %v380 = vsel %vm252, %v188, %v316
  %v381 = vsel %vm253, %v189, %v317
  %v382 = vsel %vm254, %v190, %v318
  %v383 = vsel %vm255, %v191, %v319
  %v384 = vsel %vm256, %v192, %v320
  %v385 = vsel %vm257, %v193, %v321
  %v386 = vsel %vm258, %v194, %v322
  %v387 = vsel %vm259, %v195, %v323
  %v388 = vsel %vm260, %v196, %v324
  %v389 = vsel %vm261, %v197, %v325
  %v390 = vsel %vm262, %v198, %v326
  %v391 = vsel %vm263, %v199, %v327
  %v392 = vsel %vm264, %v200, %v328
  %v393 = vsel %vm265, %v201, %v329
  %v394 = vsel %vm266, %v202, %v330
  %v395 = vsel %vm267, %v203, %v331
  %v396 = vsel %vm268, %v204, %v332
  %v397 = vsel %vm269, %v205, %v333
  %v398 = vsel %vm270, %v206, %v334
  %v399 = vsel %vm271, %v207, %v335
  %v400 = vsel %vm272, %v208, %v336
  %v401 = vsel %vm273, %v209, %v337
  %v402 = vsel %vm274, %v210, %v338
  %v403 = vsel %vm275, %v211, %v339
  %v404 = vsel %vm276, %v212, %v340
  %v405 = vsel %vm277, %v213, %v341
  %v406 = vsel %vm278, %v214, %v342
  %v407 = vsel %vm279, %v215, %v343
  %v408 = vsel %vm280, %v216, %v344
  %v409 = vsel %vm281, %v217, %v345
  %v410 = vsel %vm282, %v218, %v346
  %v411 = vsel %vm283, %v219, %v347
  %412 = vst [vmem:[%s3] sm:$0xff] %v348
  %413 = vst [vmem:[%s3 + $0x8] sm:$0xff] %v349
  %414 = vst [vmem:[%s3 + $0x10] sm:$0xff] %v350
  %415 = vst [vmem:[%s3 + $0x18] sm:$0xff] %v351
  %416 = vst [vmem:[%s3 + $0x20] sm:$0xff] %v352
  %417 = vst [vmem:[%s3 + $0x28] sm:$0xff] %v353
  %418 = vst [vmem:[%s3 + $0x30] sm:$0xff] %v354
  %419 = vst [vmem:[%s3 + $0x38] sm:$0xff] %v355
  %420 = vst [vmem:[%s3 + $0x40] sm:$0xff] %v356
  %421 = vst [vmem:[%s3 + $0x48] sm:$0xff] %v357
  %422 = vst [vmem:[%s3 + $0x50] sm:$0xff] %v358
  %423 = vst [vmem:[%s3 + $0x58] sm:$0xff] %v359
  %424 = vst [vmem:[%s3 + $0x60] sm:$0xff] %v360
  %425 = vst [vmem:[%s3 + $0x68] sm:$0xff] %v361
  %426 = vst [vmem:[%s3 + $0x70] sm:$0xff] %v362
  %427 = vst [vmem:[%s3 + $0x78] sm:$0xff] %v363
  %428 = vst [vmem:[%s3 + $0x80] sm:$0xff] %v364
  %429 = vst [vmem:[%s3 + $0x88] sm:$0xff] %v365
  %430 = vst [vmem:[%s3 + $0x90] sm:$0xff] %v366
  %431 = vst [vmem:[%s3 + $0x98] sm:$0xff] %v367
  %432 = vst [vmem:[%s3 + $0xa0] sm:$0xff] %v368
  %433 = vst [vmem:[%s3 + $0xa8] sm:$0xff] %v369
  %434 = vst [vmem:[%s3 + $0xb0] sm:$0xff] %v370
  %435 = vst [vmem:[%s3 + $0xb8] sm:$0xff] %v371
  %436 = vst [vmem:[%s3 + $0xc0] sm:$0xff] %v372
  %437 = vst [vmem:[%s3 + $0xc8] sm:$0xff] %v373
  %438 = vst [vmem:[%s3 + $0xd0] sm:$0xff] %v374
  %439 = vst [vmem:[%s3 + $0xd8] sm:$0xff] %v375
  %440 = vst [vmem:[%s3 + $0xe0] sm:$0xff] %v376
  %441 = vst [vmem:[%s3 + $0xe8] sm:$0xff] %v377
  %442 = vst [vmem:[%s3 + $0xf0] sm:$0xff] %v378
  %443 = vst [vmem:[%s3 + $0xf8] sm:$0xff] %v379
  %444 = vst [vmem:[%s3 + $0x100] sm:$0xff] %v380
  %445 = vst [vmem:[%s3 + $0x108] sm:$0xff] %v381
  %446 = vst [vmem:[%s3 + $0x110] sm:$0xff] %v382
  %447 = vst [vmem:[%s3 + $0x118] sm:$0xff] %v383
  %448 = vst [vmem:[%s3 + $0x120] sm:$0xff] %v384
  %449 = vst [vmem:[%s3 + $0x128] sm:$0xff] %v385
  %450 = vst [vmem:[%s3 + $0x130] sm:$0xff] %v386
  %451 = vst [vmem:[%s3 + $0x138] sm:$0xff] %v387
  %452 = vst [vmem:[%s3 + $0x140] sm:$0xff] %v388
  %453 = vst [vmem:[%s3 + $0x148] sm:$0xff] %v389
  %454 = vst [vmem:[%s3 + $0x150] sm:$0xff] %v390
  %455 = vst [vmem:[%s3 + $0x158] sm:$0xff] %v391
  %456 = vst [vmem:[%s3 + $0x160] sm:$0xff] %v392
  %457 = vst [vmem:[%s3 + $0x168] sm:$0xff] %v393
  %458 = vst [vmem:[%s3 + $0x170] sm:$0xff] %v394
  %459 = vst [vmem:[%s3 + $0x178] sm:$0xff] %v395
  %460 = vst [vmem:[%s3 + $0x180] sm:$0xff] %v396
  %461 = vst [vmem:[%s3 + $0x188] sm:$0xff] %v397
  %462 = vst [vmem:[%s3 + $0x190] sm:$0xff] %v398
  %463 = vst [vmem:[%s3 + $0x198] sm:$0xff] %v399
  %464 = vst [vmem:[%s3 + $0x1a0] sm:$0xff] %v400
  %465 = vst [vmem:[%s3 + $0x1a8] sm:$0xff] %v401
  %466 = vst [vmem:[%s3 + $0x1b0] sm:$0xff] %v402
  %467 = vst [vmem:[%s3 + $0x1b8] sm:$0xff] %v403
  %468 = vst [vmem:[%s3 + $0x1c0] sm:$0xff] %v404
  %469 = vst [vmem:[%s3 + $0x1c8] sm:$0xff] %v405
  %470 = vst [vmem:[%s3 + $0x1d0] sm:$0xff] %v406
  %471 = vst [vmem:[%s3 + $0x1d8] sm:$0xff] %v407
  %472 = vst [vmem:[%s3 + $0x1e0] sm:$0xff] %v408
  %473 = vst [vmem:[%s3 + $0x1e8] sm:$0xff] %v409
  %474 = vst [vmem:[%s3 + $0x1f0] sm:$0xff] %v410
  %475 = vst [vmem:[%s3 + $0x1f8] sm:$0xff] %v411
  // Predicated region
  $region14: #{dnet_forward.10} parent=0 // pred_check
    _
  $region15: #{dnet_forward.10} parent=0 // pred_check_branch
    %477 = sbr.rel (0) target = $region17
  $region16: #{dnet_forward.10} parent=0 // pred_region
    _
  $region17: #{dnet_forward.10} parent=0 // pred_fallthru
    _
  // Predicated region
  $region18: #{dnet_forward.10} parent=0 // pred_check
    _
  $region19: #{dnet_forward.10} parent=0 // pred_check_branch
    %479 = sbr.rel (0) target = $region21
  $region20: #{dnet_forward.10} parent=0 // pred_region
    _
  $region21: #{dnet_forward.10} parent=0 // pred_fallthru
    _

// kernel: dnet_forward.11
$region0: #{dnet_forward.11}
  #allocation0 [shape = 'u32[]', space=smem, size = 0x4, offset = 0x4, fixed_abs, tag = 'smem constant byte address 0x4 - core index']
  #allocation1 [shape = 'u32[144,128]{1,0:T(1,128)}', space=vmem, size = 0x12000, scoped, tag = 'internal scratch']
  #allocation2 [shape = 'f32[128,256]{1,0:T(8,128)}', space=vmem, size = 0x20000, scoped, tag = 'scratch operand']
  %s0 = inlined_call_operand.vmem [shape: bf16[128,2048], index: 0, kind: input, shape index: {}]
  %s1 = inlined_call_operand.vmem [shape: bf16[2048,256], index: 1, kind: input, shape index: {}]
  %s2 = inlined_call_operand.vmem [shape: f32[1,256], index: 2, kind: input, shape index: {}]
  %s3 = inlined_call_operand.vmem [shape: f32[128,256], index: 3, kind: output, shape index: {0}]
  %s4 = inlined_call_operand.vmem [shape: f32[8,256], index: 4, kind: output, shape index: {1}]
  %s5 = inlined_call_operand.vmem [shape: f32[8,256], index: 5, kind: output, shape index: {2}]
  %6 = xla_tuple %s3, %s4, %s5
  %s7 = sld [smem:[#allocation0]]
  $region92: #{dnet_forward.11} parent=0
    _
  %s9 = ssub.s32 1, %s7
  %s10 = scalar_select 0, %s9, %s7
  $region1: #{dnet_forward.11} parent=0
    #allocation3 [shape = 'u8[262144]{0}', space=vmem, size = 0x40000, scoped, tag = 'input window, operand 0']
    loop: start=0, step=1, limit=6
    $region2: #{dnet_forward.11} parent=1 // loop_pre_header
      _
    $region3: #{dnet_forward.11} parent=1 // loop_header
      %s12 = sphi 0, %s16
      %p13 = scmp.ge.s32.totalorder %s12, 6
      %s19 = sphi 0, %s31
      %s20 = sphi 0, %s27
      %s21 = sphi 0, %s19
      %s22 = sphi 0, %s20
      %s23 = sphi 0, %s21
      %s24 = sphi 0, %s22
      %s36 = sphi 0, %s38
      %s39 = sphi 0, %s36
      %s40 = sphi 0, %s39
      %s56 = sphi 0, %s40
      %s62 = sphi 0, %s64
      %s65 = sphi 0, %s62
      %s66 = sphi 0, %s65
      %s82 = sphi 0, %s66
      %s86 = sphi 0, %s86
      %s88 = sphi 0, %s86
      %s89 = sphi 0, %s88
      %s103 = sphi 0, %s89
      %s109 = sphi 0, %s111
      %s112 = sphi 0, %s109
      %s113 = sphi 0, %s112
      %s129 = sphi 0, %s113
      %s135 = sphi 0, %s137
      %s138 = sphi 0, %s135
      %s139 = sphi 0, %s138
      %s155 = sphi 0, %s139
      %s161 = sphi 0, %s163
      %s164 = sphi 0, %s161
      %s165 = sphi 0, %s164
      %s181 = sphi 0, %s165
    $region4: #{dnet_forward.11} parent=1 // loop_header_branch
      %15 = sbr.rel (%p13) target = $region8
    $region5: #{dnet_forward.11} parent=1 // loop_body
      %s17 = ssub.s32 %s12, 1
      %s18 = ssub.s32 %s12, 2
      %s25 = sadd.s32 1, %s20
      %p26 = scmp.ge.s32.totalorder %s25, 4
      %s27 = scalar_select %p26, 0, %s25
      %s28 = sadd.s32 1, %s19
      %s29 = scalar_select %p26, %s28, %s19
      %p30 = scmp.ge.s32.totalorder %s29, 1
      %s31 = scalar_select %p30, 0, %s29
      %s32 = ssub.s32 %s19, %s31
      %s33 = ssub.s32 %s20, %s27
      %s34 = sor.u32 %s32, %s33
      %p35 = scmp.eq.s32.totalorder %s34, 0
      %s37 = sadd.s32 %s36, 1
      %s38 = scalar_select %p35, %s36, %s37
      %p41 = pneg %p35
      %p42 = scmp.eq.s32.totalorder %s12, 3
      %p43 = por %p41, %p42
      %p44 = scmp.ne.s32.totalorder %s36, %s39
      %p45 = scmp.eq.s32.totalorder %s12, 0
      %p46 = por %p44, %p45
      %p47 = scmp.ne.s32.totalorder %s36, %s39
      %p48 = scmp.eq.s32.totalorder %s17, 3
      %p49 = por %p47, %p48
      %p50 = scmp.ne.s32.totalorder %s39, %s40
      %p51 = scmp.eq.s32.totalorder %s17, 0
      %p52 = por %p50, %p51
      %p53 = scmp.ne.s32.totalorder %s39, %s40
      %p54 = scmp.eq.s32.totalorder %s18, 3
      %p55 = por %p53, %p54
      %p57 = scmp.ne.s32.totalorder %s40, %s56
      %p58 = scmp.eq.s32.totalorder %s18, 0
      %p59 = por %p57, %p58
      %s60 = ssub.s32 %s20, %s27
      %p61 = scmp.eq.s32.totalorder %s60, 0
      %s63 = sadd.s32 %s62, 1
      %s64 = scalar_select %p61, %s62, %s63
      %p67 = pneg %p61
      %p68 = scmp.eq.s32.totalorder %s12, 3
      %p69 = por %p67, %p68
      %p70 = scmp.ne.s32.totalorder %s62, %s65
      %p71 = scmp.eq.s32.totalorder %s12, 0
      %p72 = por %p70, %p71
      %p73 = scmp.ne.s32.totalorder %s62, %s65
      %p74 = scmp.eq.s32.totalorder %s17, 3
      %p75 = por %p73, %p74
      %p76 = scmp.ne.s32.totalorder %s65, %s66
      %p77 = scmp.eq.s32.totalorder %s17, 0
      %p78 = por %p76, %p77
      %p79 = scmp.ne.s32.totalorder %s65, %s66
      %p80 = scmp.eq.s32.totalorder %s18, 3
      %p81 = por %p79, %p80
      %p83 = scmp.ne.s32.totalorder %s66, %s82
      %p84 = scmp.eq.s32.totalorder %s18, 0
      %p85 = por %p83, %p84
      %s87 = sadd.s32 %s86, 1
      %p90 = scmp.eq.s32.totalorder %s12, 3
      %p91 = scmp.ne.s32.totalorder %s86, %s88
      %p92 = scmp.eq.s32.totalorder %s12, 0
      %p93 = por %p91, %p92
      %p94 = scmp.ne.s32.totalorder %s86, %s88
      %p95 = scmp.eq.s32.totalorder %s17, 3
      %p96 = por %p94, %p95
      %p97 = scmp.ne.s32.totalorder %s88, %s89
      %p98 = scmp.eq.s32.totalorder %s17, 0
      %p99 = por %p97, %p98
      %p100 = scmp.ne.s32.totalorder %s88, %s89
      %p101 = scmp.eq.s32.totalorder %s18, 3
      %p102 = por %p100, %p101
      %p104 = scmp.ne.s32.totalorder %s89, %s103
      %p105 = scmp.eq.s32.totalorder %s18, 0
      %p106 = por %p104, %p105
      %s107 = ssub.s32 %s19, %s31
      %p108 = scmp.eq.s32.totalorder %s107, 0
      %s110 = sadd.s32 %s109, 1
      %s111 = scalar_select %p108, %s109, %s110
      %p114 = pneg %p108
      %p115 = scmp.eq.s32.totalorder %s12, 3
      %p116 = por %p114, %p115
      %p117 = scmp.ne.s32.totalorder %s109, %s112
      %p118 = scmp.eq.s32.totalorder %s12, 0
      %p119 = por %p117, %p118
      %p120 = scmp.ne.s32.totalorder %s109, %s112
      %p121 = scmp.eq.s32.totalorder %s17, 3
      %p122 = por %p120, %p121
      %p123 = scmp.ne.s32.totalorder %s112, %s113
      %p124 = scmp.eq.s32.totalorder %s17, 0
      %p125 = por %p123, %p124
      %p126 = scmp.ne.s32.totalorder %s112, %s113
      %p127 = scmp.eq.s32.totalorder %s18, 3
      %p128 = por %p126, %p127
      %p130 = scmp.ne.s32.totalorder %s113, %s129
      %p131 = scmp.eq.s32.totalorder %s18, 0
      %p132 = por %p130, %p131
      %s133 = ssub.s32 %s19, %s31
      %p134 = scmp.eq.s32.totalorder %s133, 0
      %s136 = sadd.s32 %s135, 1
      %s137 = scalar_select %p134, %s135, %s136
      %p140 = pneg %p134
      %p141 = scmp.eq.s32.totalorder %s12, 3
      %p142 = por %p140, %p141
      %p143 = scmp.ne.s32.totalorder %s135, %s138
      %p144 = scmp.eq.s32.totalorder %s12, 0
      %p145 = por %p143, %p144
      %p146 = scmp.ne.s32.totalorder %s135, %s138
      %p147 = scmp.eq.s32.totalorder %s17, 3
      %p148 = por %p146, %p147
      %p149 = scmp.ne.s32.totalorder %s138, %s139
      %p150 = scmp.eq.s32.totalorder %s17, 0
      %p151 = por %p149, %p150
      %p152 = scmp.ne.s32.totalorder %s138, %s139
      %p153 = scmp.eq.s32.totalorder %s18, 3
      %p154 = por %p152, %p153
      %p156 = scmp.ne.s32.totalorder %s139, %s155
      %p157 = scmp.eq.s32.totalorder %s18, 0
      %p158 = por %p156, %p157
      %s159 = ssub.s32 %s19, %s31
      %p160 = scmp.eq.s32.totalorder %s159, 0
      %s162 = sadd.s32 %s161, 1
      %s163 = scalar_select %p160, %s161, %s162
      %p166 = pneg %p160
      %p167 = scmp.eq.s32.totalorder %s12, 3
      %p168 = por %p166, %p167
      %p169 = scmp.ne.s32.totalorder %s161, %s164
      %p170 = scmp.eq.s32.totalorder %s12, 0
      %p171 = por %p169, %p170
      %p172 = scmp.ne.s32.totalorder %s161, %s164
      %p173 = scmp.eq.s32.totalorder %s17, 3
      %p174 = por %p172, %p173
      %p175 = scmp.ne.s32.totalorder %s164, %s165
      %p176 = scmp.eq.s32.totalorder %s17, 0
      %p177 = por %p175, %p176
      %p178 = scmp.ne.s32.totalorder %s164, %s165
      %p179 = scmp.eq.s32.totalorder %s18, 3
      %p180 = por %p178, %p179
      %p182 = scmp.ne.s32.totalorder %s165, %s181
      %p183 = scmp.eq.s32.totalorder %s18, 0
      %p184 = por %p182, %p183
      %p185 = scmp.le.s32.totalorder 1, %s12
      %p186 = scmp.lt.s32.totalorder %s12, 5
      %p187 = pnand %p185, %p186
      %p188 = pneg %p187
      // Predicated region
      $region9: #{dnet_forward.11} parent=5 // pred_check
        _
      $region10: #{dnet_forward.11} parent=5 // pred_check_branch
        %190 = sbr.rel (%p187) target = $region12
      $region11: #{dnet_forward.11} parent=5 // pred_region
        %s191 = ssub.s32 %s12, 1
        // Predicated region
        $region13: #{dnet_forward.11} parent=11 // pred_check
          %p192 = pneg %p99
        $region14: #{dnet_forward.11} parent=11 // pred_check_branch
          %194 = sbr.rel (%p192) target = $region16
        $region15: #{dnet_forward.11} parent=11 // pred_region
          _
        $region16: #{dnet_forward.11} parent=11 // pred_fallthru
          _
      $region12: #{dnet_forward.11} parent=5 // pred_fallthru
        _
      %p195 = scmp.lt.s32.totalorder %s12, 4
      // Predicated region
      $region17: #{dnet_forward.11} parent=5 // pred_check
        %p196 = pneg %p195
      $region18: #{dnet_forward.11} parent=5 // pred_check_branch
        %198 = sbr.rel (%p196) target = $region20
      $region19: #{dnet_forward.11} parent=5 // pred_region
        // Predicated region
        $region21: #{dnet_forward.11} parent=19 // pred_check
          %p199 = pneg %p46
        $region22: #{dnet_forward.11} parent=19 // pred_check_branch
          %201 = sbr.rel (%p199) target = $region24
        $region23: #{dnet_forward.11} parent=19 // pred_region
          %s202 = sand.u32 %s36, 1
          %s203 = sand.u32 %s36, 1
          %s204 = smul.addr %s203, 256
          %s205 = scalar_lea.vmem [#allocation3], %s204
          %s206 = smul.u32 16, %s19
          %s207 = smul.u32 4, %s20
          %s208 = smul.addr %s206, 16
          %s209 = sadd.s32 %s207, %s208
          %s210 = smul.addr %s209, 4
          %s211 = scalar_lea.vmem %s0, %s210
          // Predicated region
          $region25: #{dnet_forward.11} parent=23 // pred_check
            _
          $region26: #{dnet_forward.11} parent=23 // pred_check_branch
            %213 = sbr.rel (0) target = $region28
          $region27: #{dnet_forward.11} parent=23 // pred_region
            // Predicated region
            $region29: #{dnet_forward.11} parent=27 // pred_check
              _
            $region30: #{dnet_forward.11} parent=27 // pred_check_branch
              %215 = sbr.rel (0) target = $region32
            $region31: #{dnet_forward.11} parent=27 // pred_region
              loop: start=0, step=1, limit=1
              $region33: #{dnet_forward.11} parent=31 // loop_pre_header
                _
              $region34: #{dnet_forward.11} parent=31 // loop_header
                %s217 = sphi 0, %s221
                %p218 = scmp.ge.s32.totalorder %s217, 1
                %s222 = sphi %s211, %s211
                %s223 = sphi %s205, %s205
              $region35: #{dnet_forward.11} parent=31 // loop_header_branch
                %220 = sbr.rel (%p218) target = $region39
              $region36: #{dnet_forward.11} parent=31 // loop_body
                %v224 = vld [vmem:[%s222] sm:$0xff]
                %225 = vst [vmem:[%s223] sm:$0xff] %v224
                %v226 = vld [vmem:[%s222 + $0x8] sm:$0xff]
                %227 = vst [vmem:[%s223 + $0x8] sm:$0xff] %v226
                %v228 = vld [vmem:[%s222 + $0x40] sm:$0xff]
                %229 = vst [vmem:[%s223 + $0x10] sm:$0xff] %v228
                %v230 = vld [vmem:[%s222 + $0x48] sm:$0xff]
                %231 = vst [vmem:[%s223 + $0x18] sm:$0xff] %v230
                %v232 = vld [vmem:[%s222 + $0x80] sm:$0xff]
                %233 = vst [vmem:[%s223 + $0x20] sm:$0xff] %v232
                %v234 = vld [vmem:[%s222 + $0x88] sm:$0xff]
                %235 = vst [vmem:[%s223 + $0x28] sm:$0xff] %v234
                %v236 = vld [vmem:[%s222 + $0xc0] sm:$0xff]
                %237 = vst [vmem:[%s223 + $0x30] sm:$0xff] %v236
                %v238 = vld [vmem:[%s222 + $0xc8] sm:$0xff]
                %239 = vst [vmem:[%s223 + $0x38] sm:$0xff] %v238
                %v240 = vld [vmem:[%s222 + $0x100] sm:$0xff]
                %241 = vst [vmem:[%s223 + $0x40] sm:$0xff] %v240
                %v242 = vld [vmem:[%s222 + $0x108] sm:$0xff]
                %243 = vst [vmem:[%s223 + $0x48] sm:$0xff] %v242
                %v244 = vld [vmem:[%s222 + $0x140] sm:$0xff]
                %245 = vst [vmem:[%s223 + $0x50] sm:$0xff] %v244
                %v246 = vld [vmem:[%s222 + $0x148] sm:$0xff]
                %247 = vst [vmem:[%s223 + $0x58] sm:$0xff] %v246
                %v248 = vld [vmem:[%s222 + $0x180] sm:$0xff]
                %249 = vst [vmem:[%s223 + $0x60] sm:$0xff] %v248
                %v250 = vld [vmem:[%s222 + $0x188] sm:$0xff]
                %251 = vst [vmem:[%s223 + $0x68] sm:$0xff] %v250
                %v252 = vld [vmem:[%s222 + $0x1c0] sm:$0xff]
                %253 = vst [vmem:[%s223 + $0x70] sm:$0xff] %v252
                %v254 = vld [vmem:[%s222 + $0x1c8] sm:$0xff]
                %255 = vst [vmem:[%s223 + $0x78] sm:$0xff] %v254
                %v256 = vld [vmem:[%s222 + $0x200] sm:$0xff]
                %257 = vst [vmem:[%s223 + $0x80] sm:$0xff] %v256
                %v258 = vld [vmem:[%s222 + $0x208] sm:$0xff]
                %259 = vst [vmem:[%s223 + $0x88] sm:$0xff] %v258
                %v260 = vld [vmem:[%s222 + $0x240] sm:$0xff]
                %261 = vst [vmem:[%s223 + $0x90] sm:$0xff] %v260
                %v262 = vld [vmem:[%s222 + $0x248] sm:$0xff]
                %263 = vst [vmem:[%s223 + $0x98] sm:$0xff] %v262
                %v264 = vld [vmem:[%s222 + $0x280] sm:$0xff]
                %265 = vst [vmem:[%s223 + $0xa0] sm:$0xff] %v264
                %v266 = vld [vmem:[%s222 + $0x288] sm:$0xff]
                %267 = vst [vmem:[%s223 + $0xa8] sm:$0xff] %v266
                %v268 = vld [vmem:[%s222 + $0x2c0] sm:$0xff]
                %269 = vst [vmem:[%s223 + $0xb0] sm:$0xff] %v268
                %v270 = vld [vmem:[%s222 + $0x2c8] sm:$0xff]
                %271 = vst [vmem:[%s223 + $0xb8] sm:$0xff] %v270
                %v272 = vld [vmem:[%s222 + $0x300] sm:$0xff]
                %273 = vst [vmem:[%s223 + $0xc0] sm:$0xff] %v272
                %v274 = vld [vmem:[%s222 + $0x308] sm:$0xff]
                %275 = vst [vmem:[%s223 + $0xc8] sm:$0xff] %v274
                %v276 = vld [vmem:[%s222 + $0x340] sm:$0xff]
                %277 = vst [vmem:[%s223 + $0xd0] sm:$0xff] %v276
                %v278 = vld [vmem:[%s222 + $0x348] sm:$0xff]
                %279 = vst [vmem:[%s223 + $0xd8] sm:$0xff] %v278
                %v280 = vld [vmem:[%s222 + $0x380] sm:$0xff]
                %281 = vst [vmem:[%s223 + $0xe0] sm:$0xff] %v280
                %v282 = vld [vmem:[%s222 + $0x388] sm:$0xff]
                %283 = vst [vmem:[%s223 + $0xe8] sm:$0xff] %v282
                %v284 = vld [vmem:[%s222 + $0x3c0] sm:$0xff]
                %285 = vst [vmem:[%s223 + $0xf0] sm:$0xff] %v284
                %v286 = vld [vmem:[%s222 + $0x3c8] sm:$0xff]
                %287 = vst [vmem:[%s223 + $0xf8] sm:$0xff] %v286
              $region37: #{dnet_forward.11} parent=31 // loop_footer
                %s221 = sadd.s32 1, %s217
              $region38: #{dnet_forward.11} parent=31 // loop_footer_branch
                %216 = sbr.rel target = $region34
              $region39: #{dnet_forward.11} parent=31 // loop_exit
                _
            $region32: #{dnet_forward.11} parent=27 // pred_fallthru
              _
            // Predicated region
            $region40: #{dnet_forward.11} parent=27 // pred_check
              _
            $region41: #{dnet_forward.11} parent=27 // pred_check_branch
              %289 = sbr.rel target = $region43
            $region42: #{dnet_forward.11} parent=27 // pred_region
              _
            $region43: #{dnet_forward.11} parent=27 // pred_fallthru
              _
          $region28: #{dnet_forward.11} parent=23 // pred_fallthru
            _
          %290 = vnop
        $region24: #{dnet_forward.11} parent=19 // pred_fallthru
          _
        // Predicated region
        $region44: #{dnet_forward.11} parent=19 // pred_check
          %p291 = pneg %p72
        $region45: #{dnet_forward.11} parent=19 // pred_check_branch
          %293 = sbr.rel (%p291) target = $region47
        $region46: #{dnet_forward.11} parent=19 // pred_region
          %s294 = smul.u32 64, %s20
          %p295 = scmp.lt.s32.totalorder %s294, 255
          %s296 = scalar_select %p295, %s294, 255
          %s297 = smul.addr %s296, 2
          %s298 = smul.addr %s297, 4
          %s299 = scalar_lea.vmem %s1, %s298
          %s300 = smul.u32 64, %s20
        $region47: #{dnet_forward.11} parent=19 // pred_fallthru
          _
      $region20: #{dnet_forward.11} parent=5 // pred_fallthru
        _
      %p301 = scmp.le.s32.totalorder 1, %s12
      %p302 = scmp.lt.s32.totalorder %s12, 5
      %p303 = pnand %p301, %p302
      %p304 = pneg %p303
      // Predicated region
      $region48: #{dnet_forward.11} parent=5 // pred_check
        _
      $region49: #{dnet_forward.11} parent=5 // pred_check_branch
        %306 = sbr.rel (%p303) target = $region51
      $region50: #{dnet_forward.11} parent=5 // pred_region
        %s307 = ssub.s32 %s12, 1
        %s308 = sand.u32 %s39, 1
        %s309 = sand.u32 %s39, 1
        %s310 = smul.addr %s309, 256
        %s311 = scalar_lea.vmem [#allocation3], %s310
        // Predicated region
        $region52: #{dnet_forward.11} parent=50 // pred_check
          %p312 = pneg %p52
        $region53: #{dnet_forward.11} parent=50 // pred_check_branch
          %314 = sbr.rel (%p312) target = $region55
        $region54: #{dnet_forward.11} parent=50 // pred_region
          _
        $region55: #{dnet_forward.11} parent=50 // pred_fallthru
          _
        %s315 = sand.u32 %s39, 1
        %s316 = sand.u32 %s39, 1
        %s317 = smul.addr %s316, 256
        %s318 = scalar_lea.vmem [#allocation3], %s317
        %p319 = pneg %p52
        %p320 = pneg %p49
        %s321 = smul.u32 64, %s22
        %p322 = scmp.lt.s32.totalorder %s321, 255
        %s323 = scalar_select %p322, %s321, 255
        %s324 = smul.addr %s323, 2
        %s325 = smul.addr %s324, 4
        %s326 = scalar_lea.vmem %s1, %s325
        %p327 = pneg %p78
        %p328 = pneg %p75
        %p329 = pneg %p99
        %p330 = pneg %p96
        %p331 = pneg %p125
        %p332 = pneg %p122
        %s333 = smul.u32 16, %s21
        %p334 = scmp.lt.s32.totalorder %s333, 15
        %s335 = scalar_select %p334, %s333, 15
        %s336 = smul.addr %s335, 2
        %s337 = smul.addr %s336, 8
        %s338 = scalar_lea.vmem %s3, %s337
        %p339 = pneg %p151
        %p340 = pneg %p148
        %p341 = scmp.lt.s32.totalorder %s21, 0
        %s342 = scalar_select %p341, %s21, 0
        %s343 = smul.addr %s342, 2
        %s344 = smul.addr %s343, 8
        %s345 = scalar_lea.vmem %s4, %s344
        %p346 = pneg %p177
        %p347 = pneg %p174
        %p348 = scmp.lt.s32.totalorder %s21, 0
        %s349 = scalar_select %p348, %s21, 0
        %s350 = smul.addr %s349, 2
        %s351 = smul.addr %s350, 8
        %s352 = scalar_lea.vmem %s5, %s351
        %s353 = smul.u32 16, %s21
        %s354 = smul.u32 4, %s22
        %s355 = smul.u32 64, %s22
        %p356 = scmp.lt.s32.totalorder %s355, 255
        %s357 = scalar_select %p356, %s355, 255
        %s358 = smul.addr %s357, 2
        %s359 = smul.addr %s358, 4
        %s360 = scalar_lea.vmem %s1, %s359
        %s361 = smul.u32 64, %s22
        %s362 = smul.u32 16, %s21
        %p363 = scmp.lt.s32.totalorder %s362, 15
        %s364 = scalar_select %p363, %s362, 15
        %s365 = smul.addr %s364, 2
        %s366 = smul.addr %s365, 8
        %s367 = scalar_lea.vmem %s3, %s366
        %s368 = smul.u32 16, %s21
        %p369 = scmp.lt.s32.totalorder %s21, 0
        %s370 = scalar_select %p369, %s21, 0
        %s371 = smul.addr %s370, 2
        %s372 = smul.addr %s371, 8
        %s373 = scalar_lea.vmem %s4, %s372
        %p374 = scmp.lt.s32.totalorder %s21, 0
        %s375 = scalar_select %p374, %s21, 0
        %s376 = smul.addr %s375, 2
        %s377 = smul.addr %s376, 8
        %s378 = scalar_lea.vmem %s5, %s377
        %p379 = scmp.eq.s32.totalorder %s22, 0
        // Predicated region
        $region56: #{dnet_forward.11} parent=50 // pred_check
          %p380 = pneg %p379
        $region57: #{dnet_forward.11} parent=50 // pred_check_branch
          %382 = sbr.rel (%p380) target = $region59
        $region58: #{dnet_forward.11} parent=50 // pred_region
          %383 = vst [vmem:[#allocation2] sm:$0xff] 0.0
          %384 = vst [vmem:[#allocation2 + $0x8] sm:$0xff] 0.0
          %385 = vst [vmem:[#allocation2 + $0x10] sm:$0xff] 0.0
          %386 = vst [vmem:[#allocation2 + $0x18] sm:$0xff] 0.0
          %387 = vst [vmem:[#allocation2 + $0x20] sm:$0xff] 0.0
          %388 = vst [vmem:[#allocation2 + $0x28] sm:$0xff] 0.0
          %389 = vst [vmem:[#allocation2 + $0x30] sm:$0xff] 0.0
          %390 = vst [vmem:[#allocation2 + $0x38] sm:$0xff] 0.0
          %391 = vst [vmem:[#allocation2 + $0x40] sm:$0xff] 0.0
          %392 = vst [vmem:[#allocation2 + $0x48] sm:$0xff] 0.0
          %393 = vst [vmem:[#allocation2 + $0x50] sm:$0xff] 0.0
          %394 = vst [vmem:[#allocation2 + $0x58] sm:$0xff] 0.0
          %395 = vst [vmem:[#allocation2 + $0x60] sm:$0xff] 0.0
          %396 = vst [vmem:[#allocation2 + $0x68] sm:$0xff] 0.0
          %397 = vst [vmem:[#allocation2 + $0x70] sm:$0xff] 0.0
          %398 = vst [vmem:[#allocation2 + $0x78] sm:$0xff] 0.0
          %399 = vst [vmem:[#allocation2 + $0x80] sm:$0xff] 0.0
          %400 = vst [vmem:[#allocation2 + $0x88] sm:$0xff] 0.0
          %401 = vst [vmem:[#allocation2 + $0x90] sm:$0xff] 0.0
          %402 = vst [vmem:[#allocation2 + $0x98] sm:$0xff] 0.0
          %403 = vst [vmem:[#allocation2 + $0xa0] sm:$0xff] 0.0
          %404 = vst [vmem:[#allocation2 + $0xa8] sm:$0xff] 0.0
          %405 = vst [vmem:[#allocation2 + $0xb0] sm:$0xff] 0.0
          %406 = vst [vmem:[#allocation2 + $0xb8] sm:$0xff] 0.0
          %407 = vst [vmem:[#allocation2 + $0xc0] sm:$0xff] 0.0
          %408 = vst [vmem:[#allocation2 + $0xc8] sm:$0xff] 0.0
          %409 = vst [vmem:[#allocation2 + $0xd0] sm:$0xff] 0.0
          %410 = vst [vmem:[#allocation2 + $0xd8] sm:$0xff] 0.0
          %411 = vst [vmem:[#allocation2 + $0xe0] sm:$0xff] 0.0
          %412 = vst [vmem:[#allocation2 + $0xe8] sm:$0xff] 0.0
          %413 = vst [vmem:[#allocation2 + $0xf0] sm:$0xff] 0.0
          %414 = vst [vmem:[#allocation2 + $0xf8] sm:$0xff] 0.0
        $region59: #{dnet_forward.11} parent=50 // pred_fallthru
          _
        %v415 = vld [vmem:[#allocation2] sm:$0xff]
        %v416 = vld [vmem:[#allocation2 + $0x8] sm:$0xff]
        %v417 = vld [vmem:[#allocation2 + $0x10] sm:$0xff]
        %v418 = vld [vmem:[#allocation2 + $0x18] sm:$0xff]
        %v419 = vld [vmem:[#allocation2 + $0x20] sm:$0xff]
        %v420 = vld [vmem:[#allocation2 + $0x28] sm:$0xff]
        %v421 = vld [vmem:[#allocation2 + $0x30] sm:$0xff]
        %v422 = vld [vmem:[#allocation2 + $0x38] sm:$0xff]
        %v423 = vld [vmem:[#allocation2 + $0x40] sm:$0xff]
        %v424 = vld [vmem:[#allocation2 + $0x48] sm:$0xff]
        %v425 = vld [vmem:[#allocation2 + $0x50] sm:$0xff]
        %v426 = vld [vmem:[#allocation2 + $0x58] sm:$0xff]
        %v427 = vld [vmem:[#allocation2 + $0x60] sm:$0xff]
        %v428 = vld [vmem:[#allocation2 + $0x68] sm:$0xff]
        %v429 = vld [vmem:[#allocation2 + $0x70] sm:$0xff]
        %v430 = vld [vmem:[#allocation2 + $0x78] sm:$0xff]
        %v431 = vld [vmem:[#allocation2 + $0x80] sm:$0xff]
        %v432 = vld [vmem:[#allocation2 + $0x88] sm:$0xff]
        %v433 = vld [vmem:[#allocation2 + $0x90] sm:$0xff]
        %v434 = vld [vmem:[#allocation2 + $0x98] sm:$0xff]
        %v435 = vld [vmem:[#allocation2 + $0xa0] sm:$0xff]
        %v436 = vld [vmem:[#allocation2 + $0xa8] sm:$0xff]
        %v437 = vld [vmem:[#allocation2 + $0xb0] sm:$0xff]
        %v438 = vld [vmem:[#allocation2 + $0xb8] sm:$0xff]
        %v439 = vld [vmem:[#allocation2 + $0xc0] sm:$0xff]
        %v440 = vld [vmem:[#allocation2 + $0xc8] sm:$0xff]
        %v441 = vld [vmem:[#allocation2 + $0xd0] sm:$0xff]
        %v442 = vld [vmem:[#allocation2 + $0xd8] sm:$0xff]
        %v443 = vld [vmem:[#allocation2 + $0xe0] sm:$0xff]
        %v444 = vld [vmem:[#allocation2 + $0xe8] sm:$0xff]
        %v445 = vld [vmem:[#allocation2 + $0xf0] sm:$0xff]
        %v446 = vld [vmem:[#allocation2 + $0xf8] sm:$0xff]
        %v447 = vld [vmem:[%s311] sm:$0xff]
        %v448 = vld [vmem:[%s311 + $0x8] sm:$0xff]
        %v449 = vld [vmem:[%s311 + $0x10] sm:$0xff]
        %v450 = vld [vmem:[%s311 + $0x18] sm:$0xff]
        %v451 = vld [vmem:[%s311 + $0x20] sm:$0xff]
        %v452 = vld [vmem:[%s311 + $0x28] sm:$0xff]
        %v453 = vld [vmem:[%s311 + $0x30] sm:$0xff]
        %v454 = vld [vmem:[%s311 + $0x38] sm:$0xff]
        %v455 = vld [vmem:[%s311 + $0x40] sm:$0xff]
        %v456 = vld [vmem:[%s311 + $0x48] sm:$0xff]
        %v457 = vld [vmem:[%s311 + $0x50] sm:$0xff]
        %v458 = vld [vmem:[%s311 + $0x58] sm:$0xff]
        %v459 = vld [vmem:[%s311 + $0x60] sm:$0xff]
        %v460 = vld [vmem:[%s311 + $0x68] sm:$0xff]
        %v461 = vld [vmem:[%s311 + $0x70] sm:$0xff]
        %v462 = vld [vmem:[%s311 + $0x78] sm:$0xff]
        %v463 = vld [vmem:[%s311 + $0x80] sm:$0xff]
        %v464 = vld [vmem:[%s311 + $0x88] sm:$0xff]
        %v465 = vld [vmem:[%s311 + $0x90] sm:$0xff]
        %v466 = vld [vmem:[%s311 + $0x98] sm:$0xff]
        %v467 = vld [vmem:[%s311 + $0xa0] sm:$0xff]
        %v468 = vld [vmem:[%s311 + $0xa8] sm:$0xff]
        %v469 = vld [vmem:[%s311 + $0xb0] sm:$0xff]
        %v470 = vld [vmem:[%s311 + $0xb8] sm:$0xff]
        %v471 = vld [vmem:[%s311 + $0xc0] sm:$0xff]
        %v472 = vld [vmem:[%s311 + $0xc8] sm:$0xff]
        %v473 = vld [vmem:[%s311 + $0xd0] sm:$0xff]
        %v474 = vld [vmem:[%s311 + $0xd8] sm:$0xff]
        %v475 = vld [vmem:[%s311 + $0xe0] sm:$0xff]
        %v476 = vld [vmem:[%s311 + $0xe8] sm:$0xff]
        %v477 = vld [vmem:[%s311 + $0xf0] sm:$0xff]
        %v478 = vld [vmem:[%s311 + $0xf8] sm:$0xff]
        %v479 = vld [vmem:[%s360] sm:$0xff]
        %v480 = vld [vmem:[%s360 + $0x8] sm:$0xff]
        %v481 = vld [vmem:[%s360 + $0x10] sm:$0xff]
        %v482 = vld [vmem:[%s360 + $0x18] sm:$0xff]
        %v483 = vld [vmem:[%s360 + $0x20] sm:$0xff]
        %v484 = vld [vmem:[%s360 + $0x28] sm:$0xff]
        %v485 = vld [vmem:[%s360 + $0x30] sm:$0xff]
        %v486 = vld [vmem:[%s360 + $0x38] sm:$0xff]
        %v487 = vld [vmem:[%s360 + $0x40] sm:$0xff]
        %v488 = vld [vmem:[%s360 + $0x48] sm:$0xff]
        %v489 = vld [vmem:[%s360 + $0x50] sm:$0xff]
        %v490 = vld [vmem:[%s360 + $0x58] sm:$0xff]
        %v491 = vld [vmem:[%s360 + $0x60] sm:$0xff]
        %v492 = vld [vmem:[%s360 + $0x68] sm:$0xff]
        %v493 = vld [vmem:[%s360 + $0x70] sm:$0xff]
        %v494 = vld [vmem:[%s360 + $0x78] sm:$0xff]
        %v495 = vld [vmem:[%s360 + $0x80] sm:$0xff]
        %v496 = vld [vmem:[%s360 + $0x88] sm:$0xff]
        %v497 = vld [vmem:[%s360 + $0x90] sm:$0xff]
        %v498 = vld [vmem:[%s360 + $0x98] sm:$0xff]
        %v499 = vld [vmem:[%s360 + $0xa0] sm:$0xff]
        %v500 = vld [vmem:[%s360 + $0xa8] sm:$0xff]
        %v501 = vld [vmem:[%s360 + $0xb0] sm:$0xff]
        %v502 = vld [vmem:[%s360 + $0xb8] sm:$0xff]
        %v503 = vld [vmem:[%s360 + $0xc0] sm:$0xff]
        %v504 = vld [vmem:[%s360 + $0xc8] sm:$0xff]
        %v505 = vld [vmem:[%s360 + $0xd0] sm:$0xff]
        %v506 = vld [vmem:[%s360 + $0xd8] sm:$0xff]
        %v507 = vld [vmem:[%s360 + $0xe0] sm:$0xff]
        %v508 = vld [vmem:[%s360 + $0xe8] sm:$0xff]
        %v509 = vld [vmem:[%s360 + $0xf0] sm:$0xff]
        %v510 = vld [vmem:[%s360 + $0xf8] sm:$0xff]
        %v511 = vld [vmem:[%s360 + $0x100] sm:$0xff]
        %v512 = vld [vmem:[%s360 + $0x108] sm:$0xff]
        %v513 = vld [vmem:[%s360 + $0x110] sm:$0xff]
        %v514 = vld [vmem:[%s360 + $0x118] sm:$0xff]
        %v515 = vld [vmem:[%s360 + $0x120] sm:$0xff]
        %v516 = vld [vmem:[%s360 + $0x128] sm:$0xff]
        %v517 = vld [vmem:[%s360 + $0x130] sm:$0xff]
        %v518 = vld [vmem:[%s360 + $0x138] sm:$0xff]
        %v519 = vld [vmem:[%s360 + $0x140] sm:$0xff]
        %v520 = vld [vmem:[%s360 + $0x148] sm:$0xff]
        %v521 = vld [vmem:[%s360 + $0x150] sm:$0xff]
        %v522 = vld [vmem:[%s360 + $0x158] sm:$0xff]
        %v523 = vld [vmem:[%s360 + $0x160] sm:$0xff]
        %v524 = vld [vmem:[%s360 + $0x168] sm:$0xff]
        %v525 = vld [vmem:[%s360 + $0x170] sm:$0xff]
        %v526 = vld [vmem:[%s360 + $0x178] sm:$0xff]
        %v527 = vld [vmem:[%s360 + $0x180] sm:$0xff]
        %v528 = vld [vmem:[%s360 + $0x188] sm:$0xff]
        %v529 = vld [vmem:[%s360 + $0x190] sm:$0xff]
        %v530 = vld [vmem:[%s360 + $0x198] sm:$0xff]
        %v531 = vld [vmem:[%s360 + $0x1a0] sm:$0xff]
        %v532 = vld [vmem:[%s360 + $0x1a8] sm:$0xff]
        %v533 = vld [vmem:[%s360 + $0x1b0] sm:$0xff]
        %v534 = vld [vmem:[%s360 + $0x1b8] sm:$0xff]
        %v535 = vld [vmem:[%s360 + $0x1c0] sm:$0xff]
        %v536 = vld [vmem:[%s360 + $0x1c8] sm:$0xff]
        %v537 = vld [vmem:[%s360 + $0x1d0] sm:$0xff]
        %v538 = vld [vmem:[%s360 + $0x1d8] sm:$0xff]
        %v539 = vld [vmem:[%s360 + $0x1e0] sm:$0xff]
        %v540 = vld [vmem:[%s360 + $0x1e8] sm:$0xff]
        %v541 = vld [vmem:[%s360 + $0x1f0] sm:$0xff]
        %v542 = vld [vmem:[%s360 + $0x1f8] sm:$0xff]
        %v575 = vunpack.c.l.b16 %v447
        %v576 = vunpack.c.h.b16 %v447
        %v577 = vunpack.c.l.b16 %v448
        %v578 = vunpack.c.h.b16 %v448
        %v579 = vunpack.c.l.b16 %v449
        %v580 = vunpack.c.h.b16 %v449
        %v581 = vunpack.c.l.b16 %v450
        %v582 = vunpack.c.h.b16 %v450
        %v583 = vunpack.c.l.b16 %v451
        %v584 = vunpack.c.h.b16 %v451
        %v585 = vunpack.c.l.b16 %v452
        %v586 = vunpack.c.h.b16 %v452
        %v587 = vunpack.c.l.b16 %v453
        %v588 = vunpack.c.h.b16 %v453
        %v589 = vunpack.c.l.b16 %v454
        %v590 = vunpack.c.h.b16 %v454
        %v591 = vunpack.c.l.b16 %v455
        %v592 = vunpack.c.h.b16 %v455
        %v593 = vunpack.c.l.b16 %v456
        %v594 = vunpack.c.h.b16 %v456
        %v595 = vunpack.c.l.b16 %v457
        %v596 = vunpack.c.h.b16 %v457
        %v597 = vunpack.c.l.b16 %v458
        %v598 = vunpack.c.h.b16 %v458
        %v599 = vunpack.c.l.b16 %v459
        %v600 = vunpack.c.h.b16 %v459
        %v601 = vunpack.c.l.b16 %v460
        %v602 = vunpack.c.h.b16 %v460
        %v603 = vunpack.c.l.b16 %v461
        %v604 = vunpack.c.h.b16 %v461
        %v605 = vunpack.c.l.b16 %v462
        %v606 = vunpack.c.h.b16 %v462
        %v607 = vunpack.c.l.b16 %v463
        %v608 = vunpack.c.h.b16 %v463
        %v609 = vunpack.c.l.b16 %v464
        %v610 = vunpack.c.h.b16 %v464
        %v611 = vunpack.c.l.b16 %v465
        %v612 = vunpack.c.h.b16 %v465
        %v613 = vunpack.c.l.b16 %v466
        %v614 = vunpack.c.h.b16 %v466
        %v615 = vunpack.c.l.b16 %v467
        %v616 = vunpack.c.h.b16 %v467
        %v617 = vunpack.c.l.b16 %v468
        %v618 = vunpack.c.h.b16 %v468
        %v619 = vunpack.c.l.b16 %v469
        %v620 = vunpack.c.h.b16 %v469
        %v621 = vunpack.c.l.b16 %v470
        %v622 = vunpack.c.h.b16 %v470
        %v623 = vunpack.c.l.b16 %v471
        %v624 = vunpack.c.h.b16 %v471
        %v625 = vunpack.c.l.b16 %v472
        %v626 = vunpack.c.h.b16 %v472
        %v627 = vunpack.c.l.b16 %v473
        %v628 = vunpack.c.h.b16 %v473
        %v629 = vunpack.c.l.b16 %v474
        %v630 = vunpack.c.h.b16 %v474
        %v631 = vunpack.c.l.b16 %v475
        %v632 = vunpack.c.h.b16 %v475
        %v633 = vunpack.c.l.b16 %v476
        %v634 = vunpack.c.h.b16 %v476
        %v635 = vunpack.c.l.b16 %v477
        %v636 = vunpack.c.h.b16 %v477
        %v637 = vunpack.c.l.b16 %v478
        %v638 = vunpack.c.h.b16 %v478
        %v639 = vpack.c.b16 %v579, %v575
        %v640 = vpack.c.b16 %v580, %v576
        %v641 = vpack.c.b16 %v581, %v577
        %v642 = vpack.c.b16 %v582, %v578
        %v643 = vpack.c.b16 %v587, %v583
        %v644 = vpack.c.b16 %v588, %v584
        %v645 = vpack.c.b16 %v589, %v585
        %v646 = vpack.c.b16 %v590, %v586
        %v647 = vpack.c.b16 %v595, %v591
        %v648 = vpack.c.b16 %v596, %v592
        %v649 = vpack.c.b16 %v597, %v593
        %v650 = vpack.c.b16 %v598, %v594
        %v651 = vpack.c.b16 %v603, %v599
        %v652 = vpack.c.b16 %v604, %v600
        %v653 = vpack.c.b16 %v605, %v601
        %v654 = vpack.c.b16 %v606, %v602
        %v655 = vpack.c.b16 %v611, %v607
        %v656 = vpack.c.b16 %v612, %v608
        %v657 = vpack.c.b16 %v613, %v609
        %v658 = vpack.c.b16 %v614, %v610
        %v659 = vpack.c.b16 %v619, %v615
        %v660 = vpack.c.b16 %v620, %v616
        %v661 = vpack.c.b16 %v621, %v617
        %v662 = vpack.c.b16 %v622, %v618
        %v663 = vpack.c.b16 %v627, %v623
        %v664 = vpack.c.b16 %v628, %v624
        %v665 = vpack.c.b16 %v629, %v625
        %v666 = vpack.c.b16 %v630, %v626
        %v667 = vpack.c.b16 %v635, %v631
        %v668 = vpack.c.b16 %v636, %v632
        %v669 = vpack.c.b16 %v637, %v633
        %v670 = vpack.c.b16 %v638, %v634
        %v767 = vunpack.c.l.b16 %v479
        %v768 = vunpack.c.h.b16 %v479
        %v769 = vunpack.c.l.b16 %v480
        %v770 = vunpack.c.h.b16 %v480
        %v771 = vunpack.c.l.b16 %v481
        %v772 = vunpack.c.h.b16 %v481
        %v773 = vunpack.c.l.b16 %v482
        %v774 = vunpack.c.h.b16 %v482
        %v775 = vunpack.c.l.b16 %v483
        %v776 = vunpack.c.h.b16 %v483
        %v777 = vunpack.c.l.b16 %v484
        %v778 = vunpack.c.h.b16 %v484
        %v779 = vunpack.c.l.b16 %v485
        %v780 = vunpack.c.h.b16 %v485
        %v781 = vunpack.c.l.b16 %v486
        %v782 = vunpack.c.h.b16 %v486
        %v783 = vunpack.c.l.b16 %v487
        %v784 = vunpack.c.h.b16 %v487
        %v785 = vunpack.c.l.b16 %v488
        %v786 = vunpack.c.h.b16 %v488
        %v787 = vunpack.c.l.b16 %v489
        %v788 = vunpack.c.h.b16 %v489
        %v789 = vunpack.c.l.b16 %v490
        %v790 = vunpack.c.h.b16 %v490
        %v791 = vunpack.c.l.b16 %v491
        %v792 = vunpack.c.h.b16 %v491
        %v793 = vunpack.c.l.b16 %v492
        %v794 = vunpack.c.h.b16 %v492
        %v795 = vunpack.c.l.b16 %v493
        %v796 = vunpack.c.h.b16 %v493
        %v797 = vunpack.c.l.b16 %v494
        %v798 = vunpack.c.h.b16 %v494
        %v799 = vunpack.c.l.b16 %v495
        %v800 = vunpack.c.h.b16 %v495
        %v801 = vunpack.c.l.b16 %v496
        %v802 = vunpack.c.h.b16 %v496
        %v803 = vunpack.c.l.b16 %v497
        %v804 = vunpack.c.h.b16 %v497
        %v805 = vunpack.c.l.b16 %v498
        %v806 = vunpack.c.h.b16 %v498
        %v807 = vunpack.c.l.b16 %v499
        %v808 = vunpack.c.h.b16 %v499
        %v809 = vunpack.c.l.b16 %v500
        %v810 = vunpack.c.h.b16 %v500
        %v811 = vunpack.c.l.b16 %v501
        %v812 = vunpack.c.h.b16 %v501
        %v813 = vunpack.c.l.b16 %v502
        %v814 = vunpack.c.h.b16 %v502
        %v815 = vunpack.c.l.b16 %v503
        %v816 = vunpack.c.h.b16 %v503
        %v817 = vunpack.c.l.b16 %v504
        %v818 = vunpack.c.h.b16 %v504
        %v819 = vunpack.c.l.b16 %v505
        %v820 = vunpack.c.h.b16 %v505
        %v821 = vunpack.c.l.b16 %v506
        %v822 = vunpack.c.h.b16 %v506
        %v823 = vunpack.c.l.b16 %v507
        %v824 = vunpack.c.h.b16 %v507
        %v825 = vunpack.c.l.b16 %v508
        %v826 = vunpack.c.h.b16 %v508
        %v827 = vunpack.c.l.b16 %v509
        %v828 = vunpack.c.h.b16 %v509
        %v829 = vunpack.c.l.b16 %v510
        %v830 = vunpack.c.h.b16 %v510
        %v831 = vunpack.c.l.b16 %v511
        %v832 = vunpack.c.h.b16 %v511
        %v833 = vunpack.c.l.b16 %v512
        %v834 = vunpack.c.h.b16 %v512
        %v835 = vunpack.c.l.b16 %v513
        %v836 = vunpack.c.h.b16 %v513
        %v837 = vunpack.c.l.b16 %v514
        %v838 = vunpack.c.h.b16 %v514
        %v839 = vunpack.c.l.b16 %v515
        %v840 = vunpack.c.h.b16 %v515
        %v841 = vunpack.c.l.b16 %v516
        %v842 = vunpack.c.h.b16 %v516
        %v843 = vunpack.c.l.b16 %v517
        %v844 = vunpack.c.h.b16 %v517
        %v845 = vunpack.c.l.b16 %v518
        %v846 = vunpack.c.h.b16 %v518
        %v847 = vunpack.c.l.b16 %v519
        %v848 = vunpack.c.h.b16 %v519
        %v849 = vunpack.c.l.b16 %v520
        %v850 = vunpack.c.h.b16 %v520
        %v851 = vunpack.c.l.b16 %v521
        %v852 = vunpack.c.h.b16 %v521
        %v853 = vunpack.c.l.b16 %v522
        %v854 = vunpack.c.h.b16 %v522
        %v855 = vunpack.c.l.b16 %v523
        %v856 = vunpack.c.h.b16 %v523
        %v857 = vunpack.c.l.b16 %v524
        %v858 = vunpack.c.h.b16 %v524
        %v859 = vunpack.c.l.b16 %v525
        %v860 = vunpack.c.h.b16 %v525
        %v861 = vunpack.c.l.b16 %v526
        %v862 = vunpack.c.h.b16 %v526
        %v863 = vunpack.c.l.b16 %v527
        %v864 = vunpack.c.h.b16 %v527
        %v865 = vunpack.c.l.b16 %v528
        %v866 = vunpack.c.h.b16 %v528
        %v867 = vunpack.c.l.b16 %v529
        %v868 = vunpack.c.h.b16 %v529
        %v869 = vunpack.c.l.b16 %v530
        %v870 = vunpack.c.h.b16 %v530
        %v871 = vunpack.c.l.b16 %v531
        %v872 = vunpack.c.h.b16 %v531
        %v873 = vunpack.c.l.b16 %v532
        %v874 = vunpack.c.h.b16 %v532
        %v875 = vunpack.c.l.b16 %v533
        %v876 = vunpack.c.h.b16 %v533
        %v877 = vunpack.c.l.b16 %v534
        %v878 = vunpack.c.h.b16 %v534
        %v879 = vunpack.c.l.b16 %v535
        %v880 = vunpack.c.h.b16 %v535
        %v881 = vunpack.c.l.b16 %v536
        %v882 = vunpack.c.h.b16 %v536
        %v883 = vunpack.c.l.b16 %v537
        %v884 = vunpack.c.h.b16 %v537
        %v885 = vunpack.c.l.b16 %v538
        %v886 = vunpack.c.h.b16 %v538
        %v887 = vunpack.c.l.b16 %v539
        %v888 = vunpack.c.h.b16 %v539
        %v889 = vunpack.c.l.b16 %v540
        %v890 = vunpack.c.h.b16 %v540
        %v891 = vunpack.c.l.b16 %v541
        %v892 = vunpack.c.h.b16 %v541
        %v893 = vunpack.c.l.b16 %v542
        %v894 = vunpack.c.h.b16 %v542
        %v895 = vpack.c.b16 %v769, %v767
        %v896 = vpack.c.b16 %v770, %v768
        %v897 = vpack.c.b16 %v773, %v771
        %v898 = vpack.c.b16 %v774, %v772
        %v899 = vpack.c.b16 %v777, %v775
        %v900 = vpack.c.b16 %v778, %v776
        %v901 = vpack.c.b16 %v781, %v779
        %v902 = vpack.c.b16 %v782, %v780
        %v903 = vpack.c.b16 %v785, %v783
        %v904 = vpack.c.b16 %v786, %v784
        %v905 = vpack.c.b16 %v789, %v787
        %v906 = vpack.c.b16 %v790, %v788
        %v907 = vpack.c.b16 %v793, %v791
        %v908 = vpack.c.b16 %v794, %v792
        %v909 = vpack.c.b16 %v797, %v795
        %v910 = vpack.c.b16 %v798, %v796
        %v911 = vpack.c.b16 %v801, %v799
        %v912 = vpack.c.b16 %v802, %v800
        %v913 = vpack.c.b16 %v805, %v803
        %v914 = vpack.c.b16 %v806, %v804
        %v915 = vpack.c.b16 %v809, %v807
        %v916 = vpack.c.b16 %v810, %v808
        %v917 = vpack.c.b16 %v813, %v811
        %v918 = vpack.c.b16 %v814, %v812
        %v919 = vpack.c.b16 %v817, %v815
        %v920 = vpack.c.b16 %v818, %v816
        %v921 = vpack.c.b16 %v821, %v819
        %v922 = vpack.c.b16 %v822, %v820
        %v923 = vpack.c.b16 %v825, %v823
        %v924 = vpack.c.b16 %v826, %v824
        %v925 = vpack.c.b16 %v829, %v827
        %v926 = vpack.c.b16 %v830, %v828
        %v927 = vpack.c.b16 %v833, %v831
        %v928 = vpack.c.b16 %v834, %v832
        %v929 = vpack.c.b16 %v837, %v835
        %v930 = vpack.c.b16 %v838, %v836
        %v931 = vpack.c.b16 %v841, %v839
        %v932 = vpack.c.b16 %v842, %v840
        %v933 = vpack.c.b16 %v845, %v843
        %v934 = vpack.c.b16 %v846, %v844
        %v935 = vpack.c.b16 %v849, %v847
        %v936 = vpack.c.b16 %v850, %v848
        %v937 = vpack.c.b16 %v853, %v851
        %v938 = vpack.c.b16 %v854, %v852
        %v939 = vpack.c.b16 %v857, %v855
        %v940 = vpack.c.b16 %v858, %v856
        %v941 = vpack.c.b16 %v861, %v859
        %v942 = vpack.c.b16 %v862, %v860
        %v943 = vpack.c.b16 %v865, %v863
        %v944 = vpack.c.b16 %v866, %v864
        %v945 = vpack.c.b16 %v869, %v867
        %v946 = vpack.c.b16 %v870, %v868
        %v947 = vpack.c.b16 %v873, %v871
        %v948 = vpack.c.b16 %v874, %v872
        %v949 = vpack.c.b16 %v877, %v875
        %v950 = vpack.c.b16 %v878, %v876
        %v951 = vpack.c.b16 %v881, %v879
        %v952 = vpack.c.b16 %v882, %v880
        %v953 = vpack.c.b16 %v885, %v883
        %v954 = vpack.c.b16 %v886, %v884
        %v955 = vpack.c.b16 %v889, %v887
        %v956 = vpack.c.b16 %v890, %v888
        %v957 = vpack.c.b16 %v893, %v891
        %v958 = vpack.c.b16 %v894, %v892
        %1023 = vmatprep.subr.bf16.mxu0 %v896
        %1024 = vmatpush1.bf16.msra.mxu0 %v895
        %1025 = vmatprep.subr.bf16.mxu0 %v898
        %1026 = vmatpush1.bf16.msra.mxu0 %v897
        %1027 = vmatprep.subr.bf16.mxu0 %v900
        %1028 = vmatpush1.bf16.msra.mxu0 %v899
        %1029 = vmatprep.subr.bf16.mxu0 %v902
        %1030 = vmatpush1.bf16.msra.mxu0 %v901
        %1031 = vmatprep.subr.bf16.mxu0 %v904
        %1032 = vmatpush1.bf16.msra.mxu0 %v903
        %1033 = vmatprep.subr.bf16.mxu0 %v906
        %1034 = vmatpush1.bf16.msra.mxu0 %v905
        %1035 = vmatprep.subr.bf16.mxu0 %v908
        %1036 = vmatpush1.bf16.msra.mxu0 %v907
        %1037 = vmatprep.subr.bf16.mxu0 %v910
        %1038 = vmatpush1.bf16.msra.mxu0 %v909
        %1039 = vmatprep.subr.bf16.mxu0 %v912
        %1040 = vmatpush1.bf16.msra.mxu0 %v911
        %1041 = vmatprep.subr.bf16.mxu0 %v914
        %1042 = vmatpush1.bf16.msra.mxu0 %v913
        %1043 = vmatprep.subr.bf16.mxu0 %v916
        %1044 = vmatpush1.bf16.msra.mxu0 %v915
        %1045 = vmatprep.subr.bf16.mxu0 %v918
        %1046 = vmatpush1.bf16.msra.mxu0 %v917
        %1047 = vmatprep.subr.bf16.mxu0 %v920
        %1048 = vmatpush1.bf16.msra.mxu0 %v919
        %1049 = vmatprep.subr.bf16.mxu0 %v922
        %1050 = vmatpush1.bf16.msra.mxu0 %v921
        %1051 = vmatprep.subr.bf16.mxu0 %v924
        %1052 = vmatpush1.bf16.msra.mxu0 %v923
        %1053 = vmatprep.subr.bf16.mxu0 %v926
        %1054 = vmatpush1.bf16.msra.mxu0 %v925
        %1055 = vmatprep.mubr.bf16.mxu0 %v640
        %1056 = vmatmul.mubr.bf16.gmra.mrb[0].mxu0 %v639
        %v1057 = vpop.f32.mrb[0].mxu0
        %v1058 = vadd.f32 0.0, %v1057
        %v1059 = vpop.f32.mrb[0].mxu0
        %v1060 = vadd.f32 0.0, %v1059
        %v1061 = vpop.f32.mrb[0].mxu0
        %v1062 = vadd.f32 0.0, %v1061
        %v1063 = vpop.f32.mrb[0].mxu0
        %v1064 = vadd.f32 0.0, %v1063
        %1065 = vmatprep.mubr.bf16.mxu0 %v644
        %1066 = vmatmul.mubr.bf16.gmra.mrb[0].mxu0 %v643
        %v1067 = vpop.f32.mrb[0].mxu0
        %v1068 = vadd.f32 0.0, %v1067
        %v1069 = vpop.f32.mrb[0].mxu0
        %v1070 = vadd.f32 0.0, %v1069
        %v1071 = vpop.f32.mrb[0].mxu0
        %v1072 = vadd.f32 0.0, %v1071
        %v1073 = vpop.f32.mrb[0].mxu0
        %v1074 = vadd.f32 0.0, %v1073
        %1075 = vmatprep.mubr.bf16.mxu0 %v648
        %1076 = vmatmul.mubr.bf16.gmra.mrb[0].mxu0 %v647
        %v1077 = vpop.f32.mrb[0].mxu0
        %v1078 = vadd.f32 0.0, %v1077
        %v1079 = vpop.f32.mrb[0].mxu0
        %v1080 = vadd.f32 0.0, %v1079
        %v1081 = vpop.f32.mrb[0].mxu0
        %v1082 = vadd.f32 0.0, %v1081
        %v1083 = vpop.f32.mrb[0].mxu0
        %v1084 = vadd.f32 0.0, %v1083
        %1085 = vmatprep.mubr.bf16.mxu0 %v652
        %1086 = vmatmul.mubr.bf16.gmra.mrb[0].mxu0 %v651
        %v1087 = vpop.f32.mrb[0].mxu0
        %v1088 = vadd.f32 0.0, %v1087
        %v1089 = vpop.f32.mrb[0].mxu0
        %v1090 = vadd.f32 0.0, %v1089
        %v1091 = vpop.f32.mrb[0].mxu0
        %v1092 = vadd.f32 0.0, %v1091
        %v1093 = vpop.f32.mrb[0].mxu0
        %v1094 = vadd.f32 0.0, %v1093
        %1095 = vmatprep.mubr.bf16.mxu0 %v656
        %1096 = vmatmul.mubr.bf16.gmra.mrb[0].mxu0 %v655
        %v1097 = vpop.f32.mrb[0].mxu0
        %v1098 = vadd.f32 0.0, %v1097
        %v1099 = vpop.f32.mrb[0].mxu0
        %v1100 = vadd.f32 0.0, %v1099
        %v1101 = vpop.f32.mrb[0].mxu0
        %v1102 = vadd.f32 0.0, %v1101
        %v1103 = vpop.f32.mrb[0].mxu0
        %v1104 = vadd.f32 0.0, %v1103
        %1105 = vmatprep.mubr.bf16.mxu0 %v660
        %1106 = vmatmul.mubr.bf16.gmra.mrb[0].mxu0 %v659
        %v1107 = vpop.f32.mrb[0].mxu0
        %v1108 = vadd.f32 0.0, %v1107
        %v1109 = vpop.f32.mrb[0].mxu0
        %v1110 = vadd.f32 0.0, %v1109
        %v1111 = vpop.f32.mrb[0].mxu0
        %v1112 = vadd.f32 0.0, %v1111
        %v1113 = vpop.f32.mrb[0].mxu0
        %v1114 = vadd.f32 0.0, %v1113
        %1115 = vmatprep.mubr.bf16.mxu0 %v664
        %1116 = vmatmul.mubr.bf16.gmra.mrb[0].mxu0 %v663
        %v1117 = vpop.f32.mrb[0].mxu0
        %v1118 = vadd.f32 0.0, %v1117
        %v1119 = vpop.f32.mrb[0].mxu0
        %v1120 = vadd.f32 0.0, %v1119
        %v1121 = vpop.f32.mrb[0].mxu0
        %v1122 = vadd.f32 0.0, %v1121
        %v1123 = vpop.f32.mrb[0].mxu0
        %v1124 = vadd.f32 0.0, %v1123
        %1125 = vmatprep.mubr.bf16.mxu0 %v668
        %1126 = vmatmul.mubr.bf16.gmra.mrb[0].mxu0 %v667
        %v1127 = vpop.f32.mrb[0].mxu0
        %v1128 = vadd.f32 0.0, %v1127
        %v1129 = vpop.f32.mrb[0].mxu0
        %v1130 = vadd.f32 0.0, %v1129
        %v1131 = vpop.f32.mrb[0].mxu0
        %v1132 = vadd.f32 0.0, %v1131
        %v1133 = vpop.f32.mrb[0].mxu0
        %v1134 = vadd.f32 0.0, %v1133
        %1135 = vdwg.mxu0
        %1136 = vmatprep.subr.bf16.mxu0 %v928
        %1137 = vmatpush1.bf16.msra.mxu0 %v927
        %1138 = vmatprep.subr.bf16.mxu0 %v930
        %1139 = vmatpush1.bf16.msra.mxu0 %v929
        %1140 = vmatprep.subr.bf16.mxu0 %v932
        %1141 = vmatpush1.bf16.msra.mxu0 %v931
        %1142 = vmatprep.subr.bf16.mxu0 %v934
        %1143 = vmatpush1.bf16.msra.mxu0 %v933
        %1144 = vmatprep.subr.bf16.mxu0 %v936
        %1145 = vmatpush1.bf16.msra.mxu0 %v935
        %1146 = vmatprep.subr.bf16.mxu0 %v938
        %1147 = vmatpush1.bf16.msra.mxu0 %v937
        %1148 = vmatprep.subr.bf16.mxu0 %v940
        %1149 = vmatpush1.bf16.msra.mxu0 %v939
        %1150 = vmatprep.subr.bf16.mxu0 %v942
        %1151 = vmatpush1.bf16.msra.mxu0 %v941
        %1152 = vmatprep.subr.bf16.mxu0 %v944
        %1153 = vmatpush1.bf16.msra.mxu0 %v943
        %1154 = vmatprep.subr.bf16.mxu0 %v946
        %1155 = vmatpush1.bf16.msra.mxu0 %v945
        %1156 = vmatprep.subr.bf16.mxu0 %v948
        %1157 = vmatpush1.bf16.msra.mxu0 %v947
        %1158 = vmatprep.subr.bf16.mxu0 %v950
        %1159 = vmatpush1.bf16.msra.mxu0 %v949
        %1160 = vmatprep.subr.bf16.mxu0 %v952
        %1161 = vmatpush1.bf16.msra.mxu0 %v951
        %1162 = vmatprep.subr.bf16.mxu0 %v954
        %1163 = vmatpush1.bf16.msra.mxu0 %v953
        %1164 = vmatprep.subr.bf16.mxu0 %v956
        %1165 = vmatpush1.bf16.msra.mxu0 %v955
        %1166 = vmatprep.subr.bf16.mxu0 %v958
        %1167 = vmatpush1.bf16.msra.mxu0 %v957
        %1168 = vmatprep.mubr.bf16.mxu0 %v642
        %1169 = vmatmul.mubr.bf16.gmra.mrb[0].mxu0 %v641
        %v1170 = vpop.f32.mrb[0].mxu0
        %v1171 = vadd.f32 %v1058, %v1170
        %v1172 = vpop.f32.mrb[0].mxu0
        %v1173 = vadd.f32 %v1060, %v1172
        %v1174 = vpop.f32.mrb[0].mxu0
        %v1175 = vadd.f32 %v1062, %v1174
        %v1176 = vpop.f32.mrb[0].mxu0
        %v1177 = vadd.f32 %v1064, %v1176
        %1178 = vmatprep.mubr.bf16.mxu0 %v646
        %1179 = vmatmul.mubr.bf16.gmra.mrb[0].mxu0 %v645
        %v1180 = vpop.f32.mrb[0].mxu0
        %v1181 = vadd.f32 %v1068, %v1180
        %v1182 = vpop.f32.mrb[0].mxu0
        %v1183 = vadd.f32 %v1070, %v1182
        %v1184 = vpop.f32.mrb[0].mxu0
        %v1185 = vadd.f32 %v1072, %v1184
        %v1186 = vpop.f32.mrb[0].mxu0
        %v1187 = vadd.f32 %v1074, %v1186
        %1188 = vmatprep.mubr.bf16.mxu0 %v650
        %1189 = vmatmul.mubr.bf16.gmra.mrb[0].mxu0 %v649
        %v1190 = vpop.f32.mrb[0].mxu0
        %v1191 = vadd.f32 %v1078, %v1190
        %v1192 = vpop.f32.mrb[0].mxu0
        %v1193 = vadd.f32 %v1080, %v1192
        %v1194 = vpop.f32.mrb[0].mxu0
        %v1195 = vadd.f32 %v1082, %v1194
        %v1196 = vpop.f32.mrb[0].mxu0
        %v1197 = vadd.f32 %v1084, %v1196
        %1198 = vmatprep.mubr.bf16.mxu0 %v654
        %1199 = vmatmul.mubr.bf16.gmra.mrb[0].mxu0 %v653
        %v1200 = vpop.f32.mrb[0].mxu0
        %v1201 = vadd.f32 %v1088, %v1200
        %v1202 = vpop.f32.mrb[0].mxu0
        %v1203 = vadd.f32 %v1090, %v1202
        %v1204 = vpop.f32.mrb[0].mxu0
        %v1205 = vadd.f32 %v1092, %v1204
        %v1206 = vpop.f32.mrb[0].mxu0
        %v1207 = vadd.f32 %v1094, %v1206
        %1208 = vmatprep.mubr.bf16.mxu0 %v658
        %1209 = vmatmul.mubr.bf16.gmra.mrb[0].mxu0 %v657
        %v1210 = vpop.f32.mrb[0].mxu0
        %v1211 = vadd.f32 %v1098, %v1210
        %v1212 = vpop.f32.mrb[0].mxu0
        %v1213 = vadd.f32 %v1100, %v1212
        %v1214 = vpop.f32.mrb[0].mxu0
        %v1215 = vadd.f32 %v1102, %v1214
        %v1216 = vpop.f32.mrb[0].mxu0
        %v1217 = vadd.f32 %v1104, %v1216
        %1218 = vmatprep.mubr.bf16.mxu0 %v662
        %1219 = vmatmul.mubr.bf16.gmra.mrb[0].mxu0 %v661
        %v1220 = vpop.f32.mrb[0].mxu0
        %v1221 = vadd.f32 %v1108, %v1220
        %v1222 = vpop.f32.mrb[0].mxu0
        %v1223 = vadd.f32 %v1110, %v1222
        %v1224 = vpop.f32.mrb[0].mxu0
        %v1225 = vadd.f32 %v1112, %v1224
        %v1226 = vpop.f32.mrb[0].mxu0
        %v1227 = vadd.f32 %v1114, %v1226
        %1228 = vmatprep.mubr.bf16.mxu0 %v666
        %1229 = vmatmul.mubr.bf16.gmra.mrb[0].mxu0 %v665
        %v1230 = vpop.f32.mrb[0].mxu0
        %v1231 = vadd.f32 %v1118, %v1230
        %v1232 = vpop.f32.mrb[0].mxu0
        %v1233 = vadd.f32 %v1120, %v1232
        %v1234 = vpop.f32.mrb[0].mxu0
        %v1235 = vadd.f32 %v1122, %v1234
        %v1236 = vpop.f32.mrb[0].mxu0
        %v1237 = vadd.f32 %v1124, %v1236
        %1238 = vmatprep.mubr.bf16.mxu0 %v670
        %1239 = vmatmul.mubr.bf16.gmra.mrb[0].mxu0 %v669
        %v1240 = vpop.f32.mrb[0].mxu0
        %v1241 = vadd.f32 %v1128, %v1240
        %v1242 = vpop.f32.mrb[0].mxu0
        %v1243 = vadd.f32 %v1130, %v1242
        %v1244 = vpop.f32.mrb[0].mxu0
        %v1245 = vadd.f32 %v1132, %v1244
        %v1246 = vpop.f32.mrb[0].mxu0
        %v1247 = vadd.f32 %v1134, %v1246
        %1248 = vdwg.mxu0
        %v1249 = vadd.f32 %v415, %v1171
        %v1250 = vadd.f32 %v416, %v1173
        %v1251 = vadd.f32 %v417, %v1175
        %v1252 = vadd.f32 %v418, %v1177
        %v1253 = vadd.f32 %v419, %v1181
        %v1254 = vadd.f32 %v420, %v1183
        %v1255 = vadd.f32 %v421, %v1185
        %v1256 = vadd.f32 %v422, %v1187
        %v1257 = vadd.f32 %v423, %v1191
        %v1258 = vadd.f32 %v424, %v1193
        %v1259 = vadd.f32 %v425, %v1195
        %v1260 = vadd.f32 %v426, %v1197
        %v1261 = vadd.f32 %v427, %v1201
        %v1262 = vadd.f32 %v428, %v1203
        %v1263 = vadd.f32 %v429, %v1205
        %v1264 = vadd.f32 %v430, %v1207
        %v1265 = vadd.f32 %v431, %v1211
        %v1266 = vadd.f32 %v432, %v1213
        %v1267 = vadd.f32 %v433, %v1215
        %v1268 = vadd.f32 %v434, %v1217
        %v1269 = vadd.f32 %v435, %v1221
        %v1270 = vadd.f32 %v436, %v1223
        %v1271 = vadd.f32 %v437, %v1225
        %v1272 = vadd.f32 %v438, %v1227
        %v1273 = vadd.f32 %v439, %v1231
        %v1274 = vadd.f32 %v440, %v1233
        %v1275 = vadd.f32 %v441, %v1235
        %v1276 = vadd.f32 %v442, %v1237
        %v1277 = vadd.f32 %v443, %v1241
        %v1278 = vadd.f32 %v444, %v1243
        %v1279 = vadd.f32 %v445, %v1245
        %v1280 = vadd.f32 %v446, %v1247
        %1281 = vst [vmem:[#allocation2] sm:$0xff] %v1249
        %1282 = vst [vmem:[#allocation2 + $0x8] sm:$0xff] %v1250
        %1283 = vst [vmem:[#allocation2 + $0x10] sm:$0xff] %v1251
        %1284 = vst [vmem:[#allocation2 + $0x18] sm:$0xff] %v1252
        %1285 = vst [vmem:[#allocation2 + $0x20] sm:$0xff] %v1253
        %1286 = vst [vmem:[#allocation2 + $0x28] sm:$0xff] %v1254
        %1287 = vst [vmem:[#allocation2 + $0x30] sm:$0xff] %v1255
        %1288 = vst [vmem:[#allocation2 + $0x38] sm:$0xff] %v1256
        %1289 = vst [vmem:[#allocation2 + $0x40] sm:$0xff] %v1257
        %1290 = vst [vmem:[#allocation2 + $0x48] sm:$0xff] %v1258
        %1291 = vst [vmem:[#allocation2 + $0x50] sm:$0xff] %v1259
        %1292 = vst [vmem:[#allocation2 + $0x58] sm:$0xff] %v1260
        %1293 = vst [vmem:[#allocation2 + $0x60] sm:$0xff] %v1261
        %1294 = vst [vmem:[#allocation2 + $0x68] sm:$0xff] %v1262
        %1295 = vst [vmem:[#allocation2 + $0x70] sm:$0xff] %v1263
        %1296 = vst [vmem:[#allocation2 + $0x78] sm:$0xff] %v1264
        %1297 = vst [vmem:[#allocation2 + $0x80] sm:$0xff] %v1265
        %1298 = vst [vmem:[#allocation2 + $0x88] sm:$0xff] %v1266
        %1299 = vst [vmem:[#allocation2 + $0x90] sm:$0xff] %v1267
        %1300 = vst [vmem:[#allocation2 + $0x98] sm:$0xff] %v1268
        %1301 = vst [vmem:[#allocation2 + $0xa0] sm:$0xff] %v1269
        %1302 = vst [vmem:[#allocation2 + $0xa8] sm:$0xff] %v1270
        %1303 = vst [vmem:[#allocation2 + $0xb0] sm:$0xff] %v1271
        %1304 = vst [vmem:[#allocation2 + $0xb8] sm:$0xff] %v1272
        %1305 = vst [vmem:[#allocation2 + $0xc0] sm:$0xff] %v1273
        %1306 = vst [vmem:[#allocation2 + $0xc8] sm:$0xff] %v1274
        %1307 = vst [vmem:[#allocation2 + $0xd0] sm:$0xff] %v1275
        %1308 = vst [vmem:[#allocation2 + $0xd8] sm:$0xff] %v1276
        %1309 = vst [vmem:[#allocation2 + $0xe0] sm:$0xff] %v1277
        %1310 = vst [vmem:[#allocation2 + $0xe8] sm:$0xff] %v1278
        %1311 = vst [vmem:[#allocation2 + $0xf0] sm:$0xff] %v1279
        %1312 = vst [vmem:[#allocation2 + $0xf8] sm:$0xff] %v1280
        %p1313 = scmp.eq.s32.totalorder %s22, 3
        // Predicated region
        $region60: #{dnet_forward.11} parent=50 // pred_check
          %p1314 = pneg %p1313
        $region61: #{dnet_forward.11} parent=50 // pred_check_branch
          %1316 = sbr.rel (%p1314) target = $region63
        $region62: #{dnet_forward.11} parent=50 // pred_region
          %v1317 = vld [vmem:[#allocation2] sm:$0xff]
          %v1318 = vld [vmem:[#allocation2 + $0x8] sm:$0xff]
          %v1319 = vld [vmem:[#allocation2 + $0x10] sm:$0xff]
          %v1320 = vld [vmem:[#allocation2 + $0x18] sm:$0xff]
          %v1321 = vld [vmem:[#allocation2 + $0x20] sm:$0xff]
          %v1322 = vld [vmem:[#allocation2 + $0x28] sm:$0xff]
          %v1323 = vld [vmem:[#allocation2 + $0x30] sm:$0xff]
          %v1324 = vld [vmem:[#allocation2 + $0x38] sm:$0xff]
          %v1325 = vld [vmem:[#allocation2 + $0x40] sm:$0xff]
          %v1326 = vld [vmem:[#allocation2 + $0x48] sm:$0xff]
          %v1327 = vld [vmem:[#allocation2 + $0x50] sm:$0xff]
          %v1328 = vld [vmem:[#allocation2 + $0x58] sm:$0xff]
          %v1329 = vld [vmem:[#allocation2 + $0x60] sm:$0xff]
          %v1330 = vld [vmem:[#allocation2 + $0x68] sm:$0xff]
          %v1331 = vld [vmem:[#allocation2 + $0x70] sm:$0xff]
          %v1332 = vld [vmem:[#allocation2 + $0x78] sm:$0xff]
          %v1333 = vld [vmem:[#allocation2 + $0x80] sm:$0xff]
          %v1334 = vld [vmem:[#allocation2 + $0x88] sm:$0xff]
          %v1335 = vld [vmem:[#allocation2 + $0x90] sm:$0xff]
          %v1336 = vld [vmem:[#allocation2 + $0x98] sm:$0xff]
          %v1337 = vld [vmem:[#allocation2 + $0xa0] sm:$0xff]
          %v1338 = vld [vmem:[#allocation2 + $0xa8] sm:$0xff]
          %v1339 = vld [vmem:[#allocation2 + $0xb0] sm:$0xff]
          %v1340 = vld [vmem:[#allocation2 + $0xb8] sm:$0xff]
          %v1341 = vld [vmem:[#allocation2 + $0xc0] sm:$0xff]
          %v1342 = vld [vmem:[#allocation2 + $0xc8] sm:$0xff]
          %v1343 = vld [vmem:[#allocation2 + $0xd0] sm:$0xff]
          %v1344 = vld [vmem:[#allocation2 + $0xd8] sm:$0xff]
          %v1345 = vld [vmem:[#allocation2 + $0xe0] sm:$0xff]
          %v1346 = vld [vmem:[#allocation2 + $0xe8] sm:$0xff]
          %v1347 = vld [vmem:[#allocation2 + $0xf0] sm:$0xff]
          %v1348 = vld [vmem:[#allocation2 + $0xf8] sm:$0xff]
          %v1349 = vld [vmem:[%s2] sm:$0x3]
          %v1351 = vlaneseq
          %v1352 = vshrl.u32 %v1351, 7
          %v1353 = vsub.s32 0, %v1352
          %v1354 = vrot.slane %v1349, %v1353
          %v1355 = vlaneseq
          %v1356 = vshrl.u32 %v1355, 7
          %v1357 = vsub.s32 1, %v1356
          %v1358 = vrot.slane %v1349, %v1357
          %v1361 = vadd.f32 %v1317, %v1354
          %v1362 = vadd.f32 %v1318, %v1358
          %v1363 = vadd.f32 %v1319, %v1354
          %v1364 = vadd.f32 %v1320, %v1358
          %v1365 = vadd.f32 %v1321, %v1354
          %v1366 = vadd.f32 %v1322, %v1358
          %v1367 = vadd.f32 %v1323, %v1354
          %v1368 = vadd.f32 %v1324, %v1358
          %v1369 = vadd.f32 %v1325, %v1354
          %v1370 = vadd.f32 %v1326, %v1358
          %v1371 = vadd.f32 %v1327, %v1354
          %v1372 = vadd.f32 %v1328, %v1358
          %v1373 = vadd.f32 %v1329, %v1354
          %v1374 = vadd.f32 %v1330, %v1358
          %v1375 = vadd.f32 %v1331, %v1354
          %v1376 = vadd.f32 %v1332, %v1358
          %v1377 = vadd.f32 %v1333, %v1354
          %v1378 = vadd.f32 %v1334, %v1358
          %v1379 = vadd.f32 %v1335, %v1354
          %v1380 = vadd.f32 %v1336, %v1358
          %v1381 = vadd.f32 %v1337, %v1354
          %v1382 = vadd.f32 %v1338, %v1358
          %v1383 = vadd.f32 %v1339, %v1354
          %v1384 = vadd.f32 %v1340, %v1358
          %v1385 = vadd.f32 %v1341, %v1354
          %v1386 = vadd.f32 %v1342, %v1358
          %v1387 = vadd.f32 %v1343, %v1354
          %v1388 = vadd.f32 %v1344, %v1358
          %v1389 = vadd.f32 %v1345, %v1354
          %v1390 = vadd.f32 %v1346, %v1358
          %v1391 = vadd.f32 %v1347, %v1354
          %v1392 = vadd.f32 %v1348, %v1358
          %1393 = vst [vmem:[%s367] sm:$0xff] %v1361
          %1394 = vst [vmem:[%s367 + $0x8] sm:$0xff] %v1362
          %1395 = vst [vmem:[%s367 + $0x10] sm:$0xff] %v1363
          %1396 = vst [vmem:[%s367 + $0x18] sm:$0xff] %v1364
          %1397 = vst [vmem:[%s367 + $0x20] sm:$0xff] %v1365
          %1398 = vst [vmem:[%s367 + $0x28] sm:$0xff] %v1366
          %1399 = vst [vmem:[%s367 + $0x30] sm:$0xff] %v1367
          %1400 = vst [vmem:[%s367 + $0x38] sm:$0xff] %v1368
          %1401 = vst [vmem:[%s367 + $0x40] sm:$0xff] %v1369
          %1402 = vst [vmem:[%s367 + $0x48] sm:$0xff] %v1370
          %1403 = vst [vmem:[%s367 + $0x50] sm:$0xff] %v1371
          %1404 = vst [vmem:[%s367 + $0x58] sm:$0xff] %v1372
          %1405 = vst [vmem:[%s367 + $0x60] sm:$0xff] %v1373
          %1406 = vst [vmem:[%s367 + $0x68] sm:$0xff] %v1374
          %1407 = vst [vmem:[%s367 + $0x70] sm:$0xff] %v1375
          %1408 = vst [vmem:[%s367 + $0x78] sm:$0xff] %v1376
          %1409 = vst [vmem:[%s367 + $0x80] sm:$0xff] %v1377
          %1410 = vst [vmem:[%s367 + $0x88] sm:$0xff] %v1378
          %1411 = vst [vmem:[%s367 + $0x90] sm:$0xff] %v1379
          %1412 = vst [vmem:[%s367 + $0x98] sm:$0xff] %v1380
          %1413 = vst [vmem:[%s367 + $0xa0] sm:$0xff] %v1381
          %1414 = vst [vmem:[%s367 + $0xa8] sm:$0xff] %v1382
          %1415 = vst [vmem:[%s367 + $0xb0] sm:$0xff] %v1383
          %1416 = vst [vmem:[%s367 + $0xb8] sm:$0xff] %v1384
          %1417 = vst [vmem:[%s367 + $0xc0] sm:$0xff] %v1385
          %1418 = vst [vmem:[%s367 + $0xc8] sm:$0xff] %v1386
          %1419 = vst [vmem:[%s367 + $0xd0] sm:$0xff] %v1387
          %1420 = vst [vmem:[%s367 + $0xd8] sm:$0xff] %v1388
          %1421 = vst [vmem:[%s367 + $0xe0] sm:$0xff] %v1389
          %1422 = vst [vmem:[%s367 + $0xe8] sm:$0xff] %v1390
          %1423 = vst [vmem:[%s367 + $0xf0] sm:$0xff] %v1391
          %1424 = vst [vmem:[%s367 + $0xf8] sm:$0xff] %v1392
          %v1425 = vadd.f32 %v1361, %v1363
          %v1426 = vadd.f32 %v1425, %v1365
          %v1427 = vadd.f32 %v1426, %v1367
          %v1428 = vadd.f32 %v1427, %v1369
          %v1429 = vadd.f32 %v1428, %v1371
          %v1430 = vadd.f32 %v1429, %v1373
          %v1431 = vadd.f32 %v1430, %v1375
          %v1432 = vadd.f32 %v1431, %v1377
          %v1433 = vadd.f32 %v1432, %v1379
          %v1434 = vadd.f32 %v1433, %v1381
          %v1435 = vadd.f32 %v1434, %v1383
          %v1436 = vadd.f32 %v1435, %v1385
          %v1437 = vadd.f32 %v1436, %v1387
          %v1438 = vadd.f32 %v1437, %v1389
          %v1439 = vadd.f32 %v1438, %v1391
          %v1440 = vrot.slane %v1439, 4
          %v1441 = vadd.f32 %v1439, %v1440
          %v1442 = vrot.slane %v1441, 2
          %v1443 = vadd.f32 %v1441, %v1442
          %v1444 = vrot.slane %v1443, 1
          %v1445 = vadd.f32 %v1443, %v1444
          %v1446 = vadd.f32 %v1362, %v1364
          %v1447 = vadd.f32 %v1446, %v1366
          %v1448 = vadd.f32 %v1447, %v1368
          %v1449 = vadd.f32 %v1448, %v1370
          %v1450 = vadd.f32 %v1449, %v1372
          %v1451 = vadd.f32 %v1450, %v1374
          %v1452 = vadd.f32 %v1451, %v1376
          %v1453 = vadd.f32 %v1452, %v1378
          %v1454 = vadd.f32 %v1453, %v1380
          %v1455 = vadd.f32 %v1454, %v1382
          %v1456 = vadd.f32 %v1455, %v1384
          %v1457 = vadd.f32 %v1456, %v1386
          %v1458 = vadd.f32 %v1457, %v1388
          %v1459 = vadd.f32 %v1458, %v1390
          %v1460 = vadd.f32 %v1459, %v1392
          %v1461 = vrot.slane %v1460, 4
          %v1462 = vadd.f32 %v1460, %v1461
          %v1463 = vrot.slane %v1462, 2
          %v1464 = vadd.f32 %v1462, %v1463
          %v1465 = vrot.slane %v1464, 1
          %v1466 = vadd.f32 %v1464, %v1465
          %v1467 = vmul.f32 %v1361, %v1361
          %v1468 = vmul.f32 %v1362, %v1362
          %v1469 = vmul.f32 %v1363, %v1363
          %v1470 = vmul.f32 %v1364, %v1364
          %v1471 = vmul.f32 %v1365, %v1365
          %v1472 = vmul.f32 %v1366, %v1366
          %v1473 = vmul.f32 %v1367, %v1367
          %v1474 = vmul.f32 %v1368, %v1368
          %v1475 = vmul.f32 %v1369, %v1369
          %v1476 = vmul.f32 %v1370, %v1370
          %v1477 = vmul.f32 %v1371, %v1371
          %v1478 = vmul.f32 %v1372, %v1372
          %v1479 = vmul.f32 %v1373, %v1373
          %v1480 = vmul.f32 %v1374, %v1374
          %v1481 = vmul.f32 %v1375, %v1375
          %v1482 = vmul.f32 %v1376, %v1376
          %v1483 = vmul.f32 %v1377, %v1377
          %v1484 = vmul.f32 %v1378, %v1378
          %v1485 = vmul.f32 %v1379, %v1379
          %v1486 = vmul.f32 %v1380, %v1380
          %v1487 = vmul.f32 %v1381, %v1381
          %v1488 = vmul.f32 %v1382, %v1382
          %v1489 = vmul.f32 %v1383, %v1383
          %v1490 = vmul.f32 %v1384, %v1384
          %v1491 = vmul.f32 %v1385, %v1385
          %v1492 = vmul.f32 %v1386, %v1386
          %v1493 = vmul.f32 %v1387, %v1387
          %v1494 = vmul.f32 %v1388, %v1388
          %v1495 = vmul.f32 %v1389, %v1389
          %v1496 = vmul.f32 %v1390, %v1390
          %v1497 = vmul.f32 %v1391, %v1391
          %v1498 = vmul.f32 %v1392, %v1392
          %v1499 = vadd.f32 %v1467, %v1469
          %v1500 = vadd.f32 %v1499, %v1471
          %v1501 = vadd.f32 %v1500, %v1473
          %v1502 = vadd.f32 %v1501, %v1475
          %v1503 = vadd.f32 %v1502, %v1477
          %v1504 = vadd.f32 %v1503, %v1479
          %v1505 = vadd.f32 %v1504, %v1481
          %v1506 = vadd.f32 %v1505, %v1483
          %v1507 = vadd.f32 %v1506, %v1485
          %v1508 = vadd.f32 %v1507, %v1487
          %v1509 = vadd.f32 %v1508, %v1489
          %v1510 = vadd.f32 %v1509, %v1491
          %v1511 = vadd.f32 %v1510, %v1493
          %v1512 = vadd.f32 %v1511, %v1495
          %v1513 = vadd.f32 %v1512, %v1497
          %v1514 = vrot.slane %v1513, 4
          %v1515 = vadd.f32 %v1513, %v1514
          %v1516 = vrot.slane %v1515, 2
          %v1517 = vadd.f32 %v1515, %v1516
          %v1518 = vrot.slane %v1517, 1
          %v1519 = vadd.f32 %v1517, %v1518
          %v1520 = vadd.f32 %v1468, %v1470
          %v1521 = vadd.f32 %v1520, %v1472
          %v1522 = vadd.f32 %v1521, %v1474
          %v1523 = vadd.f32 %v1522, %v1476
          %v1524 = vadd.f32 %v1523, %v1478
          %v1525 = vadd.f32 %v1524, %v1480
          %v1526 = vadd.f32 %v1525, %v1482
          %v1527 = vadd.f32 %v1526, %v1484
          %v1528 = vadd.f32 %v1527, %v1486
          %v1529 = vadd.f32 %v1528, %v1488
          %v1530 = vadd.f32 %v1529, %v1490
          %v1531 = vadd.f32 %v1530, %v1492
          %v1532 = vadd.f32 %v1531, %v1494
          %v1533 = vadd.f32 %v1532, %v1496
          %v1534 = vadd.f32 %v1533, %v1498
          %v1535 = vrot.slane %v1534, 4
          %v1536 = vadd.f32 %v1534, %v1535
          %v1537 = vrot.slane %v1536, 2
          %v1538 = vadd.f32 %v1536, %v1537
          %v1539 = vrot.slane %v1538, 1
          %v1540 = vadd.f32 %v1538, %v1539
          %1541 = vst [vmem:[%s373] sm:$0xff] %v1445
          %1542 = vst [vmem:[%s373 + $0x8] sm:$0xff] %v1466
          %1543 = vst [vmem:[%s378] sm:$0xff] %v1519
          %1544 = vst [vmem:[%s378 + $0x8] sm:$0xff] %v1540
        $region63: #{dnet_forward.11} parent=50 // pred_fallthru
          _
        %s1545 = smul.u32 16, %s21
        %p1546 = scmp.lt.s32.totalorder %s1545, 15
        %s1547 = scalar_select %p1546, %s1545, 15
        %s1548 = smul.addr %s1547, 2
        %s1549 = smul.addr %s1548, 8
        %s1550 = scalar_lea.vmem %s3, %s1549
        %p1551 = scmp.lt.s32.totalorder %s21, 0
        %s1552 = scalar_select %p1551, %s21, 0
        %s1553 = smul.addr %s1552, 2
        %s1554 = smul.addr %s1553, 8
        %s1555 = scalar_lea.vmem %s4, %s1554
        %p1556 = scmp.lt.s32.totalorder %s21, 0
        %s1557 = scalar_select %p1556, %s21, 0
        %s1558 = smul.addr %s1557, 2
        %s1559 = smul.addr %s1558, 8
        %s1560 = scalar_lea.vmem %s5, %s1559
        // Predicated region
        $region64: #{dnet_forward.11} parent=50 // pred_check
          %p1561 = pneg %p122
        $region65: #{dnet_forward.11} parent=50 // pred_check_branch
          %1563 = sbr.rel (%p1561) target = $region67
        $region66: #{dnet_forward.11} parent=50 // pred_region
          %s1564 = smul.u32 16, %s21
        $region67: #{dnet_forward.11} parent=50 // pred_fallthru
          _
        // Predicated region
        $region68: #{dnet_forward.11} parent=50 // pred_check
          %p1565 = pneg %p148
        $region69: #{dnet_forward.11} parent=50 // pred_check_branch
          %1567 = sbr.rel (%p1565) target = $region71
        $region70: #{dnet_forward.11} parent=50 // pred_region
          _
        $region71: #{dnet_forward.11} parent=50 // pred_fallthru
          _
        // Predicated region
        $region72: #{dnet_forward.11} parent=50 // pred_check
          %p1568 = pneg %p174
        $region73: #{dnet_forward.11} parent=50 // pred_check_branch
          %1570 = sbr.rel (%p1568) target = $region75
        $region74: #{dnet_forward.11} parent=50 // pred_region
          _
        $region75: #{dnet_forward.11} parent=50 // pred_fallthru
          _
        // Predicated region
        $region76: #{dnet_forward.11} parent=50 // pred_check
          %p1571 = pneg %p122
        $region77: #{dnet_forward.11} parent=50 // pred_check_branch
          %1573 = sbr.rel (%p1571) target = $region79
        $region78: #{dnet_forward.11} parent=50 // pred_region
          %s1574 = smul.u32 16, %s21
          %p1575 = scmp.lt.s32.totalorder %s1574, 15
          %s1576 = scalar_select %p1575, %s1574, 15
          %s1577 = smul.addr %s1576, 2
          %s1578 = smul.addr %s1577, 8
          %s1579 = scalar_lea.vmem %s3, %s1578
        $region79: #{dnet_forward.11} parent=50 // pred_fallthru
          _
        // Predicated region
        $region80: #{dnet_forward.11} parent=50 // pred_check
          %p1580 = pneg %p148
        $region81: #{dnet_forward.11} parent=50 // pred_check_branch
          %1582 = sbr.rel (%p1580) target = $region83
        $region82: #{dnet_forward.11} parent=50 // pred_region
          %p1583 = scmp.lt.s32.totalorder %s21, 0
          %s1584 = scalar_select %p1583, %s21, 0
          %s1585 = smul.addr %s1584, 2
          %s1586 = smul.addr %s1585, 8
          %s1587 = scalar_lea.vmem %s4, %s1586
        $region83: #{dnet_forward.11} parent=50 // pred_fallthru
          _
        // Predicated region
        $region84: #{dnet_forward.11} parent=50 // pred_check
          %p1588 = pneg %p174
        $region85: #{dnet_forward.11} parent=50 // pred_check_branch
          %1590 = sbr.rel (%p1588) target = $region87
        $region86: #{dnet_forward.11} parent=50 // pred_region
          %p1591 = scmp.lt.s32.totalorder %s21, 0
          %s1592 = scalar_select %p1591, %s21, 0
          %s1593 = smul.addr %s1592, 2
          %s1594 = smul.addr %s1593, 8
          %s1595 = scalar_lea.vmem %s5, %s1594
        $region87: #{dnet_forward.11} parent=50 // pred_fallthru
          _
      $region51: #{dnet_forward.11} parent=5 // pred_fallthru
        _
      %p1596 = scmp.le.s32.totalorder 2, %s12
      // Predicated region
      $region88: #{dnet_forward.11} parent=5 // pred_check
        %p1597 = pneg %p1596
      $region89: #{dnet_forward.11} parent=5 // pred_check_branch
        %1599 = sbr.rel (%p1597) target = $region91
      $region90: #{dnet_forward.11} parent=5 // pred_region
        %s1600 = ssub.s32 %s12, 2
      $region91: #{dnet_forward.11} parent=5 // pred_fallthru
        _
    $region6: #{dnet_forward.11} parent=1 // loop_footer
      %s16 = sadd.s32 1, %s12
    $region7: #{dnet_forward.11} parent=1 // loop_footer_branch
      %11 = sbr.rel target = $region3
    $region8: #{dnet_forward.11} parent=1 // loop_exit
      _

// kernel: dnet_forward.12
$region0: #{dnet_forward.12}
  #allocation0 [shape = 'u32[]', space=smem, size = 0x4, offset = 0x4, fixed_abs, tag = 'smem constant byte address 0x4 - core index']
  #allocation1 [shape = 'u32[144,128]{1,0:T(1,128)}', space=vmem, size = 0x12000, scoped, tag = 'internal scratch']
  %s0 = inlined_call_operand.vmem [shape: f32[128,256], index: 0, kind: input, shape index: {}]
  %s1 = inlined_call_operand.vmem [shape: f32[1,256], index: 1, kind: input, shape index: {}]
  %s2 = inlined_call_operand.vmem [shape: f32[1,256], index: 2, kind: input, shape index: {}]
  %s3 = inlined_call_operand.vmem [shape: f32[128,256], index: 3, kind: output, shape index: {}]
  %s4 = sld [smem:[#allocation0]]
  $region22: #{dnet_forward.12} parent=0
    _
  %s6 = ssub.s32 1, %s4
  %s7 = scalar_select 0, %s6, %s4
  // Predicated region
  $region2: #{dnet_forward.12} parent=0 // pred_check
    _
  $region3: #{dnet_forward.12} parent=0 // pred_check_branch
    %9 = sbr.rel (0) target = $region5
  $region4: #{dnet_forward.12} parent=0 // pred_region
    _
  $region5: #{dnet_forward.12} parent=0 // pred_fallthru
    _
  // Predicated region
  $region6: #{dnet_forward.12} parent=0 // pred_check
    _
  $region7: #{dnet_forward.12} parent=0 // pred_check_branch
    %11 = sbr.rel (0) target = $region9
  $region8: #{dnet_forward.12} parent=0 // pred_region
    _
  $region9: #{dnet_forward.12} parent=0 // pred_fallthru
    _
  // Predicated region
  $region10: #{dnet_forward.12} parent=0 // pred_check
    _
  $region11: #{dnet_forward.12} parent=0 // pred_check_branch
    %13 = sbr.rel (0) target = $region13
  $region12: #{dnet_forward.12} parent=0 // pred_region
    _
  $region13: #{dnet_forward.12} parent=0 // pred_fallthru
    _
  %v14 = vld [vmem:[%s0] sm:$0xff]
  %v15 = vld [vmem:[%s0 + $0x8] sm:$0xff]
  %v16 = vld [vmem:[%s0 + $0x10] sm:$0xff]
  %v17 = vld [vmem:[%s0 + $0x18] sm:$0xff]
  %v18 = vld [vmem:[%s0 + $0x20] sm:$0xff]
  %v19 = vld [vmem:[%s0 + $0x28] sm:$0xff]
  %v20 = vld [vmem:[%s0 + $0x30] sm:$0xff]
  %v21 = vld [vmem:[%s0 + $0x38] sm:$0xff]
  %v22 = vld [vmem:[%s0 + $0x40] sm:$0xff]
  %v23 = vld [vmem:[%s0 + $0x48] sm:$0xff]
  %v24 = vld [vmem:[%s0 + $0x50] sm:$0xff]
  %v25 = vld [vmem:[%s0 + $0x58] sm:$0xff]
  %v26 = vld [vmem:[%s0 + $0x60] sm:$0xff]
  %v27 = vld [vmem:[%s0 + $0x68] sm:$0xff]
  %v28 = vld [vmem:[%s0 + $0x70] sm:$0xff]
  %v29 = vld [vmem:[%s0 + $0x78] sm:$0xff]
  %v30 = vld [vmem:[%s0 + $0x80] sm:$0xff]
  %v31 = vld [vmem:[%s0 + $0x88] sm:$0xff]
  %v32 = vld [vmem:[%s0 + $0x90] sm:$0xff]
  %v33 = vld [vmem:[%s0 + $0x98] sm:$0xff]
  %v34 = vld [vmem:[%s0 + $0xa0] sm:$0xff]
  %v35 = vld [vmem:[%s0 + $0xa8] sm:$0xff]
  %v36 = vld [vmem:[%s0 + $0xb0] sm:$0xff]
  %v37 = vld [vmem:[%s0 + $0xb8] sm:$0xff]
  %v38 = vld [vmem:[%s0 + $0xc0] sm:$0xff]
  %v39 = vld [vmem:[%s0 + $0xc8] sm:$0xff]
  %v40 = vld [vmem:[%s0 + $0xd0] sm:$0xff]
  %v41 = vld [vmem:[%s0 + $0xd8] sm:$0xff]
  %v42 = vld [vmem:[%s0 + $0xe0] sm:$0xff]
  %v43 = vld [vmem:[%s0 + $0xe8] sm:$0xff]
  %v44 = vld [vmem:[%s0 + $0xf0] sm:$0xff]
  %v45 = vld [vmem:[%s0 + $0xf8] sm:$0xff]
  %v46 = vld [vmem:[%s1] sm:$0x3]
  %v48 = vlaneseq
  %v49 = vshrl.u32 %v48, 7
  %v50 = vsub.s32 0, %v49
  %v51 = vrot.slane %v46, %v50
  %v52 = vlaneseq
  %v53 = vshrl.u32 %v52, 7
  %v54 = vsub.s32 1, %v53
  %v55 = vrot.slane %v46, %v54
  %v58 = vmul.f32 %v14, %v51
  %v59 = vmul.f32 %v15, %v55
  %v60 = vmul.f32 %v16, %v51
  %v61 = vmul.f32 %v17, %v55
  %v62 = vmul.f32 %v18, %v51
  %v63 = vmul.f32 %v19, %v55
  %v64 = vmul.f32 %v20, %v51
  %v65 = vmul.f32 %v21, %v55
  %v66 = vmul.f32 %v22, %v51
  %v67 = vmul.f32 %v23, %v55
  %v68 = vmul.f32 %v24, %v51
  %v69 = vmul.f32 %v25, %v55
  %v70 = vmul.f32 %v26, %v51
  %v71 = vmul.f32 %v27, %v55
  %v72 = vmul.f32 %v28, %v51
  %v73 = vmul.f32 %v29, %v55
  %v74 = vmul.f32 %v30, %v51
  %v75 = vmul.f32 %v31, %v55
  %v76 = vmul.f32 %v32, %v51
  %v77 = vmul.f32 %v33, %v55
  %v78 = vmul.f32 %v34, %v51
  %v79 = vmul.f32 %v35, %v55
  %v80 = vmul.f32 %v36, %v51
  %v81 = vmul.f32 %v37, %v55
  %v82 = vmul.f32 %v38, %v51
  %v83 = vmul.f32 %v39, %v55
  %v84 = vmul.f32 %v40, %v51
  %v85 = vmul.f32 %v41, %v55
  %v86 = vmul.f32 %v42, %v51
  %v87 = vmul.f32 %v43, %v55
  %v88 = vmul.f32 %v44, %v51
  %v89 = vmul.f32 %v45, %v55
  %v90 = vld [vmem:[%s2] sm:$0x3]
  %v92 = vlaneseq
  %v93 = vshrl.u32 %v92, 7
  %v94 = vsub.s32 0, %v93
  %v95 = vrot.slane %v90, %v94
  %v96 = vlaneseq
  %v97 = vshrl.u32 %v96, 7
  %v98 = vsub.s32 1, %v97
  %v99 = vrot.slane %v90, %v98
  %v102 = vadd.f32 %v58, %v95
  %v103 = vadd.f32 %v59, %v99
  %v104 = vadd.f32 %v60, %v95
  %v105 = vadd.f32 %v61, %v99
  %v106 = vadd.f32 %v62, %v95
  %v107 = vadd.f32 %v63, %v99
  %v108 = vadd.f32 %v64, %v95
  %v109 = vadd.f32 %v65, %v99
  %v110 = vadd.f32 %v66, %v95
  %v111 = vadd.f32 %v67, %v99
  %v112 = vadd.f32 %v68, %v95
  %v113 = vadd.f32 %v69, %v99
  %v114 = vadd.f32 %v70, %v95
  %v115 = vadd.f32 %v71, %v99
  %v116 = vadd.f32 %v72, %v95
  %v117 = vadd.f32 %v73, %v99
  %v118 = vadd.f32 %v74, %v95
  %v119 = vadd.f32 %v75, %v99
  %v120 = vadd.f32 %v76, %v95
  %v121 = vadd.f32 %v77, %v99
  %v122 = vadd.f32 %v78, %v95
  %v123 = vadd.f32 %v79, %v99
  %v124 = vadd.f32 %v80, %v95
  %v125 = vadd.f32 %v81, %v99
  %v126 = vadd.f32 %v82, %v95
  %v127 = vadd.f32 %v83, %v99
  %v128 = vadd.f32 %v84, %v95
  %v129 = vadd.f32 %v85, %v99
  %v130 = vadd.f32 %v86, %v95
  %v131 = vadd.f32 %v87, %v99
  %v132 = vadd.f32 %v88, %v95
  %v133 = vadd.f32 %v89, %v99
  %vm134 = vcmp.gt.f32.partialorder %v102, 0.0
  %vm135 = vcmp.gt.f32.partialorder %v103, 0.0
  %vm136 = vcmp.gt.f32.partialorder %v104, 0.0
  %vm137 = vcmp.gt.f32.partialorder %v105, 0.0
  %vm138 = vcmp.gt.f32.partialorder %v106, 0.0
  %vm139 = vcmp.gt.f32.partialorder %v107, 0.0
  %vm140 = vcmp.gt.f32.partialorder %v108, 0.0
  %vm141 = vcmp.gt.f32.partialorder %v109, 0.0
  %vm142 = vcmp.gt.f32.partialorder %v110, 0.0
  %vm143 = vcmp.gt.f32.partialorder %v111, 0.0
  %vm144 = vcmp.gt.f32.partialorder %v112, 0.0
  %vm145 = vcmp.gt.f32.partialorder %v113, 0.0
  %vm146 = vcmp.gt.f32.partialorder %v114, 0.0
  %vm147 = vcmp.gt.f32.partialorder %v115, 0.0
  %vm148 = vcmp.gt.f32.partialorder %v116, 0.0
  %vm149 = vcmp.gt.f32.partialorder %v117, 0.0
  %vm150 = vcmp.gt.f32.partialorder %v118, 0.0
  %vm151 = vcmp.gt.f32.partialorder %v119, 0.0
  %vm152 = vcmp.gt.f32.partialorder %v120, 0.0
  %vm153 = vcmp.gt.f32.partialorder %v121, 0.0
  %vm154 = vcmp.gt.f32.partialorder %v122, 0.0
  %vm155 = vcmp.gt.f32.partialorder %v123, 0.0
  %vm156 = vcmp.gt.f32.partialorder %v124, 0.0
  %vm157 = vcmp.gt.f32.partialorder %v125, 0.0
  %vm158 = vcmp.gt.f32.partialorder %v126, 0.0
  %vm159 = vcmp.gt.f32.partialorder %v127, 0.0
  %vm160 = vcmp.gt.f32.partialorder %v128, 0.0
  %vm161 = vcmp.gt.f32.partialorder %v129, 0.0
  %vm162 = vcmp.gt.f32.partialorder %v130, 0.0
  %vm163 = vcmp.gt.f32.partialorder %v131, 0.0
  %vm164 = vcmp.gt.f32.partialorder %v132, 0.0
  %vm165 = vcmp.gt.f32.partialorder %v133, 0.0
  %v166 = vmul.f32 %v102, 0.2
  %v167 = vmul.f32 %v103, 0.2
  %v168 = vmul.f32 %v104, 0.2
  %v169 = vmul.f32 %v105, 0.2
  %v170 = vmul.f32 %v106, 0.2
  %v171 = vmul.f32 %v107, 0.2
  %v172 = vmul.f32 %v108, 0.2
  %v173 = vmul.f32 %v109, 0.2
  %v174 = vmul.f32 %v110, 0.2
  %v175 = vmul.f32 %v111, 0.2
  %v176 = vmul.f32 %v112, 0.2
  %v177 = vmul.f32 %v113, 0.2
  %v178 = vmul.f32 %v114, 0.2
  %v179 = vmul.f32 %v115, 0.2
  %v180 = vmul.f32 %v116, 0.2
  %v181 = vmul.f32 %v117, 0.2
  %v182 = vmul.f32 %v118, 0.2
  %v183 = vmul.f32 %v119, 0.2
  %v184 = vmul.f32 %v120, 0.2
  %v185 = vmul.f32 %v121, 0.2
  %v186 = vmul.f32 %v122, 0.2
  %v187 = vmul.f32 %v123, 0.2
  %v188 = vmul.f32 %v124, 0.2
  %v189 = vmul.f32 %v125, 0.2
  %v190 = vmul.f32 %v126, 0.2
  %v191 = vmul.f32 %v127, 0.2
  %v192 = vmul.f32 %v128, 0.2
  %v193 = vmul.f32 %v129, 0.2
  %v194 = vmul.f32 %v130, 0.2
  %v195 = vmul.f32 %v131, 0.2
  %v196 = vmul.f32 %v132, 0.2
  %v197 = vmul.f32 %v133, 0.2
  %v198 = vsel %vm134, %v102, %v166
  %v199 = vsel %vm135, %v103, %v167
  %v200 = vsel %vm136, %v104, %v168
  %v201 = vsel %vm137, %v105, %v169
  %v202 = vsel %vm138, %v106, %v170
  %v203 = vsel %vm139, %v107, %v171
  %v204 = vsel %vm140, %v108, %v172
  %v205 = vsel %vm141, %v109, %v173
  %v206 = vsel %vm142, %v110, %v174
  %v207 = vsel %vm143, %v111, %v175
  %v208 = vsel %vm144, %v112, %v176
  %v209 = vsel %vm145, %v113, %v177
  %v210 = vsel %vm146, %v114, %v178
  %v211 = vsel %vm147, %v115, %v179
  %v212 = vsel %vm148, %v116, %v180
  %v213 = vsel %vm149, %v117, %v181
  %v214 = vsel %vm150, %v118, %v182
  %v215 = vsel %vm151, %v119, %v183
  %v216 = vsel %vm152, %v120, %v184
  %v217 = vsel %vm153, %v121, %v185
  %v218 = vsel %vm154, %v122, %v186
  %v219 = vsel %vm155, %v123, %v187
  %v220 = vsel %vm156, %v124, %v188
  %v221 = vsel %vm157, %v125, %v189
  %v222 = vsel %vm158, %v126, %v190
  %v223 = vsel %vm159, %v127, %v191
  %v224 = vsel %vm160, %v128, %v192
  %v225 = vsel %vm161, %v129, %v193
  %v226 = vsel %vm162, %v130, %v194
  %v227 = vsel %vm163, %v131, %v195
  %v228 = vsel %vm164, %v132, %v196
  %v229 = vsel %vm165, %v133, %v197
  %230 = vst [vmem:[%s3] sm:$0xff] %v198
  %231 = vst [vmem:[%s3 + $0x8] sm:$0xff] %v199
  %232 = vst [vmem:[%s3 + $0x10] sm:$0xff] %v200
  %233 = vst [vmem:[%s3 + $0x18] sm:$0xff] %v201
  %234 = vst [vmem:[%s3 + $0x20] sm:$0xff] %v202
  %235 = vst [vmem:[%s3 + $0x28] sm:$0xff] %v203
  %236 = vst [vmem:[%s3 + $0x30] sm:$0xff] %v204
  %237 = vst [vmem:[%s3 + $0x38] sm:$0xff] %v205
  %238 = vst [vmem:[%s3 + $0x40] sm:$0xff] %v206
  %239 = vst [vmem:[%s3 + $0x48] sm:$0xff] %v207
  %240 = vst [vmem:[%s3 + $0x50] sm:$0xff] %v208
  %241 = vst [vmem:[%s3 + $0x58] sm:$0xff] %v209
  %242 = vst [vmem:[%s3 + $0x60] sm:$0xff] %v210
  %243 = vst [vmem:[%s3 + $0x68] sm:$0xff] %v211
  %244 = vst [vmem:[%s3 + $0x70] sm:$0xff] %v212
  %245 = vst [vmem:[%s3 + $0x78] sm:$0xff] %v213
  %246 = vst [vmem:[%s3 + $0x80] sm:$0xff] %v214
  %247 = vst [vmem:[%s3 + $0x88] sm:$0xff] %v215
  %248 = vst [vmem:[%s3 + $0x90] sm:$0xff] %v216
  %249 = vst [vmem:[%s3 + $0x98] sm:$0xff] %v217
  %250 = vst [vmem:[%s3 + $0xa0] sm:$0xff] %v218
  %251 = vst [vmem:[%s3 + $0xa8] sm:$0xff] %v219
  %252 = vst [vmem:[%s3 + $0xb0] sm:$0xff] %v220
  %253 = vst [vmem:[%s3 + $0xb8] sm:$0xff] %v221
  %254 = vst [vmem:[%s3 + $0xc0] sm:$0xff] %v222
  %255 = vst [vmem:[%s3 + $0xc8] sm:$0xff] %v223
  %256 = vst [vmem:[%s3 + $0xd0] sm:$0xff] %v224
  %257 = vst [vmem:[%s3 + $0xd8] sm:$0xff] %v225
  %258 = vst [vmem:[%s3 + $0xe0] sm:$0xff] %v226
  %259 = vst [vmem:[%s3 + $0xe8] sm:$0xff] %v227
  %260 = vst [vmem:[%s3 + $0xf0] sm:$0xff] %v228
  %261 = vst [vmem:[%s3 + $0xf8] sm:$0xff] %v229
  // Predicated region
  $region14: #{dnet_forward.12} parent=0 // pred_check
    _
  $region15: #{dnet_forward.12} parent=0 // pred_check_branch
    %263 = sbr.rel (0) target = $region17
  $region16: #{dnet_forward.12} parent=0 // pred_region
    _
  $region17: #{dnet_forward.12} parent=0 // pred_fallthru
    _
  // Predicated region
  $region18: #{dnet_forward.12} parent=0 // pred_check
    _
  $region19: #{dnet_forward.12} parent=0 // pred_check_branch
    %265 = sbr.rel (0) target = $region21
  $region20: #{dnet_forward.12} parent=0 // pred_region
    _
  $region21: #{dnet_forward.12} parent=0 // pred_fallthru
    _

// kernel: dnet_forward.13
$region0: #{dnet_forward.13}
  #allocation0 [shape = 'u32[]', space=smem, size = 0x4, offset = 0x4, fixed_abs, tag = 'smem constant byte address 0x4 - core index']
  #allocation1 [shape = 'u32[144,128]{1,0:T(1,128)}', space=vmem, size = 0x12000, scoped, tag = 'internal scratch']
  #allocation2 [shape = 'f32[32,512]{1,0:T(8,128)}', space=vmem, size = 0x10000, scoped, tag = 'scratch operand']
  %s0 = inlined_call_operand.vmem [shape: bf16[32,4096], index: 0, kind: input, shape index: {}]
  %s1 = inlined_call_operand.vmem [shape: bf16[4096,512], index: 1, kind: input, shape index: {}]
  %s2 = inlined_call_operand.vmem [shape: f32[1,512], index: 2, kind: input, shape index: {}]
  %s3 = inlined_call_operand.vmem [shape: f32[32,512], index: 3, kind: output, shape index: {0}]
  %s4 = inlined_call_operand.vmem [shape: f32[8,512], index: 4, kind: output, shape index: {1}]
  %s5 = inlined_call_operand.vmem [shape: f32[8,512], index: 5, kind: output, shape index: {2}]
  %6 = xla_tuple %s3, %s4, %s5
  %s7 = sld [smem:[#allocation0]]
  $region92: #{dnet_forward.13} parent=0
    _
  %s9 = ssub.s32 1, %s7
  %s10 = scalar_select 0, %s9, %s7
  $region1: #{dnet_forward.13} parent=0
    #allocation3 [shape = 'u8[65536]{0}', space=vmem, size = 0x10000, scoped, tag = 'input window, operand 0']
    loop: start=0, step=1, limit=10
    $region2: #{dnet_forward.13} parent=1 // loop_pre_header
      _
    $region3: #{dnet_forward.13} parent=1 // loop_header
      %s12 = sphi 0, %s16
      %p13 = scmp.ge.s32.totalorder %s12, 10
      %s19 = sphi 0, %s31
      %s20 = sphi 0, %s27
      %s21 = sphi 0, %s19
      %s22 = sphi 0, %s20
      %s23 = sphi 0, %s21
      %s24 = sphi 0, %s22
      %s36 = sphi 0, %s38
      %s39 = sphi 0, %s36
      %s40 = sphi 0, %s39
      %s56 = sphi 0, %s40
      %s62 = sphi 0, %s64
      %s65 = sphi 0, %s62
      %s66 = sphi 0, %s65
      %s82 = sphi 0, %s66
      %s86 = sphi 0, %s86
      %s88 = sphi 0, %s86
      %s89 = sphi 0, %s88
      %s103 = sphi 0, %s89
      %s109 = sphi 0, %s111
      %s112 = sphi 0, %s109
      %s113 = sphi 0, %s112
      %s129 = sphi 0, %s113
      %s135 = sphi 0, %s137
      %s138 = sphi 0, %s135
      %s139 = sphi 0, %s138
      %s155 = sphi 0, %s139
      %s161 = sphi 0, %s163
      %s164 = sphi 0, %s161
      %s165 = sphi 0, %s164
      %s181 = sphi 0, %s165
    $region4: #{dnet_forward.13} parent=1 // loop_header_branch
      %15 = sbr.rel (%p13) target = $region8
    $region5: #{dnet_forward.13} parent=1 // loop_body
      %s17 = ssub.s32 %s12, 1
      %s18 = ssub.s32 %s12, 2
      %s25 = sadd.s32 1, %s20
      %p26 = scmp.ge.s32.totalorder %s25, 8
      %s27 = scalar_select %p26, 0, %s25
      %s28 = sadd.s32 1, %s19
      %s29 = scalar_select %p26, %s28, %s19
      %p30 = scmp.ge.s32.totalorder %s29, 1
      %s31 = scalar_select %p30, 0, %s29
      %s32 = ssub.s32 %s19, %s31
      %s33 = ssub.s32 %s20, %s27
      %s34 = sor.u32 %s32, %s33
      %p35 = scmp.eq.s32.totalorder %s34, 0
      %s37 = sadd.s32 %s36, 1
      %s38 = scalar_select %p35, %s36, %s37
      %p41 = pneg %p35
      %p42 = scmp.eq.s32.totalorder %s12, 7
      %p43 = por %p41, %p42
      %p44 = scmp.ne.s32.totalorder %s36, %s39
      %p45 = scmp.eq.s32.totalorder %s12, 0
      %p46 = por %p44, %p45
      %p47 = scmp.ne.s32.totalorder %s36, %s39
      %p48 = scmp.eq.s32.totalorder %s17, 7
      %p49 = por %p47, %p48
      %p50 = scmp.ne.s32.totalorder %s39, %s40
      %p51 = scmp.eq.s32.totalorder %s17, 0
      %p52 = por %p50, %p51
      %p53 = scmp.ne.s32.totalorder %s39, %s40
      %p54 = scmp.eq.s32.totalorder %s18, 7
      %p55 = por %p53, %p54
      %p57 = scmp.ne.s32.totalorder %s40, %s56
      %p58 = scmp.eq.s32.totalorder %s18, 0
      %p59 = por %p57, %p58
      %s60 = ssub.s32 %s20, %s27
      %p61 = scmp.eq.s32.totalorder %s60, 0
      %s63 = sadd.s32 %s62, 1
      %s64 = scalar_select %p61, %s62, %s63
      %p67 = pneg %p61
      %p68 = scmp.eq.s32.totalorder %s12, 7
      %p69 = por %p67, %p68
      %p70 = scmp.ne.s32.totalorder %s62, %s65
      %p71 = scmp.eq.s32.totalorder %s12, 0
      %p72 = por %p70, %p71
      %p73 = scmp.ne.s32.totalorder %s62, %s65
      %p74 = scmp.eq.s32.totalorder %s17, 7
      %p75 = por %p73, %p74
      %p76 = scmp.ne.s32.totalorder %s65, %s66
      %p77 = scmp.eq.s32.totalorder %s17, 0
      %p78 = por %p76, %p77
      %p79 = scmp.ne.s32.totalorder %s65, %s66
      %p80 = scmp.eq.s32.totalorder %s18, 7
      %p81 = por %p79, %p80
      %p83 = scmp.ne.s32.totalorder %s66, %s82
      %p84 = scmp.eq.s32.totalorder %s18, 0
      %p85 = por %p83, %p84
      %s87 = sadd.s32 %s86, 1
      %p90 = scmp.eq.s32.totalorder %s12, 7
      %p91 = scmp.ne.s32.totalorder %s86, %s88
      %p92 = scmp.eq.s32.totalorder %s12, 0
      %p93 = por %p91, %p92
      %p94 = scmp.ne.s32.totalorder %s86, %s88
      %p95 = scmp.eq.s32.totalorder %s17, 7
      %p96 = por %p94, %p95
      %p97 = scmp.ne.s32.totalorder %s88, %s89
      %p98 = scmp.eq.s32.totalorder %s17, 0
      %p99 = por %p97, %p98
      %p100 = scmp.ne.s32.totalorder %s88, %s89
      %p101 = scmp.eq.s32.totalorder %s18, 7
      %p102 = por %p100, %p101
      %p104 = scmp.ne.s32.totalorder %s89, %s103
      %p105 = scmp.eq.s32.totalorder %s18, 0
      %p106 = por %p104, %p105
      %s107 = ssub.s32 %s19, %s31
      %p108 = scmp.eq.s32.totalorder %s107, 0
      %s110 = sadd.s32 %s109, 1
      %s111 = scalar_select %p108, %s109, %s110
      %p114 = pneg %p108
      %p115 = scmp.eq.s32.totalorder %s12, 7
      %p116 = por %p114, %p115
      %p117 = scmp.ne.s32.totalorder %s109, %s112
      %p118 = scmp.eq.s32.totalorder %s12, 0
      %p119 = por %p117, %p118
      %p120 = scmp.ne.s32.totalorder %s109, %s112
      %p121 = scmp.eq.s32.totalorder %s17, 7
      %p122 = por %p120, %p121
      %p123 = scmp.ne.s32.totalorder %s112, %s113
      %p124 = scmp.eq.s32.totalorder %s17, 0
      %p125 = por %p123, %p124
      %p126 = scmp.ne.s32.totalorder %s112, %s113
      %p127 = scmp.eq.s32.totalorder %s18, 7
      %p128 = por %p126, %p127
      %p130 = scmp.ne.s32.totalorder %s113, %s129
      %p131 = scmp.eq.s32.totalorder %s18, 0
      %p132 = por %p130, %p131
      %s133 = ssub.s32 %s19, %s31
      %p134 = scmp.eq.s32.totalorder %s133, 0
      %s136 = sadd.s32 %s135, 1
      %s137 = scalar_select %p134, %s135, %s136
      %p140 = pneg %p134
      %p141 = scmp.eq.s32.totalorder %s12, 7
      %p142 = por %p140, %p141
      %p143 = scmp.ne.s32.totalorder %s135, %s138
      %p144 = scmp.eq.s32.totalorder %s12, 0
      %p145 = por %p143, %p144
      %p146 = scmp.ne.s32.totalorder %s135, %s138
      %p147 = scmp.eq.s32.totalorder %s17, 7
      %p148 = por %p146, %p147
      %p149 = scmp.ne.s32.totalorder %s138, %s139
      %p150 = scmp.eq.s32.totalorder %s17, 0
      %p151 = por %p149, %p150
      %p152 = scmp.ne.s32.totalorder %s138, %s139
      %p153 = scmp.eq.s32.totalorder %s18, 7
      %p154 = por %p152, %p153
      %p156 = scmp.ne.s32.totalorder %s139, %s155
      %p157 = scmp.eq.s32.totalorder %s18, 0
      %p158 = por %p156, %p157
      %s159 = ssub.s32 %s19, %s31
      %p160 = scmp.eq.s32.totalorder %s159, 0
      %s162 = sadd.s32 %s161, 1
      %s163 = scalar_select %p160, %s161, %s162
      %p166 = pneg %p160
      %p167 = scmp.eq.s32.totalorder %s12, 7
      %p168 = por %p166, %p167
      %p169 = scmp.ne.s32.totalorder %s161, %s164
      %p170 = scmp.eq.s32.totalorder %s12, 0
      %p171 = por %p169, %p170
      %p172 = scmp.ne.s32.totalorder %s161, %s164
      %p173 = scmp.eq.s32.totalorder %s17, 7
      %p174 = por %p172, %p173
      %p175 = scmp.ne.s32.totalorder %s164, %s165
      %p176 = scmp.eq.s32.totalorder %s17, 0
      %p177 = por %p175, %p176
      %p178 = scmp.ne.s32.totalorder %s164, %s165
      %p179 = scmp.eq.s32.totalorder %s18, 7
      %p180 = por %p178, %p179
      %p182 = scmp.ne.s32.totalorder %s165, %s181
      %p183 = scmp.eq.s32.totalorder %s18, 0
      %p184 = por %p182, %p183
      %p185 = scmp.le.s32.totalorder 1, %s12
      %p186 = scmp.lt.s32.totalorder %s12, 9
      %p187 = pnand %p185, %p186
      %p188 = pneg %p187
      // Predicated region
      $region9: #{dnet_forward.13} parent=5 // pred_check
        _
      $region10: #{dnet_forward.13} parent=5 // pred_check_branch
        %190 = sbr.rel (%p187) target = $region12
      $region11: #{dnet_forward.13} parent=5 // pred_region
        %s191 = ssub.s32 %s12, 1
        // Predicated region
        $region13: #{dnet_forward.13} parent=11 // pred_check
          %p192 = pneg %p99
        $region14: #{dnet_forward.13} parent=11 // pred_check_branch
          %194 = sbr.rel (%p192) target = $region16
        $region15: #{dnet_forward.13} parent=11 // pred_region
          _
        $region16: #{dnet_forward.13} parent=11 // pred_fallthru
          _
      $region12: #{dnet_forward.13} parent=5 // pred_fallthru
        _
      %p195 = scmp.lt.s32.totalorder %s12, 8
      // Predicated region
      $region17: #{dnet_forward.13} parent=5 // pred_check
        %p196 = pneg %p195
      $region18: #{dnet_forward.13} parent=5 // pred_check_branch
        %198 = sbr.rel (%p196) target = $region20
      $region19: #{dnet_forward.13} parent=5 // pred_region
        // Predicated region
        $region21: #{dnet_forward.13} parent=19 // pred_check
          %p199 = pneg %p46
        $region22: #{dnet_forward.13} parent=19 // pred_check_branch
          %201 = sbr.rel (%p199) target = $region24
        $region23: #{dnet_forward.13} parent=19 // pred_region
          %s202 = sand.u32 %s36, 1
          %s203 = sand.u32 %s36, 1
          %s204 = smul.addr %s203, 64
          %s205 = scalar_lea.vmem [#allocation3], %s204
          %s206 = smul.u32 4, %s19
          %s207 = smul.u32 4, %s20
          %s208 = smul.addr %s206, 32
          %s209 = sadd.s32 %s207, %s208
          %s210 = smul.addr %s209, 4
          %s211 = scalar_lea.vmem %s0, %s210
          // Predicated region
          $region25: #{dnet_forward.13} parent=23 // pred_check
            _
          $region26: #{dnet_forward.13} parent=23 // pred_check_branch
            %213 = sbr.rel (0) target = $region28
          $region27: #{dnet_forward.13} parent=23 // pred_region
            // Predicated region
            $region29: #{dnet_forward.13} parent=27 // pred_check
              _
            $region30: #{dnet_forward.13} parent=27 // pred_check_branch
              %215 = sbr.rel (0) target = $region32
            $region31: #{dnet_forward.13} parent=27 // pred_region
              loop: start=0, step=1, limit=1
              $region33: #{dnet_forward.13} parent=31 // loop_pre_header
                _
              $region34: #{dnet_forward.13} parent=31 // loop_header
                %s217 = sphi 0, %s221
                %p218 = scmp.ge.s32.totalorder %s217, 1
                %s222 = sphi %s211, %s211
                %s223 = sphi %s205, %s205
              $region35: #{dnet_forward.13} parent=31 // loop_header_branch
                %220 = sbr.rel (%p218) target = $region39
              $region36: #{dnet_forward.13} parent=31 // loop_body
                %v224 = vld [vmem:[%s222] sm:$0xff]
                %225 = vst [vmem:[%s223] sm:$0xff] %v224
                %v226 = vld [vmem:[%s222 + $0x8] sm:$0xff]
                %227 = vst [vmem:[%s223 + $0x8] sm:$0xff] %v226
                %v228 = vld [vmem:[%s222 + $0x80] sm:$0xff]
                %229 = vst [vmem:[%s223 + $0x10] sm:$0xff] %v228
                %v230 = vld [vmem:[%s222 + $0x88] sm:$0xff]
                %231 = vst [vmem:[%s223 + $0x18] sm:$0xff] %v230
                %v232 = vld [vmem:[%s222 + $0x100] sm:$0xff]
                %233 = vst [vmem:[%s223 + $0x20] sm:$0xff] %v232
                %v234 = vld [vmem:[%s222 + $0x108] sm:$0xff]
                %235 = vst [vmem:[%s223 + $0x28] sm:$0xff] %v234
                %v236 = vld [vmem:[%s222 + $0x180] sm:$0xff]
                %237 = vst [vmem:[%s223 + $0x30] sm:$0xff] %v236
                %v238 = vld [vmem:[%s222 + $0x188] sm:$0xff]
                %239 = vst [vmem:[%s223 + $0x38] sm:$0xff] %v238
              $region37: #{dnet_forward.13} parent=31 // loop_footer
                %s221 = sadd.s32 1, %s217
              $region38: #{dnet_forward.13} parent=31 // loop_footer_branch
                %216 = sbr.rel target = $region34
              $region39: #{dnet_forward.13} parent=31 // loop_exit
                _
            $region32: #{dnet_forward.13} parent=27 // pred_fallthru
              _
            // Predicated region
            $region40: #{dnet_forward.13} parent=27 // pred_check
              _
            $region41: #{dnet_forward.13} parent=27 // pred_check_branch
              %241 = sbr.rel target = $region43
            $region42: #{dnet_forward.13} parent=27 // pred_region
              _
            $region43: #{dnet_forward.13} parent=27 // pred_fallthru
              _
          $region28: #{dnet_forward.13} parent=23 // pred_fallthru
            _
          %242 = vnop
        $region24: #{dnet_forward.13} parent=19 // pred_fallthru
          _
        // Predicated region
        $region44: #{dnet_forward.13} parent=19 // pred_check
          %p243 = pneg %p72
        $region45: #{dnet_forward.13} parent=19 // pred_check_branch
          %245 = sbr.rel (%p243) target = $region47
        $region46: #{dnet_forward.13} parent=19 // pred_region
          %s246 = smul.u32 64, %s20
          %p247 = scmp.lt.s32.totalorder %s246, 511
          %s248 = scalar_select %p247, %s246, 511
          %s249 = smul.addr %s248, 4
          %s250 = smul.addr %s249, 4
          %s251 = scalar_lea.vmem %s1, %s250
          %s252 = smul.u32 64, %s20
        $region47: #{dnet_forward.13} parent=19 // pred_fallthru
          _
      $region20: #{dnet_forward.13} parent=5 // pred_fallthru
        _
      %p253 = scmp.le.s32.totalorder 1, %s12
      %p254 = scmp.lt.s32.totalorder %s12, 9
      %p255 = pnand %p253, %p254
      %p256 = pneg %p255
      // Predicated region
      $region48: #{dnet_forward.13} parent=5 // pred_check
        _
      $region49: #{dnet_forward.13} parent=5 // pred_check_branch
        %258 = sbr.rel (%p255) target = $region51
      $region50: #{dnet_forward.13} parent=5 // pred_region
        %s259 = ssub.s32 %s12, 1
        %s260 = sand.u32 %s39, 1
        %s261 = sand.u32 %s39, 1
        %s262 = smul.addr %s261, 64
        %s263 = scalar_lea.vmem [#allocation3], %s262
        // Predicated region
        $region52: #{dnet_forward.13} parent=50 // pred_check
          %p264 = pneg %p52
        $region53: #{dnet_forward.13} parent=50 // pred_check_branch
          %266 = sbr.rel (%p264) target = $region55
        $region54: #{dnet_forward.13} parent=50 // pred_region
          _
        $region55: #{dnet_forward.13} parent=50 // pred_fallthru
          _
        %s267 = sand.u32 %s39, 1
        %s268 = sand.u32 %s39, 1
        %s269 = smul.addr %s268, 64
        %s270 = scalar_lea.vmem [#allocation3], %s269
        %p271 = pneg %p52
        %p272 = pneg %p49
        %s273 = smul.u32 64, %s22
        %p274 = scmp.lt.s32.totalorder %s273, 511
        %s275 = scalar_select %p274, %s273, 511
        %s276 = smul.addr %s275, 4
        %s277 = smul.addr %s276, 4
        %s278 = scalar_lea.vmem %s1, %s277
        %p279 = pneg %p78
        %p280 = pneg %p75
        %p281 = pneg %p99
        %p282 = pneg %p96
        %p283 = pneg %p125
        %p284 = pneg %p122
        %s285 = smul.u32 4, %s21
        %p286 = scmp.lt.s32.totalorder %s285, 3
        %s287 = scalar_select %p286, %s285, 3
        %s288 = smul.addr %s287, 4
        %s289 = smul.addr %s288, 8
        %s290 = scalar_lea.vmem %s3, %s289
        %p291 = pneg %p151
        %p292 = pneg %p148
        %p293 = scmp.lt.s32.totalorder %s21, 0
        %s294 = scalar_select %p293, %s21, 0
        %s295 = smul.addr %s294, 4
        %s296 = smul.addr %s295, 8
        %s297 = scalar_lea.vmem %s4, %s296
        %p298 = pneg %p177
        %p299 = pneg %p174
        %p300 = scmp.lt.s32.totalorder %s21, 0
        %s301 = scalar_select %p300, %s21, 0
        %s302 = smul.addr %s301, 4
        %s303 = smul.addr %s302, 8
        %s304 = scalar_lea.vmem %s5, %s303
        %s305 = smul.u32 4, %s21
        %s306 = smul.u32 4, %s22
        %s307 = smul.u32 64, %s22
        %p308 = scmp.lt.s32.totalorder %s307, 511
        %s309 = scalar_select %p308, %s307, 511
        %s310 = smul.addr %s309, 4
        %s311 = smul.addr %s310, 4
        %s312 = scalar_lea.vmem %s1, %s311
        %s313 = smul.u32 64, %s22
        %s314 = smul.u32 4, %s21
        %p315 = scmp.lt.s32.totalorder %s314, 3
        %s316 = scalar_select %p315, %s314, 3
        %s317 = smul.addr %s316, 4
        %s318 = smul.addr %s317, 8
        %s319 = scalar_lea.vmem %s3, %s318
        %s320 = smul.u32 4, %s21
        %p321 = scmp.lt.s32.totalorder %s21, 0
        %s322 = scalar_select %p321, %s21, 0
        %s323 = smul.addr %s322, 4
        %s324 = smul.addr %s323, 8
        %s325 = scalar_lea.vmem %s4, %s324
        %p326 = scmp.lt.s32.totalorder %s21, 0
        %s327 = scalar_select %p326, %s21, 0
        %s328 = smul.addr %s327, 4
        %s329 = smul.addr %s328, 8
        %s330 = scalar_lea.vmem %s5, %s329
        %p331 = scmp.eq.s32.totalorder %s22, 0
        // Predicated region
        $region56: #{dnet_forward.13} parent=50 // pred_check
          %p332 = pneg %p331
        $region57: #{dnet_forward.13} parent=50 // pred_check_branch
          %334 = sbr.rel (%p332) target = $region59
        $region58: #{dnet_forward.13} parent=50 // pred_region
          %335 = vst [vmem:[#allocation2] sm:$0xff] 0.0
          %336 = vst [vmem:[#allocation2 + $0x8] sm:$0xff] 0.0
          %337 = vst [vmem:[#allocation2 + $0x10] sm:$0xff] 0.0
          %338 = vst [vmem:[#allocation2 + $0x18] sm:$0xff] 0.0
          %339 = vst [vmem:[#allocation2 + $0x20] sm:$0xff] 0.0
          %340 = vst [vmem:[#allocation2 + $0x28] sm:$0xff] 0.0
          %341 = vst [vmem:[#allocation2 + $0x30] sm:$0xff] 0.0
          %342 = vst [vmem:[#allocation2 + $0x38] sm:$0xff] 0.0
          %343 = vst [vmem:[#allocation2 + $0x40] sm:$0xff] 0.0
          %344 = vst [vmem:[#allocation2 + $0x48] sm:$0xff] 0.0
          %345 = vst [vmem:[#allocation2 + $0x50] sm:$0xff] 0.0
          %346 = vst [vmem:[#allocation2 + $0x58] sm:$0xff] 0.0
          %347 = vst [vmem:[#allocation2 + $0x60] sm:$0xff] 0.0
          %348 = vst [vmem:[#allocation2 + $0x68] sm:$0xff] 0.0
          %349 = vst [vmem:[#allocation2 + $0x70] sm:$0xff] 0.0
          %350 = vst [vmem:[#allocation2 + $0x78] sm:$0xff] 0.0
        $region59: #{dnet_forward.13} parent=50 // pred_fallthru
          _
        %v351 = vld [vmem:[#allocation2] sm:$0xff]
        %v352 = vld [vmem:[#allocation2 + $0x8] sm:$0xff]
        %v353 = vld [vmem:[#allocation2 + $0x10] sm:$0xff]
        %v354 = vld [vmem:[#allocation2 + $0x18] sm:$0xff]
        %v355 = vld [vmem:[#allocation2 + $0x20] sm:$0xff]
        %v356 = vld [vmem:[#allocation2 + $0x28] sm:$0xff]
        %v357 = vld [vmem:[#allocation2 + $0x30] sm:$0xff]
        %v358 = vld [vmem:[#allocation2 + $0x38] sm:$0xff]
        %v359 = vld [vmem:[#allocation2 + $0x40] sm:$0xff]
        %v360 = vld [vmem:[#allocation2 + $0x48] sm:$0xff]
        %v361 = vld [vmem:[#allocation2 + $0x50] sm:$0xff]
        %v362 = vld [vmem:[#allocation2 + $0x58] sm:$0xff]
        %v363 = vld [vmem:[#allocation2 + $0x60] sm:$0xff]
        %v364 = vld [vmem:[#allocation2 + $0x68] sm:$0xff]
        %v365 = vld [vmem:[#allocation2 + $0x70] sm:$0xff]
        %v366 = vld [vmem:[#allocation2 + $0x78] sm:$0xff]
        %v367 = vld [vmem:[%s263] sm:$0xff]
        %v368 = vld [vmem:[%s263 + $0x8] sm:$0xff]
        %v369 = vld [vmem:[%s263 + $0x10] sm:$0xff]
        %v370 = vld [vmem:[%s263 + $0x18] sm:$0xff]
        %v371 = vld [vmem:[%s263 + $0x20] sm:$0xff]
        %v372 = vld [vmem:[%s263 + $0x28] sm:$0xff]
        %v373 = vld [vmem:[%s263 + $0x30] sm:$0xff]
        %v374 = vld [vmem:[%s263 + $0x38] sm:$0xff]
        %v375 = vld [vmem:[%s312] sm:$0xff]
        %v376 = vld [vmem:[%s312 + $0x8] sm:$0xff]
        %v377 = vld [vmem:[%s312 + $0x10] sm:$0xff]
        %v378 = vld [vmem:[%s312 + $0x18] sm:$0xff]
        %v379 = vld [vmem:[%s312 + $0x20] sm:$0xff]
        %v380 = vld [vmem:[%s312 + $0x28] sm:$0xff]
        %v381 = vld [vmem:[%s312 + $0x30] sm:$0xff]
        %v382 = vld [vmem:[%s312 + $0x38] sm:$0xff]
        %v383 = vld [vmem:[%s312 + $0x40] sm:$0xff]
        %v384 = vld [vmem:[%s312 + $0x48] sm:$0xff]
        %v385 = vld [vmem:[%s312 + $0x50] sm:$0xff]
        %v386 = vld [vmem:[%s312 + $0x58] sm:$0xff]
        %v387 = vld [vmem:[%s312 + $0x60] sm:$0xff]
        %v388 = vld [vmem:[%s312 + $0x68] sm:$0xff]
        %v389 = vld [vmem:[%s312 + $0x70] sm:$0xff]
        %v390 = vld [vmem:[%s312 + $0x78] sm:$0xff]
        %v391 = vld [vmem:[%s312 + $0x80] sm:$0xff]
        %v392 = vld [vmem:[%s312 + $0x88] sm:$0xff]
        %v393 = vld [vmem:[%s312 + $0x90] sm:$0xff]
        %v394 = vld [vmem:[%s312 + $0x98] sm:$0xff]
        %v395 = vld [vmem:[%s312 + $0xa0] sm:$0xff]
        %v396 = vld [vmem:[%s312 + $0xa8] sm:$0xff]
        %v397 = vld [vmem:[%s312 + $0xb0] sm:$0xff]
        %v398 = vld [vmem:[%s312 + $0xb8] sm:$0xff]
        %v399 = vld [vmem:[%s312 + $0xc0] sm:$0xff]
        %v400 = vld [vmem:[%s312 + $0xc8] sm:$0xff]
        %v401 = vld [vmem:[%s312 + $0xd0] sm:$0xff]
        %v402 = vld [vmem:[%s312 + $0xd8] sm:$0xff]
        %v403 = vld [vmem:[%s312 + $0xe0] sm:$0xff]
        %v404 = vld [vmem:[%s312 + $0xe8] sm:$0xff]
        %v405 = vld [vmem:[%s312 + $0xf0] sm:$0xff]
        %v406 = vld [vmem:[%s312 + $0xf8] sm:$0xff]
        %v407 = vld [vmem:[%s312 + $0x100] sm:$0xff]
        %v408 = vld [vmem:[%s312 + $0x108] sm:$0xff]
        %v409 = vld [vmem:[%s312 + $0x110] sm:$0xff]
        %v410 = vld [vmem:[%s312 + $0x118] sm:$0xff]
        %v411 = vld [vmem:[%s312 + $0x120] sm:$0xff]
        %v412 = vld [vmem:[%s312 + $0x128] sm:$0xff]
        %v413 = vld [vmem:[%s312 + $0x130] sm:$0xff]
        %v414 = vld [vmem:[%s312 + $0x138] sm:$0xff]
        %v415 = vld [vmem:[%s312 + $0x140] sm:$0xff]
        %v416 = vld [vmem:[%s312 + $0x148] sm:$0xff]
        %v417 = vld [vmem:[%s312 + $0x150] sm:$0xff]
        %v418 = vld [vmem:[%s312 + $0x158] sm:$0xff]
        %v419 = vld [vmem:[%s312 + $0x160] sm:$0xff]
        %v420 = vld [vmem:[%s312 + $0x168] sm:$0xff]
        %v421 = vld [vmem:[%s312 + $0x170] sm:$0xff]
        %v422 = vld [vmem:[%s312 + $0x178] sm:$0xff]
        %v423 = vld [vmem:[%s312 + $0x180] sm:$0xff]
        %v424 = vld [vmem:[%s312 + $0x188] sm:$0xff]
        %v425 = vld [vmem:[%s312 + $0x190] sm:$0xff]
        %v426 = vld [vmem:[%s312 + $0x198] sm:$0xff]
        %v427 = vld [vmem:[%s312 + $0x1a0] sm:$0xff]
        %v428 = vld [vmem:[%s312 + $0x1a8] sm:$0xff]
        %v429 = vld [vmem:[%s312 + $0x1b0] sm:$0xff]
        %v430 = vld [vmem:[%s312 + $0x1b8] sm:$0xff]
        %v431 = vld [vmem:[%s312 + $0x1c0] sm:$0xff]
        %v432 = vld [vmem:[%s312 + $0x1c8] sm:$0xff]
        %v433 = vld [vmem:[%s312 + $0x1d0] sm:$0xff]
        %v434 = vld [vmem:[%s312 + $0x1d8] sm:$0xff]
        %v435 = vld [vmem:[%s312 + $0x1e0] sm:$0xff]
        %v436 = vld [vmem:[%s312 + $0x1e8] sm:$0xff]
        %v437 = vld [vmem:[%s312 + $0x1f0] sm:$0xff]
        %v438 = vld [vmem:[%s312 + $0x1f8] sm:$0xff]
        %v439 = vld [vmem:[%s312 + $0x200] sm:$0xff]
        %v440 = vld [vmem:[%s312 + $0x208] sm:$0xff]
        %v441 = vld [vmem:[%s312 + $0x210] sm:$0xff]
        %v442 = vld [vmem:[%s312 + $0x218] sm:$0xff]
        %v443 = vld [vmem:[%s312 + $0x220] sm:$0xff]
        %v444 = vld [vmem:[%s312 + $0x228] sm:$0xff]
        %v445 = vld [vmem:[%s312 + $0x230] sm:$0xff]
        %v446 = vld [vmem:[%s312 + $0x238] sm:$0xff]
        %v447 = vld [vmem:[%s312 + $0x240] sm:$0xff]
        %v448 = vld [vmem:[%s312 + $0x248] sm:$0xff]
        %v449 = vld [vmem:[%s312 + $0x250] sm:$0xff]
        %v450 = vld [vmem:[%s312 + $0x258] sm:$0xff]
        %v451 = vld [vmem:[%s312 + $0x260] sm:$0xff]
        %v452 = vld [vmem:[%s312 + $0x268] sm:$0xff]
        %v453 = vld [vmem:[%s312 + $0x270] sm:$0xff]
        %v454 = vld [vmem:[%s312 + $0x278] sm:$0xff]
        %v455 = vld [vmem:[%s312 + $0x280] sm:$0xff]
        %v456 = vld [vmem:[%s312 + $0x288] sm:$0xff]
        %v457 = vld [vmem:[%s312 + $0x290] sm:$0xff]
        %v458 = vld [vmem:[%s312 + $0x298] sm:$0xff]
        %v459 = vld [vmem:[%s312 + $0x2a0] sm:$0xff]
        %v460 = vld [vmem:[%s312 + $0x2a8] sm:$0xff]
        %v461 = vld [vmem:[%s312 + $0x2b0] sm:$0xff]
        %v462 = vld [vmem:[%s312 + $0x2b8] sm:$0xff]
        %v463 = vld [vmem:[%s312 + $0x2c0] sm:$0xff]
        %v464 = vld [vmem:[%s312 + $0x2c8] sm:$0xff]
        %v465 = vld [vmem:[%s312 + $0x2d0] sm:$0xff]
        %v466 = vld [vmem:[%s312 + $0x2d8] sm:$0xff]
        %v467 = vld [vmem:[%s312 + $0x2e0] sm:$0xff]
        %v468 = vld [vmem:[%s312 + $0x2e8] sm:$0xff]
        %v469 = vld [vmem:[%s312 + $0x2f0] sm:$0xff]
        %v470 = vld [vmem:[%s312 + $0x2f8] sm:$0xff]
        %v471 = vld [vmem:[%s312 + $0x300] sm:$0xff]
        %v472 = vld [vmem:[%s312 + $0x308] sm:$0xff]
        %v473 = vld [vmem:[%s312 + $0x310] sm:$0xff]
        %v474 = vld [vmem:[%s312 + $0x318] sm:$0xff]
        %v475 = vld [vmem:[%s312 + $0x320] sm:$0xff]
        %v476 = vld [vmem:[%s312 + $0x328] sm:$0xff]
        %v477 = vld [vmem:[%s312 + $0x330] sm:$0xff]
        %v478 = vld [vmem:[%s312 + $0x338] sm:$0xff]
        %v479 = vld [vmem:[%s312 + $0x340] sm:$0xff]
        %v480 = vld [vmem:[%s312 + $0x348] sm:$0xff]
        %v481 = vld [vmem:[%s312 + $0x350] sm:$0xff]
        %v482 = vld [vmem:[%s312 + $0x358] sm:$0xff]
        %v483 = vld [vmem:[%s312 + $0x360] sm:$0xff]
        %v484 = vld [vmem:[%s312 + $0x368] sm:$0xff]
        %v485 = vld [vmem:[%s312 + $0x370] sm:$0xff]
        %v486 = vld [vmem:[%s312 + $0x378] sm:$0xff]
        %v487 = vld [vmem:[%s312 + $0x380] sm:$0xff]
        %v488 = vld [vmem:[%s312 + $0x388] sm:$0xff]
        %v489 = vld [vmem:[%s312 + $0x390] sm:$0xff]
        %v490 = vld [vmem:[%s312 + $0x398] sm:$0xff]
        %v491 = vld [vmem:[%s312 + $0x3a0] sm:$0xff]
        %v492 = vld [vmem:[%s312 + $0x3a8] sm:$0xff]
        %v493 = vld [vmem:[%s312 + $0x3b0] sm:$0xff]
        %v494 = vld [vmem:[%s312 + $0x3b8] sm:$0xff]
        %v495 = vld [vmem:[%s312 + $0x3c0] sm:$0xff]
        %v496 = vld [vmem:[%s312 + $0x3c8] sm:$0xff]
        %v497 = vld [vmem:[%s312 + $0x3d0] sm:$0xff]
        %v498 = vld [vmem:[%s312 + $0x3d8] sm:$0xff]
        %v499 = vld [vmem:[%s312 + $0x3e0] sm:$0xff]
        %v500 = vld [vmem:[%s312 + $0x3e8] sm:$0xff]
        %v501 = vld [vmem:[%s312 + $0x3f0] sm:$0xff]
        %v502 = vld [vmem:[%s312 + $0x3f8] sm:$0xff]
        %v511 = vunpack.c.l.b16 %v367
        %v512 = vunpack.c.h.b16 %v367
        %v513 = vunpack.c.l.b16 %v368
        %v514 = vunpack.c.h.b16 %v368
        %v515 = vunpack.c.l.b16 %v369
        %v516 = vunpack.c.h.b16 %v369
        %v517 = vunpack.c.l.b16 %v370
        %v518 = vunpack.c.h.b16 %v370
        %v519 = vunpack.c.l.b16 %v371
        %v520 = vunpack.c.h.b16 %v371
        %v521 = vunpack.c.l.b16 %v372
        %v522 = vunpack.c.h.b16 %v372
        %v523 = vunpack.c.l.b16 %v373
        %v524 = vunpack.c.h.b16 %v373
        %v525 = vunpack.c.l.b16 %v374
        %v526 = vunpack.c.h.b16 %v374
        %v527 = vpack.c.b16 %v515, %v511
        %v528 = vpack.c.b16 %v516, %v512
        %v529 = vpack.c.b16 %v517, %v513
        %v530 = vpack.c.b16 %v518, %v514
        %v531 = vpack.c.b16 %v523, %v519
        %v532 = vpack.c.b16 %v524, %v520
        %v533 = vpack.c.b16 %v525, %v521
        %v534 = vpack.c.b16 %v526, %v522
        %v671 = vunpack.c.l.b16 %v375
        %v672 = vunpack.c.h.b16 %v375
        %v673 = vunpack.c.l.b16 %v376
        %v674 = vunpack.c.h.b16 %v376
        %v675 = vunpack.c.l.b16 %v377
        %v676 = vunpack.c.h.b16 %v377
        %v677 = vunpack.c.l.b16 %v378
        %v678 = vunpack.c.h.b16 %v378
        %v679 = vunpack.c.l.b16 %v379
        %v680 = vunpack.c.h.b16 %v379
        %v681 = vunpack.c.l.b16 %v380
        %v682 = vunpack.c.h.b16 %v380
        %v683 = vunpack.c.l.b16 %v381
        %v684 = vunpack.c.h.b16 %v381
        %v685 = vunpack.c.l.b16 %v382
        %v686 = vunpack.c.h.b16 %v382
        %v687 = vunpack.c.l.b16 %v383
        %v688 = vunpack.c.h.b16 %v383
        %v689 = vunpack.c.l.b16 %v384
        %v690 = vunpack.c.h.b16 %v384
        %v691 = vunpack.c.l.b16 %v385
        %v692 = vunpack.c.h.b16 %v385
        %v693 = vunpack.c.l.b16 %v386
        %v694 = vunpack.c.h.b16 %v386
        %v695 = vunpack.c.l.b16 %v387
        %v696 = vunpack.c.h.b16 %v387
        %v697 = vunpack.c.l.b16 %v388
        %v698 = vunpack.c.h.b16 %v388
        %v699 = vunpack.c.l.b16 %v389
        %v700 = vunpack.c.h.b16 %v389
        %v701 = vunpack.c.l.b16 %v390
        %v702 = vunpack.c.h.b16 %v390
        %v703 = vunpack.c.l.b16 %v391
        %v704 = vunpack.c.h.b16 %v391
        %v705 = vunpack.c.l.b16 %v392
        %v706 = vunpack.c.h.b16 %v392
        %v707 = vunpack.c.l.b16 %v393
        %v708 = vunpack.c.h.b16 %v393
        %v709 = vunpack.c.l.b16 %v394
        %v710 = vunpack.c.h.b16 %v394
        %v711 = vunpack.c.l.b16 %v395
        %v712 = vunpack.c.h.b16 %v395
        %v713 = vunpack.c.l.b16 %v396
        %v714 = vunpack.c.h.b16 %v396
        %v715 = vunpack.c.l.b16 %v397
        %v716 = vunpack.c.h.b16 %v397
        %v717 = vunpack.c.l.b16 %v398
        %v718 = vunpack.c.h.b16 %v398
        %v719 = vunpack.c.l.b16 %v399
        %v720 = vunpack.c.h.b16 %v399
        %v721 = vunpack.c.l.b16 %v400
        %v722 = vunpack.c.h.b16 %v400
        %v723 = vunpack.c.l.b16 %v401
        %v724 = vunpack.c.h.b16 %v401
        %v725 = vunpack.c.l.b16 %v402
        %v726 = vunpack.c.h.b16 %v402
        %v727 = vunpack.c.l.b16 %v403
        %v728 = vunpack.c.h.b16 %v403
        %v729 = vunpack.c.l.b16 %v404
        %v730 = vunpack.c.h.b16 %v404
        %v731 = vunpack.c.l.b16 %v405
        %v732 = vunpack.c.h.b16 %v405
        %v733 = vunpack.c.l.b16 %v406
        %v734 = vunpack.c.h.b16 %v406
        %v735 = vunpack.c.l.b16 %v407
        %v736 = vunpack.c.h.b16 %v407
        %v737 = vunpack.c.l.b16 %v408
        %v738 = vunpack.c.h.b16 %v408
        %v739 = vunpack.c.l.b16 %v409
        %v740 = vunpack.c.h.b16 %v409
        %v741 = vunpack.c.l.b16 %v410
        %v742 = vunpack.c.h.b16 %v410
        %v743 = vunpack.c.l.b16 %v411
        %v744 = vunpack.c.h.b16 %v411
        %v745 = vunpack.c.l.b16 %v412
        %v746 = vunpack.c.h.b16 %v412
        %v747 = vunpack.c.l.b16 %v413
        %v748 = vunpack.c.h.b16 %v413
        %v749 = vunpack.c.l.b16 %v414
        %v750 = vunpack.c.h.b16 %v414
        %v751 = vunpack.c.l.b16 %v415
        %v752 = vunpack.c.h.b16 %v415
        %v753 = vunpack.c.l.b16 %v416
        %v754 = vunpack.c.h.b16 %v416
        %v755 = vunpack.c.l.b16 %v417
        %v756 = vunpack.c.h.b16 %v417
        %v757 = vunpack.c.l.b16 %v418
        %v758 = vunpack.c.h.b16 %v418
        %v759 = vunpack.c.l.b16 %v419
        %v760 = vunpack.c.h.b16 %v419
        %v761 = vunpack.c.l.b16 %v420
        %v762 = vunpack.c.h.b16 %v420
        %v763 = vunpack.c.l.b16 %v421
        %v764 = vunpack.c.h.b16 %v421
        %v765 = vunpack.c.l.b16 %v422
        %v766 = vunpack.c.h.b16 %v422
        %v767 = vunpack.c.l.b16 %v423
        %v768 = vunpack.c.h.b16 %v423
        %v769 = vunpack.c.l.b16 %v424
        %v770 = vunpack.c.h.b16 %v424
        %v771 = vunpack.c.l.b16 %v425
        %v772 = vunpack.c.h.b16 %v425
        %v773 = vunpack.c.l.b16 %v426
        %v774 = vunpack.c.h.b16 %v426
        %v775 = vunpack.c.l.b16 %v427
        %v776 = vunpack.c.h.b16 %v427
        %v777 = vunpack.c.l.b16 %v428
        %v778 = vunpack.c.h.b16 %v428
        %v779 = vunpack.c.l.b16 %v429
        %v780 = vunpack.c.h.b16 %v429
        %v781 = vunpack.c.l.b16 %v430
        %v782 = vunpack.c.h.b16 %v430
        %v783 = vunpack.c.l.b16 %v431
        %v784 = vunpack.c.h.b16 %v431
        %v785 = vunpack.c.l.b16 %v432
        %v786 = vunpack.c.h.b16 %v432
        %v787 = vunpack.c.l.b16 %v433
        %v788 = vunpack.c.h.b16 %v433
        %v789 = vunpack.c.l.b16 %v434
        %v790 = vunpack.c.h.b16 %v434
        %v791 = vunpack.c.l.b16 %v435
        %v792 = vunpack.c.h.b16 %v435
        %v793 = vunpack.c.l.b16 %v436
        %v794 = vunpack.c.h.b16 %v436
        %v795 = vunpack.c.l.b16 %v437
        %v796 = vunpack.c.h.b16 %v437
        %v797 = vunpack.c.l.b16 %v438
        %v798 = vunpack.c.h.b16 %v438
        %v799 = vunpack.c.l.b16 %v439
        %v800 = vunpack.c.h.b16 %v439
        %v801 = vunpack.c.l.b16 %v440
        %v802 = vunpack.c.h.b16 %v440
        %v803 = vunpack.c.l.b16 %v441
        %v804 = vunpack.c.h.b16 %v441
        %v805 = vunpack.c.l.b16 %v442
        %v806 = vunpack.c.h.b16 %v442
        %v807 = vunpack.c.l.b16 %v443
        %v808 = vunpack.c.h.b16 %v443
        %v809 = vunpack.c.l.b16 %v444
        %v810 = vunpack.c.h.b16 %v444
        %v811 = vunpack.c.l.b16 %v445
        %v812 = vunpack.c.h.b16 %v445
        %v813 = vunpack.c.l.b16 %v446
        %v814 = vunpack.c.h.b16 %v446
        %v815 = vunpack.c.l.b16 %v447
        %v816 = vunpack.c.h.b16 %v447
        %v817 = vunpack.c.l.b16 %v448
        %v818 = vunpack.c.h.b16 %v448
        %v819 = vunpack.c.l.b16 %v449
        %v820 = vunpack.c.h.b16 %v449
        %v821 = vunpack.c.l.b16 %v450
        %v822 = vunpack.c.h.b16 %v450
        %v823 = vunpack.c.l.b16 %v451
        %v824 = vunpack.c.h.b16 %v451
        %v825 = vunpack.c.l.b16 %v452
        %v826 = vunpack.c.h.b16 %v452
        %v827 = vunpack.c.l.b16 %v453
        %v828 = vunpack.c.h.b16 %v453
        %v829 = vunpack.c.l.b16 %v454
        %v830 = vunpack.c.h.b16 %v454
        %v831 = vunpack.c.l.b16 %v455
        %v832 = vunpack.c.h.b16 %v455
        %v833 = vunpack.c.l.b16 %v456
        %v834 = vunpack.c.h.b16 %v456
        %v835 = vunpack.c.l.b16 %v457
        %v836 = vunpack.c.h.b16 %v457
        %v837 = vunpack.c.l.b16 %v458
        %v838 = vunpack.c.h.b16 %v458
        %v839 = vunpack.c.l.b16 %v459
        %v840 = vunpack.c.h.b16 %v459
        %v841 = vunpack.c.l.b16 %v460
        %v842 = vunpack.c.h.b16 %v460
        %v843 = vunpack.c.l.b16 %v461
        %v844 = vunpack.c.h.b16 %v461
        %v845 = vunpack.c.l.b16 %v462
        %v846 = vunpack.c.h.b16 %v462
        %v847 = vunpack.c.l.b16 %v463
        %v848 = vunpack.c.h.b16 %v463
        %v849 = vunpack.c.l.b16 %v464
        %v850 = vunpack.c.h.b16 %v464
        %v851 = vunpack.c.l.b16 %v465
        %v852 = vunpack.c.h.b16 %v465
        %v853 = vunpack.c.l.b16 %v466
        %v854 = vunpack.c.h.b16 %v466
        %v855 = vunpack.c.l.b16 %v467
        %v856 = vunpack.c.h.b16 %v467
        %v857 = vunpack.c.l.b16 %v468
        %v858 = vunpack.c.h.b16 %v468
        %v859 = vunpack.c.l.b16 %v469
        %v860 = vunpack.c.h.b16 %v469
        %v861 = vunpack.c.l.b16 %v470
        %v862 = vunpack.c.h.b16 %v470
        %v863 = vunpack.c.l.b16 %v471
        %v864 = vunpack.c.h.b16 %v471
        %v865 = vunpack.c.l.b16 %v472
        %v866 = vunpack.c.h.b16 %v472
        %v867 = vunpack.c.l.b16 %v473
        %v868 = vunpack.c.h.b16 %v473
        %v869 = vunpack.c.l.b16 %v474
        %v870 = vunpack.c.h.b16 %v474
        %v871 = vunpack.c.l.b16 %v475
        %v872 = vunpack.c.h.b16 %v475
        %v873 = vunpack.c.l.b16 %v476
        %v874 = vunpack.c.h.b16 %v476
        %v875 = vunpack.c.l.b16 %v477
        %v876 = vunpack.c.h.b16 %v477
        %v877 = vunpack.c.l.b16 %v478
        %v878 = vunpack.c.h.b16 %v478
        %v879 = vunpack.c.l.b16 %v479
        %v880 = vunpack.c.h.b16 %v479
        %v881 = vunpack.c.l.b16 %v480
        %v882 = vunpack.c.h.b16 %v480
        %v883 = vunpack.c.l.b16 %v481
        %v884 = vunpack.c.h.b16 %v481
        %v885 = vunpack.c.l.b16 %v482
        %v886 = vunpack.c.h.b16 %v482
        %v887 = vunpack.c.l.b16 %v483
        %v888 = vunpack.c.h.b16 %v483
        %v889 = vunpack.c.l.b16 %v484
        %v890 = vunpack.c.h.b16 %v484
        %v891 = vunpack.c.l.b16 %v485
        %v892 = vunpack.c.h.b16 %v485
        %v893 = vunpack.c.l.b16 %v486
        %v894 = vunpack.c.h.b16 %v486
        %v895 = vunpack.c.l.b16 %v487
        %v896 = vunpack.c.h.b16 %v487
        %v897 = vunpack.c.l.b16 %v488
        %v898 = vunpack.c.h.b16 %v488
        %v899 = vunpack.c.l.b16 %v489
        %v900 = vunpack.c.h.b16 %v489
        %v901 = vunpack.c.l.b16 %v490
        %v902 = vunpack.c.h.b16 %v490
        %v903 = vunpack.c.l.b16 %v491
        %v904 = vunpack.c.h.b16 %v491
        %v905 = vunpack.c.l.b16 %v492
        %v906 = vunpack.c.h.b16 %v492
        %v907 = vunpack.c.l.b16 %v493
        %v908 = vunpack.c.h.b16 %v493
        %v909 = vunpack.c.l.b16 %v494
        %v910 = vunpack.c.h.b16 %v494
        %v911 = vunpack.c.l.b16 %v495
        %v912 = vunpack.c.h.b16 %v495
        %v913 = vunpack.c.l.b16 %v496
        %v914 = vunpack.c.h.b16 %v496
        %v915 = vunpack.c.l.b16 %v497
        %v916 = vunpack.c.h.b16 %v497
        %v917 = vunpack.c.l.b16 %v498
        %v918 = vunpack.c.h.b16 %v498
        %v919 = vunpack.c.l.b16 %v499
        %v920 = vunpack.c.h.b16 %v499
        %v921 = vunpack.c.l.b16 %v500
        %v922 = vunpack.c.h.b16 %v500
        %v923 = vunpack.c.l.b16 %v501
        %v924 = vunpack.c.h.b16 %v501
        %v925 = vunpack.c.l.b16 %v502
        %v926 = vunpack.c.h.b16 %v502
        %v927 = vpack.c.b16 %v675, %v671
        %v928 = vpack.c.b16 %v676, %v672
        %v929 = vpack.c.b16 %v677, %v673
        %v930 = vpack.c.b16 %v678, %v674
        %v931 = vpack.c.b16 %v683, %v679
        %v932 = vpack.c.b16 %v684, %v680
        %v933 = vpack.c.b16 %v685, %v681
        %v934 = vpack.c.b16 %v686, %v682
        %v935 = vpack.c.b16 %v691, %v687
        %v936 = vpack.c.b16 %v692, %v688
        %v937 = vpack.c.b16 %v693, %v689
        %v938 = vpack.c.b16 %v694, %v690
        %v939 = vpack.c.b16 %v699, %v695
        %v940 = vpack.c.b16 %v700, %v696
        %v941 = vpack.c.b16 %v701, %v697
        %v942 = vpack.c.b16 %v702, %v698
        %v943 = vpack.c.b16 %v707, %v703
        %v944 = vpack.c.b16 %v708, %v704
        %v945 = vpack.c.b16 %v709, %v705
        %v946 = vpack.c.b16 %v710, %v706
        %v947 = vpack.c.b16 %v715, %v711
        %v948 = vpack.c.b16 %v716, %v712
        %v949 = vpack.c.b16 %v717, %v713
        %v950 = vpack.c.b16 %v718, %v714
        %v951 = vpack.c.b16 %v723, %v719
        %v952 = vpack.c.b16 %v724, %v720
        %v953 = vpack.c.b16 %v725, %v721
        %v954 = vpack.c.b16 %v726, %v722
        %v955 = vpack.c.b16 %v731, %v727
        %v956 = vpack.c.b16 %v732, %v728
        %v957 = vpack.c.b16 %v733, %v729
        %v958 = vpack.c.b16 %v734, %v730
        %v959 = vpack.c.b16 %v739, %v735
        %v960 = vpack.c.b16 %v740, %v736
        %v961 = vpack.c.b16 %v741, %v737
        %v962 = vpack.c.b16 %v742, %v738
        %v963 = vpack.c.b16 %v747, %v743
        %v964 = vpack.c.b16 %v748, %v744
        %v965 = vpack.c.b16 %v749, %v745
        %v966 = vpack.c.b16 %v750, %v746
        %v967 = vpack.c.b16 %v755, %v751
        %v968 = vpack.c.b16 %v756, %v752
        %v969 = vpack.c.b16 %v757, %v753
        %v970 = vpack.c.b16 %v758, %v754
        %v971 = vpack.c.b16 %v763, %v759
        %v972 = vpack.c.b16 %v764, %v760
        %v973 = vpack.c.b16 %v765, %v761
        %v974 = vpack.c.b16 %v766, %v762
        %v975 = vpack.c.b16 %v771, %v767
        %v976 = vpack.c.b16 %v772, %v768
        %v977 = vpack.c.b16 %v773, %v769
        %v978 = vpack.c.b16 %v774, %v770
        %v979 = vpack.c.b16 %v779, %v775
        %v980 = vpack.c.b16 %v780, %v776
        %v981 = vpack.c.b16 %v781, %v777
        %v982 = vpack.c.b16 %v782, %v778
        %v983 = vpack.c.b16 %v787, %v783
        %v984 = vpack.c.b16 %v788, %v784
        %v985 = vpack.c.b16 %v789, %v785
        %v986 = vpack.c.b16 %v790, %v786
        %v987 = vpack.c.b16 %v795, %v791
        %v988 = vpack.c.b16 %v796, %v792
        %v989 = vpack.c.b16 %v797, %v793
        %v990 = vpack.c.b16 %v798, %v794
        %v991 = vpack.c.b16 %v803, %v799
        %v992 = vpack.c.b16 %v804, %v800
        %v993 = vpack.c.b16 %v805, %v801
        %v994 = vpack.c.b16 %v806, %v802
        %v995 = vpack.c.b16 %v811, %v807
        %v996 = vpack.c.b16 %v812, %v808
        %v997 = vpack.c.b16 %v813, %v809
        %v998 = vpack.c.b16 %v814, %v810
        %v999 = vpack.c.b16 %v819, %v815
        %v1000 = vpack.c.b16 %v820, %v816
        %v1001 = vpack.c.b16 %v821, %v817
        %v1002 = vpack.c.b16 %v822, %v818
        %v1003 = vpack.c.b16 %v827, %v823
        %v1004 = vpack.c.b16 %v828, %v824
        %v1005 = vpack.c.b16 %v829, %v825
        %v1006 = vpack.c.b16 %v830, %v826
        %v1007 = vpack.c.b16 %v835, %v831
        %v1008 = vpack.c.b16 %v836, %v832
        %v1009 = vpack.c.b16 %v837, %v833
        %v1010 = vpack.c.b16 %v838, %v834
        %v1011 = vpack.c.b16 %v843, %v839
        %v1012 = vpack.c.b16 %v844, %v840
        %v1013 = vpack.c.b16 %v845, %v841
        %v1014 = vpack.c.b16 %v846, %v842
        %v1015 = vpack.c.b16 %v851, %v847
        %v1016 = vpack.c.b16 %v852, %v848
        %v1017 = vpack.c.b16 %v853, %v849
        %v1018 = vpack.c.b16 %v854, %v850
        %v1019 = vpack.c.b16 %v859, %v855
        %v1020 = vpack.c.b16 %v860, %v856
        %v1021 = vpack.c.b16 %v861, %v857
        %v1022 = vpack.c.b16 %v862, %v858
        %v1023 = vpack.c.b16 %v867, %v863
        %v1024 = vpack.c.b16 %v868, %v864
        %v1025 = vpack.c.b16 %v869, %v865
        %v1026 = vpack.c.b16 %v870, %v866
        %v1027 = vpack.c.b16 %v875, %v871
        %v1028 = vpack.c.b16 %v876, %v872
        %v1029 = vpack.c.b16 %v877, %v873
        %v1030 = vpack.c.b16 %v878, %v874
        %v1031 = vpack.c.b16 %v883, %v879
        %v1032 = vpack.c.b16 %v884, %v880
        %v1033 = vpack.c.b16 %v885, %v881
        %v1034 = vpack.c.b16 %v886, %v882
        %v1035 = vpack.c.b16 %v891, %v887
        %v1036 = vpack.c.b16 %v892, %v888
        %v1037 = vpack.c.b16 %v893, %v889
        %v1038 = vpack.c.b16 %v894, %v890
        %v1039 = vpack.c.b16 %v899, %v895
        %v1040 = vpack.c.b16 %v900, %v896
        %v1041 = vpack.c.b16 %v901, %v897
        %v1042 = vpack.c.b16 %v902, %v898
        %v1043 = vpack.c.b16 %v907, %v903
        %v1044 = vpack.c.b16 %v908, %v904
        %v1045 = vpack.c.b16 %v909, %v905
        %v1046 = vpack.c.b16 %v910, %v906
        %v1047 = vpack.c.b16 %v915, %v911
        %v1048 = vpack.c.b16 %v916, %v912
        %v1049 = vpack.c.b16 %v917, %v913
        %v1050 = vpack.c.b16 %v918, %v914
        %v1051 = vpack.c.b16 %v923, %v919
        %v1052 = vpack.c.b16 %v924, %v920
        %v1053 = vpack.c.b16 %v925, %v921
        %v1054 = vpack.c.b16 %v926, %v922
        %1183 = vmatprep.subr.bf16.mxu0 %v928
        %1184 = vmatpush1.bf16.msra.mxu0 %v927
        %1185 = vmatprep.subr.bf16.mxu0 %v932
        %1186 = vmatpush1.bf16.msra.mxu0 %v931
        %1187 = vmatprep.subr.bf16.mxu0 %v936
        %1188 = vmatpush1.bf16.msra.mxu0 %v935
        %1189 = vmatprep.subr.bf16.mxu0 %v940
        %1190 = vmatpush1.bf16.msra.mxu0 %v939
        %1191 = vmatprep.subr.bf16.mxu0 %v944
        %1192 = vmatpush1.bf16.msra.mxu0 %v943
        %1193 = vmatprep.subr.bf16.mxu0 %v948
        %1194 = vmatpush1.bf16.msra.mxu0 %v947
        %1195 = vmatprep.subr.bf16.mxu0 %v952
        %1196 = vmatpush1.bf16.msra.mxu0 %v951
        %1197 = vmatprep.subr.bf16.mxu0 %v956
        %1198 = vmatpush1.bf16.msra.mxu0 %v955
        %1199 = vmatprep.subr.bf16.mxu0 %v960
        %1200 = vmatpush1.bf16.msra.mxu0 %v959
        %1201 = vmatprep.subr.bf16.mxu0 %v964
        %1202 = vmatpush1.bf16.msra.mxu0 %v963
        %1203 = vmatprep.subr.bf16.mxu0 %v968
        %1204 = vmatpush1.bf16.msra.mxu0 %v967
        %1205 = vmatprep.subr.bf16.mxu0 %v972
        %1206 = vmatpush1.bf16.msra.mxu0 %v971
        %1207 = vmatprep.subr.bf16.mxu0 %v976
        %1208 = vmatpush1.bf16.msra.mxu0 %v975
        %1209 = vmatprep.subr.bf16.mxu0 %v980
        %1210 = vmatpush1.bf16.msra.mxu0 %v979
        %1211 = vmatprep.subr.bf16.mxu0 %v984
        %1212 = vmatpush1.bf16.msra.mxu0 %v983
        %1213 = vmatprep.subr.bf16.mxu0 %v988
        %1214 = vmatpush1.bf16.msra.mxu0 %v987
        %1215 = vmatprep.mubr.bf16.mxu0 %v528
        %1216 = vmatmul.mubr.bf16.gmra.mrb[0].mxu0 %v527
        %v1217 = vpop.f32.mrb[0].mxu0
        %v1218 = vadd.f32 0.0, %v1217
        %v1219 = vpop.f32.mrb[0].mxu0
        %v1220 = vadd.f32 0.0, %v1219
        %v1221 = vpop.f32.mrb[0].mxu0
        %v1222 = vadd.f32 0.0, %v1221
        %v1223 = vpop.f32.mrb[0].mxu0
        %v1224 = vadd.f32 0.0, %v1223
        %1225 = vmatprep.mubr.bf16.mxu0 %v532
        %1226 = vmatmul.mubr.bf16.gmra.mrb[0].mxu0 %v531
        %v1227 = vpop.f32.mrb[0].mxu0
        %v1228 = vadd.f32 0.0, %v1227
        %v1229 = vpop.f32.mrb[0].mxu0
        %v1230 = vadd.f32 0.0, %v1229
        %v1231 = vpop.f32.mrb[0].mxu0
        %v1232 = vadd.f32 0.0, %v1231
        %v1233 = vpop.f32.mrb[0].mxu0
        %v1234 = vadd.f32 0.0, %v1233
        %1235 = vdwg.mxu0
        %1236 = vmatprep.subr.bf16.mxu0 %v992
        %1237 = vmatpush1.bf16.msra.mxu0 %v991
        %1238 = vmatprep.subr.bf16.mxu0 %v996
        %1239 = vmatpush1.bf16.msra.mxu0 %v995
        %1240 = vmatprep.subr.bf16.mxu0 %v1000
        %1241 = vmatpush1.bf16.msra.mxu0 %v999
        %1242 = vmatprep.subr.bf16.mxu0 %v1004
        %1243 = vmatpush1.bf16.msra.mxu0 %v1003
        %1244 = vmatprep.subr.bf16.mxu0 %v1008
        %1245 = vmatpush1.bf16.msra.mxu0 %v1007
        %1246 = vmatprep.subr.bf16.mxu0 %v1012
        %1247 = vmatpush1.bf16.msra.mxu0 %v1011
        %1248 = vmatprep.subr.bf16.mxu0 %v1016
        %1249 = vmatpush1.bf16.msra.mxu0 %v1015
        %1250 = vmatprep.subr.bf16.mxu0 %v1020
        %1251 = vmatpush1.bf16.msra.mxu0 %v1019
        %1252 = vmatprep.subr.bf16.mxu0 %v1024
        %1253 = vmatpush1.bf16.msra.mxu0 %v1023
        %1254 = vmatprep.subr.bf16.mxu0 %v1028
        %1255 = vmatpush1.bf16.msra.mxu0 %v1027
        %1256 = vmatprep.subr.bf16.mxu0 %v1032
        %1257 = vmatpush1.bf16.msra.mxu0 %v1031
        %1258 = vmatprep.subr.bf16.mxu0 %v1036
        %1259 = vmatpush1.bf16.msra.mxu0 %v1035
        %1260 = vmatprep.subr.bf16.mxu0 %v1040
        %1261 = vmatpush1.bf16.msra.mxu0 %v1039
        %1262 = vmatprep.subr.bf16.mxu0 %v1044
        %1263 = vmatpush1.bf16.msra.mxu0 %v1043
        %1264 = vmatprep.subr.bf16.mxu0 %v1048
        %1265 = vmatpush1.bf16.msra.mxu0 %v1047
        %1266 = vmatprep.subr.bf16.mxu0 %v1052
        %1267 = vmatpush1.bf16.msra.mxu0 %v1051
        %1268 = vmatprep.mubr.bf16.mxu0 %v530
        %1269 = vmatmul.mubr.bf16.gmra.mrb[0].mxu0 %v529
        %v1270 = vpop.f32.mrb[0].mxu0
        %v1271 = vadd.f32 %v1218, %v1270
        %v1272 = vpop.f32.mrb[0].mxu0
        %v1273 = vadd.f32 %v1220, %v1272
        %v1274 = vpop.f32.mrb[0].mxu0
        %v1275 = vadd.f32 %v1222, %v1274
        %v1276 = vpop.f32.mrb[0].mxu0
        %v1277 = vadd.f32 %v1224, %v1276
        %1278 = vmatprep.mubr.bf16.mxu0 %v534
        %1279 = vmatmul.mubr.bf16.gmra.mrb[0].mxu0 %v533
        %v1280 = vpop.f32.mrb[0].mxu0
        %v1281 = vadd.f32 %v1228, %v1280
        %v1282 = vpop.f32.mrb[0].mxu0
        %v1283 = vadd.f32 %v1230, %v1282
        %v1284 = vpop.f32.mrb[0].mxu0
        %v1285 = vadd.f32 %v1232, %v1284
        %v1286 = vpop.f32.mrb[0].mxu0
        %v1287 = vadd.f32 %v1234, %v1286
        %1288 = vdwg.mxu0
        %1289 = vmatprep.subr.bf16.mxu0 %v930
        %1290 = vmatpush1.bf16.msra.mxu0 %v929
        %1291 = vmatprep.subr.bf16.mxu0 %v934
        %1292 = vmatpush1.bf16.msra.mxu0 %v933
        %1293 = vmatprep.subr.bf16.mxu0 %v938
        %1294 = vmatpush1.bf16.msra.mxu0 %v937
        %1295 = vmatprep.subr.bf16.mxu0 %v942
        %1296 = vmatpush1.bf16.msra.mxu0 %v941
        %1297 = vmatprep.subr.bf16.mxu0 %v946
        %1298 = vmatpush1.bf16.msra.mxu0 %v945
        %1299 = vmatprep.subr.bf16.mxu0 %v950
        %1300 = vmatpush1.bf16.msra.mxu0 %v949
        %1301 = vmatprep.subr.bf16.mxu0 %v954
        %1302 = vmatpush1.bf16.msra.mxu0 %v953
        %1303 = vmatprep.subr.bf16.mxu0 %v958
        %1304 = vmatpush1.bf16.msra.mxu0 %v957
        %1305 = vmatprep.subr.bf16.mxu0 %v962
        %1306 = vmatpush1.bf16.msra.mxu0 %v961
        %1307 = vmatprep.subr.bf16.mxu0 %v966
        %1308 = vmatpush1.bf16.msra.mxu0 %v965
        %1309 = vmatprep.subr.bf16.mxu0 %v970
        %1310 = vmatpush1.bf16.msra.mxu0 %v969
        %1311 = vmatprep.subr.bf16.mxu0 %v974
        %1312 = vmatpush1.bf16.msra.mxu0 %v973
        %1313 = vmatprep.subr.bf16.mxu0 %v978
        %1314 = vmatpush1.bf16.msra.mxu0 %v977
        %1315 = vmatprep.subr.bf16.mxu0 %v982
        %1316 = vmatpush1.bf16.msra.mxu0 %v981
        %1317 = vmatprep.subr.bf16.mxu0 %v986
        %1318 = vmatpush1.bf16.msra.mxu0 %v985
        %1319 = vmatprep.subr.bf16.mxu0 %v990
        %1320 = vmatpush1.bf16.msra.mxu0 %v989
        %1321 = vmatprep.mubr.bf16.mxu0 %v528
        %1322 = vmatmul.mubr.bf16.gmra.mrb[0].mxu0 %v527
        %v1323 = vpop.f32.mrb[0].mxu0
        %v1324 = vadd.f32 0.0, %v1323
        %v1325 = vpop.f32.mrb[0].mxu0
        %v1326 = vadd.f32 0.0, %v1325
        %v1327 = vpop.f32.mrb[0].mxu0
        %v1328 = vadd.f32 0.0, %v1327
        %v1329 = vpop.f32.mrb[0].mxu0
        %v1330 = vadd.f32 0.0, %v1329
        %1331 = vmatprep.mubr.bf16.mxu0 %v532
        %1332 = vmatmul.mubr.bf16.gmra.mrb[0].mxu0 %v531
        %v1333 = vpop.f32.mrb[0].mxu0
        %v1334 = vadd.f32 0.0, %v1333
        %v1335 = vpop.f32.mrb[0].mxu0
        %v1336 = vadd.f32 0.0, %v1335
        %v1337 = vpop.f32.mrb[0].mxu0
        %v1338 = vadd.f32 0.0, %v1337
        %v1339 = vpop.f32.mrb[0].mxu0
        %v1340 = vadd.f32 0.0, %v1339
        %1341 = vdwg.mxu0
        %1342 = vmatprep.subr.bf16.mxu0 %v994
        %1343 = vmatpush1.bf16.msra.mxu0 %v993
        %1344 = vmatprep.subr.bf16.mxu0 %v998
        %1345 = vmatpush1.bf16.msra.mxu0 %v997
        %1346 = vmatprep.subr.bf16.mxu0 %v1002
        %1347 = vmatpush1.bf16.msra.mxu0 %v1001
        %1348 = vmatprep.subr.bf16.mxu0 %v1006
        %1349 = vmatpush1.bf16.msra.mxu0 %v1005
        %1350 = vmatprep.subr.bf16.mxu0 %v1010
        %1351 = vmatpush1.bf16.msra.mxu0 %v1009
        %1352 = vmatprep.subr.bf16.mxu0 %v1014
        %1353 = vmatpush1.bf16.msra.mxu0 %v1013
        %1354 = vmatprep.subr.bf16.mxu0 %v1018
        %1355 = vmatpush1.bf16.msra.mxu0 %v1017
        %1356 = vmatprep.subr.bf16.mxu0 %v1022
        %1357 = vmatpush1.bf16.msra.mxu0 %v1021
        %1358 = vmatprep.subr.bf16.mxu0 %v1026
        %1359 = vmatpush1.bf16.msra.mxu0 %v1025
        %1360 = vmatprep.subr.bf16.mxu0 %v1030
        %1361 = vmatpush1.bf16.msra.mxu0 %v1029
        %1362 = vmatprep.subr.bf16.mxu0 %v1034
        %1363 = vmatpush1.bf16.msra.mxu0 %v1033
        %1364 = vmatprep.subr.bf16.mxu0 %v1038
        %1365 = vmatpush1.bf16.msra.mxu0 %v1037
        %1366 = vmatprep.subr.bf16.mxu0 %v1042
        %1367 = vmatpush1.bf16.msra.mxu0 %v1041
        %1368 = vmatprep.subr.bf16.mxu0 %v1046
        %1369 = vmatpush1.bf16.msra.mxu0 %v1045
        %1370 = vmatprep.subr.bf16.mxu0 %v1050
        %1371 = vmatpush1.bf16.msra.mxu0 %v1049
        %1372 = vmatprep.subr.bf16.mxu0 %v1054
        %1373 = vmatpush1.bf16.msra.mxu0 %v1053
        %1374 = vmatprep.mubr.bf16.mxu0 %v530
        %1375 = vmatmul.mubr.bf16.gmra.mrb[0].mxu0 %v529
        %v1376 = vpop.f32.mrb[0].mxu0
        %v1377 = vadd.f32 %v1324, %v1376
        %v1378 = vpop.f32.mrb[0].mxu0
        %v1379 = vadd.f32 %v1326, %v1378
        %v1380 = vpop.f32.mrb[0].mxu0
        %v1381 = vadd.f32 %v1328, %v1380
        %v1382 = vpop.f32.mrb[0].mxu0
        %v1383 = vadd.f32 %v1330, %v1382
        %1384 = vmatprep.mubr.bf16.mxu0 %v534
        %1385 = vmatmul.mubr.bf16.gmra.mrb[0].mxu0 %v533
        %v1386 = vpop.f32.mrb[0].mxu0
        %v1387 = vadd.f32 %v1334, %v1386
        %v1388 = vpop.f32.mrb[0].mxu0
        %v1389 = vadd.f32 %v1336, %v1388
        %v1390 = vpop.f32.mrb[0].mxu0
        %v1391 = vadd.f32 %v1338, %v1390
        %v1392 = vpop.f32.mrb[0].mxu0
        %v1393 = vadd.f32 %v1340, %v1392
        %1394 = vdwg.mxu0
        %v1395 = vadd.f32 %v351, %v1271
        %v1396 = vadd.f32 %v352, %v1273
        %v1397 = vadd.f32 %v353, %v1377
        %v1398 = vadd.f32 %v354, %v1379
        %v1399 = vadd.f32 %v355, %v1275
        %v1400 = vadd.f32 %v356, %v1277
        %v1401 = vadd.f32 %v357, %v1381
        %v1402 = vadd.f32 %v358, %v1383
        %v1403 = vadd.f32 %v359, %v1281
        %v1404 = vadd.f32 %v360, %v1283
        %v1405 = vadd.f32 %v361, %v1387
        %v1406 = vadd.f32 %v362, %v1389
        %v1407 = vadd.f32 %v363, %v1285
        %v1408 = vadd.f32 %v364, %v1287
        %v1409 = vadd.f32 %v365, %v1391
        %v1410 = vadd.f32 %v366, %v1393
        %1411 = vst [vmem:[#allocation2] sm:$0xff] %v1395
        %1412 = vst [vmem:[#allocation2 + $0x8] sm:$0xff] %v1396
        %1413 = vst [vmem:[#allocation2 + $0x10] sm:$0xff] %v1397
        %1414 = vst [vmem:[#allocation2 + $0x18] sm:$0xff] %v1398
        %1415 = vst [vmem:[#allocation2 + $0x20] sm:$0xff] %v1399
        %1416 = vst [vmem:[#allocation2 + $0x28] sm:$0xff] %v1400
        %1417 = vst [vmem:[#allocation2 + $0x30] sm:$0xff] %v1401
        %1418 = vst [vmem:[#allocation2 + $0x38] sm:$0xff] %v1402
        %1419 = vst [vmem:[#allocation2 + $0x40] sm:$0xff] %v1403
        %1420 = vst [vmem:[#allocation2 + $0x48] sm:$0xff] %v1404
        %1421 = vst [vmem:[#allocation2 + $0x50] sm:$0xff] %v1405
        %1422 = vst [vmem:[#allocation2 + $0x58] sm:$0xff] %v1406
        %1423 = vst [vmem:[#allocation2 + $0x60] sm:$0xff] %v1407
        %1424 = vst [vmem:[#allocation2 + $0x68] sm:$0xff] %v1408
        %1425 = vst [vmem:[#allocation2 + $0x70] sm:$0xff] %v1409
        %1426 = vst [vmem:[#allocation2 + $0x78] sm:$0xff] %v1410
        %p1427 = scmp.eq.s32.totalorder %s22, 7
        // Predicated region
        $region60: #{dnet_forward.13} parent=50 // pred_check
          %p1428 = pneg %p1427
        $region61: #{dnet_forward.13} parent=50 // pred_check_branch
          %1430 = sbr.rel (%p1428) target = $region63
        $region62: #{dnet_forward.13} parent=50 // pred_region
          %v1431 = vld [vmem:[#allocation2] sm:$0xff]
          %v1432 = vld [vmem:[#allocation2 + $0x8] sm:$0xff]
          %v1433 = vld [vmem:[#allocation2 + $0x10] sm:$0xff]
          %v1434 = vld [vmem:[#allocation2 + $0x18] sm:$0xff]
          %v1435 = vld [vmem:[#allocation2 + $0x20] sm:$0xff]
          %v1436 = vld [vmem:[#allocation2 + $0x28] sm:$0xff]
          %v1437 = vld [vmem:[#allocation2 + $0x30] sm:$0xff]
          %v1438 = vld [vmem:[#allocation2 + $0x38] sm:$0xff]
          %v1439 = vld [vmem:[#allocation2 + $0x40] sm:$0xff]
          %v1440 = vld [vmem:[#allocation2 + $0x48] sm:$0xff]
          %v1441 = vld [vmem:[#allocation2 + $0x50] sm:$0xff]
          %v1442 = vld [vmem:[#allocation2 + $0x58] sm:$0xff]
          %v1443 = vld [vmem:[#allocation2 + $0x60] sm:$0xff]
          %v1444 = vld [vmem:[#allocation2 + $0x68] sm:$0xff]
          %v1445 = vld [vmem:[#allocation2 + $0x70] sm:$0xff]
          %v1446 = vld [vmem:[#allocation2 + $0x78] sm:$0xff]
          %v1447 = vld [vmem:[%s2] sm:$0xf]
          %v1449 = vlaneseq
          %v1450 = vshrl.u32 %v1449, 7
          %v1451 = vsub.s32 0, %v1450
          %v1452 = vrot.slane %v1447, %v1451
          %v1453 = vlaneseq
          %v1454 = vshrl.u32 %v1453, 7
          %v1455 = vsub.s32 1, %v1454
          %v1456 = vrot.slane %v1447, %v1455
          %v1457 = vlaneseq
          %v1458 = vshrl.u32 %v1457, 7
          %v1459 = vsub.s32 2, %v1458
          %v1460 = vrot.slane %v1447, %v1459
          %v1461 = vlaneseq
          %v1462 = vshrl.u32 %v1461, 7
          %v1463 = vsub.s32 3, %v1462
          %v1464 = vrot.slane %v1447, %v1463
          %v1469 = vadd.f32 %v1431, %v1452
          %v1470 = vadd.f32 %v1432, %v1456
          %v1471 = vadd.f32 %v1433, %v1460
          %v1472 = vadd.f32 %v1434, %v1464
          %v1473 = vadd.f32 %v1435, %v1452
          %v1474 = vadd.f32 %v1436, %v1456
          %v1475 = vadd.f32 %v1437, %v1460
          %v1476 = vadd.f32 %v1438, %v1464
          %v1477 = vadd.f32 %v1439, %v1452
          %v1478 = vadd.f32 %v1440, %v1456
          %v1479 = vadd.f32 %v1441, %v1460
          %v1480 = vadd.f32 %v1442, %v1464
          %v1481 = vadd.f32 %v1443, %v1452
          %v1482 = vadd.f32 %v1444, %v1456
          %v1483 = vadd.f32 %v1445, %v1460
          %v1484 = vadd.f32 %v1446, %v1464
          %1485 = vst [vmem:[%s319] sm:$0xff] %v1469
          %1486 = vst [vmem:[%s319 + $0x8] sm:$0xff] %v1470
          %1487 = vst [vmem:[%s319 + $0x10] sm:$0xff] %v1471
          %1488 = vst [vmem:[%s319 + $0x18] sm:$0xff] %v1472
          %1489 = vst [vmem:[%s319 + $0x20] sm:$0xff] %v1473
          %1490 = vst [vmem:[%s319 + $0x28] sm:$0xff] %v1474
          %1491 = vst [vmem:[%s319 + $0x30] sm:$0xff] %v1475
          %1492 = vst [vmem:[%s319 + $0x38] sm:$0xff] %v1476
          %1493 = vst [vmem:[%s319 + $0x40] sm:$0xff] %v1477
          %1494 = vst [vmem:[%s319 + $0x48] sm:$0xff] %v1478
          %1495 = vst [vmem:[%s319 + $0x50] sm:$0xff] %v1479
          %1496 = vst [vmem:[%s319 + $0x58] sm:$0xff] %v1480
          %1497 = vst [vmem:[%s319 + $0x60] sm:$0xff] %v1481
          %1498 = vst [vmem:[%s319 + $0x68] sm:$0xff] %v1482
          %1499 = vst [vmem:[%s319 + $0x70] sm:$0xff] %v1483
          %1500 = vst [vmem:[%s319 + $0x78] sm:$0xff] %v1484
          %v1501 = vadd.f32 %v1469, %v1473
          %v1502 = vadd.f32 %v1501, %v1477
          %v1503 = vadd.f32 %v1502, %v1481
          %v1504 = vrot.slane %v1503, 4
          %v1505 = vadd.f32 %v1503, %v1504
          %v1506 = vrot.slane %v1505, 2
          %v1507 = vadd.f32 %v1505, %v1506
          %v1508 = vrot.slane %v1507, 1
          %v1509 = vadd.f32 %v1507, %v1508
          %v1510 = vadd.f32 %v1470, %v1474
          %v1511 = vadd.f32 %v1510, %v1478
          %v1512 = vadd.f32 %v1511, %v1482
          %v1513 = vrot.slane %v1512, 4
          %v1514 = vadd.f32 %v1512, %v1513
          %v1515 = vrot.slane %v1514, 2
          %v1516 = vadd.f32 %v1514, %v1515
          %v1517 = vrot.slane %v1516, 1
          %v1518 = vadd.f32 %v1516, %v1517
          %v1519 = vadd.f32 %v1471, %v1475
          %v1520 = vadd.f32 %v1519, %v1479
          %v1521 = vadd.f32 %v1520, %v1483
          %v1522 = vrot.slane %v1521, 4
          %v1523 = vadd.f32 %v1521, %v1522
          %v1524 = vrot.slane %v1523, 2
          %v1525 = vadd.f32 %v1523, %v1524
          %v1526 = vrot.slane %v1525, 1
          %v1527 = vadd.f32 %v1525, %v1526
          %v1528 = vadd.f32 %v1472, %v1476
          %v1529 = vadd.f32 %v1528, %v1480
          %v1530 = vadd.f32 %v1529, %v1484
          %v1531 = vrot.slane %v1530, 4
          %v1532 = vadd.f32 %v1530, %v1531
          %v1533 = vrot.slane %v1532, 2
          %v1534 = vadd.f32 %v1532, %v1533
          %v1535 = vrot.slane %v1534, 1
          %v1536 = vadd.f32 %v1534, %v1535
          %v1537 = vmul.f32 %v1469, %v1469
          %v1538 = vmul.f32 %v1470, %v1470
          %v1539 = vmul.f32 %v1471, %v1471
          %v1540 = vmul.f32 %v1472, %v1472
          %v1541 = vmul.f32 %v1473, %v1473
          %v1542 = vmul.f32 %v1474, %v1474
          %v1543 = vmul.f32 %v1475, %v1475
          %v1544 = vmul.f32 %v1476, %v1476
          %v1545 = vmul.f32 %v1477, %v1477
          %v1546 = vmul.f32 %v1478, %v1478
          %v1547 = vmul.f32 %v1479, %v1479
          %v1548 = vmul.f32 %v1480, %v1480
          %v1549 = vmul.f32 %v1481, %v1481
          %v1550 = vmul.f32 %v1482, %v1482
          %v1551 = vmul.f32 %v1483, %v1483
          %v1552 = vmul.f32 %v1484, %v1484
          %v1553 = vadd.f32 %v1537, %v1541
          %v1554 = vadd.f32 %v1553, %v1545
          %v1555 = vadd.f32 %v1554, %v1549
          %v1556 = vrot.slane %v1555, 4
          %v1557 = vadd.f32 %v1555, %v1556
          %v1558 = vrot.slane %v1557, 2
          %v1559 = vadd.f32 %v1557, %v1558
          %v1560 = vrot.slane %v1559, 1
          %v1561 = vadd.f32 %v1559, %v1560
          %v1562 = vadd.f32 %v1538, %v1542
          %v1563 = vadd.f32 %v1562, %v1546
          %v1564 = vadd.f32 %v1563, %v1550
          %v1565 = vrot.slane %v1564, 4
          %v1566 = vadd.f32 %v1564, %v1565
          %v1567 = vrot.slane %v1566, 2
          %v1568 = vadd.f32 %v1566, %v1567
          %v1569 = vrot.slane %v1568, 1
          %v1570 = vadd.f32 %v1568, %v1569
          %v1571 = vadd.f32 %v1539, %v1543
          %v1572 = vadd.f32 %v1571, %v1547
          %v1573 = vadd.f32 %v1572, %v1551
          %v1574 = vrot.slane %v1573, 4
          %v1575 = vadd.f32 %v1573, %v1574
          %v1576 = vrot.slane %v1575, 2
          %v1577 = vadd.f32 %v1575, %v1576
          %v1578 = vrot.slane %v1577, 1
          %v1579 = vadd.f32 %v1577, %v1578
          %v1580 = vadd.f32 %v1540, %v1544
          %v1581 = vadd.f32 %v1580, %v1548
          %v1582 = vadd.f32 %v1581, %v1552
          %v1583 = vrot.slane %v1582, 4
          %v1584 = vadd.f32 %v1582, %v1583
          %v1585 = vrot.slane %v1584, 2
          %v1586 = vadd.f32 %v1584, %v1585
          %v1587 = vrot.slane %v1586, 1
          %v1588 = vadd.f32 %v1586, %v1587
          %1589 = vst [vmem:[%s325] sm:$0xff] %v1509
          %1590 = vst [vmem:[%s325 + $0x8] sm:$0xff] %v1518
          %1591 = vst [vmem:[%s325 + $0x10] sm:$0xff] %v1527
          %1592 = vst [vmem:[%s325 + $0x18] sm:$0xff] %v1536
          %1593 = vst [vmem:[%s330] sm:$0xff] %v1561
          %1594 = vst [vmem:[%s330 + $0x8] sm:$0xff] %v1570
          %1595 = vst [vmem:[%s330 + $0x10] sm:$0xff] %v1579
          %1596 = vst [vmem:[%s330 + $0x18] sm:$0xff] %v1588
        $region63: #{dnet_forward.13} parent=50 // pred_fallthru
          _
        %s1597 = smul.u32 4, %s21
        %p1598 = scmp.lt.s32.totalorder %s1597, 3
        %s1599 = scalar_select %p1598, %s1597, 3
        %s1600 = smul.addr %s1599, 4
        %s1601 = smul.addr %s1600, 8
        %s1602 = scalar_lea.vmem %s3, %s1601
        %p1603 = scmp.lt.s32.totalorder %s21, 0
        %s1604 = scalar_select %p1603, %s21, 0
        %s1605 = smul.addr %s1604, 4
        %s1606 = smul.addr %s1605, 8
        %s1607 = scalar_lea.vmem %s4, %s1606
        %p1608 = scmp.lt.s32.totalorder %s21, 0
        %s1609 = scalar_select %p1608, %s21, 0
        %s1610 = smul.addr %s1609, 4
        %s1611 = smul.addr %s1610, 8
        %s1612 = scalar_lea.vmem %s5, %s1611
        // Predicated region
        $region64: #{dnet_forward.13} parent=50 // pred_check
          %p1613 = pneg %p122
        $region65: #{dnet_forward.13} parent=50 // pred_check_branch
          %1615 = sbr.rel (%p1613) target = $region67
        $region66: #{dnet_forward.13} parent=50 // pred_region
          %s1616 = smul.u32 4, %s21
        $region67: #{dnet_forward.13} parent=50 // pred_fallthru
          _
        // Predicated region
        $region68: #{dnet_forward.13} parent=50 // pred_check
          %p1617 = pneg %p148
        $region69: #{dnet_forward.13} parent=50 // pred_check_branch
          %1619 = sbr.rel (%p1617) target = $region71
        $region70: #{dnet_forward.13} parent=50 // pred_region
          _
        $region71: #{dnet_forward.13} parent=50 // pred_fallthru
          _
        // Predicated region
        $region72: #{dnet_forward.13} parent=50 // pred_check
          %p1620 = pneg %p174
        $region73: #{dnet_forward.13} parent=50 // pred_check_branch
          %1622 = sbr.rel (%p1620) target = $region75
        $region74: #{dnet_forward.13} parent=50 // pred_region
          _
        $region75: #{dnet_forward.13} parent=50 // pred_fallthru
          _
        // Predicated region
        $region76: #{dnet_forward.13} parent=50 // pred_check
          %p1623 = pneg %p122
        $region77: #{dnet_forward.13} parent=50 // pred_check_branch
          %1625 = sbr.rel (%p1623) target = $region79
        $region78: #{dnet_forward.13} parent=50 // pred_region
          %s1626 = smul.u32 4, %s21
          %p1627 = scmp.lt.s32.totalorder %s1626, 3
          %s1628 = scalar_select %p1627, %s1626, 3
          %s1629 = smul.addr %s1628, 4
          %s1630 = smul.addr %s1629, 8
          %s1631 = scalar_lea.vmem %s3, %s1630
        $region79: #{dnet_forward.13} parent=50 // pred_fallthru
          _
        // Predicated region
        $region80: #{dnet_forward.13} parent=50 // pred_check
          %p1632 = pneg %p148
        $region81: #{dnet_forward.13} parent=50 // pred_check_branch
          %1634 = sbr.rel (%p1632) target = $region83
        $region82: #{dnet_forward.13} parent=50 // pred_region
          %p1635 = scmp.lt.s32.totalorder %s21, 0
          %s1636 = scalar_select %p1635, %s21, 0
          %s1637 = smul.addr %s1636, 4
          %s1638 = smul.addr %s1637, 8
          %s1639 = scalar_lea.vmem %s4, %s1638
        $region83: #{dnet_forward.13} parent=50 // pred_fallthru
          _
        // Predicated region
        $region84: #{dnet_forward.13} parent=50 // pred_check
          %p1640 = pneg %p174
        $region85: #{dnet_forward.13} parent=50 // pred_check_branch
          %1642 = sbr.rel (%p1640) target = $region87
        $region86: #{dnet_forward.13} parent=50 // pred_region
          %p1643 = scmp.lt.s32.totalorder %s21, 0
          %s1644 = scalar_select %p1643, %s21, 0
          %s1645 = smul.addr %s1644, 4
          %s1646 = smul.addr %s1645, 8
          %s1647 = scalar_lea.vmem %s5, %s1646
        $region87: #{dnet_forward.13} parent=50 // pred_fallthru
          _
      $region51: #{dnet_forward.13} parent=5 // pred_fallthru
        _
      %p1648 = scmp.le.s32.totalorder 2, %s12
      // Predicated region
      $region88: #{dnet_forward.13} parent=5 // pred_check
        %p1649 = pneg %p1648
      $region89: #{dnet_forward.13} parent=5 // pred_check_branch
        %1651 = sbr.rel (%p1649) target = $region91
      $region90: #{dnet_forward.13} parent=5 // pred_region
        %s1652 = ssub.s32 %s12, 2
      $region91: #{dnet_forward.13} parent=5 // pred_fallthru
        _
    $region6: #{dnet_forward.13} parent=1 // loop_footer
      %s16 = sadd.s32 1, %s12
    $region7: #{dnet_forward.13} parent=1 // loop_footer_branch
      %11 = sbr.rel target = $region3
    $region8: #{dnet_forward.13} parent=1 // loop_exit
      _

// kernel: dnet_forward.14
$region0: #{dnet_forward.14}
  #allocation0 [shape = 'u32[]', space=smem, size = 0x4, offset = 0x4, fixed_abs, tag = 'smem constant byte address 0x4 - core index']
  #allocation1 [shape = 'u32[144,128]{1,0:T(1,128)}', space=vmem, size = 0x12000, scoped, tag = 'internal scratch']
  %s0 = inlined_call_operand.vmem [shape: f32[32,512], index: 0, kind: input, shape index: {}]
  %s1 = inlined_call_operand.vmem [shape: f32[1,512], index: 1, kind: input, shape index: {}]
  %s2 = inlined_call_operand.vmem [shape: f32[1,512], index: 2, kind: input, shape index: {}]
  %s3 = inlined_call_operand.vmem [shape: f32[32,512], index: 3, kind: output, shape index: {}]
  %s4 = sld [smem:[#allocation0]]
  $region22: #{dnet_forward.14} parent=0
    _
  %s6 = ssub.s32 1, %s4
  %s7 = scalar_select 0, %s6, %s4
  // Predicated region
  $region2: #{dnet_forward.14} parent=0 // pred_check
    _
  $region3: #{dnet_forward.14} parent=0 // pred_check_branch
    %9 = sbr.rel (0) target = $region5
  $region4: #{dnet_forward.14} parent=0 // pred_region
    _
  $region5: #{dnet_forward.14} parent=0 // pred_fallthru
    _
  // Predicated region
  $region6: #{dnet_forward.14} parent=0 // pred_check
    _
  $region7: #{dnet_forward.14} parent=0 // pred_check_branch
    %11 = sbr.rel (0) target = $region9
  $region8: #{dnet_forward.14} parent=0 // pred_region
    _
  $region9: #{dnet_forward.14} parent=0 // pred_fallthru
    _
  // Predicated region
  $region10: #{dnet_forward.14} parent=0 // pred_check
    _
  $region11: #{dnet_forward.14} parent=0 // pred_check_branch
    %13 = sbr.rel (0) target = $region13
  $region12: #{dnet_forward.14} parent=0 // pred_region
    _
  $region13: #{dnet_forward.14} parent=0 // pred_fallthru
    _
  %v14 = vld [vmem:[%s0] sm:$0xff]
  %v15 = vld [vmem:[%s0 + $0x8] sm:$0xff]
  %v16 = vld [vmem:[%s0 + $0x10] sm:$0xff]
  %v17 = vld [vmem:[%s0 + $0x18] sm:$0xff]
  %v18 = vld [vmem:[%s0 + $0x20] sm:$0xff]
  %v19 = vld [vmem:[%s0 + $0x28] sm:$0xff]
  %v20 = vld [vmem:[%s0 + $0x30] sm:$0xff]
  %v21 = vld [vmem:[%s0 + $0x38] sm:$0xff]
  %v22 = vld [vmem:[%s0 + $0x40] sm:$0xff]
  %v23 = vld [vmem:[%s0 + $0x48] sm:$0xff]
  %v24 = vld [vmem:[%s0 + $0x50] sm:$0xff]
  %v25 = vld [vmem:[%s0 + $0x58] sm:$0xff]
  %v26 = vld [vmem:[%s0 + $0x60] sm:$0xff]
  %v27 = vld [vmem:[%s0 + $0x68] sm:$0xff]
  %v28 = vld [vmem:[%s0 + $0x70] sm:$0xff]
  %v29 = vld [vmem:[%s0 + $0x78] sm:$0xff]
  %v30 = vld [vmem:[%s1] sm:$0xf]
  %v32 = vlaneseq
  %v33 = vshrl.u32 %v32, 7
  %v34 = vsub.s32 0, %v33
  %v35 = vrot.slane %v30, %v34
  %v36 = vlaneseq
  %v37 = vshrl.u32 %v36, 7
  %v38 = vsub.s32 1, %v37
  %v39 = vrot.slane %v30, %v38
  %v40 = vlaneseq
  %v41 = vshrl.u32 %v40, 7
  %v42 = vsub.s32 2, %v41
  %v43 = vrot.slane %v30, %v42
  %v44 = vlaneseq
  %v45 = vshrl.u32 %v44, 7
  %v46 = vsub.s32 3, %v45
  %v47 = vrot.slane %v30, %v46
  %v52 = vmul.f32 %v14, %v35
  %v53 = vmul.f32 %v15, %v39
  %v54 = vmul.f32 %v16, %v43
  %v55 = vmul.f32 %v17, %v47
  %v56 = vmul.f32 %v18, %v35
  %v57 = vmul.f32 %v19, %v39
  %v58 = vmul.f32 %v20, %v43
  %v59 = vmul.f32 %v21, %v47
  %v60 = vmul.f32 %v22, %v35
  %v61 = vmul.f32 %v23, %v39
  %v62 = vmul.f32 %v24, %v43
  %v63 = vmul.f32 %v25, %v47
  %v64 = vmul.f32 %v26, %v35
  %v65 = vmul.f32 %v27, %v39
  %v66 = vmul.f32 %v28, %v43
  %v67 = vmul.f32 %v29, %v47
  %v68 = vld [vmem:[%s2] sm:$0xf]
  %v70 = vlaneseq
  %v71 = vshrl.u32 %v70, 7
  %v72 = vsub.s32 0, %v71
  %v73 = vrot.slane %v68, %v72
  %v74 = vlaneseq
  %v75 = vshrl.u32 %v74, 7
  %v76 = vsub.s32 1, %v75
  %v77 = vrot.slane %v68, %v76
  %v78 = vlaneseq
  %v79 = vshrl.u32 %v78, 7
  %v80 = vsub.s32 2, %v79
  %v81 = vrot.slane %v68, %v80
  %v82 = vlaneseq
  %v83 = vshrl.u32 %v82, 7
  %v84 = vsub.s32 3, %v83
  %v85 = vrot.slane %v68, %v84
  %v90 = vadd.f32 %v52, %v73
  %v91 = vadd.f32 %v53, %v77
  %v92 = vadd.f32 %v54, %v81
  %v93 = vadd.f32 %v55, %v85
  %v94 = vadd.f32 %v56, %v73
  %v95 = vadd.f32 %v57, %v77
  %v96 = vadd.f32 %v58, %v81
  %v97 = vadd.f32 %v59, %v85
  %v98 = vadd.f32 %v60, %v73
  %v99 = vadd.f32 %v61, %v77
  %v100 = vadd.f32 %v62, %v81
  %v101 = vadd.f32 %v63, %v85
  %v102 = vadd.f32 %v64, %v73
  %v103 = vadd.f32 %v65, %v77
  %v104 = vadd.f32 %v66, %v81
  %v105 = vadd.f32 %v67, %v85
  %vm106 = vcmp.gt.f32.partialorder %v90, 0.0
  %vm107 = vcmp.gt.f32.partialorder %v91, 0.0
  %vm108 = vcmp.gt.f32.partialorder %v92, 0.0
  %vm109 = vcmp.gt.f32.partialorder %v93, 0.0
  %vm110 = vcmp.gt.f32.partialorder %v94, 0.0
  %vm111 = vcmp.gt.f32.partialorder %v95, 0.0
  %vm112 = vcmp.gt.f32.partialorder %v96, 0.0
  %vm113 = vcmp.gt.f32.partialorder %v97, 0.0
  %vm114 = vcmp.gt.f32.partialorder %v98, 0.0
  %vm115 = vcmp.gt.f32.partialorder %v99, 0.0
  %vm116 = vcmp.gt.f32.partialorder %v100, 0.0
  %vm117 = vcmp.gt.f32.partialorder %v101, 0.0
  %vm118 = vcmp.gt.f32.partialorder %v102, 0.0
  %vm119 = vcmp.gt.f32.partialorder %v103, 0.0
  %vm120 = vcmp.gt.f32.partialorder %v104, 0.0
  %vm121 = vcmp.gt.f32.partialorder %v105, 0.0
  %v122 = vmul.f32 %v90, 0.2
  %v123 = vmul.f32 %v91, 0.2
  %v124 = vmul.f32 %v92, 0.2
  %v125 = vmul.f32 %v93, 0.2
  %v126 = vmul.f32 %v94, 0.2
  %v127 = vmul.f32 %v95, 0.2
  %v128 = vmul.f32 %v96, 0.2
  %v129 = vmul.f32 %v97, 0.2
  %v130 = vmul.f32 %v98, 0.2
  %v131 = vmul.f32 %v99, 0.2
  %v132 = vmul.f32 %v100, 0.2
  %v133 = vmul.f32 %v101, 0.2
  %v134 = vmul.f32 %v102, 0.2
  %v135 = vmul.f32 %v103, 0.2
  %v136 = vmul.f32 %v104, 0.2
  %v137 = vmul.f32 %v105, 0.2
  %v138 = vsel %vm106, %v90, %v122
  %v139 = vsel %vm107, %v91, %v123
  %v140 = vsel %vm108, %v92, %v124
  %v141 = vsel %vm109, %v93, %v125
  %v142 = vsel %vm110, %v94, %v126
  %v143 = vsel %vm111, %v95, %v127
  %v144 = vsel %vm112, %v96, %v128
  %v145 = vsel %vm113, %v97, %v129
  %v146 = vsel %vm114, %v98, %v130
  %v147 = vsel %vm115, %v99, %v131
  %v148 = vsel %vm116, %v100, %v132
  %v149 = vsel %vm117, %v101, %v133
  %v150 = vsel %vm118, %v102, %v134
  %v151 = vsel %vm119, %v103, %v135
  %v152 = vsel %vm120, %v104, %v136
  %v153 = vsel %vm121, %v105, %v137
  %154 = vst [vmem:[%s3] sm:$0xff] %v138
  %155 = vst [vmem:[%s3 + $0x8] sm:$0xff] %v139
  %156 = vst [vmem:[%s3 + $0x10] sm:$0xff] %v140
  %157 = vst [vmem:[%s3 + $0x18] sm:$0xff] %v141
  %158 = vst [vmem:[%s3 + $0x20] sm:$0xff] %v142
  %159 = vst [vmem:[%s3 + $0x28] sm:$0xff] %v143
  %160 = vst [vmem:[%s3 + $0x30] sm:$0xff] %v144
  %161 = vst [vmem:[%s3 + $0x38] sm:$0xff] %v145
  %162 = vst [vmem:[%s3 + $0x40] sm:$0xff] %v146
  %163 = vst [vmem:[%s3 + $0x48] sm:$0xff] %v147
  %164 = vst [vmem:[%s3 + $0x50] sm:$0xff] %v148
  %165 = vst [vmem:[%s3 + $0x58] sm:$0xff] %v149
  %166 = vst [vmem:[%s3 + $0x60] sm:$0xff] %v150
  %167 = vst [vmem:[%s3 + $0x68] sm:$0xff] %v151
  %168 = vst [vmem:[%s3 + $0x70] sm:$0xff] %v152
  %169 = vst [vmem:[%s3 + $0x78] sm:$0xff] %v153
  // Predicated region
  $region14: #{dnet_forward.14} parent=0 // pred_check
    _
  $region15: #{dnet_forward.14} parent=0 // pred_check_branch
    %171 = sbr.rel (0) target = $region17
  $region16: #{dnet_forward.14} parent=0 // pred_region
    _
  $region17: #{dnet_forward.14} parent=0 // pred_fallthru
    _
  // Predicated region
  $region18: #{dnet_forward.14} parent=0 // pred_check
    _
  $region19: #{dnet_forward.14} parent=0 // pred_check_branch
    %173 = sbr.rel (0) target = $region21
  $region20: #{dnet_forward.14} parent=0 // pred_region
    _
  $region21: #{dnet_forward.14} parent=0 // pred_fallthru
    _

// kernel: dnet_forward.15
$region0: #{dnet_forward.15}
  #allocation0 [shape = 'u32[]', space=smem, size = 0x4, offset = 0x4, fixed_abs, tag = 'smem constant byte address 0x4 - core index']
  #allocation1 [shape = 'u32[144,128]{1,0:T(1,128)}', space=vmem, size = 0x12000, scoped, tag = 'internal scratch']
  #allocation2 [shape = 'f32[2,128]{1,0:T(2,128)}', space=vmem, size = 0x400, scoped, tag = 'scratch operand']
  %s0 = inlined_call_operand.vmem [shape: bf16[2,8192], index: 0, kind: input, shape index: {}]
  %s1 = inlined_call_operand.vmem [shape: bf16[8192,128], index: 1, kind: input, shape index: {}]
  %s2 = inlined_call_operand.vmem [shape: f32[1,128], index: 2, kind: input, shape index: {}]
  %s3 = inlined_call_operand.vmem [shape: f32[2,128], index: 3, kind: output, shape index: {}]
  %s4 = sld [smem:[#allocation0]]
  $region53: #{dnet_forward.15} parent=0
    _
  %s6 = ssub.s32 1, %s4
  %s7 = scalar_select 0, %s6, %s4
  loop: start=0, step=1, limit=18
  $region2: #{dnet_forward.15} parent=0 // loop_pre_header
    _
  $region3: #{dnet_forward.15} parent=0 // loop_header
    %s9 = sphi 0, %s13
    %p10 = scmp.ge.s32.totalorder %s9, 18
    %s16 = sphi 0, %s28
    %s17 = sphi 0, %s24
    %s18 = sphi 0, %s16
    %s19 = sphi 0, %s17
    %s20 = sphi 0, %s18
    %s21 = sphi 0, %s19
    %s33 = sphi 0, %s35
    %s36 = sphi 0, %s33
    %s37 = sphi 0, %s36
    %s53 = sphi 0, %s37
    %s59 = sphi 0, %s61
    %s62 = sphi 0, %s59
    %s63 = sphi 0, %s62
    %s79 = sphi 0, %s63
    %s83 = sphi 0, %s83
    %s85 = sphi 0, %s83
    %s86 = sphi 0, %s85
    %s100 = sphi 0, %s86
    %s106 = sphi 0, %s108
    %s109 = sphi 0, %s106
    %s110 = sphi 0, %s109
    %s126 = sphi 0, %s110
  $region4: #{dnet_forward.15} parent=0 // loop_header_branch
    %12 = sbr.rel (%p10) target = $region8
  $region5: #{dnet_forward.15} parent=0 // loop_body
    %s14 = ssub.s32 %s9, 1
    %s15 = ssub.s32 %s9, 2
    %s22 = sadd.s32 1, %s17
    %p23 = scmp.ge.s32.totalorder %s22, 16
    %s24 = scalar_select %p23, 0, %s22
    %s25 = sadd.s32 1, %s16
    %s26 = scalar_select %p23, %s25, %s16
    %p27 = scmp.ge.s32.totalorder %s26, 1
    %s28 = scalar_select %p27, 0, %s26
    %s29 = ssub.s32 %s16, %s28
    %s30 = ssub.s32 %s17, %s24
    %s31 = sor.u32 %s29, %s30
    %p32 = scmp.eq.s32.totalorder %s31, 0
    %s34 = sadd.s32 %s33, 1
    %s35 = scalar_select %p32, %s33, %s34
    %p38 = pneg %p32
    %p39 = scmp.eq.s32.totalorder %s9, 15
    %p40 = por %p38, %p39
    %p41 = scmp.ne.s32.totalorder %s33, %s36
    %p42 = scmp.eq.s32.totalorder %s9, 0
    %p43 = por %p41, %p42
    %p44 = scmp.ne.s32.totalorder %s33, %s36
    %p45 = scmp.eq.s32.totalorder %s14, 15
    %p46 = por %p44, %p45
    %p47 = scmp.ne.s32.totalorder %s36, %s37
    %p48 = scmp.eq.s32.totalorder %s14, 0
    %p49 = por %p47, %p48
    %p50 = scmp.ne.s32.totalorder %s36, %s37
    %p51 = scmp.eq.s32.totalorder %s15, 15
    %p52 = por %p50, %p51
    %p54 = scmp.ne.s32.totalorder %s37, %s53
    %p55 = scmp.eq.s32.totalorder %s15, 0
    %p56 = por %p54, %p55
    %s57 = ssub.s32 %s17, %s24
    %p58 = scmp.eq.s32.totalorder %s57, 0
    %s60 = sadd.s32 %s59, 1
    %s61 = scalar_select %p58, %s59, %s60
    %p64 = pneg %p58
    %p65 = scmp.eq.s32.totalorder %s9, 15
    %p66 = por %p64, %p65
    %p67 = scmp.ne.s32.totalorder %s59, %s62
    %p68 = scmp.eq.s32.totalorder %s9, 0
    %p69 = por %p67, %p68
    %p70 = scmp.ne.s32.totalorder %s59, %s62
    %p71 = scmp.eq.s32.totalorder %s14, 15
    %p72 = por %p70, %p71
    %p73 = scmp.ne.s32.totalorder %s62, %s63
    %p74 = scmp.eq.s32.totalorder %s14, 0
    %p75 = por %p73, %p74
    %p76 = scmp.ne.s32.totalorder %s62, %s63
    %p77 = scmp.eq.s32.totalorder %s15, 15
    %p78 = por %p76, %p77
    %p80 = scmp.ne.s32.totalorder %s63, %s79
    %p81 = scmp.eq.s32.totalorder %s15, 0
    %p82 = por %p80, %p81
    %s84 = sadd.s32 %s83, 1
    %p87 = scmp.eq.s32.totalorder %s9, 15
    %p88 = scmp.ne.s32.totalorder %s83, %s85
    %p89 = scmp.eq.s32.totalorder %s9, 0
    %p90 = por %p88, %p89
    %p91 = scmp.ne.s32.totalorder %s83, %s85
    %p92 = scmp.eq.s32.totalorder %s14, 15
    %p93 = por %p91, %p92
    %p94 = scmp.ne.s32.totalorder %s85, %s86
    %p95 = scmp.eq.s32.totalorder %s14, 0
    %p96 = por %p94, %p95
    %p97 = scmp.ne.s32.totalorder %s85, %s86
    %p98 = scmp.eq.s32.totalorder %s15, 15
    %p99 = por %p97, %p98
    %p101 = scmp.ne.s32.totalorder %s86, %s100
    %p102 = scmp.eq.s32.totalorder %s15, 0
    %p103 = por %p101, %p102
    %s104 = ssub.s32 %s16, %s28
    %p105 = scmp.eq.s32.totalorder %s104, 0
    %s107 = sadd.s32 %s106, 1
    %s108 = scalar_select %p105, %s106, %s107
    %p111 = pneg %p105
    %p112 = scmp.eq.s32.totalorder %s9, 15
    %p113 = por %p111, %p112
    %p114 = scmp.ne.s32.totalorder %s106, %s109
    %p115 = scmp.eq.s32.totalorder %s9, 0
    %p116 = por %p114, %p115
    %p117 = scmp.ne.s32.totalorder %s106, %s109
    %p118 = scmp.eq.s32.totalorder %s14, 15
    %p119 = por %p117, %p118
    %p120 = scmp.ne.s32.totalorder %s109, %s110
    %p121 = scmp.eq.s32.totalorder %s14, 0
    %p122 = por %p120, %p121
    %p123 = scmp.ne.s32.totalorder %s109, %s110
    %p124 = scmp.eq.s32.totalorder %s15, 15
    %p125 = por %p123, %p124
    %p127 = scmp.ne.s32.totalorder %s110, %s126
    %p128 = scmp.eq.s32.totalorder %s15, 0
    %p129 = por %p127, %p128
    %p130 = scmp.le.s32.totalorder 1, %s9
    %p131 = scmp.lt.s32.totalorder %s9, 17
    %p132 = pnand %p130, %p131
    %p133 = pneg %p132
    // Predicated region
    $region9: #{dnet_forward.15} parent=5 // pred_check
      _
    $region10: #{dnet_forward.15} parent=5 // pred_check_branch
      %135 = sbr.rel (%p132) target = $region12
    $region11: #{dnet_forward.15} parent=5 // pred_region
      %s136 = ssub.s32 %s9, 1
      // Predicated region
      $region13: #{dnet_forward.15} parent=11 // pred_check
        %p137 = pneg %p96
      $region14: #{dnet_forward.15} parent=11 // pred_check_branch
        %139 = sbr.rel (%p137) target = $region16
      $region15: #{dnet_forward.15} parent=11 // pred_region
        _
      $region16: #{dnet_forward.15} parent=11 // pred_fallthru
        _
    $region12: #{dnet_forward.15} parent=5 // pred_fallthru
      _
    %p140 = scmp.lt.s32.totalorder %s9, 16
    // Predicated region
    $region17: #{dnet_forward.15} parent=5 // pred_check
      %p141 = pneg %p140
    $region18: #{dnet_forward.15} parent=5 // pred_check_branch
      %143 = sbr.rel (%p141) target = $region20
    $region19: #{dnet_forward.15} parent=5 // pred_region
      // Predicated region
      $region21: #{dnet_forward.15} parent=19 // pred_check
        %p144 = pneg %p43
      $region22: #{dnet_forward.15} parent=19 // pred_check_branch
        %146 = sbr.rel (%p144) target = $region24
      $region23: #{dnet_forward.15} parent=19 // pred_region
        %s147 = smul.u32 4, %s17
        %p148 = scmp.lt.s32.totalorder %s16, 0
        %s149 = scalar_select %p148, %s16, 0
        %p150 = scmp.lt.s32.totalorder %s147, 63
        %s151 = scalar_select %p150, %s147, 63
        %s152 = smul.addr %s149, 64
        %s153 = sadd.s32 %s151, %s152
        %s154 = scalar_lea.vmem %s0, %s153
        %s155 = smul.u32 4, %s17
      $region24: #{dnet_forward.15} parent=19 // pred_fallthru
        _
      // Predicated region
      $region25: #{dnet_forward.15} parent=19 // pred_check
        %p156 = pneg %p69
      $region26: #{dnet_forward.15} parent=19 // pred_check_branch
        %158 = sbr.rel (%p156) target = $region28
      $region27: #{dnet_forward.15} parent=19 // pred_region
        %s159 = smul.u32 64, %s17
        %p160 = scmp.lt.s32.totalorder %s159, 1023
        %s161 = scalar_select %p160, %s159, 1023
        %s162 = smul.addr %s161, 4
        %s163 = scalar_lea.vmem %s1, %s162
        %s164 = smul.u32 64, %s17
      $region28: #{dnet_forward.15} parent=19 // pred_fallthru
        _
    $region20: #{dnet_forward.15} parent=5 // pred_fallthru
      _
    %p165 = scmp.le.s32.totalorder 1, %s9
    %p166 = scmp.lt.s32.totalorder %s9, 17
    %p167 = pnand %p165, %p166
    %p168 = pneg %p167
    // Predicated region
    $region29: #{dnet_forward.15} parent=5 // pred_check
      _
    $region30: #{dnet_forward.15} parent=5 // pred_check_branch
      %170 = sbr.rel (%p167) target = $region32
    $region31: #{dnet_forward.15} parent=5 // pred_region
      %s171 = ssub.s32 %s9, 1
      %s172 = smul.u32 4, %s19
      %p173 = scmp.lt.s32.totalorder %s18, 0
      %s174 = scalar_select %p173, %s18, 0
      %p175 = scmp.lt.s32.totalorder %s172, 63
      %s176 = scalar_select %p175, %s172, 63
      %s177 = smul.addr %s174, 64
      %s178 = sadd.s32 %s176, %s177
      %s179 = scalar_lea.vmem %s0, %s178
      %p180 = pneg %p49
      %p181 = pneg %p46
      %s182 = smul.u32 64, %s19
      %p183 = scmp.lt.s32.totalorder %s182, 1023
      %s184 = scalar_select %p183, %s182, 1023
      %s185 = smul.addr %s184, 4
      %s186 = scalar_lea.vmem %s1, %s185
      %p187 = pneg %p75
      %p188 = pneg %p72
      %p189 = pneg %p96
      %p190 = pneg %p93
      %p191 = pneg %p122
      %p192 = pneg %p119
      %p193 = scmp.lt.s32.totalorder %s18, 0
      %s194 = scalar_select %p193, %s18, 0
      %s195 = smul.addr %s194, 2
      %s196 = scalar_lea.vmem %s3, %s195
      %s197 = smul.u32 4, %s19
      %p198 = scmp.lt.s32.totalorder %s18, 0
      %s199 = scalar_select %p198, %s18, 0
      %p200 = scmp.lt.s32.totalorder %s197, 63
      %s201 = scalar_select %p200, %s197, 63
      %s202 = smul.addr %s199, 64
      %s203 = sadd.s32 %s201, %s202
      %s204 = scalar_lea.vmem %s0, %s203
      %s205 = smul.u32 4, %s19
      %s206 = smul.u32 64, %s19
      %p207 = scmp.lt.s32.totalorder %s206, 1023
      %s208 = scalar_select %p207, %s206, 1023
      %s209 = smul.addr %s208, 4
      %s210 = scalar_lea.vmem %s1, %s209
      %s211 = smul.u32 64, %s19
      %p212 = scmp.lt.s32.totalorder %s18, 0
      %s213 = scalar_select %p212, %s18, 0
      %s214 = smul.addr %s213, 2
      %s215 = scalar_lea.vmem %s3, %s214
      %p217 = scmp.eq.s32.totalorder %s19, 0
      // Predicated region
      $region33: #{dnet_forward.15} parent=31 // pred_check
        %p218 = pneg %p217
      $region34: #{dnet_forward.15} parent=31 // pred_check_branch
        %220 = sbr.rel (%p218) target = $region36
      $region35: #{dnet_forward.15} parent=31 // pred_region
        %221 = vst [vmem:[#allocation2] sm:$0x3] 0.0
      $region36: #{dnet_forward.15} parent=31 // pred_fallthru
        _
      %v222 = vld [vmem:[#allocation2] sm:$0x3]
      %v223 = vld [vmem:[%s204] sm:$0xf]
      %v224 = vld [vmem:[%s210] sm:$0xf]
      %v225 = vld [vmem:[%s210 + $0x4] sm:$0xf]
      %v226 = vld [vmem:[%s210 + $0x8] sm:$0xf]
      %v227 = vld [vmem:[%s210 + $0xc] sm:$0xf]
      %v228 = vld [vmem:[%s210 + $0x10] sm:$0xf]
      %v229 = vld [vmem:[%s210 + $0x14] sm:$0xf]
      %v230 = vld [vmem:[%s210 + $0x18] sm:$0xf]
      %v231 = vld [vmem:[%s210 + $0x1c] sm:$0xf]
      %v232 = vld [vmem:[%s210 + $0x20] sm:$0xf]
      %v233 = vld [vmem:[%s210 + $0x24] sm:$0xf]
      %v234 = vld [vmem:[%s210 + $0x28] sm:$0xf]
      %v235 = vld [vmem:[%s210 + $0x2c] sm:$0xf]
      %v236 = vld [vmem:[%s210 + $0x30] sm:$0xf]
      %v237 = vld [vmem:[%s210 + $0x34] sm:$0xf]
      %v238 = vld [vmem:[%s210 + $0x38] sm:$0xf]
      %v239 = vld [vmem:[%s210 + $0x3c] sm:$0xf]
      %v240 = vld [vmem:[%s210 + $0x40] sm:$0xf]
      %v241 = vld [vmem:[%s210 + $0x44] sm:$0xf]
      %v242 = vld [vmem:[%s210 + $0x48] sm:$0xf]
      %v243 = vld [vmem:[%s210 + $0x4c] sm:$0xf]
      %v244 = vld [vmem:[%s210 + $0x50] sm:$0xf]
      %v245 = vld [vmem:[%s210 + $0x54] sm:$0xf]
      %v246 = vld [vmem:[%s210 + $0x58] sm:$0xf]
      %v247 = vld [vmem:[%s210 + $0x5c] sm:$0xf]
      %v248 = vld [vmem:[%s210 + $0x60] sm:$0xf]
      %v249 = vld [vmem:[%s210 + $0x64] sm:$0xf]
      %v250 = vld [vmem:[%s210 + $0x68] sm:$0xf]
      %v251 = vld [vmem:[%s210 + $0x6c] sm:$0xf]
      %v252 = vld [vmem:[%s210 + $0x70] sm:$0xf]
      %v253 = vld [vmem:[%s210 + $0x74] sm:$0xf]
      %v254 = vld [vmem:[%s210 + $0x78] sm:$0xf]
      %v255 = vld [vmem:[%s210 + $0x7c] sm:$0xf]
      %v256 = vld [vmem:[%s210 + $0x80] sm:$0xf]
      %v257 = vld [vmem:[%s210 + $0x84] sm:$0xf]
      %v258 = vld [vmem:[%s210 + $0x88] sm:$0xf]
      %v259 = vld [vmem:[%s210 + $0x8c] sm:$0xf]
      %v260 = vld [vmem:[%s210 + $0x90] sm:$0xf]
      %v261 = vld [vmem:[%s210 + $0x94] sm:$0xf]
      %v262 = vld [vmem:[%s210 + $0x98] sm:$0xf]
      %v263 = vld [vmem:[%s210 + $0x9c] sm:$0xf]
      %v264 = vld [vmem:[%s210 + $0xa0] sm:$0xf]
      %v265 = vld [vmem:[%s210 + $0xa4] sm:$0xf]
      %v266 = vld [vmem:[%s210 + $0xa8] sm:$0xf]
      %v267 = vld [vmem:[%s210 + $0xac] sm:$0xf]
      %v268 = vld [vmem:[%s210 + $0xb0] sm:$0xf]
      %v269 = vld [vmem:[%s210 + $0xb4] sm:$0xf]
      %v270 = vld [vmem:[%s210 + $0xb8] sm:$0xf]
      %v271 = vld [vmem:[%s210 + $0xbc] sm:$0xf]
      %v272 = vld [vmem:[%s210 + $0xc0] sm:$0xf]
      %v273 = vld [vmem:[%s210 + $0xc4] sm:$0xf]
      %v274 = vld [vmem:[%s210 + $0xc8] sm:$0xf]
      %v275 = vld [vmem:[%s210 + $0xcc] sm:$0xf]
      %v276 = vld [vmem:[%s210 + $0xd0] sm:$0xf]
      %v277 = vld [vmem:[%s210 + $0xd4] sm:$0xf]
      %v278 = vld [vmem:[%s210 + $0xd8] sm:$0xf]
      %v279 = vld [vmem:[%s210 + $0xdc] sm:$0xf]
      %v280 = vld [vmem:[%s210 + $0xe0] sm:$0xf]
      %v281 = vld [vmem:[%s210 + $0xe4] sm:$0xf]
      %v282 = vld [vmem:[%s210 + $0xe8] sm:$0xf]
      %v283 = vld [vmem:[%s210 + $0xec] sm:$0xf]
      %v284 = vld [vmem:[%s210 + $0xf0] sm:$0xf]
      %v285 = vld [vmem:[%s210 + $0xf4] sm:$0xf]
      %v286 = vld [vmem:[%s210 + $0xf8] sm:$0xf]
      %v287 = vld [vmem:[%s210 + $0xfc] sm:$0xf]
      %v290 = vunpack.c.l.s4 1966171168
      %v291 = vunpack.c.0.s8 %v290
      %v292 = vlaneseq
      %v293 = vshrl.u32 %v292, 7
      %v294 = vsub.s32 %v291, %v293
      %v295 = vrot.slane %v223, %v294
      %v296 = vcombine.high %v295, %v295
      %v298 = vunpack.c.l.s4 1966171168
      %v299 = vunpack.c.0.s8 %v298
      %v300 = vlaneseq
      %v301 = vshrl.u32 %v300, 7
      %v302 = vsub.s32 %v299, %v301
      %v303 = vrot.slane %v295, %v302
      %v305 = vunpack.c.l.s4 1966171168
      %v306 = vunpack.c.0.s8 %v305
      %v307 = vlaneseq
      %v308 = vshrl.u32 %v307, 7
      %v309 = vsub.s32 %v306, %v308
      %v310 = vrot.slane %v296, %v309
      %v311 = vcombine.high %v303, %v303
      %v312 = vcombine.high %v310, %v310
      %v381 = vunpack.c.l.b16 %v224
      %v382 = vunpack.c.l.b16 %v225
      %v383 = vunpack.c.l.b16 %v226
      %v384 = vunpack.c.l.b16 %v227
      %v385 = vunpack.c.l.b16 %v228
      %v386 = vunpack.c.l.b16 %v229
      %v387 = vunpack.c.l.b16 %v230
      %v388 = vunpack.c.l.b16 %v231
      %v389 = vunpack.c.l.b16 %v232
      %v390 = vunpack.c.l.b16 %v233
      %v391 = vunpack.c.l.b16 %v234
      %v392 = vunpack.c.l.b16 %v235
      %v393 = vunpack.c.l.b16 %v236
      %v394 = vunpack.c.l.b16 %v237
      %v395 = vunpack.c.l.b16 %v238
      %v396 = vunpack.c.l.b16 %v239
      %v397 = vunpack.c.l.b16 %v240
      %v398 = vunpack.c.l.b16 %v241
      %v399 = vunpack.c.l.b16 %v242
      %v400 = vunpack.c.l.b16 %v243
      %v401 = vunpack.c.l.b16 %v244
      %v402 = vunpack.c.l.b16 %v245
      %v403 = vunpack.c.l.b16 %v246
      %v404 = vunpack.c.l.b16 %v247
      %v405 = vunpack.c.l.b16 %v248
      %v406 = vunpack.c.l.b16 %v249
      %v407 = vunpack.c.l.b16 %v250
      %v408 = vunpack.c.l.b16 %v251
      %v409 = vunpack.c.l.b16 %v252
      %v410 = vunpack.c.l.b16 %v253
      %v411 = vunpack.c.l.b16 %v254
      %v412 = vunpack.c.l.b16 %v255
      %v413 = vunpack.c.l.b16 %v256
      %v414 = vunpack.c.l.b16 %v257
      %v415 = vunpack.c.l.b16 %v258
      %v416 = vunpack.c.l.b16 %v259
      %v417 = vunpack.c.l.b16 %v260
      %v418 = vunpack.c.l.b16 %v261
      %v419 = vunpack.c.l.b16 %v262
      %v420 = vunpack.c.l.b16 %v263
      %v421 = vunpack.c.l.b16 %v264
      %v422 = vunpack.c.l.b16 %v265
      %v423 = vunpack.c.l.b16 %v266
      %v424 = vunpack.c.l.b16 %v267
      %v425 = vunpack.c.l.b16 %v268
      %v426 = vunpack.c.l.b16 %v269
      %v427 = vunpack.c.l.b16 %v270
      %v428 = vunpack.c.l.b16 %v271
      %v429 = vunpack.c.l.b16 %v272
      %v430 = vunpack.c.l.b16 %v273
      %v431 = vunpack.c.l.b16 %v274
      %v432 = vunpack.c.l.b16 %v275
      %v433 = vunpack.c.l.b16 %v276
      %v434 = vunpack.c.l.b16 %v277
      %v435 = vunpack.c.l.b16 %v278
      %v436 = vunpack.c.l.b16 %v279
      %v437 = vunpack.c.l.b16 %v280
      %v438 = vunpack.c.l.b16 %v281
      %v439 = vunpack.c.l.b16 %v282
      %v440 = vunpack.c.l.b16 %v283
      %v441 = vunpack.c.l.b16 %v284
      %v442 = vunpack.c.l.b16 %v285
      %v443 = vunpack.c.l.b16 %v286
      %v444 = vunpack.c.l.b16 %v287
      %v445 = vpack.c.b16 %v382, %v381
      %v446 = vpack.c.b16 %v384, %v383
      %v447 = vpack.c.b16 %v386, %v385
      %v448 = vpack.c.b16 %v388, %v387
      %v449 = vpack.c.b16 %v390, %v389
      %v450 = vpack.c.b16 %v392, %v391
      %v451 = vpack.c.b16 %v394, %v393
      %v452 = vpack.c.b16 %v396, %v395
      %v453 = vpack.c.b16 %v398, %v397
      %v454 = vpack.c.b16 %v400, %v399
      %v455 = vpack.c.b16 %v402, %v401
      %v456 = vpack.c.b16 %v404, %v403
      %v457 = vpack.c.b16 %v406, %v405
      %v458 = vpack.c.b16 %v408, %v407
      %v459 = vpack.c.b16 %v410, %v409
      %v460 = vpack.c.b16 %v412, %v411
      %v461 = vpack.c.b16 %v414, %v413
      %v462 = vpack.c.b16 %v416, %v415
      %v463 = vpack.c.b16 %v418, %v417
      %v464 = vpack.c.b16 %v420, %v419
      %v465 = vpack.c.b16 %v422, %v421
      %v466 = vpack.c.b16 %v424, %v423
      %v467 = vpack.c.b16 %v426, %v425
      %v468 = vpack.c.b16 %v428, %v427
      %v469 = vpack.c.b16 %v430, %v429
      %v470 = vpack.c.b16 %v432, %v431
      %v471 = vpack.c.b16 %v434, %v433
      %v472 = vpack.c.b16 %v436, %v435
      %v473 = vpack.c.b16 %v438, %v437
      %v474 = vpack.c.b16 %v440, %v439
      %v475 = vpack.c.b16 %v442, %v441
      %v476 = vpack.c.b16 %v444, %v443
      %509 = vmatprep.subr.bf16.mxu0 0
      %510 = vmatpush1.bf16.msra.mxu0 %v445
      %511 = vmatprep.subr.bf16.mxu0 0
      %512 = vmatpush1.bf16.msra.mxu0 %v446
      %513 = vmatprep.subr.bf16.mxu0 0
      %514 = vmatpush1.bf16.msra.mxu0 %v447
      %515 = vmatprep.subr.bf16.mxu0 0
      %516 = vmatpush1.bf16.msra.mxu0 %v448
      %517 = vmatprep.subr.bf16.mxu0 0
      %518 = vmatpush1.bf16.msra.mxu0 %v449
      %519 = vmatprep.subr.bf16.mxu0 0
      %520 = vmatpush1.bf16.msra.mxu0 %v450
      %521 = vmatprep.subr.bf16.mxu0 0
      %522 = vmatpush1.bf16.msra.mxu0 %v451
      %523 = vmatprep.subr.bf16.mxu0 0
      %524 = vmatpush1.bf16.msra.mxu0 %v452
      %525 = vmatprep.subr.bf16.mxu0 0
      %526 = vmatpush1.bf16.msra.mxu0 %v453
      %527 = vmatprep.subr.bf16.mxu0 0
      %528 = vmatpush1.bf16.msra.mxu0 %v454
      %529 = vmatprep.subr.bf16.mxu0 0
      %530 = vmatpush1.bf16.msra.mxu0 %v455
      %531 = vmatprep.subr.bf16.mxu0 0
      %532 = vmatpush1.bf16.msra.mxu0 %v456
      %533 = vmatprep.subr.bf16.mxu0 0
      %534 = vmatpush1.bf16.msra.mxu0 %v457
      %535 = vmatprep.subr.bf16.mxu0 0
      %536 = vmatpush1.bf16.msra.mxu0 %v458
      %537 = vmatprep.subr.bf16.mxu0 0
      %538 = vmatpush1.bf16.msra.mxu0 %v459
      %539 = vmatprep.subr.bf16.mxu0 0
      %540 = vmatpush1.bf16.msra.mxu0 %v460
      %541 = vmatprep.mubr.bf16.mxu0 %v310
      %542 = vmatmul.mubr.bf16.gmra.mrb[0].mxu0 %v303
      %v543 = vpop.f32.mrb[0].mxu0
      %v544 = vadd.f32 0.0, %v543
      %v545 = vpop.f32.mrb[0].mxu0
      %v546 = vpop.f32.mrb[0].mxu0
      %v547 = vpop.f32.mrb[0].mxu0
      %548 = vdwg.mxu0
      %549 = vmatprep.subr.bf16.mxu0 0
      %550 = vmatpush1.bf16.msra.mxu0 %v461
      %551 = vmatprep.subr.bf16.mxu0 0
      %552 = vmatpush1.bf16.msra.mxu0 %v462
      %553 = vmatprep.subr.bf16.mxu0 0
      %554 = vmatpush1.bf16.msra.mxu0 %v463
      %555 = vmatprep.subr.bf16.mxu0 0
      %556 = vmatpush1.bf16.msra.mxu0 %v464
      %557 = vmatprep.subr.bf16.mxu0 0
      %558 = vmatpush1.bf16.msra.mxu0 %v465
      %559 = vmatprep.subr.bf16.mxu0 0
      %560 = vmatpush1.bf16.msra.mxu0 %v466
      %561 = vmatprep.subr.bf16.mxu0 0
      %562 = vmatpush1.bf16.msra.mxu0 %v467
      %563 = vmatprep.subr.bf16.mxu0 0
      %564 = vmatpush1.bf16.msra.mxu0 %v468
      %565 = vmatprep.subr.bf16.mxu0 0
      %566 = vmatpush1.bf16.msra.mxu0 %v469
      %567 = vmatprep.subr.bf16.mxu0 0
      %568 = vmatpush1.bf16.msra.mxu0 %v470
      %569 = vmatprep.subr.bf16.mxu0 0
      %570 = vmatpush1.bf16.msra.mxu0 %v471
      %571 = vmatprep.subr.bf16.mxu0 0
      %572 = vmatpush1.bf16.msra.mxu0 %v472
      %573 = vmatprep.subr.bf16.mxu0 0
      %574 = vmatpush1.bf16.msra.mxu0 %v473
      %575 = vmatprep.subr.bf16.mxu0 0
      %576 = vmatpush1.bf16.msra.mxu0 %v474
      %577 = vmatprep.subr.bf16.mxu0 0
      %578 = vmatpush1.bf16.msra.mxu0 %v475
      %579 = vmatprep.subr.bf16.mxu0 0
      %580 = vmatpush1.bf16.msra.mxu0 %v476
      %581 = vmatprep.mubr.bf16.mxu0 %v312
      %582 = vmatmul.mubr.bf16.gmra.mrb[0].mxu0 %v311
      %v583 = vpop.f32.mrb[0].mxu0
      %v584 = vadd.f32 %v544, %v583
      %v585 = vpop.f32.mrb[0].mxu0
      %v586 = vpop.f32.mrb[0].mxu0
      %v587 = vpop.f32.mrb[0].mxu0
      %588 = vdwg.mxu0
      %v589 = vadd.f32 %v222, %v584
      %590 = vst [vmem:[#allocation2] sm:$0x3] %v589
      %p591 = scmp.eq.s32.totalorder %s19, 15
      // Predicated region
      $region37: #{dnet_forward.15} parent=31 // pred_check
        %p592 = pneg %p591
      $region38: #{dnet_forward.15} parent=31 // pred_check_branch
        %594 = sbr.rel (%p592) target = $region40
      $region39: #{dnet_forward.15} parent=31 // pred_region
        %v595 = vld [vmem:[#allocation2] sm:$0x3]
        %v596 = vld [vmem:[%s2] sm:$0x1]
        %v598 = vlaneseq
        %v599 = vshrl.u32 %v598, 7
        %v600 = vsub.s32 0, %v599
        %v601 = vrot.slane %v596, %v600
        %v603 = vadd.f32 %v595, %v601
        %v604 = vsub.f32 0.0, %v603
        %v605 = vmul.f32 %v604, 1.442695
        %v606 = vpow.pop %v605
        %v607 = vadd.f32 %v606, 1.0
        %v608 = vrcp.pop %v607
        %v609 = vmul.f32 1.0, %v608
        %610 = vst [vmem:[%s215] sm:$0x3] %v609
      $region40: #{dnet_forward.15} parent=31 // pred_fallthru
        _
      %p611 = scmp.lt.s32.totalorder %s18, 0
      %s612 = scalar_select %p611, %s18, 0
      %s613 = smul.addr %s612, 2
      %s614 = scalar_lea.vmem %s3, %s613
      // Predicated region
      $region41: #{dnet_forward.15} parent=31 // pred_check
        %p615 = pneg %p119
      $region42: #{dnet_forward.15} parent=31 // pred_check_branch
        %617 = sbr.rel (%p615) target = $region44
      $region43: #{dnet_forward.15} parent=31 // pred_region
        _
      $region44: #{dnet_forward.15} parent=31 // pred_fallthru
        _
      // Predicated region
      $region45: #{dnet_forward.15} parent=31 // pred_check
        %p618 = pneg %p119
      $region46: #{dnet_forward.15} parent=31 // pred_check_branch
        %620 = sbr.rel (%p618) target = $region48
      $region47: #{dnet_forward.15} parent=31 // pred_region
        %p621 = scmp.lt.s32.totalorder %s18, 0
        %s622 = scalar_select %p621, %s18, 0
        %s623 = smul.addr %s622, 2
        %s624 = scalar_lea.vmem %s3, %s623
      $region48: #{dnet_forward.15} parent=31 // pred_fallthru
        _
    $region32: #{dnet_forward.15} parent=5 // pred_fallthru
      _
    %p625 = scmp.le.s32.totalorder 2, %s9
    // Predicated region
    $region49: #{dnet_forward.15} parent=5 // pred_check
      %p626 = pneg %p625
    $region50: #{dnet_forward.15} parent=5 // pred_check_branch
      %628 = sbr.rel (%p626) target = $region52
    $region51: #{dnet_forward.15} parent=5 // pred_region
      %s629 = ssub.s32 %s9, 2
    $region52: #{dnet_forward.15} parent=5 // pred_fallthru
      _
  $region6: #{dnet_forward.15} parent=0 // loop_footer
    %s13 = sadd.s32 1, %s9
  $region7: #{dnet_forward.15} parent=0 // loop_footer_branch
    %8 = sbr.rel target = $region3
  $region8: #{dnet_forward.15} parent=0 // loop_exit
    _

</llo_original>
